<compile_context>
chip_gen: v6e
topology: v6e:2x2x1
jax: 0.10.0
libtpu: 0.0.40
codegen_flags: <defaults>
</compile_context>

<pallas_src>
import functools

import numpy as np
import jax
import jax.numpy as jnp
from jax.experimental import pallas as pl
from jax.experimental.pallas import tpu as pltpu


def _round_up(v, m):
    return (v + m - 1) // m * m


# -----------------------------------------------------------------------------
# XLA-side glue: corner-major patch construction directly from x (no `pat`)
# -----------------------------------------------------------------------------
def _corner_patches(x, k):
    """x: (N, C, D, H, W) -> 4 corner patch slabs (N, K, D*PH*PW) + stats-only tail.

    K is ordered (c, kh, kw) to match w.reshape(OC, C*k*k).  Corner (i, j) holds the
    conv outputs that feed pool position (ph, pw) at offset (i, j) inside the 2x2 window.
    """
    N, C, D, H, W = x.shape
    OH, OW = H - k + 1, W - k + 1
    PH, PW = OH // 2, OW // 2
    K = C * k * k
    P = D * PH * PW

    def slab(h0, h1, w0, w1, sh, sw):
        taps = [x[:, :, :, h0 + kh:h1 + kh:sh, w0 + kw:w1 + kw:sw]
                for kh in range(k) for kw in range(k)]
        t = jnp.stack(taps, axis=2)                    # (N, C, k*k, D, rh, rw)
        return t.reshape(N, K, -1)

    corners = [slab(i, i + 2 * PH, j, j + 2 * PW, 2, 2)
               for i in (0, 1) for j in (0, 1)]

    # Leftover conv outputs (odd OH/OW) never reach a pool window but ARE part of the
    # InstanceNorm statistics of the pre-pool tensor.
    tails = []
    if OH > 2 * PH:
        tails.append(slab(2 * PH, OH, 0, OW, 1, 1))
    if OW > 2 * PW:
        tails.append(slab(0, 2 * PH, 2 * PW, OW, 1, 1))
    tail = jnp.concatenate(tails, axis=-1) if tails else None

    dims = dict(OH=OH, OW=OW, PH=PH, PW=PW, K=K, P=P)
    return corners, tail, dims


def _concat_lane_slabs(slabs, widths, lane=128):
    """Pad each slab's last dim to a multiple of `lane`, concat along lanes, build a
    validity mask (1, total) marking real (non-pad) columns."""
    parts, mask_parts = [], []
    for s, wv in zip(slabs, widths):
        wp = _round_up(wv, lane)
        parts.append(jnp.pad(s, ((0, 0), (0, 0), (0, wp - wv))))
        m = np.zeros((wp,), np.float32)
        m[:wv] = 1.0
        mask_parts.append(m)
    cat = jnp.concatenate(parts, axis=-1)
    mask = jnp.asarray(np.concatenate(mask_parts)[None, :], jnp.float32)
    return cat, mask


def _build_selection(d, ph, pw, k, p_pad, dtype):
    """0/1 selection matrices (k*k, p_pad, P3): in-kernel im2col for the last block's conv.
    Column layout of the pooled feature is row-major (d, ph, pw)."""
    oh, ow = ph - k + 1, pw - k + 1
    p3 = d * oh * ow
    s = np.zeros((k * k, p_pad, p3), np.float32)
    for kh in range(k):
        for kw in range(k):
            t = kh * k + kw
            p = 0
            for dd in range(d):
                for h in range(oh):
                    for w in range(ow):
                        s[t, dd * ph * pw + (h + kh) * pw + (w + kw), p] = 1.0
                        p += 1
    return jnp.asarray(s, dtype)


# -----------------------------------------------------------------------------
# Kernels
# -----------------------------------------------------------------------------
def _block0_kernel(p_ref, w_ref, b_ref, o_ref, *, alpha):
    """Block 0: conv(+bias) -> LeakyReLU -> 2x2 avg-pool, spatial axis tiled on lanes.

    p_ref: (4, K, TP) pool-corner-major patches, w_ref: (OC, K), b_ref: (OC, 1) f32,
    o_ref: (OC, TP)."""
    w = w_ref[...]
    b = b_ref[...]
    acc = None
    for c in range(4):
        y = jnp.dot(w, p_ref[c], preferred_element_type=jnp.float32) + b
        y = jnp.maximum(y, alpha * y)                  # LeakyReLU(0.2)
        acc = y if acc is None else acc + y
    o_ref[...] = (0.25 * acc).astype(o_ref.dtype)


def _norm_pool_kernel(p_ref, m_ref, w_ref, g_ref, bt_ref, o_ref,
                      *, p_pad, n_valid, eps, alpha):
    """Middle blocks: conv -> InstanceNorm -> LeakyReLU -> 2x2 avg-pool, one lane-dense matmul.

    p_ref: (K, 4*p_pad [+ tail_pad]) corner-major concatenated patches (zero padded),
    m_ref: (1, total) validity mask, w_ref: (OC, K), g_ref/bt_ref: (OC, 1) f32,
    o_ref: (OC, p_pad)."""
    # Conv WITHOUT bias: the bias cancels exactly under InstanceNorm, and zero-padded
    # columns then contribute exactly 0 to the statistics.
    y = jnp.dot(w_ref[...], p_ref[...], preferred_element_type=jnp.float32)
    inv_n = 1.0 / n_valid
    mean = jnp.sum(y, axis=1, keepdims=True) * inv_n           # pads contribute 0
    d = (y - mean) * m_ref[...]                                # mask pads out of the variance
    var = jnp.sum(d * d, axis=1, keepdims=True) * inv_n
    scale = jax.lax.rsqrt(var + eps) * g_ref[...]
    shift = bt_ref[...] - mean * scale
    y = y * scale + shift
    y = jnp.maximum(y, alpha * y)                              # LeakyReLU(0.2)
    feat = 0.25 * (y[:, 0:p_pad] + y[:, p_pad:2 * p_pad]
                   + y[:, 2 * p_pad:3 * p_pad] + y[:, 3 * p_pad:4 * p_pad])
    o_ref[...] = feat.astype(o_ref.dtype)


def _fused_tail_kernel(p2_ref, m2_ref, w2_ref, g2_ref, bt2_ref,
                       s_ref, w3_ref, g3_ref, bt3_ref, wf_ref, bf_ref,
                       o2_ref, o3_ref, pr_ref,
                       *, p_pad2, n2_valid, n3, n_taps, eps, alpha):
    """Fused: block N-2 (conv/norm/lrelu/pool) + block N-1 (conv/norm/lrelu, in-kernel im2col
    via per-tap selection matmuls) + final 1x1x1 conv."""
    # ---- block N-2 ----
    y2 = jnp.dot(w2_ref[...], p2_ref[...], preferred_element_type=jnp.float32)
    inv_n2 = 1.0 / n2_valid
    mean2 = jnp.sum(y2, axis=1, keepdims=True) * inv_n2
    d2 = (y2 - mean2) * m2_ref[...]
    var2 = jnp.sum(d2 * d2, axis=1, keepdims=True) * inv_n2
    scale2 = jax.lax.rsqrt(var2 + eps) * g2_ref[...]
    shift2 = bt2_ref[...] - mean2 * scale2
    y2 = y2 * scale2 + shift2
    y2 = jnp.maximum(y2, alpha * y2)
    feat2 = 0.25 * (y2[:, 0:p_pad2] + y2[:, p_pad2:2 * p_pad2]
                    + y2[:, 2 * p_pad2:3 * p_pad2] + y2[:, 3 * p_pad2:4 * p_pad2])
    feat2_md = feat2.astype(o2_ref.dtype)
    o2_ref[...] = feat2_md                                     # (OC2, p_pad2), lane-dense store

    # ---- block N-1: 4x4 conv as 16 (select, tap-weight) matmul pairs, all in VMEM ----
    y3 = None
    for t in range(n_taps):
        g = jnp.dot(feat2_md, s_ref[t],
                    preferred_element_type=jnp.float32).astype(feat2_md.dtype)
        z = jnp.dot(w3_ref[t], g, preferred_element_type=jnp.float32)
        y3 = z if y3 is None else y3 + z                       # (OC3, P3)
    inv_n3 = 1.0 / n3
    mean3 = jnp.sum(y3, axis=1, keepdims=True) * inv_n3
    d3 = y3 - mean3
    var3 = jnp.sum(d3 * d3, axis=1, keepdims=True) * inv_n3
    scale3 = jax.lax.rsqrt(var3 + eps) * g3_ref[...]
    shift3 = bt3_ref[...] - mean3 * scale3
    y3 = y3 * scale3 + shift3
    feat3 = jnp.maximum(y3, alpha * y3)
    o3_ref[...] = feat3.astype(o3_ref.dtype)

    # ---- final 1x1x1 conv (with bias, no norm) ----
    pred = jnp.dot(wf_ref[...], feat3, preferred_element_type=jnp.float32) + bf_ref[...]
    pr_ref[...] = pred.astype(pr_ref.dtype)


# -----------------------------------------------------------------------------
# pallas_call wrappers (one fused call per block / fused tail)
# -----------------------------------------------------------------------------
def _block0(x, w, b, *, k=4, tile_p=1024, matmul_dtype=jnp.bfloat16,
            out_dtype=None, alpha=0.2):
    N, C, D, H, W = x.shape
    OC = w.shape[0]
    out_dtype = out_dtype or matmul_dtype
    corners, _, dims = _corner_patches(x.astype(matmul_dtype), k)
    K, P, PH, PW = dims["K"], dims["P"], dims["PH"], dims["PW"]
    patches = jnp.stack(corners, axis=1)                       # (N, 4, K, P)
    w2d = w.reshape(OC, K).astype(matmul_dtype)
    b2 = b.reshape(OC, 1).astype(jnp.float32)
    kernel = functools.partial(_block0_kernel, alpha=alpha)

    if P > tile_p:
        tp = tile_p
        grid = (N, pl.cdiv(P, tp))
        in_specs = [pl.BlockSpec((None, 4, K, tp), lambda n, t: (n, 0, 0, t)),
                    pl.BlockSpec((OC, K), lambda n, t: (0, 0)),
                    pl.BlockSpec((OC, 1), lambda n, t: (0, 0))]
        out_specs = pl.BlockSpec((None, OC, tp), lambda n, t: (n, 0, t))
        dim_sem = ("parallel", "parallel")
    else:
        grid = (N,)
        in_specs = [pl.BlockSpec((None, 4, K, P), lambda n: (n, 0, 0, 0)),
                    pl.BlockSpec((OC, K), lambda n: (0, 0)),
                    pl.BlockSpec((OC, 1), lambda n: (0, 0))]
        out_specs = pl.BlockSpec((None, OC, P), lambda n: (n, 0, 0))
        dim_sem = ("parallel",)

    out = pl.pallas_call(
        kernel, grid=grid, in_specs=in_specs, out_specs=out_specs,
        out_shape=jax.ShapeDtypeStruct((N, OC, P), out_dtype),
        compiler_params=pltpu.CompilerParams(dimension_semantics=dim_sem),
    )(patches, w2d, b2)
    return out.reshape(N, OC, D, PH, PW)


def _norm_pool_block(x, w, gamma, beta, *, k=4, matmul_dtype=jnp.bfloat16,
                     out_dtype=None, eps=1e-5, alpha=0.2):
    N, C, D, H, W = x.shape
    OC = w.shape[0]
    out_dtype = out_dtype or matmul_dtype
    corners, tail, dims = _corner_patches(x.astype(matmul_dtype), k)
    K, P, PH, PW = dims["K"], dims["P"], dims["PH"], dims["PW"]
    P_pad = _round_up(P, 128)
    slabs, widths = list(corners), [P] * 4
    if tail is not None:
        slabs.append(tail)
        widths.append(tail.shape[-1])
    cat, mask = _concat_lane_slabs(slabs, widths)
    C4P = cat.shape[-1]
    n_valid = D * dims["OH"] * dims["OW"]
    w2d = w.reshape(OC, K).astype(matmul_dtype)
    g = gamma.reshape(OC, 1).astype(jnp.float32)
    bt = beta.reshape(OC, 1).astype(jnp.float32)
    kernel = functools.partial(_norm_pool_kernel, p_pad=P_pad, n_valid=n_valid,
                               eps=eps, alpha=alpha)
    out = pl.pallas_call(
        kernel, grid=(N,),
        in_specs=[pl.BlockSpec((None, K, C4P), lambda n: (n, 0, 0)),
                  pl.BlockSpec((1, C4P), lambda n: (0, 0)),
                  pl.BlockSpec((OC, K), lambda n: (0, 0)),
                  pl.BlockSpec((OC, 1), lambda n: (0, 0)),
                  pl.BlockSpec((OC, 1), lambda n: (0, 0))],
        out_specs=pl.BlockSpec((None, OC, P_pad), lambda n: (n, 0, 0)),
        out_shape=jax.ShapeDtypeStruct((N, OC, P_pad), out_dtype),
        compiler_params=pltpu.CompilerParams(dimension_semantics=("parallel",)),
    )(cat, mask, w2d, g, bt)
    return out[:, :, :P].reshape(N, OC, D, PH, PW)


def _fused_tail(x, blk2, blk3, w_final, b_final, *, k=4, matmul_dtype=jnp.bfloat16,
                out_dtype=None, eps=1e-5, alpha=0.2):
    """Blocks N-2 (norm+pool), N-1 (norm, no pool) and the final 1x1x1 conv, one pallas_call."""
    N, C, D, H, W = x.shape
    OC2 = blk2["w"].shape[0]
    OC3 = blk3["w"].shape[0]
    out_dtype = out_dtype or matmul_dtype
    corners, tail, dims = _corner_patches(x.astype(matmul_dtype), k)
    K2, P2, PH2, PW2 = dims["K"], dims["P"], dims["PH"], dims["PW"]
    P_pad2 = _round_up(P2, 128)
    slabs, widths = list(corners), [P2] * 4
    if tail is not None:
        slabs.append(tail)
        widths.append(tail.shape[-1])
    cat, mask = _concat_lane_slabs(slabs, widths)
    C4P2 = cat.shape[-1]
    n2_valid = D * dims["OH"] * dims["OW"]

    OH3, OW3 = PH2 - k + 1, PW2 - k + 1
    assert OH3 >= 1 and OW3 >= 1, "input too small for the last 4x4 conv"
    P3 = D * OH3 * OW3
    s_sel = _build_selection(D, PH2, PW2, k, P_pad2, matmul_dtype)     # (16, P_pad2, P3)

    w2d = blk2["w"].reshape(OC2, K2).astype(matmul_dtype)
    g2 = blk2["gamma"].reshape(OC2, 1).astype(jnp.float32)
    bt2 = blk2["beta"].reshape(OC2, 1).astype(jnp.float32)
    w3t = jnp.transpose(blk3["w"].reshape(OC3, OC2, k * k), (2, 0, 1)).astype(matmul_dtype)
    g3 = blk3["gamma"].reshape(OC3, 1).astype(jnp.float32)
    bt3 = blk3["beta"].reshape(OC3, 1).astype(jnp.float32)
    wf = w_final.reshape(1, OC3).astype(jnp.float32)
    bf = b_final.reshape(1, 1).astype(jnp.float32)

    kernel = functools.partial(_fused_tail_kernel, p_pad2=P_pad2, n2_valid=n2_valid,
                               n3=P3, n_taps=k * k, eps=eps, alpha=alpha)
    o2, o3, pred = pl.pallas_call(
        kernel, grid=(N,),
        in_specs=[pl.BlockSpec((None, K2, C4P2), lambda n: (n, 0, 0)),
                  pl.BlockSpec((1, C4P2), lambda n: (0, 0)),
                  pl.BlockSpec((OC2, K2), lambda n: (0, 0)),
                  pl.BlockSpec((OC2, 1), lambda n: (0, 0)),
                  pl.BlockSpec((OC2, 1), lambda n: (0, 0)),
                  pl.BlockSpec((k * k, P_pad2, P3), lambda n: (0, 0, 0)),
                  pl.BlockSpec((k * k, OC3, OC2), lambda n: (0, 0, 0)),
                  pl.BlockSpec((OC3, 1), lambda n: (0, 0)),
                  pl.BlockSpec((OC3, 1), lambda n: (0, 0)),
                  pl.BlockSpec((1, OC3), lambda n: (0, 0)),
                  pl.BlockSpec((1, 1), lambda n: (0, 0))],
        out_specs=(pl.BlockSpec((None, OC2, P_pad2), lambda n: (n, 0, 0)),
                   pl.BlockSpec((None, OC3, P3), lambda n: (n, 0, 0)),
                   pl.BlockSpec((None, 1, P3), lambda n: (n, 0, 0))),
        out_shape=(jax.ShapeDtypeStruct((N, OC2, P_pad2), out_dtype),
                   jax.ShapeDtypeStruct((N, OC3, P3), out_dtype),
                   jax.ShapeDtypeStruct((N, 1, P3), jnp.float32)),
        compiler_params=pltpu.CompilerParams(dimension_semantics=("parallel",)),
    )(cat, mask, w2d, g2, bt2, s_sel, w3t, g3, bt3, wf, bf)

    feat2 = o2[:, :, :P2].reshape(N, OC2, D, PH2, PW2)
    feat3 = o3.reshape(N, OC3, D, OH3, OW3)
    pred = pred.reshape(N, 1, D, OH3, OW3)
    return feat2, feat3, pred


# -----------------------------------------------------------------------------
# Parameters + full forward
# -----------------------------------------------------------------------------
def init_params(key, num_channels=3, block_expansion=8, num_blocks=4,
                max_features=32, k=4):
    """Synthetic parameters matching the PyTorch module's tensor shapes."""
    blocks = []
    cout = num_channels
    for i in range(num_blocks):
        cin = num_channels if i == 0 else min(max_features, block_expansion * 2 ** i)
        cout = min(max_features, block_expansion * 2 ** (i + 1))
        key, k1, k2 = jax.random.split(key, 3)
        w = jax.random.normal(k1, (cout, cin, 1, k, k), jnp.float32) * 0.05   # Conv3d (1,k,k)
        b = jax.random.normal(k2, (cout,), jnp.float32) * 0.05
        gamma = jnp.ones((cout,), jnp.float32)    # InstanceNorm3d(affine=True) default init
        beta = jnp.zeros((cout,), jnp.float32)
        blocks.append(dict(w=w, b=b, gamma=gamma, beta=beta))
    key, k1, k2 = jax.random.split(key, 3)
    w_final = jax.random.normal(k1, (1, cout, 1, 1, 1), jnp.float32) * 0.05   # 1x1x1 conv
    b_final = jax.random.normal(k2, (1,), jnp.float32) * 0.05
    return dict(blocks=blocks, w_final=w_final, b_final=b_final)


def discriminator_forward(params, x, kp_driving=None, kp_source=None,
                          matmul_dtype=jnp.bfloat16):
    """Returns out_maps = [x, block_1, ..., block_N, prediction_map], all NCDHW.

    Feature maps are emitted in `matmul_dtype` (bf16 by default); the prediction map is f32.
    """
    # TODO(synk): kp_embedding (MovementEmbeddingModule) path not implemented;
    # kp_embedding_params=None default -> kp_driving/kp_source unused.
    # TODO(synk): scale_factor != 1 (F.interpolate) not implemented (default is 1).
    del kp_driving, kp_source
    blocks = params["blocks"]
    nblk = len(blocks)
    assert nblk >= 3, "the fused tail path expects at least 3 down blocks"

    out_maps = [x]
    out = _block0(x, blocks[0]["w"], blocks[0]["b"], matmul_dtype=matmul_dtype)
    out_maps.append(out)
    for i in range(1, nblk - 2):
        out = _norm_pool_block(out, blocks[i]["w"], blocks[i]["gamma"], blocks[i]["beta"],
                               matmul_dtype=matmul_dtype)
        out_maps.append(out)
    f2, f3, pred = _fused_tail(out, blocks[nblk - 2], blocks[nblk - 1],
                               params["w_final"], params["b_final"],
                               matmul_dtype=matmul_dtype)
    out_maps.extend([f2, f3, pred])
    return out_maps


if __name__ == "__main__":
    key = jax.random.PRNGKey(0)
    kx, kparams = jax.random.split(key)
    # Small config consistent with the module: batch=2, channels=3, 2 frames, 64x64
    # (4 valid k=4 convs + three 2x2 pools need spatial >= ~53).
    N, C, D, H, W = 2, 3, 2, 64, 64
    x = jax.random.normal(kx, (N, C, D, H, W), jnp.float32)
    params = init_params(kparams, num_channels=C, block_expansion=8,
                         num_blocks=4, max_features=32)

    fwd = jax.jit(discriminator_forward)
    out_maps = fwd(params, x)
    for o in out_maps:
        jax.block_until_ready(o)
    print("KERNEL_OK")
</pallas_src>

<mosaic_0001>
module attributes {stable_mosaic.version = 11 : i64} {
  func.func @_block0_kernel(%arg0: i32, %arg1: i32, %arg2: memref<1x4x48x1024xbf16, #tpu.memory_space<vmem>>, %arg3: memref<16x48xbf16, #tpu.memory_space<vmem>>, %arg4: memref<16x1xf32, #tpu.memory_space<vmem>>, %arg5: memref<1x16x1024xbf16, #tpu.memory_space<vmem>>) attributes {dimension_semantics = [#tpu.dimension_semantics<parallel>, #tpu.dimension_semantics<parallel>], iteration_bounds = array<i64: 2, 2>, scalar_prefetch = 0 : i64, scratch_operands = 0 : i64, tpu.core_type = #tpu.core_type<tc>, window_params = [{transform_indices = @transform_0, window_bounds = array<i64: 1, 4, 48, 1024>}, {pipeline_mode = #tpu.pipeline_mode<synchronous>, transform_indices = @transform_1, window_bounds = array<i64: 16, 48>}, {pipeline_mode = #tpu.pipeline_mode<synchronous>, transform_indices = @transform_2, window_bounds = array<i64: 16, 1>}, {transform_indices = @transform_3, window_bounds = array<i64: 1, 16, 1024>}]} {
    %c0 = arith.constant 0 : index
    %c0_0 = arith.constant 0 : index
    %0 = vector.load %arg3[%c0, %c0_0] : memref<16x48xbf16, #tpu.memory_space<vmem>>, vector<16x48xbf16>
    %c0_1 = arith.constant 0 : index
    %c0_2 = arith.constant 0 : index
    %1 = vector.load %arg4[%c0_1, %c0_2] : memref<16x1xf32, #tpu.memory_space<vmem>>, vector<16x1xf32>
    %c0_3 = arith.constant 0 : index
    %c0_4 = arith.constant 0 : index
    %c0_5 = arith.constant 0 : index
    %c0_6 = arith.constant 0 : index
    %2 = vector.load %arg2[%c0_3, %c0_4, %c0_5, %c0_6] : memref<1x4x48x1024xbf16, #tpu.memory_space<vmem>>, vector<1x1x48x1024xbf16>
    %3 = vector.shape_cast %2 : vector<1x1x48x1024xbf16> to vector<48x1024xbf16>
    %cst = arith.constant dense<0.000000e+00> : vector<16x1024xf32>
    %4 = tpu.matmul %0, %3, %cst {dimension_numbers = #tpu.dot_dimension_numbers<[1], [0], [0], [1], [0, 0, 1, 1], [], []>} : vector<16x48xbf16>, vector<48x1024xbf16>, vector<16x1024xf32> -> vector<16x1024xf32>
    %5 = vector.broadcast %1 : vector<16x1xf32> to vector<16x1024xf32>
    %6 = arith.addf %4, %5 : vector<16x1024xf32>
    %cst_7 = arith.constant 2.000000e-01 : f32
    %7 = vector.broadcast %cst_7 : f32 to vector<16x1024xf32>
    %8 = arith.mulf %7, %6 : vector<16x1024xf32>
    %9 = arith.maximumf %6, %8 : vector<16x1024xf32>
    %c0_8 = arith.constant 0 : index
    %c1 = arith.constant 1 : index
    %c0_9 = arith.constant 0 : index
    %c0_10 = arith.constant 0 : index
    %10 = vector.load %arg2[%c0_8, %c1, %c0_9, %c0_10] : memref<1x4x48x1024xbf16, #tpu.memory_space<vmem>>, vector<1x1x48x1024xbf16>
    %11 = vector.shape_cast %10 : vector<1x1x48x1024xbf16> to vector<48x1024xbf16>
    %cst_11 = arith.constant dense<0.000000e+00> : vector<16x1024xf32>
    %12 = tpu.matmul %0, %11, %cst_11 {dimension_numbers = #tpu.dot_dimension_numbers<[1], [0], [0], [1], [0, 0, 1, 1], [], []>} : vector<16x48xbf16>, vector<48x1024xbf16>, vector<16x1024xf32> -> vector<16x1024xf32>
    %13 = vector.broadcast %1 : vector<16x1xf32> to vector<16x1024xf32>
    %14 = arith.addf %12, %13 : vector<16x1024xf32>
    %cst_12 = arith.constant 2.000000e-01 : f32
    %15 = vector.broadcast %cst_12 : f32 to vector<16x1024xf32>
    %16 = arith.mulf %15, %14 : vector<16x1024xf32>
    %17 = arith.maximumf %14, %16 : vector<16x1024xf32>
    %18 = arith.addf %9, %17 : vector<16x1024xf32>
    %c0_13 = arith.constant 0 : index
    %c2 = arith.constant 2 : index
    %c0_14 = arith.constant 0 : index
    %c0_15 = arith.constant 0 : index
    %19 = vector.load %arg2[%c0_13, %c2, %c0_14, %c0_15] : memref<1x4x48x1024xbf16, #tpu.memory_space<vmem>>, vector<1x1x48x1024xbf16>
    %20 = vector.shape_cast %19 : vector<1x1x48x1024xbf16> to vector<48x1024xbf16>
    %cst_16 = arith.constant dense<0.000000e+00> : vector<16x1024xf32>
    %21 = tpu.matmul %0, %20, %cst_16 {dimension_numbers = #tpu.dot_dimension_numbers<[1], [0], [0], [1], [0, 0, 1, 1], [], []>} : vector<16x48xbf16>, vector<48x1024xbf16>, vector<16x1024xf32> -> vector<16x1024xf32>
    %22 = vector.broadcast %1 : vector<16x1xf32> to vector<16x1024xf32>
    %23 = arith.addf %21, %22 : vector<16x1024xf32>
    %cst_17 = arith.constant 2.000000e-01 : f32
    %24 = vector.broadcast %cst_17 : f32 to vector<16x1024xf32>
    %25 = arith.mulf %24, %23 : vector<16x1024xf32>
    %26 = arith.maximumf %23, %25 : vector<16x1024xf32>
    %27 = arith.addf %18, %26 : vector<16x1024xf32>
    %c0_18 = arith.constant 0 : index
    %c3 = arith.constant 3 : index
    %c0_19 = arith.constant 0 : index
    %c0_20 = arith.constant 0 : index
    %28 = vector.load %arg2[%c0_18, %c3, %c0_19, %c0_20] : memref<1x4x48x1024xbf16, #tpu.memory_space<vmem>>, vector<1x1x48x1024xbf16>
    %29 = vector.shape_cast %28 : vector<1x1x48x1024xbf16> to vector<48x1024xbf16>
    %cst_21 = arith.constant dense<0.000000e+00> : vector<16x1024xf32>
    %30 = tpu.matmul %0, %29, %cst_21 {dimension_numbers = #tpu.dot_dimension_numbers<[1], [0], [0], [1], [0, 0, 1, 1], [], []>} : vector<16x48xbf16>, vector<48x1024xbf16>, vector<16x1024xf32> -> vector<16x1024xf32>
    %31 = vector.broadcast %1 : vector<16x1xf32> to vector<16x1024xf32>
    %32 = arith.addf %30, %31 : vector<16x1024xf32>
    %cst_22 = arith.constant 2.000000e-01 : f32
    %33 = vector.broadcast %cst_22 : f32 to vector<16x1024xf32>
    %34 = arith.mulf %33, %32 : vector<16x1024xf32>
    %35 = arith.maximumf %32, %34 : vector<16x1024xf32>
    %36 = arith.addf %27, %35 : vector<16x1024xf32>
    %cst_23 = arith.constant 2.500000e-01 : f32
    %37 = vector.broadcast %cst_23 : f32 to vector<16x1024xf32>
    %38 = arith.mulf %37, %36 : vector<16x1024xf32>
    %39 = arith.truncf %38 : vector<16x1024xf32> to vector<16x1024xbf16>
    %c0_24 = arith.constant 0 : index
    %c0_25 = arith.constant 0 : index
    %c0_26 = arith.constant 0 : index
    %40 = vector.load %arg5[%c0_24, %c0_25, %c0_26] : memref<1x16x1024xbf16, #tpu.memory_space<vmem>>, vector<1x16x1024xbf16>
    %41 = vector.shape_cast %40 : vector<1x16x1024xbf16> to vector<16x1024xbf16>
    %42 = vector.shape_cast %39 : vector<16x1024xbf16> to vector<1x16x1024xbf16>
    tpu.vector_store %arg5[%c0_24, %c0_25, %c0_26], %42 {strides = array<i32>} : memref<1x16x1024xbf16, #tpu.memory_space<vmem>>, vector<1x16x1024xbf16>,
    return
  }
  func.func @transform_0(%arg0: i32, %arg1: i32) -> (i32, i32, i32, i32) {
    %c0_i32 = arith.constant 0 : i32
    %c0_i32_0 = arith.constant 0 : i32
    %c0_i32_1 = arith.constant 0 : i32
    return %arg0, %c0_i32, %c0_i32_0, %arg1 : i32, i32, i32, i32
  }
  func.func @transform_1(%arg0: i32, %arg1: i32) -> (i32, i32) {
    %c0_i32 = arith.constant 0 : i32
    %c0_i32_0 = arith.constant 0 : i32
    %c0_i32_1 = arith.constant 0 : i32
    return %c0_i32, %c0_i32_0 : i32, i32
  }
  func.func @transform_2(%arg0: i32, %arg1: i32) -> (i32, i32) {
    %c0_i32 = arith.constant 0 : i32
    %c0_i32_0 = arith.constant 0 : i32
    %c0_i32_1 = arith.constant 0 : i32
    return %c0_i32, %c0_i32_0 : i32, i32
  }
  func.func @transform_3(%arg0: i32, %arg1: i32) -> (i32, i32, i32) {
    %c0_i32 = arith.constant 0 : i32
    %c0_i32_0 = arith.constant 0 : i32
    return %arg0, %c0_i32, %arg1 : i32, i32, i32
  }
}

module attributes {stable_mosaic.version = 11 : i64} {
  func.func @_norm_pool_kernel(%arg0: i32, %arg1: memref<1x256x1664xbf16, #tpu.memory_space<vmem>>, %arg2: memref<1x1664xf32, #tpu.memory_space<vmem>>, %arg3: memref<32x256xbf16, #tpu.memory_space<vmem>>, %arg4: memref<32x1xf32, #tpu.memory_space<vmem>>, %arg5: memref<32x1xf32, #tpu.memory_space<vmem>>, %arg6: memref<1x32x384xbf16, #tpu.memory_space<vmem>>) attributes {dimension_semantics = [#tpu.dimension_semantics<parallel>], iteration_bounds = array<i64: 2>, scalar_prefetch = 0 : i64, scratch_operands = 0 : i64, tpu.core_type = #tpu.core_type<tc>, window_params = [{transform_indices = @transform_0, window_bounds = array<i64: 1, 256, 1664>}, {pipeline_mode = #tpu.pipeline_mode<synchronous>, transform_indices = @transform_1, window_bounds = array<i64: 1, 1664>}, {pipeline_mode = #tpu.pipeline_mode<synchronous>, transform_indices = @transform_2, window_bounds = array<i64: 32, 256>}, {pipeline_mode = #tpu.pipeline_mode<synchronous>, transform_indices = @transform_3, window_bounds = array<i64: 32, 1>}, {pipeline_mode = #tpu.pipeline_mode<synchronous>, transform_indices = @transform_4, window_bounds = array<i64: 32, 1>}, {transform_indices = @transform_5, window_bounds = array<i64: 1, 32, 384>}]} {
    %c0 = arith.constant 0 : index
    %c0_0 = arith.constant 0 : index
    %0 = vector.load %arg3[%c0, %c0_0] : memref<32x256xbf16, #tpu.memory_space<vmem>>, vector<32x256xbf16>
    %c0_1 = arith.constant 0 : index
    %c0_2 = arith.constant 0 : index
    %c0_3 = arith.constant 0 : index
    %1 = vector.load %arg1[%c0_1, %c0_2, %c0_3] : memref<1x256x1664xbf16, #tpu.memory_space<vmem>>, vector<1x256x1664xbf16>
    %2 = vector.shape_cast %1 : vector<1x256x1664xbf16> to vector<256x1664xbf16>
    %cst = arith.constant dense<0.000000e+00> : vector<32x1664xf32>
    %3 = tpu.matmul %0, %2, %cst {dimension_numbers = #tpu.dot_dimension_numbers<[1], [0], [0], [1], [0, 0, 1, 1], [], []>} : vector<32x256xbf16>, vector<256x1664xbf16>, vector<32x1664xf32> -> vector<32x1664xf32>
    %cst_4 = arith.constant dense<0.000000e+00> : vector<32xf32>
    %4 = vector.multi_reduction <add>, %3, %cst_4 [1] : vector<32x1664xf32> to vector<32xf32>
    %5 = vector.shape_cast %4 : vector<32xf32> to vector<32x1xf32>
    %cst_5 = arith.constant 6.85871055E-4 : f32
    %6 = vector.broadcast %cst_5 : f32 to vector<32x1xf32>
    %7 = arith.mulf %5, %6 : vector<32x1xf32>
    %8 = vector.broadcast %7 : vector<32x1xf32> to vector<32x1664xf32>
    %9 = arith.subf %3, %8 : vector<32x1664xf32>
    %c0_6 = arith.constant 0 : index
    %c0_7 = arith.constant 0 : index
    %10 = vector.load %arg2[%c0_6, %c0_7] : memref<1x1664xf32, #tpu.memory_space<vmem>>, vector<1x1664xf32>
    %11 = vector.broadcast %10 : vector<1x1664xf32> to vector<32x1664xf32>
    %12 = arith.mulf %9, %11 : vector<32x1664xf32>
    %13 = arith.mulf %12, %12 : vector<32x1664xf32>
    %cst_8 = arith.constant dense<0.000000e+00> : vector<32xf32>
    %14 = vector.multi_reduction <add>, %13, %cst_8 [1] : vector<32x1664xf32> to vector<32xf32>
    %15 = vector.shape_cast %14 : vector<32xf32> to vector<32x1xf32>
    %cst_9 = arith.constant 6.85871055E-4 : f32
    %16 = vector.broadcast %cst_9 : f32 to vector<32x1xf32>
    %17 = arith.mulf %15, %16 : vector<32x1xf32>
    %cst_10 = arith.constant 9.99999974E-6 : f32
    %18 = vector.broadcast %cst_10 : f32 to vector<32x1xf32>
    %19 = arith.addf %17, %18 : vector<32x1xf32>
    %20 = math.rsqrt %19 : vector<32x1xf32>
    %c0_11 = arith.constant 0 : index
    %c0_12 = arith.constant 0 : index
    %21 = vector.load %arg4[%c0_11, %c0_12] : memref<32x1xf32, #tpu.memory_space<vmem>>, vector<32x1xf32>
    %22 = arith.mulf %20, %21 : vector<32x1xf32>
    %c0_13 = arith.constant 0 : index
    %c0_14 = arith.constant 0 : index
    %23 = vector.load %arg5[%c0_13, %c0_14] : memref<32x1xf32, #tpu.memory_space<vmem>>, vector<32x1xf32>
    %24 = arith.mulf %7, %22 : vector<32x1xf32>
    %25 = arith.subf %23, %24 : vector<32x1xf32>
    %26 = vector.broadcast %22 : vector<32x1xf32> to vector<32x1664xf32>
    %27 = arith.mulf %3, %26 : vector<32x1664xf32>
    %28 = vector.broadcast %25 : vector<32x1xf32> to vector<32x1664xf32>
    %29 = arith.addf %27, %28 : vector<32x1664xf32>
    %cst_15 = arith.constant 2.000000e-01 : f32
    %30 = vector.broadcast %cst_15 : f32 to vector<32x1664xf32>
    %31 = arith.mulf %30, %29 : vector<32x1664xf32>
    %32 = arith.maximumf %29, %31 : vector<32x1664xf32>
    %33 = vector.extract_strided_slice %32 {offsets = [0, 0], sizes = [32, 384], strides = [1, 1]} : vector<32x1664xf32> to vector<32x384xf32>
    %34 = vector.extract_strided_slice %32 {offsets = [0, 384], sizes = [32, 384], strides = [1, 1]} : vector<32x1664xf32> to vector<32x384xf32>
    %35 = arith.addf %33, %34 : vector<32x384xf32>
    %36 = vector.extract_strided_slice %32 {offsets = [0, 768], sizes = [32, 384], strides = [1, 1]} : vector<32x1664xf32> to vector<32x384xf32>
    %37 = arith.addf %35, %36 : vector<32x384xf32>
    %38 = vector.extract_strided_slice %32 {offsets = [0, 1152], sizes = [32, 384], strides = [1, 1]} : vector<32x1664xf32> to vector<32x384xf32>
    %39 = arith.addf %37, %38 : vector<32x384xf32>
    %cst_16 = arith.constant 2.500000e-01 : f32
    %40 = vector.broadcast %cst_16 : f32 to vector<32x384xf32>
    %41 = arith.mulf %40, %39 : vector<32x384xf32>
    %42 = arith.truncf %41 : vector<32x384xf32> to vector<32x384xbf16>
    %c0_17 = arith.constant 0 : index
    %c0_18 = arith.constant 0 : index
    %c0_19 = arith.constant 0 : index
    %43 = vector.load %arg6[%c0_17, %c0_18, %c0_19] : memref<1x32x384xbf16, #tpu.memory_space<vmem>>, vector<1x32x384xbf16>
    %44 = vector.shape_cast %43 : vector<1x32x384xbf16> to vector<32x384xbf16>
    %45 = vector.shape_cast %42 : vector<32x384xbf16> to vector<1x32x384xbf16>
    tpu.vector_store %arg6[%c0_17, %c0_18, %c0_19], %45 {strides = array<i32>} : memref<1x32x384xbf16, #tpu.memory_space<vmem>>, vector<1x32x384xbf16>,
    return
  }
  func.func @transform_0(%arg0: i32) -> (i32, i32, i32) {
    %c0_i32 = arith.constant 0 : i32
    %c0_i32_0 = arith.constant 0 : i32
    %c0_i32_1 = arith.constant 0 : i32
    return %arg0, %c0_i32, %c0_i32_0 : i32, i32, i32
  }
  func.func @transform_1(%arg0: i32) -> (i32, i32) {
    %c0_i32 = arith.constant 0 : i32
    %c0_i32_0 = arith.constant 0 : i32
    %c0_i32_1 = arith.constant 0 : i32
    return %c0_i32, %c0_i32_0 : i32, i32
  }
  func.func @transform_2(%arg0: i32) -> (i32, i32) {
    %c0_i32 = arith.constant 0 : i32
    %c0_i32_0 = arith.constant 0 : i32
    %c0_i32_1 = arith.constant 0 : i32
    return %c0_i32, %c0_i32_0 : i32, i32
  }
  func.func @transform_3(%arg0: i32) -> (i32, i32) {
    %c0_i32 = arith.constant 0 : i32
    %c0_i32_0 = arith.constant 0 : i32
    %c0_i32_1 = arith.constant 0 : i32
    return %c0_i32, %c0_i32_0 : i32, i32
  }
  func.func @transform_4(%arg0: i32) -> (i32, i32) {
    %c0_i32 = arith.constant 0 : i32
    %c0_i32_0 = arith.constant 0 : i32
    %c0_i32_1 = arith.constant 0 : i32
    return %c0_i32, %c0_i32_0 : i32, i32
  }
  func.func @transform_5(%arg0: i32) -> (i32, i32, i32) {
    %c0_i32 = arith.constant 0 : i32
    %c0_i32_0 = arith.constant 0 : i32
    %c0_i32_1 = arith.constant 0 : i32
    return %arg0, %c0_i32, %c0_i32_0 : i32, i32, i32
  }
}

module attributes {stable_mosaic.version = 11 : i64} {
  func.func @_fused_tail_kernel(%arg0: i32, %arg1: memref<1x512x512xbf16, #tpu.memory_space<vmem>>, %arg2: memref<1x512xf32, #tpu.memory_space<vmem>>, %arg3: memref<32x512xbf16, #tpu.memory_space<vmem>>, %arg4: memref<32x1xf32, #tpu.memory_space<vmem>>, %arg5: memref<32x1xf32, #tpu.memory_space<vmem>>, %arg6: memref<16x128x8xbf16, #tpu.memory_space<vmem>>, %arg7: memref<16x32x32xbf16, #tpu.memory_space<vmem>>, %arg8: memref<32x1xf32, #tpu.memory_space<vmem>>, %arg9: memref<32x1xf32, #tpu.memory_space<vmem>>, %arg10: memref<1x32xf32, #tpu.memory_space<vmem>>, %arg11: memref<1x1xf32, #tpu.memory_space<vmem>>, %arg12: memref<1x32x128xbf16, #tpu.memory_space<vmem>>, %arg13: memref<1x32x8xbf16, #tpu.memory_space<vmem>>, %arg14: memref<1x1x8xf32, #tpu.memory_space<vmem>>) attributes {dimension_semantics = [#tpu.dimension_semantics<parallel>], iteration_bounds = array<i64: 2>, scalar_prefetch = 0 : i64, scratch_operands = 0 : i64, tpu.core_type = #tpu.core_type<tc>, window_params = [{transform_indices = @transform_0, window_bounds = array<i64: 1, 512, 512>}, {pipeline_mode = #tpu.pipeline_mode<synchronous>, transform_indices = @transform_1, window_bounds = array<i64: 1, 512>}, {pipeline_mode = #tpu.pipeline_mode<synchronous>, transform_indices = @transform_2, window_bounds = array<i64: 32, 512>}, {pipeline_mode = #tpu.pipeline_mode<synchronous>, transform_indices = @transform_3, window_bounds = array<i64: 32, 1>}, {pipeline_mode = #tpu.pipeline_mode<synchronous>, transform_indices = @transform_4, window_bounds = array<i64: 32, 1>}, {pipeline_mode = #tpu.pipeline_mode<synchronous>, transform_indices = @transform_5, window_bounds = array<i64: 16, 128, 8>}, {pipeline_mode = #tpu.pipeline_mode<synchronous>, transform_indices = @transform_6, window_bounds = array<i64: 16, 32, 32>}, {pipeline_mode = #tpu.pipeline_mode<synchronous>, transform_indices = @transform_7, window_bounds = array<i64: 32, 1>}, {pipeline_mode = #tpu.pipeline_mode<synchronous>, transform_indices = @transform_8, window_bounds = array<i64: 32, 1>}, {pipeline_mode = #tpu.pipeline_mode<synchronous>, transform_indices = @transform_9, window_bounds = array<i64: 1, 32>}, {pipeline_mode = #tpu.pipeline_mode<synchronous>, transform_indices = @transform_10, window_bounds = array<i64: 1, 1>}, {transform_indices = @transform_11, window_bounds = array<i64: 1, 32, 128>}, {transform_indices = @transform_12, window_bounds = array<i64: 1, 32, 8>}, {transform_indices = @transform_13, window_bounds = array<i64: 1, 1, 8>}]} {
    %c0 = arith.constant 0 : index
    %c0_0 = arith.constant 0 : index
    %0 = vector.load %arg3[%c0, %c0_0] : memref<32x512xbf16, #tpu.memory_space<vmem>>, vector<32x512xbf16>
    %c0_1 = arith.constant 0 : index
    %c0_2 = arith.constant 0 : index
    %c0_3 = arith.constant 0 : index
    %1 = vector.load %arg1[%c0_1, %c0_2, %c0_3] : memref<1x512x512xbf16, #tpu.memory_space<vmem>>, vector<1x512x512xbf16>
    %2 = vector.shape_cast %1 : vector<1x512x512xbf16> to vector<512x512xbf16>
    %cst = arith.constant dense<0.000000e+00> : vector<32x512xf32>
    %3 = tpu.matmul %0, %2, %cst {dimension_numbers = #tpu.dot_dimension_numbers<[1], [0], [0], [1], [0, 0, 1, 1], [], []>} : vector<32x512xbf16>, vector<512x512xbf16>, vector<32x512xf32> -> vector<32x512xf32>
    %cst_4 = arith.constant dense<0.000000e+00> : vector<32xf32>
    %4 = vector.multi_reduction <add>, %3, %cst_4 [1] : vector<32x512xf32> to vector<32xf32>
    %5 = vector.shape_cast %4 : vector<32xf32> to vector<32x1xf32>
    %cst_5 = arith.constant 5.000000e-03 : f32
    %6 = vector.broadcast %cst_5 : f32 to vector<32x1xf32>
    %7 = arith.mulf %5, %6 : vector<32x1xf32>
    %8 = vector.broadcast %7 : vector<32x1xf32> to vector<32x512xf32>
    %9 = arith.subf %3, %8 : vector<32x512xf32>
    %c0_6 = arith.constant 0 : index
    %c0_7 = arith.constant 0 : index
    %10 = vector.load %arg2[%c0_6, %c0_7] : memref<1x512xf32, #tpu.memory_space<vmem>>, vector<1x512xf32>
    %11 = vector.broadcast %10 : vector<1x512xf32> to vector<32x512xf32>
    %12 = arith.mulf %9, %11 : vector<32x512xf32>
    %13 = arith.mulf %12, %12 : vector<32x512xf32>
    %cst_8 = arith.constant dense<0.000000e+00> : vector<32xf32>
    %14 = vector.multi_reduction <add>, %13, %cst_8 [1] : vector<32x512xf32> to vector<32xf32>
    %15 = vector.shape_cast %14 : vector<32xf32> to vector<32x1xf32>
    %cst_9 = arith.constant 5.000000e-03 : f32
    %16 = vector.broadcast %cst_9 : f32 to vector<32x1xf32>
    %17 = arith.mulf %15, %16 : vector<32x1xf32>
    %cst_10 = arith.constant 9.99999974E-6 : f32
    %18 = vector.broadcast %cst_10 : f32 to vector<32x1xf32>
    %19 = arith.addf %17, %18 : vector<32x1xf32>
    %20 = math.rsqrt %19 : vector<32x1xf32>
    %c0_11 = arith.constant 0 : index
    %c0_12 = arith.constant 0 : index
    %21 = vector.load %arg4[%c0_11, %c0_12] : memref<32x1xf32, #tpu.memory_space<vmem>>, vector<32x1xf32>
    %22 = arith.mulf %20, %21 : vector<32x1xf32>
    %c0_13 = arith.constant 0 : index
    %c0_14 = arith.constant 0 : index
    %23 = vector.load %arg5[%c0_13, %c0_14] : memref<32x1xf32, #tpu.memory_space<vmem>>, vector<32x1xf32>
    %24 = arith.mulf %7, %22 : vector<32x1xf32>
    %25 = arith.subf %23, %24 : vector<32x1xf32>
    %26 = vector.broadcast %22 : vector<32x1xf32> to vector<32x512xf32>
    %27 = arith.mulf %3, %26 : vector<32x512xf32>
    %28 = vector.broadcast %25 : vector<32x1xf32> to vector<32x512xf32>
    %29 = arith.addf %27, %28 : vector<32x512xf32>
    %cst_15 = arith.constant 2.000000e-01 : f32
    %30 = vector.broadcast %cst_15 : f32 to vector<32x512xf32>
    %31 = arith.mulf %30, %29 : vector<32x512xf32>
    %32 = arith.maximumf %29, %31 : vector<32x512xf32>
    %33 = vector.extract_strided_slice %32 {offsets = [0, 0], sizes = [32, 128], strides = [1, 1]} : vector<32x512xf32> to vector<32x128xf32>
    %34 = vector.extract_strided_slice %32 {offsets = [0, 128], sizes = [32, 128], strides = [1, 1]} : vector<32x512xf32> to vector<32x128xf32>
    %35 = arith.addf %33, %34 : vector<32x128xf32>
    %36 = vector.extract_strided_slice %32 {offsets = [0, 256], sizes = [32, 128], strides = [1, 1]} : vector<32x512xf32> to vector<32x128xf32>
    %37 = arith.addf %35, %36 : vector<32x128xf32>
    %38 = vector.extract_strided_slice %32 {offsets = [0, 384], sizes = [32, 128], strides = [1, 1]} : vector<32x512xf32> to vector<32x128xf32>
    %39 = arith.addf %37, %38 : vector<32x128xf32>
    %cst_16 = arith.constant 2.500000e-01 : f32
    %40 = vector.broadcast %cst_16 : f32 to vector<32x128xf32>
    %41 = arith.mulf %40, %39 : vector<32x128xf32>
    %42 = arith.truncf %41 : vector<32x128xf32> to vector<32x128xbf16>
    %c0_17 = arith.constant 0 : index
    %c0_18 = arith.constant 0 : index
    %c0_19 = arith.constant 0 : index
    %43 = vector.load %arg12[%c0_17, %c0_18, %c0_19] : memref<1x32x128xbf16, #tpu.memory_space<vmem>>, vector<1x32x128xbf16>
    %44 = vector.shape_cast %43 : vector<1x32x128xbf16> to vector<32x128xbf16>
    %45 = vector.shape_cast %42 : vector<32x128xbf16> to vector<1x32x128xbf16>
    tpu.vector_store %arg12[%c0_17, %c0_18, %c0_19], %45 {strides = array<i32>} : memref<1x32x128xbf16, #tpu.memory_space<vmem>>, vector<1x32x128xbf16>,
    %c0_20 = arith.constant 0 : index
    %c0_21 = arith.constant 0 : index
    %c0_22 = arith.constant 0 : index
    %46 = vector.load %arg6[%c0_20, %c0_21, %c0_22] : memref<16x128x8xbf16, #tpu.memory_space<vmem>>, vector<1x128x8xbf16>
    %47 = vector.shape_cast %46 : vector<1x128x8xbf16> to vector<128x8xbf16>
    %cst_23 = arith.constant dense<0.000000e+00> : vector<32x8xf32>
    %48 = tpu.matmul %42, %47, %cst_23 {dimension_numbers = #tpu.dot_dimension_numbers<[1], [0], [0], [1], [0, 0, 1, 1], [], []>} : vector<32x128xbf16>, vector<128x8xbf16>, vector<32x8xf32> -> vector<32x8xf32>
    %49 = arith.truncf %48 : vector<32x8xf32> to vector<32x8xbf16>
    %c0_24 = arith.constant 0 : index
    %c0_25 = arith.constant 0 : index
    %c0_26 = arith.constant 0 : index
    %50 = vector.load %arg7[%c0_24, %c0_25, %c0_26] : memref<16x32x32xbf16, #tpu.memory_space<vmem>>, vector<1x32x32xbf16>
    %51 = vector.shape_cast %50 : vector<1x32x32xbf16> to vector<32x32xbf16>
    %cst_27 = arith.constant dense<0.000000e+00> : vector<32x8xf32>
    %52 = tpu.matmul %51, %49, %cst_27 {dimension_numbers = #tpu.dot_dimension_numbers<[1], [0], [0], [1], [0, 0, 1, 1], [], []>} : vector<32x32xbf16>, vector<32x8xbf16>, vector<32x8xf32> -> vector<32x8xf32>
    %c1 = arith.constant 1 : index
    %c0_28 = arith.constant 0 : index
    %c0_29 = arith.constant 0 : index
    %53 = vector.load %arg6[%c1, %c0_28, %c0_29] : memref<16x128x8xbf16, #tpu.memory_space<vmem>>, vector<1x128x8xbf16>
    %54 = vector.shape_cast %53 : vector<1x128x8xbf16> to vector<128x8xbf16>
    %cst_30 = arith.constant dense<0.000000e+00> : vector<32x8xf32>
    %55 = tpu.matmul %42, %54, %cst_30 {dimension_numbers = #tpu.dot_dimension_numbers<[1], [0], [0], [1], [0, 0, 1, 1], [], []>} : vector<32x128xbf16>, vector<128x8xbf16>, vector<32x8xf32> -> vector<32x8xf32>
    %56 = arith.truncf %55 : vector<32x8xf32> to vector<32x8xbf16>
    %c1_31 = arith.constant 1 : index
    %c0_32 = arith.constant 0 : index
    %c0_33 = arith.constant 0 : index
    %57 = vector.load %arg7[%c1_31, %c0_32, %c0_33] : memref<16x32x32xbf16, #tpu.memory_space<vmem>>, vector<1x32x32xbf16>
    %58 = vector.shape_cast %57 : vector<1x32x32xbf16> to vector<32x32xbf16>
    %cst_34 = arith.constant dense<0.000000e+00> : vector<32x8xf32>
    %59 = tpu.matmul %58, %56, %cst_34 {dimension_numbers = #tpu.dot_dimension_numbers<[1], [0], [0], [1], [0, 0, 1, 1], [], []>} : vector<32x32xbf16>, vector<32x8xbf16>, vector<32x8xf32> -> vector<32x8xf32>
    %60 = arith.addf %52, %59 : vector<32x8xf32>
    %c2 = arith.constant 2 : index
    %c0_35 = arith.constant 0 : index
    %c0_36 = arith.constant 0 : index
    %61 = vector.load %arg6[%c2, %c0_35, %c0_36] : memref<16x128x8xbf16, #tpu.memory_space<vmem>>, vector<1x128x8xbf16>
    %62 = vector.shape_cast %61 : vector<1x128x8xbf16> to vector<128x8xbf16>
    %cst_37 = arith.constant dense<0.000000e+00> : vector<32x8xf32>
    %63 = tpu.matmul %42, %62, %cst_37 {dimension_numbers = #tpu.dot_dimension_numbers<[1], [0], [0], [1], [0, 0, 1, 1], [], []>} : vector<32x128xbf16>, vector<128x8xbf16>, vector<32x8xf32> -> vector<32x8xf32>
    %64 = arith.truncf %63 : vector<32x8xf32> to vector<32x8xbf16>
    %c2_38 = arith.constant 2 : index
    %c0_39 = arith.constant 0 : index
    %c0_40 = arith.constant 0 : index
    %65 = vector.load %arg7[%c2_38, %c0_39, %c0_40] : memref<16x32x32xbf16, #tpu.memory_space<vmem>>, vector<1x32x32xbf16>
    %66 = vector.shape_cast %65 : vector<1x32x32xbf16> to vector<32x32xbf16>
    %cst_41 = arith.constant dense<0.000000e+00> : vector<32x8xf32>
    %67 = tpu.matmul %66, %64, %cst_41 {dimension_numbers = #tpu.dot_dimension_numbers<[1], [0], [0], [1], [0, 0, 1, 1], [], []>} : vector<32x32xbf16>, vector<32x8xbf16>, vector<32x8xf32> -> vector<32x8xf32>
    %68 = arith.addf %60, %67 : vector<32x8xf32>
    %c3 = arith.constant 3 : index
    %c0_42 = arith.constant 0 : index
    %c0_43 = arith.constant 0 : index
    %69 = vector.load %arg6[%c3, %c0_42, %c0_43] : memref<16x128x8xbf16, #tpu.memory_space<vmem>>, vector<1x128x8xbf16>
    %70 = vector.shape_cast %69 : vector<1x128x8xbf16> to vector<128x8xbf16>
    %cst_44 = arith.constant dense<0.000000e+00> : vector<32x8xf32>
    %71 = tpu.matmul %42, %70, %cst_44 {dimension_numbers = #tpu.dot_dimension_numbers<[1], [0], [0], [1], [0, 0, 1, 1], [], []>} : vector<32x128xbf16>, vector<128x8xbf16>, vector<32x8xf32> -> vector<32x8xf32>
    %72 = arith.truncf %71 : vector<32x8xf32> to vector<32x8xbf16>
    %c3_45 = arith.constant 3 : index
    %c0_46 = arith.constant 0 : index
    %c0_47 = arith.constant 0 : index
    %73 = vector.load %arg7[%c3_45, %c0_46, %c0_47] : memref<16x32x32xbf16, #tpu.memory_space<vmem>>, vector<1x32x32xbf16>
    %74 = vector.shape_cast %73 : vector<1x32x32xbf16> to vector<32x32xbf16>
    %cst_48 = arith.constant dense<0.000000e+00> : vector<32x8xf32>
    %75 = tpu.matmul %74, %72, %cst_48 {dimension_numbers = #tpu.dot_dimension_numbers<[1], [0], [0], [1], [0, 0, 1, 1], [], []>} : vector<32x32xbf16>, vector<32x8xbf16>, vector<32x8xf32> -> vector<32x8xf32>
    %76 = arith.addf %68, %75 : vector<32x8xf32>
    %c4 = arith.constant 4 : index
    %c0_49 = arith.constant 0 : index
    %c0_50 = arith.constant 0 : index
    %77 = vector.load %arg6[%c4, %c0_49, %c0_50] : memref<16x128x8xbf16, #tpu.memory_space<vmem>>, vector<1x128x8xbf16>
    %78 = vector.shape_cast %77 : vector<1x128x8xbf16> to vector<128x8xbf16>
    %cst_51 = arith.constant dense<0.000000e+00> : vector<32x8xf32>
    %79 = tpu.matmul %42, %78, %cst_51 {dimension_numbers = #tpu.dot_dimension_numbers<[1], [0], [0], [1], [0, 0, 1, 1], [], []>} : vector<32x128xbf16>, vector<128x8xbf16>, vector<32x8xf32> -> vector<32x8xf32>
    %80 = arith.truncf %79 : vector<32x8xf32> to vector<32x8xbf16>
    %c4_52 = arith.constant 4 : index
    %c0_53 = arith.constant 0 : index
    %c0_54 = arith.constant 0 : index
    %81 = vector.load %arg7[%c4_52, %c0_53, %c0_54] : memref<16x32x32xbf16, #tpu.memory_space<vmem>>, vector<1x32x32xbf16>
    %82 = vector.shape_cast %81 : vector<1x32x32xbf16> to vector<32x32xbf16>
    %cst_55 = arith.constant dense<0.000000e+00> : vector<32x8xf32>
    %83 = tpu.matmul %82, %80, %cst_55 {dimension_numbers = #tpu.dot_dimension_numbers<[1], [0], [0], [1], [0, 0, 1, 1], [], []>} : vector<32x32xbf16>, vector<32x8xbf16>, vector<32x8xf32> -> vector<32x8xf32>
    %84 = arith.addf %76, %83 : vector<32x8xf32>
    %c5 = arith.constant 5 : index
    %c0_56 = arith.constant 0 : index
    %c0_57 = arith.constant 0 : index
    %85 = vector.load %arg6[%c5, %c0_56, %c0_57] : memref<16x128x8xbf16, #tpu.memory_space<vmem>>, vector<1x128x8xbf16>
    %86 = vector.shape_cast %85 : vector<1x128x8xbf16> to vector<128x8xbf16>
    %cst_58 = arith.constant dense<0.000000e+00> : vector<32x8xf32>
    %87 = tpu.matmul %42, %86, %cst_58 {dimension_numbers = #tpu.dot_dimension_numbers<[1], [0], [0], [1], [0, 0, 1, 1], [], []>} : vector<32x128xbf16>, vector<128x8xbf16>, vector<32x8xf32> -> vector<32x8xf32>
    %88 = arith.truncf %87 : vector<32x8xf32> to vector<32x8xbf16>
    %c5_59 = arith.constant 5 : index
    %c0_60 = arith.constant 0 : index
    %c0_61 = arith.constant 0 : index
    %89 = vector.load %arg7[%c5_59, %c0_60, %c0_61] : memref<16x32x32xbf16, #tpu.memory_space<vmem>>, vector<1x32x32xbf16>
    %90 = vector.shape_cast %89 : vector<1x32x32xbf16> to vector<32x32xbf16>
    %cst_62 = arith.constant dense<0.000000e+00> : vector<32x8xf32>
    %91 = tpu.matmul %90, %88, %cst_62 {dimension_numbers = #tpu.dot_dimension_numbers<[1], [0], [0], [1], [0, 0, 1, 1], [], []>} : vector<32x32xbf16>, vector<32x8xbf16>, vector<32x8xf32> -> vector<32x8xf32>
    %92 = arith.addf %84, %91 : vector<32x8xf32>
    %c6 = arith.constant 6 : index
    %c0_63 = arith.constant 0 : index
    %c0_64 = arith.constant 0 : index
    %93 = vector.load %arg6[%c6, %c0_63, %c0_64] : memref<16x128x8xbf16, #tpu.memory_space<vmem>>, vector<1x128x8xbf16>
    %94 = vector.shape_cast %93 : vector<1x128x8xbf16> to vector<128x8xbf16>
    %cst_65 = arith.constant dense<0.000000e+00> : vector<32x8xf32>
    %95 = tpu.matmul %42, %94, %cst_65 {dimension_numbers = #tpu.dot_dimension_numbers<[1], [0], [0], [1], [0, 0, 1, 1], [], []>} : vector<32x128xbf16>, vector<128x8xbf16>, vector<32x8xf32> -> vector<32x8xf32>
    %96 = arith.truncf %95 : vector<32x8xf32> to vector<32x8xbf16>
    %c6_66 = arith.constant 6 : index
    %c0_67 = arith.constant 0 : index
    %c0_68 = arith.constant 0 : index
    %97 = vector.load %arg7[%c6_66, %c0_67, %c0_68] : memref<16x32x32xbf16, #tpu.memory_space<vmem>>, vector<1x32x32xbf16>
    %98 = vector.shape_cast %97 : vector<1x32x32xbf16> to vector<32x32xbf16>
    %cst_69 = arith.constant dense<0.000000e+00> : vector<32x8xf32>
    %99 = tpu.matmul %98, %96, %cst_69 {dimension_numbers = #tpu.dot_dimension_numbers<[1], [0], [0], [1], [0, 0, 1, 1], [], []>} : vector<32x32xbf16>, vector<32x8xbf16>, vector<32x8xf32> -> vector<32x8xf32>
    %100 = arith.addf %92, %99 : vector<32x8xf32>
    %c7 = arith.constant 7 : index
    %c0_70 = arith.constant 0 : index
    %c0_71 = arith.constant 0 : index
    %101 = vector.load %arg6[%c7, %c0_70, %c0_71] : memref<16x128x8xbf16, #tpu.memory_space<vmem>>, vector<1x128x8xbf16>
    %102 = vector.shape_cast %101 : vector<1x128x8xbf16> to vector<128x8xbf16>
    %cst_72 = arith.constant dense<0.000000e+00> : vector<32x8xf32>
    %103 = tpu.matmul %42, %102, %cst_72 {dimension_numbers = #tpu.dot_dimension_numbers<[1], [0], [0], [1], [0, 0, 1, 1], [], []>} : vector<32x128xbf16>, vector<128x8xbf16>, vector<32x8xf32> -> vector<32x8xf32>
    %104 = arith.truncf %103 : vector<32x8xf32> to vector<32x8xbf16>
    %c7_73 = arith.constant 7 : index
    %c0_74 = arith.constant 0 : index
    %c0_75 = arith.constant 0 : index
    %105 = vector.load %arg7[%c7_73, %c0_74, %c0_75] : memref<16x32x32xbf16, #tpu.memory_space<vmem>>, vector<1x32x32xbf16>
    %106 = vector.shape_cast %105 : vector<1x32x32xbf16> to vector<32x32xbf16>
    %cst_76 = arith.constant dense<0.000000e+00> : vector<32x8xf32>
    %107 = tpu.matmul %106, %104, %cst_76 {dimension_numbers = #tpu.dot_dimension_numbers<[1], [0], [0], [1], [0, 0, 1, 1], [], []>} : vector<32x32xbf16>, vector<32x8xbf16>, vector<32x8xf32> -> vector<32x8xf32>
    %108 = arith.addf %100, %107 : vector<32x8xf32>
    %c8 = arith.constant 8 : index
    %c0_77 = arith.constant 0 : index
    %c0_78 = arith.constant 0 : index
    %109 = vector.load %arg6[%c8, %c0_77, %c0_78] : memref<16x128x8xbf16, #tpu.memory_space<vmem>>, vector<1x128x8xbf16>
    %110 = vector.shape_cast %109 : vector<1x128x8xbf16> to vector<128x8xbf16>
    %cst_79 = arith.constant dense<0.000000e+00> : vector<32x8xf32>
    %111 = tpu.matmul %42, %110, %cst_79 {dimension_numbers = #tpu.dot_dimension_numbers<[1], [0], [0], [1], [0, 0, 1, 1], [], []>} : vector<32x128xbf16>, vector<128x8xbf16>, vector<32x8xf32> -> vector<32x8xf32>
    %112 = arith.truncf %111 : vector<32x8xf32> to vector<32x8xbf16>
    %c8_80 = arith.constant 8 : index
    %c0_81 = arith.constant 0 : index
    %c0_82 = arith.constant 0 : index
    %113 = vector.load %arg7[%c8_80, %c0_81, %c0_82] : memref<16x32x32xbf16, #tpu.memory_space<vmem>>, vector<1x32x32xbf16>
    %114 = vector.shape_cast %113 : vector<1x32x32xbf16> to vector<32x32xbf16>
    %cst_83 = arith.constant dense<0.000000e+00> : vector<32x8xf32>
    %115 = tpu.matmul %114, %112, %cst_83 {dimension_numbers = #tpu.dot_dimension_numbers<[1], [0], [0], [1], [0, 0, 1, 1], [], []>} : vector<32x32xbf16>, vector<32x8xbf16>, vector<32x8xf32> -> vector<32x8xf32>
    %116 = arith.addf %108, %115 : vector<32x8xf32>
    %c9 = arith.constant 9 : index
    %c0_84 = arith.constant 0 : index
    %c0_85 = arith.constant 0 : index
    %117 = vector.load %arg6[%c9, %c0_84, %c0_85] : memref<16x128x8xbf16, #tpu.memory_space<vmem>>, vector<1x128x8xbf16>
    %118 = vector.shape_cast %117 : vector<1x128x8xbf16> to vector<128x8xbf16>
    %cst_86 = arith.constant dense<0.000000e+00> : vector<32x8xf32>
    %119 = tpu.matmul %42, %118, %cst_86 {dimension_numbers = #tpu.dot_dimension_numbers<[1], [0], [0], [1], [0, 0, 1, 1], [], []>} : vector<32x128xbf16>, vector<128x8xbf16>, vector<32x8xf32> -> vector<32x8xf32>
    %120 = arith.truncf %119 : vector<32x8xf32> to vector<32x8xbf16>
    %c9_87 = arith.constant 9 : index
    %c0_88 = arith.constant 0 : index
    %c0_89 = arith.constant 0 : index
    %121 = vector.load %arg7[%c9_87, %c0_88, %c0_89] : memref<16x32x32xbf16, #tpu.memory_space<vmem>>, vector<1x32x32xbf16>
    %122 = vector.shape_cast %121 : vector<1x32x32xbf16> to vector<32x32xbf16>
    %cst_90 = arith.constant dense<0.000000e+00> : vector<32x8xf32>
    %123 = tpu.matmul %122, %120, %cst_90 {dimension_numbers = #tpu.dot_dimension_numbers<[1], [0], [0], [1], [0, 0, 1, 1], [], []>} : vector<32x32xbf16>, vector<32x8xbf16>, vector<32x8xf32> -> vector<32x8xf32>
    %124 = arith.addf %116, %123 : vector<32x8xf32>
    %c10 = arith.constant 10 : index
    %c0_91 = arith.constant 0 : index
    %c0_92 = arith.constant 0 : index
    %125 = vector.load %arg6[%c10, %c0_91, %c0_92] : memref<16x128x8xbf16, #tpu.memory_space<vmem>>, vector<1x128x8xbf16>
    %126 = vector.shape_cast %125 : vector<1x128x8xbf16> to vector<128x8xbf16>
    %cst_93 = arith.constant dense<0.000000e+00> : vector<32x8xf32>
    %127 = tpu.matmul %42, %126, %cst_93 {dimension_numbers = #tpu.dot_dimension_numbers<[1], [0], [0], [1], [0, 0, 1, 1], [], []>} : vector<32x128xbf16>, vector<128x8xbf16>, vector<32x8xf32> -> vector<32x8xf32>
    %128 = arith.truncf %127 : vector<32x8xf32> to vector<32x8xbf16>
    %c10_94 = arith.constant 10 : index
    %c0_95 = arith.constant 0 : index
    %c0_96 = arith.constant 0 : index
    %129 = vector.load %arg7[%c10_94, %c0_95, %c0_96] : memref<16x32x32xbf16, #tpu.memory_space<vmem>>, vector<1x32x32xbf16>
    %130 = vector.shape_cast %129 : vector<1x32x32xbf16> to vector<32x32xbf16>
    %cst_97 = arith.constant dense<0.000000e+00> : vector<32x8xf32>
    %131 = tpu.matmul %130, %128, %cst_97 {dimension_numbers = #tpu.dot_dimension_numbers<[1], [0], [0], [1], [0, 0, 1, 1], [], []>} : vector<32x32xbf16>, vector<32x8xbf16>, vector<32x8xf32> -> vector<32x8xf32>
    %132 = arith.addf %124, %131 : vector<32x8xf32>
    %c11 = arith.constant 11 : index
    %c0_98 = arith.constant 0 : index
    %c0_99 = arith.constant 0 : index
    %133 = vector.load %arg6[%c11, %c0_98, %c0_99] : memref<16x128x8xbf16, #tpu.memory_space<vmem>>, vector<1x128x8xbf16>
    %134 = vector.shape_cast %133 : vector<1x128x8xbf16> to vector<128x8xbf16>
    %cst_100 = arith.constant dense<0.000000e+00> : vector<32x8xf32>
    %135 = tpu.matmul %42, %134, %cst_100 {dimension_numbers = #tpu.dot_dimension_numbers<[1], [0], [0], [1], [0, 0, 1, 1], [], []>} : vector<32x128xbf16>, vector<128x8xbf16>, vector<32x8xf32> -> vector<32x8xf32>
    %136 = arith.truncf %135 : vector<32x8xf32> to vector<32x8xbf16>
    %c11_101 = arith.constant 11 : index
    %c0_102 = arith.constant 0 : index
    %c0_103 = arith.constant 0 : index
    %137 = vector.load %arg7[%c11_101, %c0_102, %c0_103] : memref<16x32x32xbf16, #tpu.memory_space<vmem>>, vector<1x32x32xbf16>
    %138 = vector.shape_cast %137 : vector<1x32x32xbf16> to vector<32x32xbf16>
    %cst_104 = arith.constant dense<0.000000e+00> : vector<32x8xf32>
    %139 = tpu.matmul %138, %136, %cst_104 {dimension_numbers = #tpu.dot_dimension_numbers<[1], [0], [0], [1], [0, 0, 1, 1], [], []>} : vector<32x32xbf16>, vector<32x8xbf16>, vector<32x8xf32> -> vector<32x8xf32>
    %140 = arith.addf %132, %139 : vector<32x8xf32>
    %c12 = arith.constant 12 : index
    %c0_105 = arith.constant 0 : index
    %c0_106 = arith.constant 0 : index
    %141 = vector.load %arg6[%c12, %c0_105, %c0_106] : memref<16x128x8xbf16, #tpu.memory_space<vmem>>, vector<1x128x8xbf16>
    %142 = vector.shape_cast %141 : vector<1x128x8xbf16> to vector<128x8xbf16>
    %cst_107 = arith.constant dense<0.000000e+00> : vector<32x8xf32>
    %143 = tpu.matmul %42, %142, %cst_107 {dimension_numbers = #tpu.dot_dimension_numbers<[1], [0], [0], [1], [0, 0, 1, 1], [], []>} : vector<32x128xbf16>, vector<128x8xbf16>, vector<32x8xf32> -> vector<32x8xf32>
    %144 = arith.truncf %143 : vector<32x8xf32> to vector<32x8xbf16>
    %c12_108 = arith.constant 12 : index
    %c0_109 = arith.constant 0 : index
    %c0_110 = arith.constant 0 : index
    %145 = vector.load %arg7[%c12_108, %c0_109, %c0_110] : memref<16x32x32xbf16, #tpu.memory_space<vmem>>, vector<1x32x32xbf16>
    %146 = vector.shape_cast %145 : vector<1x32x32xbf16> to vector<32x32xbf16>
    %cst_111 = arith.constant dense<0.000000e+00> : vector<32x8xf32>
    %147 = tpu.matmul %146, %144, %cst_111 {dimension_numbers = #tpu.dot_dimension_numbers<[1], [0], [0], [1], [0, 0, 1, 1], [], []>} : vector<32x32xbf16>, vector<32x8xbf16>, vector<32x8xf32> -> vector<32x8xf32>
    %148 = arith.addf %140, %147 : vector<32x8xf32>
    %c13 = arith.constant 13 : index
    %c0_112 = arith.constant 0 : index
    %c0_113 = arith.constant 0 : index
    %149 = vector.load %arg6[%c13, %c0_112, %c0_113] : memref<16x128x8xbf16, #tpu.memory_space<vmem>>, vector<1x128x8xbf16>
    %150 = vector.shape_cast %149 : vector<1x128x8xbf16> to vector<128x8xbf16>
    %cst_114 = arith.constant dense<0.000000e+00> : vector<32x8xf32>
    %151 = tpu.matmul %42, %150, %cst_114 {dimension_numbers = #tpu.dot_dimension_numbers<[1], [0], [0], [1], [0, 0, 1, 1], [], []>} : vector<32x128xbf16>, vector<128x8xbf16>, vector<32x8xf32> -> vector<32x8xf32>
    %152 = arith.truncf %151 : vector<32x8xf32> to vector<32x8xbf16>
    %c13_115 = arith.constant 13 : index
    %c0_116 = arith.constant 0 : index
    %c0_117 = arith.constant 0 : index
    %153 = vector.load %arg7[%c13_115, %c0_116, %c0_117] : memref<16x32x32xbf16, #tpu.memory_space<vmem>>, vector<1x32x32xbf16>
    %154 = vector.shape_cast %153 : vector<1x32x32xbf16> to vector<32x32xbf16>
    %cst_118 = arith.constant dense<0.000000e+00> : vector<32x8xf32>
    %155 = tpu.matmul %154, %152, %cst_118 {dimension_numbers = #tpu.dot_dimension_numbers<[1], [0], [0], [1], [0, 0, 1, 1], [], []>} : vector<32x32xbf16>, vector<32x8xbf16>, vector<32x8xf32> -> vector<32x8xf32>
    %156 = arith.addf %148, %155 : vector<32x8xf32>
    %c14 = arith.constant 14 : index
    %c0_119 = arith.constant 0 : index
    %c0_120 = arith.constant 0 : index
    %157 = vector.load %arg6[%c14, %c0_119, %c0_120] : memref<16x128x8xbf16, #tpu.memory_space<vmem>>, vector<1x128x8xbf16>
    %158 = vector.shape_cast %157 : vector<1x128x8xbf16> to vector<128x8xbf16>
    %cst_121 = arith.constant dense<0.000000e+00> : vector<32x8xf32>
    %159 = tpu.matmul %42, %158, %cst_121 {dimension_numbers = #tpu.dot_dimension_numbers<[1], [0], [0], [1], [0, 0, 1, 1], [], []>} : vector<32x128xbf16>, vector<128x8xbf16>, vector<32x8xf32> -> vector<32x8xf32>
    %160 = arith.truncf %159 : vector<32x8xf32> to vector<32x8xbf16>
    %c14_122 = arith.constant 14 : index
    %c0_123 = arith.constant 0 : index
    %c0_124 = arith.constant 0 : index
    %161 = vector.load %arg7[%c14_122, %c0_123, %c0_124] : memref<16x32x32xbf16, #tpu.memory_space<vmem>>, vector<1x32x32xbf16>
    %162 = vector.shape_cast %161 : vector<1x32x32xbf16> to vector<32x32xbf16>
    %cst_125 = arith.constant dense<0.000000e+00> : vector<32x8xf32>
    %163 = tpu.matmul %162, %160, %cst_125 {dimension_numbers = #tpu.dot_dimension_numbers<[1], [0], [0], [1], [0, 0, 1, 1], [], []>} : vector<32x32xbf16>, vector<32x8xbf16>, vector<32x8xf32> -> vector<32x8xf32>
    %164 = arith.addf %156, %163 : vector<32x8xf32>
    %c15 = arith.constant 15 : index
    %c0_126 = arith.constant 0 : index
    %c0_127 = arith.constant 0 : index
    %165 = vector.load %arg6[%c15, %c0_126, %c0_127] : memref<16x128x8xbf16, #tpu.memory_space<vmem>>, vector<1x128x8xbf16>
    %166 = vector.shape_cast %165 : vector<1x128x8xbf16> to vector<128x8xbf16>
    %cst_128 = arith.constant dense<0.000000e+00> : vector<32x8xf32>
    %167 = tpu.matmul %42, %166, %cst_128 {dimension_numbers = #tpu.dot_dimension_numbers<[1], [0], [0], [1], [0, 0, 1, 1], [], []>} : vector<32x128xbf16>, vector<128x8xbf16>, vector<32x8xf32> -> vector<32x8xf32>
    %168 = arith.truncf %167 : vector<32x8xf32> to vector<32x8xbf16>
    %c15_129 = arith.constant 15 : index
    %c0_130 = arith.constant 0 : index
    %c0_131 = arith.constant 0 : index
    %169 = vector.load %arg7[%c15_129, %c0_130, %c0_131] : memref<16x32x32xbf16, #tpu.memory_space<vmem>>, vector<1x32x32xbf16>
    %170 = vector.shape_cast %169 : vector<1x32x32xbf16> to vector<32x32xbf16>
    %cst_132 = arith.constant dense<0.000000e+00> : vector<32x8xf32>
    %171 = tpu.matmul %170, %168, %cst_132 {dimension_numbers = #tpu.dot_dimension_numbers<[1], [0], [0], [1], [0, 0, 1, 1], [], []>} : vector<32x32xbf16>, vector<32x8xbf16>, vector<32x8xf32> -> vector<32x8xf32>
    %172 = arith.addf %164, %171 : vector<32x8xf32>
    %cst_133 = arith.constant dense<0.000000e+00> : vector<32xf32>
    %173 = vector.multi_reduction <add>, %172, %cst_133 [1] : vector<32x8xf32> to vector<32xf32>
    %174 = vector.shape_cast %173 : vector<32xf32> to vector<32x1xf32>
    %cst_134 = arith.constant 1.250000e-01 : f32
    %175 = vector.broadcast %cst_134 : f32 to vector<32x1xf32>
    %176 = arith.mulf %174, %175 : vector<32x1xf32>
    %177 = vector.broadcast %176 : vector<32x1xf32> to vector<32x8xf32>
    %178 = arith.subf %172, %177 : vector<32x8xf32>
    %179 = arith.mulf %178, %178 : vector<32x8xf32>
    %cst_135 = arith.constant dense<0.000000e+00> : vector<32xf32>
    %180 = vector.multi_reduction <add>, %179, %cst_135 [1] : vector<32x8xf32> to vector<32xf32>
    %181 = vector.shape_cast %180 : vector<32xf32> to vector<32x1xf32>
    %cst_136 = arith.constant 1.250000e-01 : f32
    %182 = vector.broadcast %cst_136 : f32 to vector<32x1xf32>
    %183 = arith.mulf %181, %182 : vector<32x1xf32>
    %cst_137 = arith.constant 9.99999974E-6 : f32
    %184 = vector.broadcast %cst_137 : f32 to vector<32x1xf32>
    %185 = arith.addf %183, %184 : vector<32x1xf32>
    %186 = math.rsqrt %185 : vector<32x1xf32>
    %c0_138 = arith.constant 0 : index
    %c0_139 = arith.constant 0 : index
    %187 = vector.load %arg8[%c0_138, %c0_139] : memref<32x1xf32, #tpu.memory_space<vmem>>, vector<32x1xf32>
    %188 = arith.mulf %186, %187 : vector<32x1xf32>
    %c0_140 = arith.constant 0 : index
    %c0_141 = arith.constant 0 : index
    %189 = vector.load %arg9[%c0_140, %c0_141] : memref<32x1xf32, #tpu.memory_space<vmem>>, vector<32x1xf32>
    %190 = arith.mulf %176, %188 : vector<32x1xf32>
    %191 = arith.subf %189, %190 : vector<32x1xf32>
    %192 = vector.broadcast %188 : vector<32x1xf32> to vector<32x8xf32>
    %193 = arith.mulf %172, %192 : vector<32x8xf32>
    %194 = vector.broadcast %191 : vector<32x1xf32> to vector<32x8xf32>
    %195 = arith.addf %193, %194 : vector<32x8xf32>
    %cst_142 = arith.constant 2.000000e-01 : f32
    %196 = vector.broadcast %cst_142 : f32 to vector<32x8xf32>
    %197 = arith.mulf %196, %195 : vector<32x8xf32>
    %198 = arith.maximumf %195, %197 : vector<32x8xf32>
    %199 = arith.truncf %198 : vector<32x8xf32> to vector<32x8xbf16>
    %c0_143 = arith.constant 0 : index
    %c0_144 = arith.constant 0 : index
    %c0_145 = arith.constant 0 : index
    %200 = vector.load %arg13[%c0_143, %c0_144, %c0_145] : memref<1x32x8xbf16, #tpu.memory_space<vmem>>, vector<1x32x8xbf16>
    %201 = vector.shape_cast %200 : vector<1x32x8xbf16> to vector<32x8xbf16>
    %202 = vector.shape_cast %199 : vector<32x8xbf16> to vector<1x32x8xbf16>
    tpu.vector_store %arg13[%c0_143, %c0_144, %c0_145], %202 {strides = array<i32>} : memref<1x32x8xbf16, #tpu.memory_space<vmem>>, vector<1x32x8xbf16>,
    %c0_146 = arith.constant 0 : index
    %c0_147 = arith.constant 0 : index
    %203 = vector.load %arg10[%c0_146, %c0_147] : memref<1x32xf32, #tpu.memory_space<vmem>>, vector<1x32xf32>
    %cst_148 = arith.constant dense<0.000000e+00> : vector<1x8xf32>
    %204 = tpu.matmul %203, %198, %cst_148 {dimension_numbers = #tpu.dot_dimension_numbers<[1], [0], [0], [1], [0, 0, 1, 1], [], []>} : vector<1x32xf32>, vector<32x8xf32>, vector<1x8xf32> -> vector<1x8xf32>
    %c0_149 = arith.constant 0 : index
    %c0_150 = arith.constant 0 : index
    %205 = vector.load %arg11[%c0_149, %c0_150] : memref<1x1xf32, #tpu.memory_space<vmem>>, vector<1x1xf32>
    %206 = vector.broadcast %205 : vector<1x1xf32> to vector<1x8xf32>
    %207 = arith.addf %204, %206 : vector<1x8xf32>
    %c0_151 = arith.constant 0 : index
    %c0_152 = arith.constant 0 : index
    %c0_153 = arith.constant 0 : index
    %208 = vector.load %arg14[%c0_151, %c0_152, %c0_153] : memref<1x1x8xf32, #tpu.memory_space<vmem>>, vector<1x1x8xf32>
    %209 = vector.shape_cast %208 : vector<1x1x8xf32> to vector<1x8xf32>
    %210 = vector.shape_cast %207 : vector<1x8xf32> to vector<1x1x8xf32>
    tpu.vector_store %arg14[%c0_151, %c0_152, %c0_153], %210 {strides = array<i32>} : memref<1x1x8xf32, #tpu.memory_space<vmem>>, vector<1x1x8xf32>,
    return
  }
  func.func @transform_0(%arg0: i32) -> (i32, i32, i32) {
    %c0_i32 = arith.constant 0 : i32
    %c0_i32_0 = arith.constant 0 : i32
    %c0_i32_1 = arith.constant 0 : i32
    return %arg0, %c0_i32, %c0_i32_0 : i32, i32, i32
  }
  func.func @transform_1(%arg0: i32) -> (i32, i32) {
    %c0_i32 = arith.constant 0 : i32
    %c0_i32_0 = arith.constant 0 : i32
    %c0_i32_1 = arith.constant 0 : i32
    return %c0_i32, %c0_i32_0 : i32, i32
  }
  func.func @transform_2(%arg0: i32) -> (i32, i32) {
    %c0_i32 = arith.constant 0 : i32
    %c0_i32_0 = arith.constant 0 : i32
    %c0_i32_1 = arith.constant 0 : i32
    return %c0_i32, %c0_i32_0 : i32, i32
  }
  func.func @transform_3(%arg0: i32) -> (i32, i32) {
    %c0_i32 = arith.constant 0 : i32
    %c0_i32_0 = arith.constant 0 : i32
    %c0_i32_1 = arith.constant 0 : i32
    return %c0_i32, %c0_i32_0 : i32, i32
  }
  func.func @transform_4(%arg0: i32) -> (i32, i32) {
    %c0_i32 = arith.constant 0 : i32
    %c0_i32_0 = arith.constant 0 : i32
    %c0_i32_1 = arith.constant 0 : i32
    return %c0_i32, %c0_i32_0 : i32, i32
  }
  func.func @transform_5(%arg0: i32) -> (i32, i32, i32) {
    %c0_i32 = arith.constant 0 : i32
    %c0_i32_0 = arith.constant 0 : i32
    %c0_i32_1 = arith.constant 0 : i32
    %c0_i32_2 = arith.constant 0 : i32
    return %c0_i32, %c0_i32_0, %c0_i32_1 : i32, i32, i32
  }
  func.func @transform_6(%arg0: i32) -> (i32, i32, i32) {
    %c0_i32 = arith.constant 0 : i32
    %c0_i32_0 = arith.constant 0 : i32
    %c0_i32_1 = arith.constant 0 : i32
    %c0_i32_2 = arith.constant 0 : i32
    return %c0_i32, %c0_i32_0, %c0_i32_1 : i32, i32, i32
  }
  func.func @transform_7(%arg0: i32) -> (i32, i32) {
    %c0_i32 = arith.constant 0 : i32
    %c0_i32_0 = arith.constant 0 : i32
    %c0_i32_1 = arith.constant 0 : i32
    return %c0_i32, %c0_i32_0 : i32, i32
  }
  func.func @transform_8(%arg0: i32) -> (i32, i32) {
    %c0_i32 = arith.constant 0 : i32
    %c0_i32_0 = arith.constant 0 : i32
    %c0_i32_1 = arith.constant 0 : i32
    return %c0_i32, %c0_i32_0 : i32, i32
  }
  func.func @transform_9(%arg0: i32) -> (i32, i32) {
    %c0_i32 = arith.constant 0 : i32
    %c0_i32_0 = arith.constant 0 : i32
    %c0_i32_1 = arith.constant 0 : i32
    return %c0_i32, %c0_i32_0 : i32, i32
  }
  func.func @transform_10(%arg0: i32) -> (i32, i32) {
    %c0_i32 = arith.constant 0 : i32
    %c0_i32_0 = arith.constant 0 : i32
    %c0_i32_1 = arith.constant 0 : i32
    return %c0_i32, %c0_i32_0 : i32, i32
  }
  func.func @transform_11(%arg0: i32) -> (i32, i32, i32) {
    %c0_i32 = arith.constant 0 : i32
    %c0_i32_0 = arith.constant 0 : i32
    %c0_i32_1 = arith.constant 0 : i32
    return %arg0, %c0_i32, %c0_i32_0 : i32, i32, i32
  }
  func.func @transform_12(%arg0: i32) -> (i32, i32, i32) {
    %c0_i32 = arith.constant 0 : i32
    %c0_i32_0 = arith.constant 0 : i32
    %c0_i32_1 = arith.constant 0 : i32
    return %arg0, %c0_i32, %c0_i32_0 : i32, i32, i32
  }
  func.func @transform_13(%arg0: i32) -> (i32, i32, i32) {
    %c0_i32 = arith.constant 0 : i32
    %c0_i32_0 = arith.constant 0 : i32
    %c0_i32_1 = arith.constant 0 : i32
    return %arg0, %c0_i32, %c0_i32_0 : i32, i32, i32
  }
}

</mosaic_0001>

<llo_original>
// kernel: discriminator_forward.3
$region0: #{discriminator_forward.3}
  #allocation0 [shape = 'u32[]', space=smem, size = 0x4, offset = 0x4, fixed_abs, tag = 'smem constant byte address 0x4 - core index']
  #allocation1 [shape = 'u32[144,128]{1,0:T(1,128)}', space=vmem, size = 0x12000, scoped, tag = 'internal scratch']
  %s0 = inlined_call_operand.vmem [shape: bf16[2,4,48,1800], index: 0, kind: input, shape index: {}]
  %s1 = inlined_call_operand.vmem [shape: bf16[16,48], index: 1, kind: input, shape index: {}]
  %s2 = inlined_call_operand.vmem [shape: f32[16,1], index: 2, kind: input, shape index: {}]
  %s3 = inlined_call_operand.vmem [shape: bf16[2,16,1800], index: 3, kind: output, shape index: {}]
  %s4 = sld [smem:[#allocation0]]
  $region173: #{discriminator_forward.3} parent=0
    _
  %s6 = ssub.s32 1, %s4
  %s7 = scalar_select 0, %s6, %s4
  $region1: #{discriminator_forward.3} parent=0
    #allocation2 [shape = 'u8[786432]{0}', space=vmem, size = 0xc0000, scoped, tag = 'input window, operand 0']
    #allocation3 [shape = 'u8[65536]{0}', space=vmem, size = 0x10000, scoped, tag = 'output window, operand 0']
    loop: start=0, step=1, limit=6
    $region2: #{discriminator_forward.3} parent=1 // loop_pre_header
      _
    $region3: #{discriminator_forward.3} parent=1 // loop_header
      %s9 = sphi 0, %s13
      %p10 = scmp.ge.s32.totalorder %s9, 6
      %s16 = sphi 0, %s28
      %s17 = sphi 0, %s24
      %s18 = sphi 0, %s16
      %s19 = sphi 0, %s17
      %s20 = sphi 0, %s18
      %s21 = sphi 0, %s19
      %s33 = sphi 0, %s35
      %s36 = sphi 0, %s33
      %s37 = sphi 0, %s36
      %s53 = sphi 0, %s37
      %s57 = sphi 0, %s57
      %s59 = sphi 0, %s57
      %s60 = sphi 0, %s59
      %s74 = sphi 0, %s60
      %s78 = sphi 0, %s78
      %s80 = sphi 0, %s78
      %s81 = sphi 0, %s80
      %s95 = sphi 0, %s81
      %s103 = sphi 0, %s105
      %s106 = sphi 0, %s103
      %s107 = sphi 0, %s106
      %s123 = sphi 0, %s107
    $region4: #{discriminator_forward.3} parent=1 // loop_header_branch
      %12 = sbr.rel (%p10) target = $region8
    $region5: #{discriminator_forward.3} parent=1 // loop_body
      %s14 = ssub.s32 %s9, 1
      %s15 = ssub.s32 %s9, 2
      %s22 = sadd.s32 1, %s17
      %p23 = scmp.ge.s32.totalorder %s22, 2
      %s24 = scalar_select %p23, 0, %s22
      %s25 = sadd.s32 1, %s16
      %s26 = scalar_select %p23, %s25, %s16
      %p27 = scmp.ge.s32.totalorder %s26, 2
      %s28 = scalar_select %p27, 0, %s26
      %s29 = ssub.s32 %s16, %s28
      %s30 = ssub.s32 %s17, %s24
      %s31 = sor.u32 %s29, %s30
      %p32 = scmp.eq.s32.totalorder %s31, 0
      %s34 = sadd.s32 %s33, 1
      %s35 = scalar_select %p32, %s33, %s34
      %p38 = pneg %p32
      %p39 = scmp.eq.s32.totalorder %s9, 3
      %p40 = por %p38, %p39
      %p41 = scmp.ne.s32.totalorder %s33, %s36
      %p42 = scmp.eq.s32.totalorder %s9, 0
      %p43 = por %p41, %p42
      %p44 = scmp.ne.s32.totalorder %s33, %s36
      %p45 = scmp.eq.s32.totalorder %s14, 3
      %p46 = por %p44, %p45
      %p47 = scmp.ne.s32.totalorder %s36, %s37
      %p48 = scmp.eq.s32.totalorder %s14, 0
      %p49 = por %p47, %p48
      %p50 = scmp.ne.s32.totalorder %s36, %s37
      %p51 = scmp.eq.s32.totalorder %s15, 3
      %p52 = por %p50, %p51
      %p54 = scmp.ne.s32.totalorder %s37, %s53
      %p55 = scmp.eq.s32.totalorder %s15, 0
      %p56 = por %p54, %p55
      %s58 = sadd.s32 %s57, 1
      %p61 = scmp.eq.s32.totalorder %s9, 3
      %p62 = scmp.ne.s32.totalorder %s57, %s59
      %p63 = scmp.eq.s32.totalorder %s9, 0
      %p64 = por %p62, %p63
      %p65 = scmp.ne.s32.totalorder %s57, %s59
      %p66 = scmp.eq.s32.totalorder %s14, 3
      %p67 = por %p65, %p66
      %p68 = scmp.ne.s32.totalorder %s59, %s60
      %p69 = scmp.eq.s32.totalorder %s14, 0
      %p70 = por %p68, %p69
      %p71 = scmp.ne.s32.totalorder %s59, %s60
      %p72 = scmp.eq.s32.totalorder %s15, 3
      %p73 = por %p71, %p72
      %p75 = scmp.ne.s32.totalorder %s60, %s74
      %p76 = scmp.eq.s32.totalorder %s15, 0
      %p77 = por %p75, %p76
      %s79 = sadd.s32 %s78, 1
      %p82 = scmp.eq.s32.totalorder %s9, 3
      %p83 = scmp.ne.s32.totalorder %s78, %s80
      %p84 = scmp.eq.s32.totalorder %s9, 0
      %p85 = por %p83, %p84
      %p86 = scmp.ne.s32.totalorder %s78, %s80
      %p87 = scmp.eq.s32.totalorder %s14, 3
      %p88 = por %p86, %p87
      %p89 = scmp.ne.s32.totalorder %s80, %s81
      %p90 = scmp.eq.s32.totalorder %s14, 0
      %p91 = por %p89, %p90
      %p92 = scmp.ne.s32.totalorder %s80, %s81
      %p93 = scmp.eq.s32.totalorder %s15, 3
      %p94 = por %p92, %p93
      %p96 = scmp.ne.s32.totalorder %s81, %s95
      %p97 = scmp.eq.s32.totalorder %s15, 0
      %p98 = por %p96, %p97
      %s99 = ssub.s32 %s16, %s28
      %s100 = ssub.s32 %s17, %s24
      %s101 = sor.u32 %s99, %s100
      %p102 = scmp.eq.s32.totalorder %s101, 0
      %s104 = sadd.s32 %s103, 1
      %s105 = scalar_select %p102, %s103, %s104
      %p108 = pneg %p102
      %p109 = scmp.eq.s32.totalorder %s9, 3
      %p110 = por %p108, %p109
      %p111 = scmp.ne.s32.totalorder %s103, %s106
      %p112 = scmp.eq.s32.totalorder %s9, 0
      %p113 = por %p111, %p112
      %p114 = scmp.ne.s32.totalorder %s103, %s106
      %p115 = scmp.eq.s32.totalorder %s14, 3
      %p116 = por %p114, %p115
      %p117 = scmp.ne.s32.totalorder %s106, %s107
      %p118 = scmp.eq.s32.totalorder %s14, 0
      %p119 = por %p117, %p118
      %p120 = scmp.ne.s32.totalorder %s106, %s107
      %p121 = scmp.eq.s32.totalorder %s15, 3
      %p122 = por %p120, %p121
      %p124 = scmp.ne.s32.totalorder %s107, %s123
      %p125 = scmp.eq.s32.totalorder %s15, 0
      %p126 = por %p124, %p125
      %p127 = scmp.le.s32.totalorder 1, %s9
      %p128 = scmp.lt.s32.totalorder %s9, 5
      %p129 = pnand %p127, %p128
      %p130 = pneg %p129
      // Predicated region
      $region9: #{discriminator_forward.3} parent=5 // pred_check
        _
      $region10: #{discriminator_forward.3} parent=5 // pred_check_branch
        %132 = sbr.rel (%p129) target = $region12
      $region11: #{discriminator_forward.3} parent=5 // pred_region
        %s133 = ssub.s32 %s9, 1
        // Predicated region
        $region13: #{discriminator_forward.3} parent=11 // pred_check
          %p134 = pneg %p70
        $region14: #{discriminator_forward.3} parent=11 // pred_check_branch
          %136 = sbr.rel (%p134) target = $region16
        $region15: #{discriminator_forward.3} parent=11 // pred_region
          _
        $region16: #{discriminator_forward.3} parent=11 // pred_fallthru
          _
        // Predicated region
        $region17: #{discriminator_forward.3} parent=11 // pred_check
          %p137 = pneg %p91
        $region18: #{discriminator_forward.3} parent=11 // pred_check_branch
          %139 = sbr.rel (%p137) target = $region20
        $region19: #{discriminator_forward.3} parent=11 // pred_region
          _
        $region20: #{discriminator_forward.3} parent=11 // pred_fallthru
          _
      $region12: #{discriminator_forward.3} parent=5 // pred_fallthru
        _
      %p140 = scmp.lt.s32.totalorder %s9, 4
      // Predicated region
      $region21: #{discriminator_forward.3} parent=5 // pred_check
        %p141 = pneg %p140
      $region22: #{discriminator_forward.3} parent=5 // pred_check_branch
        %143 = sbr.rel (%p141) target = $region24
      $region23: #{discriminator_forward.3} parent=5 // pred_region
        // Predicated region
        $region25: #{discriminator_forward.3} parent=23 // pred_check
          %p144 = pneg %p43
        $region26: #{discriminator_forward.3} parent=23 // pred_check_branch
          %146 = sbr.rel (%p144) target = $region28
        $region27: #{discriminator_forward.3} parent=23 // pred_region
          %s147 = sand.u32 %s33, 1
          %s148 = sand.u32 %s33, 1
          %s149 = smul.addr %s148, 768
          %s150 = scalar_lea.vmem [#allocation2], %s149
          %s151 = smul.u32 8, %s17
          %s152 = ssub.s32 15, %s151
          %p153 = scmp.lt.s32.totalorder %s152, 8
          %s154 = scalar_select %p153, %s152, 8
          %s155 = smul.u32 1536, %s154
          %p156 = scmp.ne.s32.totalorder 0, %s155
          %s157 = smul.addr %s16, 360
          %s158 = sadd.s32 %s151, %s157
          %s159 = smul.addr %s158, 4
          %s160 = scalar_lea.vmem %s0, %s159
          %s161 = smul.u32 %s154, 4
          // Predicated region
          $region29: #{discriminator_forward.3} parent=27 // pred_check
            %p162 = pneg %p156
          $region30: #{discriminator_forward.3} parent=27 // pred_check_branch
            %164 = sbr.rel (%p162) target = $region32
          $region31: #{discriminator_forward.3} parent=27 // pred_region
            %p165 = scmp.lt.u32.totalorder %s161, 8
            %p166 = pneg %p165
            // Predicated region
            $region33: #{discriminator_forward.3} parent=31 // pred_check
              _
            $region34: #{discriminator_forward.3} parent=31 // pred_check_branch
              %168 = sbr.rel (%p165) target = $region36
            $region35: #{discriminator_forward.3} parent=31 // pred_region
              %s230 = sand.u32 %s161, 7
              %p231 = scmp.eq.s32.totalorder %s230, 0
              // Predicated region
              $region48: #{discriminator_forward.3} parent=35 // pred_check
                %p232 = pneg %p231
              $region49: #{discriminator_forward.3} parent=35 // pred_check_branch
                %234 = sbr.rel (%p232) target = $region51
              $region50: #{discriminator_forward.3} parent=35 // pred_region
                %s235 = sshrl.u32 %s161, 3
                %s236 = sdiv.u32.pop %s235, 3
                %s237 = srem.u32.pop %s235, 3
                // While loop
                $region52: #{discriminator_forward.3} parent=50 // loop_pre_header
                  _
                $region53: #{discriminator_forward.3} parent=50 // loop_header
                  %s241 = sphi 0, %s243
                  %p242 = scmp.ge.s32.totalorder %s241, %s236
                  %s246 = sphi 0, %s395
                  %s247 = sphi %s160, %s398
                  %s248 = sphi %s150, %s399
                $region54: #{discriminator_forward.3} parent=50 // loop_header_branch
                  %245 = sbr.rel (%p242) target = $region58
                $region55: #{discriminator_forward.3} parent=50 // loop_body
                  %v249 = vld [vmem:[%s247] sm:$0xff]
                  %250 = vst [vmem:[%s248] sm:$0xff] %v249
                  %v251 = vld [vmem:[%s247 + $0x8] sm:$0xff]
                  %252 = vst [vmem:[%s248 + $0x8] sm:$0xff] %v251
                  %v253 = vld [vmem:[%s247 + $0x10] sm:$0xff]
                  %254 = vst [vmem:[%s248 + $0x10] sm:$0xff] %v253
                  %v255 = vld [vmem:[%s247 + $0x3c] sm:$0xff]
                  %256 = vst [vmem:[%s248 + $0x20] sm:$0xff] %v255
                  %v257 = vld [vmem:[%s247 + $0x44] sm:$0xff]
                  %258 = vst [vmem:[%s248 + $0x28] sm:$0xff] %v257
                  %v259 = vld [vmem:[%s247 + $0x4c] sm:$0xff]
                  %260 = vst [vmem:[%s248 + $0x30] sm:$0xff] %v259
                  %v261 = vld [vmem:[%s247 + $0x78] sm:$0xff]
                  %262 = vst [vmem:[%s248 + $0x40] sm:$0xff] %v261
                  %v263 = vld [vmem:[%s247 + $0x80] sm:$0xff]
                  %264 = vst [vmem:[%s248 + $0x48] sm:$0xff] %v263
                  %v265 = vld [vmem:[%s247 + $0x88] sm:$0xff]
                  %266 = vst [vmem:[%s248 + $0x50] sm:$0xff] %v265
                  %v267 = vld [vmem:[%s247 + $0xb4] sm:$0xff]
                  %268 = vst [vmem:[%s248 + $0x60] sm:$0xff] %v267
                  %v269 = vld [vmem:[%s247 + $0xbc] sm:$0xff]
                  %270 = vst [vmem:[%s248 + $0x68] sm:$0xff] %v269
                  %v271 = vld [vmem:[%s247 + $0xc4] sm:$0xff]
                  %272 = vst [vmem:[%s248 + $0x70] sm:$0xff] %v271
                  %v273 = vld [vmem:[%s247 + $0xf0] sm:$0xff]
                  %274 = vst [vmem:[%s248 + $0x80] sm:$0xff] %v273
                  %v275 = vld [vmem:[%s247 + $0xf8] sm:$0xff]
                  %276 = vst [vmem:[%s248 + $0x88] sm:$0xff] %v275
                  %v277 = vld [vmem:[%s247 + $0x100] sm:$0xff]
                  %278 = vst [vmem:[%s248 + $0x90] sm:$0xff] %v277
                  %v279 = vld [vmem:[%s247 + $0x12c] sm:$0xff]
                  %280 = vst [vmem:[%s248 + $0xa0] sm:$0xff] %v279
                  %v281 = vld [vmem:[%s247 + $0x134] sm:$0xff]
                  %282 = vst [vmem:[%s248 + $0xa8] sm:$0xff] %v281
                  %v283 = vld [vmem:[%s247 + $0x13c] sm:$0xff]
                  %284 = vst [vmem:[%s248 + $0xb0] sm:$0xff] %v283
                  %v285 = vld [vmem:[%s247 + $0x168] sm:$0xff]
                  %286 = vst [vmem:[%s248 + $0xc0] sm:$0xff] %v285
                  %v287 = vld [vmem:[%s247 + $0x170] sm:$0xff]
                  %288 = vst [vmem:[%s248 + $0xc8] sm:$0xff] %v287
                  %v289 = vld [vmem:[%s247 + $0x178] sm:$0xff]
                  %290 = vst [vmem:[%s248 + $0xd0] sm:$0xff] %v289
                  %v291 = vld [vmem:[%s247 + $0x1a4] sm:$0xff]
                  %292 = vst [vmem:[%s248 + $0xe0] sm:$0xff] %v291
                  %v293 = vld [vmem:[%s247 + $0x1ac] sm:$0xff]
                  %294 = vst [vmem:[%s248 + $0xe8] sm:$0xff] %v293
                  %v295 = vld [vmem:[%s247 + $0x1b4] sm:$0xff]
                  %296 = vst [vmem:[%s248 + $0xf0] sm:$0xff] %v295
                  %v297 = vld [vmem:[%s247 + $0x1e0] sm:$0xff]
                  %298 = vst [vmem:[%s248 + $0x100] sm:$0xff] %v297
                  %v299 = vld [vmem:[%s247 + $0x1e8] sm:$0xff]
                  %300 = vst [vmem:[%s248 + $0x108] sm:$0xff] %v299
                  %v301 = vld [vmem:[%s247 + $0x1f0] sm:$0xff]
                  %302 = vst [vmem:[%s248 + $0x110] sm:$0xff] %v301
                  %v303 = vld [vmem:[%s247 + $0x21c] sm:$0xff]
                  %304 = vst [vmem:[%s248 + $0x120] sm:$0xff] %v303
                  %v305 = vld [vmem:[%s247 + $0x224] sm:$0xff]
                  %306 = vst [vmem:[%s248 + $0x128] sm:$0xff] %v305
                  %v307 = vld [vmem:[%s247 + $0x22c] sm:$0xff]
                  %308 = vst [vmem:[%s248 + $0x130] sm:$0xff] %v307
                  %v309 = vld [vmem:[%s247 + $0x258] sm:$0xff]
                  %310 = vst [vmem:[%s248 + $0x140] sm:$0xff] %v309
                  %v311 = vld [vmem:[%s247 + $0x260] sm:$0xff]
                  %312 = vst [vmem:[%s248 + $0x148] sm:$0xff] %v311
                  %v313 = vld [vmem:[%s247 + $0x268] sm:$0xff]
                  %314 = vst [vmem:[%s248 + $0x150] sm:$0xff] %v313
                  %v315 = vld [vmem:[%s247 + $0x294] sm:$0xff]
                  %316 = vst [vmem:[%s248 + $0x160] sm:$0xff] %v315
                  %v317 = vld [vmem:[%s247 + $0x29c] sm:$0xff]
                  %318 = vst [vmem:[%s248 + $0x168] sm:$0xff] %v317
                  %v319 = vld [vmem:[%s247 + $0x2a4] sm:$0xff]
                  %320 = vst [vmem:[%s248 + $0x170] sm:$0xff] %v319
                  %v321 = vld [vmem:[%s247 + $0x2d0] sm:$0xff]
                  %322 = vst [vmem:[%s248 + $0x180] sm:$0xff] %v321
                  %v323 = vld [vmem:[%s247 + $0x2d8] sm:$0xff]
                  %324 = vst [vmem:[%s248 + $0x188] sm:$0xff] %v323
                  %v325 = vld [vmem:[%s247 + $0x2e0] sm:$0xff]
                  %326 = vst [vmem:[%s248 + $0x190] sm:$0xff] %v325
                  %v327 = vld [vmem:[%s247 + $0x30c] sm:$0xff]
                  %328 = vst [vmem:[%s248 + $0x1a0] sm:$0xff] %v327
                  %v329 = vld [vmem:[%s247 + $0x314] sm:$0xff]
                  %330 = vst [vmem:[%s248 + $0x1a8] sm:$0xff] %v329
                  %v331 = vld [vmem:[%s247 + $0x31c] sm:$0xff]
                  %332 = vst [vmem:[%s248 + $0x1b0] sm:$0xff] %v331
                  %v333 = vld [vmem:[%s247 + $0x348] sm:$0xff]
                  %334 = vst [vmem:[%s248 + $0x1c0] sm:$0xff] %v333
                  %v335 = vld [vmem:[%s247 + $0x350] sm:$0xff]
                  %336 = vst [vmem:[%s248 + $0x1c8] sm:$0xff] %v335
                  %v337 = vld [vmem:[%s247 + $0x358] sm:$0xff]
                  %338 = vst [vmem:[%s248 + $0x1d0] sm:$0xff] %v337
                  %v339 = vld [vmem:[%s247 + $0x384] sm:$0xff]
                  %340 = vst [vmem:[%s248 + $0x1e0] sm:$0xff] %v339
                  %v341 = vld [vmem:[%s247 + $0x38c] sm:$0xff]
                  %342 = vst [vmem:[%s248 + $0x1e8] sm:$0xff] %v341
                  %v343 = vld [vmem:[%s247 + $0x394] sm:$0xff]
                  %344 = vst [vmem:[%s248 + $0x1f0] sm:$0xff] %v343
                  %v345 = vld [vmem:[%s247 + $0x3c0] sm:$0xff]
                  %346 = vst [vmem:[%s248 + $0x200] sm:$0xff] %v345
                  %v347 = vld [vmem:[%s247 + $0x3c8] sm:$0xff]
                  %348 = vst [vmem:[%s248 + $0x208] sm:$0xff] %v347
                  %v349 = vld [vmem:[%s247 + $0x3d0] sm:$0xff]
                  %350 = vst [vmem:[%s248 + $0x210] sm:$0xff] %v349
                  %v351 = vld [vmem:[%s247 + $0x3fc] sm:$0xff]
                  %352 = vst [vmem:[%s248 + $0x220] sm:$0xff] %v351
                  %v353 = vld [vmem:[%s247 + $0x404] sm:$0xff]
                  %354 = vst [vmem:[%s248 + $0x228] sm:$0xff] %v353
                  %v355 = vld [vmem:[%s247 + $0x40c] sm:$0xff]
                  %356 = vst [vmem:[%s248 + $0x230] sm:$0xff] %v355
                  %v357 = vld [vmem:[%s247 + $0x438] sm:$0xff]
                  %358 = vst [vmem:[%s248 + $0x240] sm:$0xff] %v357
                  %v359 = vld [vmem:[%s247 + $0x440] sm:$0xff]
                  %360 = vst [vmem:[%s248 + $0x248] sm:$0xff] %v359
                  %v361 = vld [vmem:[%s247 + $0x448] sm:$0xff]
                  %362 = vst [vmem:[%s248 + $0x250] sm:$0xff] %v361
                  %v363 = vld [vmem:[%s247 + $0x474] sm:$0xff]
                  %364 = vst [vmem:[%s248 + $0x260] sm:$0xff] %v363
                  %v365 = vld [vmem:[%s247 + $0x47c] sm:$0xff]
                  %366 = vst [vmem:[%s248 + $0x268] sm:$0xff] %v365
                  %v367 = vld [vmem:[%s247 + $0x484] sm:$0xff]
                  %368 = vst [vmem:[%s248 + $0x270] sm:$0xff] %v367
                  %v369 = vld [vmem:[%s247 + $0x4b0] sm:$0xff]
                  %370 = vst [vmem:[%s248 + $0x280] sm:$0xff] %v369
                  %v371 = vld [vmem:[%s247 + $0x4b8] sm:$0xff]
                  %372 = vst [vmem:[%s248 + $0x288] sm:$0xff] %v371
                  %v373 = vld [vmem:[%s247 + $0x4c0] sm:$0xff]
                  %374 = vst [vmem:[%s248 + $0x290] sm:$0xff] %v373
                  %v375 = vld [vmem:[%s247 + $0x4ec] sm:$0xff]
                  %376 = vst [vmem:[%s248 + $0x2a0] sm:$0xff] %v375
                  %v377 = vld [vmem:[%s247 + $0x4f4] sm:$0xff]
                  %378 = vst [vmem:[%s248 + $0x2a8] sm:$0xff] %v377
                  %v379 = vld [vmem:[%s247 + $0x4fc] sm:$0xff]
                  %380 = vst [vmem:[%s248 + $0x2b0] sm:$0xff] %v379
                  %v381 = vld [vmem:[%s247 + $0x528] sm:$0xff]
                  %382 = vst [vmem:[%s248 + $0x2c0] sm:$0xff] %v381
                  %v383 = vld [vmem:[%s247 + $0x530] sm:$0xff]
                  %384 = vst [vmem:[%s248 + $0x2c8] sm:$0xff] %v383
                  %v385 = vld [vmem:[%s247 + $0x538] sm:$0xff]
                  %386 = vst [vmem:[%s248 + $0x2d0] sm:$0xff] %v385
                  %v387 = vld [vmem:[%s247 + $0x564] sm:$0xff]
                  %388 = vst [vmem:[%s248 + $0x2e0] sm:$0xff] %v387
                  %v389 = vld [vmem:[%s247 + $0x56c] sm:$0xff]
                  %390 = vst [vmem:[%s248 + $0x2e8] sm:$0xff] %v389
                  %v391 = vld [vmem:[%s247 + $0x574] sm:$0xff]
                  %392 = vst [vmem:[%s248 + $0x2f0] sm:$0xff] %v391
                  %s393 = sadd.s32 1, %s246
                  %p394 = scmp.ge.s32.totalorder %s393, %s236
                  %s395 = scalar_select %p394, 0, %s393
                  %s396 = smul.u32 %s395, 24
                  %s397 = smul.u32 %s395, 24
                  %s398 = scalar_lea.vmem %s160, %s396
                  %s399 = scalar_lea.vmem %s150, %s397 [#allocation2]
                $region56: #{discriminator_forward.3} parent=50 // loop_footer
                  %s243 = sadd.s32 %s241, 1
                $region57: #{discriminator_forward.3} parent=50 // loop_footer_branch
                  %240 = sbr.rel target = $region53
                $region58: #{discriminator_forward.3} parent=50 // loop_exit
                  _
                %s400 = sdiv.u32.pop %s235, 3
                %s401 = srem.u32.pop %s235, 3
                %s402 = smul.u32 %s400, 3
                %s403 = smul.u32 128, %s402
                %s404 = sshra.s32 %s403, 4
                %s405 = scalar_lea.vmem %s160, %s404
                %s406 = smul.u32 128, %s402
                %s407 = sshra.s32 %s406, 4
                %s408 = scalar_lea.vmem %s150, %s407 [#allocation2]
                // While loop
                $region59: #{discriminator_forward.3} parent=50 // loop_pre_header
                  _
                $region60: #{discriminator_forward.3} parent=50 // loop_header
                  %s412 = sphi 0, %s414
                  %p413 = scmp.ge.s32.totalorder %s412, %s401
                  %s417 = sphi 0, %s470
                  %s418 = sphi %s405, %s473
                  %s419 = sphi %s408, %s474
                $region61: #{discriminator_forward.3} parent=50 // loop_header_branch
                  %416 = sbr.rel (%p413) target = $region65
                $region62: #{discriminator_forward.3} parent=50 // loop_body
                  %v420 = vld [vmem:[%s418] sm:$0xff]
                  %421 = vst [vmem:[%s419] sm:$0xff] %v420
                  %v422 = vld [vmem:[%s418 + $0x3c] sm:$0xff]
                  %423 = vst [vmem:[%s419 + $0x20] sm:$0xff] %v422
                  %v424 = vld [vmem:[%s418 + $0x78] sm:$0xff]
                  %425 = vst [vmem:[%s419 + $0x40] sm:$0xff] %v424
                  %v426 = vld [vmem:[%s418 + $0xb4] sm:$0xff]
                  %427 = vst [vmem:[%s419 + $0x60] sm:$0xff] %v426
                  %v428 = vld [vmem:[%s418 + $0xf0] sm:$0xff]
                  %429 = vst [vmem:[%s419 + $0x80] sm:$0xff] %v428
                  %v430 = vld [vmem:[%s418 + $0x12c] sm:$0xff]
                  %431 = vst [vmem:[%s419 + $0xa0] sm:$0xff] %v430
                  %v432 = vld [vmem:[%s418 + $0x168] sm:$0xff]
                  %433 = vst [vmem:[%s419 + $0xc0] sm:$0xff] %v432
                  %v434 = vld [vmem:[%s418 + $0x1a4] sm:$0xff]
                  %435 = vst [vmem:[%s419 + $0xe0] sm:$0xff] %v434
                  %v436 = vld [vmem:[%s418 + $0x1e0] sm:$0xff]
                  %437 = vst [vmem:[%s419 + $0x100] sm:$0xff] %v436
                  %v438 = vld [vmem:[%s418 + $0x21c] sm:$0xff]
                  %439 = vst [vmem:[%s419 + $0x120] sm:$0xff] %v438
                  %v440 = vld [vmem:[%s418 + $0x258] sm:$0xff]
                  %441 = vst [vmem:[%s419 + $0x140] sm:$0xff] %v440
                  %v442 = vld [vmem:[%s418 + $0x294] sm:$0xff]
                  %443 = vst [vmem:[%s419 + $0x160] sm:$0xff] %v442
                  %v444 = vld [vmem:[%s418 + $0x2d0] sm:$0xff]
                  %445 = vst [vmem:[%s419 + $0x180] sm:$0xff] %v444
                  %v446 = vld [vmem:[%s418 + $0x30c] sm:$0xff]
                  %447 = vst [vmem:[%s419 + $0x1a0] sm:$0xff] %v446
                  %v448 = vld [vmem:[%s418 + $0x348] sm:$0xff]
                  %449 = vst [vmem:[%s419 + $0x1c0] sm:$0xff] %v448
                  %v450 = vld [vmem:[%s418 + $0x384] sm:$0xff]
                  %451 = vst [vmem:[%s419 + $0x1e0] sm:$0xff] %v450
                  %v452 = vld [vmem:[%s418 + $0x3c0] sm:$0xff]
                  %453 = vst [vmem:[%s419 + $0x200] sm:$0xff] %v452
                  %v454 = vld [vmem:[%s418 + $0x3fc] sm:$0xff]
                  %455 = vst [vmem:[%s419 + $0x220] sm:$0xff] %v454
                  %v456 = vld [vmem:[%s418 + $0x438] sm:$0xff]
                  %457 = vst [vmem:[%s419 + $0x240] sm:$0xff] %v456
                  %v458 = vld [vmem:[%s418 + $0x474] sm:$0xff]
                  %459 = vst [vmem:[%s419 + $0x260] sm:$0xff] %v458
                  %v460 = vld [vmem:[%s418 + $0x4b0] sm:$0xff]
                  %461 = vst [vmem:[%s419 + $0x280] sm:$0xff] %v460
                  %v462 = vld [vmem:[%s418 + $0x4ec] sm:$0xff]
                  %463 = vst [vmem:[%s419 + $0x2a0] sm:$0xff] %v462
                  %v464 = vld [vmem:[%s418 + $0x528] sm:$0xff]
                  %465 = vst [vmem:[%s419 + $0x2c0] sm:$0xff] %v464
                  %v466 = vld [vmem:[%s418 + $0x564] sm:$0xff]
                  %467 = vst [vmem:[%s419 + $0x2e0] sm:$0xff] %v466
                  %s468 = sadd.s32 1, %s417
                  %p469 = scmp.ge.s32.totalorder %s468, %s401
                  %s470 = scalar_select %p469, 0, %s468
                  %s471 = smul.u32 %s470, 8
                  %s472 = smul.u32 %s470, 8
                  %s473 = scalar_lea.vmem %s405, %s471
                  %s474 = scalar_lea.vmem %s408, %s472 [#allocation2]
                $region63: #{discriminator_forward.3} parent=50 // loop_footer
                  %s414 = sadd.s32 %s412, 1
                $region64: #{discriminator_forward.3} parent=50 // loop_footer_branch
                  %411 = sbr.rel target = $region60
                $region65: #{discriminator_forward.3} parent=50 // loop_exit
                  _
              $region51: #{discriminator_forward.3} parent=35 // pred_fallthru
                _
              %p475 = pneg %p231
              // Predicated region
              $region66: #{discriminator_forward.3} parent=35 // pred_check
                _
              $region67: #{discriminator_forward.3} parent=35 // pred_check_branch
                %477 = sbr.rel (%p231) target = $region69
              $region68: #{discriminator_forward.3} parent=35 // pred_region
                %s478 = sand.u32 %s161, 7
                %s479 = ssub.s32 %s161, %s478
                %s480 = scalar_lea.vmem %s160, %s479
                %s481 = ssub.s32 %s161, %s478
                %s482 = scalar_lea.vmem %s150, %s481 [#allocation2]
                %s483 = sshrl.u32 %s161, 3
                %s484 = sdiv.u32.pop %s483, 3
                %s485 = srem.u32.pop %s483, 3
                // While loop
                $region70: #{discriminator_forward.3} parent=68 // loop_pre_header
                  _
                $region71: #{discriminator_forward.3} parent=68 // loop_header
                  %s489 = sphi 0, %s491
                  %p490 = scmp.ge.s32.totalorder %s489, %s484
                  %s494 = sphi 0, %s643
                  %s495 = sphi %s160, %s646
                  %s496 = sphi %s150, %s647
                $region72: #{discriminator_forward.3} parent=68 // loop_header_branch
                  %493 = sbr.rel (%p490) target = $region76
                $region73: #{discriminator_forward.3} parent=68 // loop_body
                  %v497 = vld [vmem:[%s495] sm:$0xff]
                  %498 = vst [vmem:[%s496] sm:$0xff] %v497
                  %v499 = vld [vmem:[%s495 + $0x8] sm:$0xff]
                  %500 = vst [vmem:[%s496 + $0x8] sm:$0xff] %v499
                  %v501 = vld [vmem:[%s495 + $0x10] sm:$0xff]
                  %502 = vst [vmem:[%s496 + $0x10] sm:$0xff] %v501
                  %v503 = vld [vmem:[%s495 + $0x3c] sm:$0xff]
                  %504 = vst [vmem:[%s496 + $0x20] sm:$0xff] %v503
                  %v505 = vld [vmem:[%s495 + $0x44] sm:$0xff]
                  %506 = vst [vmem:[%s496 + $0x28] sm:$0xff] %v505
                  %v507 = vld [vmem:[%s495 + $0x4c] sm:$0xff]
                  %508 = vst [vmem:[%s496 + $0x30] sm:$0xff] %v507
                  %v509 = vld [vmem:[%s495 + $0x78] sm:$0xff]
                  %510 = vst [vmem:[%s496 + $0x40] sm:$0xff] %v509
                  %v511 = vld [vmem:[%s495 + $0x80] sm:$0xff]
                  %512 = vst [vmem:[%s496 + $0x48] sm:$0xff] %v511
                  %v513 = vld [vmem:[%s495 + $0x88] sm:$0xff]
                  %514 = vst [vmem:[%s496 + $0x50] sm:$0xff] %v513
                  %v515 = vld [vmem:[%s495 + $0xb4] sm:$0xff]
                  %516 = vst [vmem:[%s496 + $0x60] sm:$0xff] %v515
                  %v517 = vld [vmem:[%s495 + $0xbc] sm:$0xff]
                  %518 = vst [vmem:[%s496 + $0x68] sm:$0xff] %v517
                  %v519 = vld [vmem:[%s495 + $0xc4] sm:$0xff]
                  %520 = vst [vmem:[%s496 + $0x70] sm:$0xff] %v519
                  %v521 = vld [vmem:[%s495 + $0xf0] sm:$0xff]
                  %522 = vst [vmem:[%s496 + $0x80] sm:$0xff] %v521
                  %v523 = vld [vmem:[%s495 + $0xf8] sm:$0xff]
                  %524 = vst [vmem:[%s496 + $0x88] sm:$0xff] %v523
                  %v525 = vld [vmem:[%s495 + $0x100] sm:$0xff]
                  %526 = vst [vmem:[%s496 + $0x90] sm:$0xff] %v525
                  %v527 = vld [vmem:[%s495 + $0x12c] sm:$0xff]
                  %528 = vst [vmem:[%s496 + $0xa0] sm:$0xff] %v527
                  %v529 = vld [vmem:[%s495 + $0x134] sm:$0xff]
                  %530 = vst [vmem:[%s496 + $0xa8] sm:$0xff] %v529
                  %v531 = vld [vmem:[%s495 + $0x13c] sm:$0xff]
                  %532 = vst [vmem:[%s496 + $0xb0] sm:$0xff] %v531
                  %v533 = vld [vmem:[%s495 + $0x168] sm:$0xff]
                  %534 = vst [vmem:[%s496 + $0xc0] sm:$0xff] %v533
                  %v535 = vld [vmem:[%s495 + $0x170] sm:$0xff]
                  %536 = vst [vmem:[%s496 + $0xc8] sm:$0xff] %v535
                  %v537 = vld [vmem:[%s495 + $0x178] sm:$0xff]
                  %538 = vst [vmem:[%s496 + $0xd0] sm:$0xff] %v537
                  %v539 = vld [vmem:[%s495 + $0x1a4] sm:$0xff]
                  %540 = vst [vmem:[%s496 + $0xe0] sm:$0xff] %v539
                  %v541 = vld [vmem:[%s495 + $0x1ac] sm:$0xff]
                  %542 = vst [vmem:[%s496 + $0xe8] sm:$0xff] %v541
                  %v543 = vld [vmem:[%s495 + $0x1b4] sm:$0xff]
                  %544 = vst [vmem:[%s496 + $0xf0] sm:$0xff] %v543
                  %v545 = vld [vmem:[%s495 + $0x1e0] sm:$0xff]
                  %546 = vst [vmem:[%s496 + $0x100] sm:$0xff] %v545
                  %v547 = vld [vmem:[%s495 + $0x1e8] sm:$0xff]
                  %548 = vst [vmem:[%s496 + $0x108] sm:$0xff] %v547
                  %v549 = vld [vmem:[%s495 + $0x1f0] sm:$0xff]
                  %550 = vst [vmem:[%s496 + $0x110] sm:$0xff] %v549
                  %v551 = vld [vmem:[%s495 + $0x21c] sm:$0xff]
                  %552 = vst [vmem:[%s496 + $0x120] sm:$0xff] %v551
                  %v553 = vld [vmem:[%s495 + $0x224] sm:$0xff]
                  %554 = vst [vmem:[%s496 + $0x128] sm:$0xff] %v553
                  %v555 = vld [vmem:[%s495 + $0x22c] sm:$0xff]
                  %556 = vst [vmem:[%s496 + $0x130] sm:$0xff] %v555
                  %v557 = vld [vmem:[%s495 + $0x258] sm:$0xff]
                  %558 = vst [vmem:[%s496 + $0x140] sm:$0xff] %v557
                  %v559 = vld [vmem:[%s495 + $0x260] sm:$0xff]
                  %560 = vst [vmem:[%s496 + $0x148] sm:$0xff] %v559
                  %v561 = vld [vmem:[%s495 + $0x268] sm:$0xff]
                  %562 = vst [vmem:[%s496 + $0x150] sm:$0xff] %v561
                  %v563 = vld [vmem:[%s495 + $0x294] sm:$0xff]
                  %564 = vst [vmem:[%s496 + $0x160] sm:$0xff] %v563
                  %v565 = vld [vmem:[%s495 + $0x29c] sm:$0xff]
                  %566 = vst [vmem:[%s496 + $0x168] sm:$0xff] %v565
                  %v567 = vld [vmem:[%s495 + $0x2a4] sm:$0xff]
                  %568 = vst [vmem:[%s496 + $0x170] sm:$0xff] %v567
                  %v569 = vld [vmem:[%s495 + $0x2d0] sm:$0xff]
                  %570 = vst [vmem:[%s496 + $0x180] sm:$0xff] %v569
                  %v571 = vld [vmem:[%s495 + $0x2d8] sm:$0xff]
                  %572 = vst [vmem:[%s496 + $0x188] sm:$0xff] %v571
                  %v573 = vld [vmem:[%s495 + $0x2e0] sm:$0xff]
                  %574 = vst [vmem:[%s496 + $0x190] sm:$0xff] %v573
                  %v575 = vld [vmem:[%s495 + $0x30c] sm:$0xff]
                  %576 = vst [vmem:[%s496 + $0x1a0] sm:$0xff] %v575
                  %v577 = vld [vmem:[%s495 + $0x314] sm:$0xff]
                  %578 = vst [vmem:[%s496 + $0x1a8] sm:$0xff] %v577
                  %v579 = vld [vmem:[%s495 + $0x31c] sm:$0xff]
                  %580 = vst [vmem:[%s496 + $0x1b0] sm:$0xff] %v579
                  %v581 = vld [vmem:[%s495 + $0x348] sm:$0xff]
                  %582 = vst [vmem:[%s496 + $0x1c0] sm:$0xff] %v581
                  %v583 = vld [vmem:[%s495 + $0x350] sm:$0xff]
                  %584 = vst [vmem:[%s496 + $0x1c8] sm:$0xff] %v583
                  %v585 = vld [vmem:[%s495 + $0x358] sm:$0xff]
                  %586 = vst [vmem:[%s496 + $0x1d0] sm:$0xff] %v585
                  %v587 = vld [vmem:[%s495 + $0x384] sm:$0xff]
                  %588 = vst [vmem:[%s496 + $0x1e0] sm:$0xff] %v587
                  %v589 = vld [vmem:[%s495 + $0x38c] sm:$0xff]
                  %590 = vst [vmem:[%s496 + $0x1e8] sm:$0xff] %v589
                  %v591 = vld [vmem:[%s495 + $0x394] sm:$0xff]
                  %592 = vst [vmem:[%s496 + $0x1f0] sm:$0xff] %v591
                  %v593 = vld [vmem:[%s495 + $0x3c0] sm:$0xff]
                  %594 = vst [vmem:[%s496 + $0x200] sm:$0xff] %v593
                  %v595 = vld [vmem:[%s495 + $0x3c8] sm:$0xff]
                  %596 = vst [vmem:[%s496 + $0x208] sm:$0xff] %v595
                  %v597 = vld [vmem:[%s495 + $0x3d0] sm:$0xff]
                  %598 = vst [vmem:[%s496 + $0x210] sm:$0xff] %v597
                  %v599 = vld [vmem:[%s495 + $0x3fc] sm:$0xff]
                  %600 = vst [vmem:[%s496 + $0x220] sm:$0xff] %v599
                  %v601 = vld [vmem:[%s495 + $0x404] sm:$0xff]
                  %602 = vst [vmem:[%s496 + $0x228] sm:$0xff] %v601
                  %v603 = vld [vmem:[%s495 + $0x40c] sm:$0xff]
                  %604 = vst [vmem:[%s496 + $0x230] sm:$0xff] %v603
                  %v605 = vld [vmem:[%s495 + $0x438] sm:$0xff]
                  %606 = vst [vmem:[%s496 + $0x240] sm:$0xff] %v605
                  %v607 = vld [vmem:[%s495 + $0x440] sm:$0xff]
                  %608 = vst [vmem:[%s496 + $0x248] sm:$0xff] %v607
                  %v609 = vld [vmem:[%s495 + $0x448] sm:$0xff]
                  %610 = vst [vmem:[%s496 + $0x250] sm:$0xff] %v609
                  %v611 = vld [vmem:[%s495 + $0x474] sm:$0xff]
                  %612 = vst [vmem:[%s496 + $0x260] sm:$0xff] %v611
                  %v613 = vld [vmem:[%s495 + $0x47c] sm:$0xff]
                  %614 = vst [vmem:[%s496 + $0x268] sm:$0xff] %v613
                  %v615 = vld [vmem:[%s495 + $0x484] sm:$0xff]
                  %616 = vst [vmem:[%s496 + $0x270] sm:$0xff] %v615
                  %v617 = vld [vmem:[%s495 + $0x4b0] sm:$0xff]
                  %618 = vst [vmem:[%s496 + $0x280] sm:$0xff] %v617
                  %v619 = vld [vmem:[%s495 + $0x4b8] sm:$0xff]
                  %620 = vst [vmem:[%s496 + $0x288] sm:$0xff] %v619
                  %v621 = vld [vmem:[%s495 + $0x4c0] sm:$0xff]
                  %622 = vst [vmem:[%s496 + $0x290] sm:$0xff] %v621
                  %v623 = vld [vmem:[%s495 + $0x4ec] sm:$0xff]
                  %624 = vst [vmem:[%s496 + $0x2a0] sm:$0xff] %v623
                  %v625 = vld [vmem:[%s495 + $0x4f4] sm:$0xff]
                  %626 = vst [vmem:[%s496 + $0x2a8] sm:$0xff] %v625
                  %v627 = vld [vmem:[%s495 + $0x4fc] sm:$0xff]
                  %628 = vst [vmem:[%s496 + $0x2b0] sm:$0xff] %v627
                  %v629 = vld [vmem:[%s495 + $0x528] sm:$0xff]
                  %630 = vst [vmem:[%s496 + $0x2c0] sm:$0xff] %v629
                  %v631 = vld [vmem:[%s495 + $0x530] sm:$0xff]
                  %632 = vst [vmem:[%s496 + $0x2c8] sm:$0xff] %v631
                  %v633 = vld [vmem:[%s495 + $0x538] sm:$0xff]
                  %634 = vst [vmem:[%s496 + $0x2d0] sm:$0xff] %v633
                  %v635 = vld [vmem:[%s495 + $0x564] sm:$0xff]
                  %636 = vst [vmem:[%s496 + $0x2e0] sm:$0xff] %v635
                  %v637 = vld [vmem:[%s495 + $0x56c] sm:$0xff]
                  %638 = vst [vmem:[%s496 + $0x2e8] sm:$0xff] %v637
                  %v639 = vld [vmem:[%s495 + $0x574] sm:$0xff]
                  %640 = vst [vmem:[%s496 + $0x2f0] sm:$0xff] %v639
                  %s641 = sadd.s32 1, %s494
                  %p642 = scmp.ge.s32.totalorder %s641, %s484
                  %s643 = scalar_select %p642, 0, %s641
                  %s644 = smul.u32 %s643, 24
                  %s645 = smul.u32 %s643, 24
                  %s646 = scalar_lea.vmem %s160, %s644
                  %s647 = scalar_lea.vmem %s150, %s645 [#allocation2]
                $region74: #{discriminator_forward.3} parent=68 // loop_footer
                  %s491 = sadd.s32 %s489, 1
                $region75: #{discriminator_forward.3} parent=68 // loop_footer_branch
                  %488 = sbr.rel target = $region71
                $region76: #{discriminator_forward.3} parent=68 // loop_exit
                  _
                %s648 = sdiv.u32.pop %s483, 3
                %s649 = srem.u32.pop %s483, 3
                %s650 = smul.u32 %s648, 3
                %s651 = smul.u32 128, %s650
                %s652 = sshra.s32 %s651, 4
                %s653 = scalar_lea.vmem %s160, %s652
                %s654 = smul.u32 128, %s650
                %s655 = sshra.s32 %s654, 4
                %s656 = scalar_lea.vmem %s150, %s655 [#allocation2]
                // While loop
                $region77: #{discriminator_forward.3} parent=68 // loop_pre_header
                  _
                $region78: #{discriminator_forward.3} parent=68 // loop_header
                  %s660 = sphi 0, %s662
                  %p661 = scmp.ge.s32.totalorder %s660, %s649
                  %s665 = sphi 0, %s718
                  %s666 = sphi %s653, %s721
                  %s667 = sphi %s656, %s722
                $region79: #{discriminator_forward.3} parent=68 // loop_header_branch
                  %664 = sbr.rel (%p661) target = $region83
                $region80: #{discriminator_forward.3} parent=68 // loop_body
                  %v668 = vld [vmem:[%s666] sm:$0xff]
                  %669 = vst [vmem:[%s667] sm:$0xff] %v668
                  %v670 = vld [vmem:[%s666 + $0x3c] sm:$0xff]
                  %671 = vst [vmem:[%s667 + $0x20] sm:$0xff] %v670
                  %v672 = vld [vmem:[%s666 + $0x78] sm:$0xff]
                  %673 = vst [vmem:[%s667 + $0x40] sm:$0xff] %v672
                  %v674 = vld [vmem:[%s666 + $0xb4] sm:$0xff]
                  %675 = vst [vmem:[%s667 + $0x60] sm:$0xff] %v674
                  %v676 = vld [vmem:[%s666 + $0xf0] sm:$0xff]
                  %677 = vst [vmem:[%s667 + $0x80] sm:$0xff] %v676
                  %v678 = vld [vmem:[%s666 + $0x12c] sm:$0xff]
                  %679 = vst [vmem:[%s667 + $0xa0] sm:$0xff] %v678
                  %v680 = vld [vmem:[%s666 + $0x168] sm:$0xff]
                  %681 = vst [vmem:[%s667 + $0xc0] sm:$0xff] %v680
                  %v682 = vld [vmem:[%s666 + $0x1a4] sm:$0xff]
                  %683 = vst [vmem:[%s667 + $0xe0] sm:$0xff] %v682
                  %v684 = vld [vmem:[%s666 + $0x1e0] sm:$0xff]
                  %685 = vst [vmem:[%s667 + $0x100] sm:$0xff] %v684
                  %v686 = vld [vmem:[%s666 + $0x21c] sm:$0xff]
                  %687 = vst [vmem:[%s667 + $0x120] sm:$0xff] %v686
                  %v688 = vld [vmem:[%s666 + $0x258] sm:$0xff]
                  %689 = vst [vmem:[%s667 + $0x140] sm:$0xff] %v688
                  %v690 = vld [vmem:[%s666 + $0x294] sm:$0xff]
                  %691 = vst [vmem:[%s667 + $0x160] sm:$0xff] %v690
                  %v692 = vld [vmem:[%s666 + $0x2d0] sm:$0xff]
                  %693 = vst [vmem:[%s667 + $0x180] sm:$0xff] %v692
                  %v694 = vld [vmem:[%s666 + $0x30c] sm:$0xff]
                  %695 = vst [vmem:[%s667 + $0x1a0] sm:$0xff] %v694
                  %v696 = vld [vmem:[%s666 + $0x348] sm:$0xff]
                  %697 = vst [vmem:[%s667 + $0x1c0] sm:$0xff] %v696
                  %v698 = vld [vmem:[%s666 + $0x384] sm:$0xff]
                  %699 = vst [vmem:[%s667 + $0x1e0] sm:$0xff] %v698
                  %v700 = vld [vmem:[%s666 + $0x3c0] sm:$0xff]
                  %701 = vst [vmem:[%s667 + $0x200] sm:$0xff] %v700
                  %v702 = vld [vmem:[%s666 + $0x3fc] sm:$0xff]
                  %703 = vst [vmem:[%s667 + $0x220] sm:$0xff] %v702
                  %v704 = vld [vmem:[%s666 + $0x438] sm:$0xff]
                  %705 = vst [vmem:[%s667 + $0x240] sm:$0xff] %v704
                  %v706 = vld [vmem:[%s666 + $0x474] sm:$0xff]
                  %707 = vst [vmem:[%s667 + $0x260] sm:$0xff] %v706
                  %v708 = vld [vmem:[%s666 + $0x4b0] sm:$0xff]
                  %709 = vst [vmem:[%s667 + $0x280] sm:$0xff] %v708
                  %v710 = vld [vmem:[%s666 + $0x4ec] sm:$0xff]
                  %711 = vst [vmem:[%s667 + $0x2a0] sm:$0xff] %v710
                  %v712 = vld [vmem:[%s666 + $0x528] sm:$0xff]
                  %713 = vst [vmem:[%s667 + $0x2c0] sm:$0xff] %v712
                  %v714 = vld [vmem:[%s666 + $0x564] sm:$0xff]
                  %715 = vst [vmem:[%s667 + $0x2e0] sm:$0xff] %v714
                  %s716 = sadd.s32 1, %s665
                  %p717 = scmp.ge.s32.totalorder %s716, %s649
                  %s718 = scalar_select %p717, 0, %s716
                  %s719 = smul.u32 %s718, 8
                  %s720 = smul.u32 %s718, 8
                  %s721 = scalar_lea.vmem %s653, %s719
                  %s722 = scalar_lea.vmem %s656, %s720 [#allocation2]
                $region81: #{discriminator_forward.3} parent=68 // loop_footer
                  %s662 = sadd.s32 %s660, 1
                $region82: #{discriminator_forward.3} parent=68 // loop_footer_branch
                  %659 = sbr.rel target = $region78
                $region83: #{discriminator_forward.3} parent=68 // loop_exit
                  _
                %s723 = sshll.u32 1, %s478
                %s724 = ssub.s32 %s723, 1
                loop: start=0, step=1, limit=1
                $region84: #{discriminator_forward.3} parent=68 // loop_pre_header
                  _
                $region85: #{discriminator_forward.3} parent=68 // loop_header
                  %s726 = sphi 0, %s730
                  %p727 = scmp.ge.s32.totalorder %s726, 1
                  %s731 = sphi %s480, %s480
                  %s732 = sphi %s482, %s482
                $region86: #{discriminator_forward.3} parent=68 // loop_header_branch
                  %729 = sbr.rel (%p727) target = $region90
                $region87: #{discriminator_forward.3} parent=68 // loop_body
                  %v733 = vld [vmem:[%s731] sm:%s724]
                  %734 = vst [vmem:[%s732] sm:%s724] %v733
                  %v735 = vld [vmem:[%s731 + $0x3c] sm:%s724]
                  %736 = vst [vmem:[%s732 + $0x20] sm:%s724] %v735
                  %v737 = vld [vmem:[%s731 + $0x78] sm:%s724]
                  %738 = vst [vmem:[%s732 + $0x40] sm:%s724] %v737
                  %v739 = vld [vmem:[%s731 + $0xb4] sm:%s724]
                  %740 = vst [vmem:[%s732 + $0x60] sm:%s724] %v739
                  %v741 = vld [vmem:[%s731 + $0xf0] sm:%s724]
                  %742 = vst [vmem:[%s732 + $0x80] sm:%s724] %v741
                  %v743 = vld [vmem:[%s731 + $0x12c] sm:%s724]
                  %744 = vst [vmem:[%s732 + $0xa0] sm:%s724] %v743
                  %v745 = vld [vmem:[%s731 + $0x168] sm:%s724]
                  %746 = vst [vmem:[%s732 + $0xc0] sm:%s724] %v745
                  %v747 = vld [vmem:[%s731 + $0x1a4] sm:%s724]
                  %748 = vst [vmem:[%s732 + $0xe0] sm:%s724] %v747
                  %v749 = vld [vmem:[%s731 + $0x1e0] sm:%s724]
                  %750 = vst [vmem:[%s732 + $0x100] sm:%s724] %v749
                  %v751 = vld [vmem:[%s731 + $0x21c] sm:%s724]
                  %752 = vst [vmem:[%s732 + $0x120] sm:%s724] %v751
                  %v753 = vld [vmem:[%s731 + $0x258] sm:%s724]
                  %754 = vst [vmem:[%s732 + $0x140] sm:%s724] %v753
                  %v755 = vld [vmem:[%s731 + $0x294] sm:%s724]
                  %756 = vst [vmem:[%s732 + $0x160] sm:%s724] %v755
                  %v757 = vld [vmem:[%s731 + $0x2d0] sm:%s724]
                  %758 = vst [vmem:[%s732 + $0x180] sm:%s724] %v757
                  %v759 = vld [vmem:[%s731 + $0x30c] sm:%s724]
                  %760 = vst [vmem:[%s732 + $0x1a0] sm:%s724] %v759
                  %v761 = vld [vmem:[%s731 + $0x348] sm:%s724]
                  %762 = vst [vmem:[%s732 + $0x1c0] sm:%s724] %v761
                  %v763 = vld [vmem:[%s731 + $0x384] sm:%s724]
                  %764 = vst [vmem:[%s732 + $0x1e0] sm:%s724] %v763
                  %v765 = vld [vmem:[%s731 + $0x3c0] sm:%s724]
                  %766 = vst [vmem:[%s732 + $0x200] sm:%s724] %v765
                  %v767 = vld [vmem:[%s731 + $0x3fc] sm:%s724]
                  %768 = vst [vmem:[%s732 + $0x220] sm:%s724] %v767
                  %v769 = vld [vmem:[%s731 + $0x438] sm:%s724]
                  %770 = vst [vmem:[%s732 + $0x240] sm:%s724] %v769
                  %v771 = vld [vmem:[%s731 + $0x474] sm:%s724]
                  %772 = vst [vmem:[%s732 + $0x260] sm:%s724] %v771
                  %v773 = vld [vmem:[%s731 + $0x4b0] sm:%s724]
                  %774 = vst [vmem:[%s732 + $0x280] sm:%s724] %v773
                  %v775 = vld [vmem:[%s731 + $0x4ec] sm:%s724]
                  %776 = vst [vmem:[%s732 + $0x2a0] sm:%s724] %v775
                  %v777 = vld [vmem:[%s731 + $0x528] sm:%s724]
                  %778 = vst [vmem:[%s732 + $0x2c0] sm:%s724] %v777
                  %v779 = vld [vmem:[%s731 + $0x564] sm:%s724]
                  %780 = vst [vmem:[%s732 + $0x2e0] sm:%s724] %v779
                $region88: #{discriminator_forward.3} parent=68 // loop_footer
                  %s730 = sadd.s32 1, %s726
                $region89: #{discriminator_forward.3} parent=68 // loop_footer_branch
                  %725 = sbr.rel target = $region85
                $region90: #{discriminator_forward.3} parent=68 // loop_exit
                  _
              $region69: #{discriminator_forward.3} parent=35 // pred_fallthru
                _
            $region36: #{discriminator_forward.3} parent=31 // pred_fallthru
              _
            // Predicated region
            $region37: #{discriminator_forward.3} parent=31 // pred_check
              %p169 = pneg %p165
            $region38: #{discriminator_forward.3} parent=31 // pred_check_branch
              %171 = sbr.rel (%p169) target = $region40
            $region39: #{discriminator_forward.3} parent=31 // pred_region
              %s172 = sshll.u32 1, %s161
              %s173 = ssub.s32 %s172, 1
              loop: start=0, step=1, limit=1
              $region41: #{discriminator_forward.3} parent=39 // loop_pre_header
                _
              $region42: #{discriminator_forward.3} parent=39 // loop_header
                %s175 = sphi 0, %s179
                %p176 = scmp.ge.s32.totalorder %s175, 1
                %s180 = sphi %s160, %s160
                %s181 = sphi %s150, %s150
              $region43: #{discriminator_forward.3} parent=39 // loop_header_branch
                %178 = sbr.rel (%p176) target = $region47
              $region44: #{discriminator_forward.3} parent=39 // loop_body
                %v182 = vld [vmem:[%s180] sm:%s173]
                %183 = vst [vmem:[%s181] sm:%s173] %v182
                %v184 = vld [vmem:[%s180 + $0x3c] sm:%s173]
                %185 = vst [vmem:[%s181 + $0x20] sm:%s173] %v184
                %v186 = vld [vmem:[%s180 + $0x78] sm:%s173]
                %187 = vst [vmem:[%s181 + $0x40] sm:%s173] %v186
                %v188 = vld [vmem:[%s180 + $0xb4] sm:%s173]
                %189 = vst [vmem:[%s181 + $0x60] sm:%s173] %v188
                %v190 = vld [vmem:[%s180 + $0xf0] sm:%s173]
                %191 = vst [vmem:[%s181 + $0x80] sm:%s173] %v190
                %v192 = vld [vmem:[%s180 + $0x12c] sm:%s173]
                %193 = vst [vmem:[%s181 + $0xa0] sm:%s173] %v192
                %v194 = vld [vmem:[%s180 + $0x168] sm:%s173]
                %195 = vst [vmem:[%s181 + $0xc0] sm:%s173] %v194
                %v196 = vld [vmem:[%s180 + $0x1a4] sm:%s173]
                %197 = vst [vmem:[%s181 + $0xe0] sm:%s173] %v196
                %v198 = vld [vmem:[%s180 + $0x1e0] sm:%s173]
                %199 = vst [vmem:[%s181 + $0x100] sm:%s173] %v198
                %v200 = vld [vmem:[%s180 + $0x21c] sm:%s173]
                %201 = vst [vmem:[%s181 + $0x120] sm:%s173] %v200
                %v202 = vld [vmem:[%s180 + $0x258] sm:%s173]
                %203 = vst [vmem:[%s181 + $0x140] sm:%s173] %v202
                %v204 = vld [vmem:[%s180 + $0x294] sm:%s173]
                %205 = vst [vmem:[%s181 + $0x160] sm:%s173] %v204
                %v206 = vld [vmem:[%s180 + $0x2d0] sm:%s173]
                %207 = vst [vmem:[%s181 + $0x180] sm:%s173] %v206
                %v208 = vld [vmem:[%s180 + $0x30c] sm:%s173]
                %209 = vst [vmem:[%s181 + $0x1a0] sm:%s173] %v208
                %v210 = vld [vmem:[%s180 + $0x348] sm:%s173]
                %211 = vst [vmem:[%s181 + $0x1c0] sm:%s173] %v210
                %v212 = vld [vmem:[%s180 + $0x384] sm:%s173]
                %213 = vst [vmem:[%s181 + $0x1e0] sm:%s173] %v212
                %v214 = vld [vmem:[%s180 + $0x3c0] sm:%s173]
                %215 = vst [vmem:[%s181 + $0x200] sm:%s173] %v214
                %v216 = vld [vmem:[%s180 + $0x3fc] sm:%s173]
                %217 = vst [vmem:[%s181 + $0x220] sm:%s173] %v216
                %v218 = vld [vmem:[%s180 + $0x438] sm:%s173]
                %219 = vst [vmem:[%s181 + $0x240] sm:%s173] %v218
                %v220 = vld [vmem:[%s180 + $0x474] sm:%s173]
                %221 = vst [vmem:[%s181 + $0x260] sm:%s173] %v220
                %v222 = vld [vmem:[%s180 + $0x4b0] sm:%s173]
                %223 = vst [vmem:[%s181 + $0x280] sm:%s173] %v222
                %v224 = vld [vmem:[%s180 + $0x4ec] sm:%s173]
                %225 = vst [vmem:[%s181 + $0x2a0] sm:%s173] %v224
                %v226 = vld [vmem:[%s180 + $0x528] sm:%s173]
                %227 = vst [vmem:[%s181 + $0x2c0] sm:%s173] %v226
                %v228 = vld [vmem:[%s180 + $0x564] sm:%s173]
                %229 = vst [vmem:[%s181 + $0x2e0] sm:%s173] %v228
              $region45: #{discriminator_forward.3} parent=39 // loop_footer
                %s179 = sadd.s32 1, %s175
              $region46: #{discriminator_forward.3} parent=39 // loop_footer_branch
                %174 = sbr.rel target = $region42
              $region47: #{discriminator_forward.3} parent=39 // loop_exit
                _
            $region40: #{discriminator_forward.3} parent=31 // pred_fallthru
              _
          $region32: #{discriminator_forward.3} parent=27 // pred_fallthru
            _
          %781 = vnop
        $region28: #{discriminator_forward.3} parent=23 // pred_fallthru
          _
      $region24: #{discriminator_forward.3} parent=5 // pred_fallthru
        _
      %p782 = scmp.le.s32.totalorder 1, %s9
      %p783 = scmp.lt.s32.totalorder %s9, 5
      %p784 = pnand %p782, %p783
      %p785 = pneg %p784
      // Predicated region
      $region91: #{discriminator_forward.3} parent=5 // pred_check
        _
      $region92: #{discriminator_forward.3} parent=5 // pred_check_branch
        %787 = sbr.rel (%p784) target = $region94
      $region93: #{discriminator_forward.3} parent=5 // pred_region
        %s788 = ssub.s32 %s9, 1
        %s789 = sand.u32 %s36, 1
        %s790 = sand.u32 %s36, 1
        %s791 = smul.addr %s790, 768
        %s792 = scalar_lea.vmem [#allocation2], %s791
        // Predicated region
        $region95: #{discriminator_forward.3} parent=93 // pred_check
          %p793 = pneg %p49
        $region96: #{discriminator_forward.3} parent=93 // pred_check_branch
          %795 = sbr.rel (%p793) target = $region98
        $region97: #{discriminator_forward.3} parent=93 // pred_region
          _
        $region98: #{discriminator_forward.3} parent=93 // pred_fallthru
          _
        %s796 = sand.u32 %s36, 1
        %s797 = sand.u32 %s36, 1
        %s798 = smul.addr %s797, 768
        %s799 = scalar_lea.vmem [#allocation2], %s798
        %p800 = pneg %p49
        %p801 = pneg %p46
        %p802 = pneg %p70
        %p803 = pneg %p67
        %p804 = pneg %p91
        %p805 = pneg %p88
        %p806 = pneg %p119
        %p807 = pneg %p116
        %s808 = sand.u32 %s106, 1
        %s809 = sand.u32 %s106, 1
        %s810 = smul.addr %s809, 64
        %s811 = scalar_lea.vmem [#allocation3], %s810
        %s812 = smul.u32 8, %s19
        %s813 = ssub.s32 15, %s812
        %p814 = scmp.lt.s32.totalorder %s813, 8
        %s815 = scalar_select %p814, %s813, 8
        %s816 = smul.u32 1536, %s815
        %s817 = smul.u32 8, %s19
        %s818 = ssub.s32 15, %s817
        %p819 = scmp.lt.s32.totalorder %s818, 8
        %s820 = scalar_select %p819, %s818, 8
        %s821 = smul.u32 128, %s820
        %v823 = vld [vmem:[%s1] sm:$0xf]
        %v824 = vld [vmem:[%s1 + $0x4] sm:$0xf]
        %v825 = vld [vmem:[%s2] sm:$0xff]
        %v826 = vld [vmem:[%s2 + $0x8] sm:$0xff]
        %v827 = vld [vmem:[%s792] sm:$0xff]
        %v828 = vld [vmem:[%s792 + $0x8] sm:$0xff]
        %v829 = vld [vmem:[%s792 + $0x10] sm:$0xff]
        %v830 = vld [vmem:[%s792 + $0x18] sm:$0xff]
        %v831 = vld [vmem:[%s792 + $0x20] sm:$0xff]
        %v832 = vld [vmem:[%s792 + $0x28] sm:$0xff]
        %v833 = vld [vmem:[%s792 + $0x30] sm:$0xff]
        %v834 = vld [vmem:[%s792 + $0x38] sm:$0xff]
        %v835 = vld [vmem:[%s792 + $0x40] sm:$0xff]
        %v836 = vld [vmem:[%s792 + $0x48] sm:$0xff]
        %v837 = vld [vmem:[%s792 + $0x50] sm:$0xff]
        %v838 = vld [vmem:[%s792 + $0x58] sm:$0xff]
        %v839 = vld [vmem:[%s792 + $0x60] sm:$0xff]
        %v840 = vld [vmem:[%s792 + $0x68] sm:$0xff]
        %v841 = vld [vmem:[%s792 + $0x70] sm:$0xff]
        %v842 = vld [vmem:[%s792 + $0x78] sm:$0xff]
        %v843 = vld [vmem:[%s792 + $0x80] sm:$0xff]
        %v844 = vld [vmem:[%s792 + $0x88] sm:$0xff]
        %v845 = vld [vmem:[%s792 + $0x90] sm:$0xff]
        %v846 = vld [vmem:[%s792 + $0x98] sm:$0xff]
        %v847 = vld [vmem:[%s792 + $0xa0] sm:$0xff]
        %v848 = vld [vmem:[%s792 + $0xa8] sm:$0xff]
        %v849 = vld [vmem:[%s792 + $0xb0] sm:$0xff]
        %v850 = vld [vmem:[%s792 + $0xb8] sm:$0xff]
        %852 = vset.pattern.permute.xlu0 0
        %853 = vperm.xlu0 %852, %v825
        %v854 = vpop.permute.xlu0 %853
        %857 = vset.pattern.permute.xlu0 0
        %858 = vperm.xlu0 %857, %v826
        %v859 = vpop.permute.xlu0 %858
        %v863 = vunpack.c.l.b16 %v823
        %v864 = vunpack.c.l.b16 %v824
        %v865 = vpack.c.b16 %v864, %v863
        %v890 = vunpack.c.l.b16 %v827
        %v891 = vunpack.c.h.b16 %v827
        %v892 = vunpack.c.l.b16 %v828
        %v893 = vunpack.c.h.b16 %v828
        %v894 = vunpack.c.l.b16 %v829
        %v895 = vunpack.c.h.b16 %v829
        %v896 = vunpack.c.l.b16 %v830
        %v897 = vunpack.c.h.b16 %v830
        %v898 = vunpack.c.l.b16 %v831
        %v899 = vunpack.c.h.b16 %v831
        %v900 = vunpack.c.l.b16 %v832
        %v901 = vunpack.c.h.b16 %v832
        %v902 = vunpack.c.l.b16 %v833
        %v903 = vunpack.c.h.b16 %v833
        %v904 = vunpack.c.l.b16 %v834
        %v905 = vunpack.c.h.b16 %v834
        %v906 = vunpack.c.l.b16 %v835
        %v907 = vunpack.c.h.b16 %v835
        %v908 = vunpack.c.l.b16 %v836
        %v909 = vunpack.c.h.b16 %v836
        %v910 = vunpack.c.l.b16 %v837
        %v911 = vunpack.c.h.b16 %v837
        %v912 = vunpack.c.l.b16 %v838
        %v913 = vunpack.c.h.b16 %v838
        %v914 = vunpack.c.l.b16 %v839
        %v915 = vunpack.c.h.b16 %v839
        %v916 = vunpack.c.l.b16 %v840
        %v917 = vunpack.c.h.b16 %v840
        %v918 = vunpack.c.l.b16 %v841
        %v919 = vunpack.c.h.b16 %v841
        %v920 = vunpack.c.l.b16 %v842
        %v921 = vunpack.c.h.b16 %v842
        %v922 = vunpack.c.l.b16 %v843
        %v923 = vunpack.c.h.b16 %v843
        %v924 = vunpack.c.l.b16 %v844
        %v925 = vunpack.c.h.b16 %v844
        %v926 = vunpack.c.l.b16 %v845
        %v927 = vunpack.c.h.b16 %v845
        %v928 = vunpack.c.l.b16 %v846
        %v929 = vunpack.c.h.b16 %v846
        %v930 = vunpack.c.l.b16 %v847
        %v931 = vunpack.c.h.b16 %v847
        %v932 = vunpack.c.l.b16 %v848
        %v933 = vunpack.c.h.b16 %v848
        %v934 = vunpack.c.l.b16 %v849
        %v935 = vunpack.c.h.b16 %v849
        %v936 = vunpack.c.l.b16 %v850
        %v937 = vunpack.c.h.b16 %v850
        %v938 = vpack.c.b16 %v898, %v890
        %v939 = vpack.c.b16 %v899, %v891
        %v940 = vpack.c.b16 %v900, %v892
        %v941 = vpack.c.b16 %v901, %v893
        %v942 = vpack.c.b16 %v902, %v894
        %v943 = vpack.c.b16 %v903, %v895
        %v944 = vpack.c.b16 %v904, %v896
        %v945 = vpack.c.b16 %v905, %v897
        %v946 = vpack.c.b16 %v914, %v906
        %v947 = vpack.c.b16 %v915, %v907
        %v948 = vpack.c.b16 %v916, %v908
        %v949 = vpack.c.b16 %v917, %v909
        %v950 = vpack.c.b16 %v918, %v910
        %v951 = vpack.c.b16 %v919, %v911
        %v952 = vpack.c.b16 %v920, %v912
        %v953 = vpack.c.b16 %v921, %v913
        %v954 = vpack.c.b16 %v930, %v922
        %v955 = vpack.c.b16 %v931, %v923
        %v956 = vpack.c.b16 %v932, %v924
        %v957 = vpack.c.b16 %v933, %v925
        %v958 = vpack.c.b16 %v934, %v926
        %v959 = vpack.c.b16 %v935, %v927
        %v960 = vpack.c.b16 %v936, %v928
        %v961 = vpack.c.b16 %v937, %v929
        %vm986 = vcmask 392192
        %v988 = vsel %vm986, %v865, 0
        %990 = vmatprep.subr.bf16.mxu0 0
        %991 = vmatpush1.bf16.msra.mxu0 0
        %992 = vmatprep.subr.bf16.mxu0 0
        %993 = vmatpush1.bf16.msra.mxu0 0
        %994 = vmatprep.subr.bf16.mxu0 0
        %995 = vmatpush1.bf16.msra.mxu0 0
        %996 = vmatprep.subr.bf16.mxu0 0
        %997 = vmatpush1.bf16.msra.mxu0 0
        %998 = vmatprep.subr.bf16.mxu0 0
        %999 = vmatpush1.bf16.msra.mxu0 0
        %1000 = vmatprep.subr.bf16.mxu0 %v955
        %1001 = vmatpush1.bf16.msra.mxu0 %v954
        %1002 = vmatprep.subr.bf16.mxu0 %v947
        %1003 = vmatpush1.bf16.msra.mxu0 %v946
        %1004 = vmatprep.subr.bf16.mxu0 %v939
        %1005 = vmatpush1.bf16.msra.mxu0 %v938
        %1006 = vmatprep.subr.bf16.mxu0 0
        %1007 = vmatpush2.bf16.msra.mxu0 0
        %1008 = vmatprep.subr.bf16.mxu0 0
        %1009 = vmatpush2.bf16.msra.mxu0 0
        %1010 = vmatprep.subr.bf16.mxu0 0
        %1011 = vmatpush2.bf16.msra.mxu0 0
        %1012 = vmatprep.subr.bf16.mxu0 0
        %1013 = vmatpush2.bf16.msra.mxu0 0
        %1014 = vmatprep.subr.bf16.mxu0 0
        %1015 = vmatpush2.bf16.msra.mxu0 0
        %1016 = vmatprep.subr.bf16.mxu0 0
        %1017 = vmatpush2.bf16.msra.mxu0 0
        %1018 = vmatprep.subr.bf16.mxu0 0
        %1019 = vmatpush2.bf16.msra.mxu0 0
        %1020 = vmatprep.subr.bf16.mxu0 0
        %1021 = vmatpush2.bf16.msra.mxu0 0
        %1022 = vmatprep.mubr.bf16.mxu0 0
        %1023 = vmatmul.mubr.bf16.gmra.mxu0 %v988
        %v1024 = vpop.f32.mrf.mxu0
        %v1025 = vadd.f32 %v854, %v1024
        %v1026 = vpop.f32.mrf.mxu0
        %v1027 = vadd.f32 %v854, %v1026
        %v1028 = vpop.f32.mrf.mxu0
        %v1029 = vadd.f32 %v859, %v1028
        %v1030 = vpop.f32.mrf.mxu0
        %v1031 = vadd.f32 %v859, %v1030
        %1032 = vdwg.mxu0
        %1033 = vmatprep.subr.bf16.mxu0 0
        %1034 = vmatpush1.bf16.msra.mxu0 0
        %1035 = vmatprep.subr.bf16.mxu0 0
        %1036 = vmatpush1.bf16.msra.mxu0 0
        %1037 = vmatprep.subr.bf16.mxu0 0
        %1038 = vmatpush1.bf16.msra.mxu0 0
        %1039 = vmatprep.subr.bf16.mxu0 0
        %1040 = vmatpush1.bf16.msra.mxu0 0
        %1041 = vmatprep.subr.bf16.mxu0 0
        %1042 = vmatpush1.bf16.msra.mxu0 0
        %1043 = vmatprep.subr.bf16.mxu0 %v957
        %1044 = vmatpush1.bf16.msra.mxu0 %v956
        %1045 = vmatprep.subr.bf16.mxu0 %v949
        %1046 = vmatpush1.bf16.msra.mxu0 %v948
        %1047 = vmatprep.subr.bf16.mxu0 %v941
        %1048 = vmatpush1.bf16.msra.mxu0 %v940
        %1049 = vmatprep.subr.bf16.mxu0 0
        %1050 = vmatpush2.bf16.msra.mxu0 0
        %1051 = vmatprep.subr.bf16.mxu0 0
        %1052 = vmatpush2.bf16.msra.mxu0 0
        %1053 = vmatprep.subr.bf16.mxu0 0
        %1054 = vmatpush2.bf16.msra.mxu0 0
        %1055 = vmatprep.subr.bf16.mxu0 0
        %1056 = vmatpush2.bf16.msra.mxu0 0
        %1057 = vmatprep.subr.bf16.mxu0 0
        %1058 = vmatpush2.bf16.msra.mxu0 0
        %1059 = vmatprep.subr.bf16.mxu0 0
        %1060 = vmatpush2.bf16.msra.mxu0 0
        %1061 = vmatprep.subr.bf16.mxu0 0
        %1062 = vmatpush2.bf16.msra.mxu0 0
        %1063 = vmatprep.subr.bf16.mxu0 0
        %1064 = vmatpush2.bf16.msra.mxu0 0
        %1065 = vmatprep.mubr.bf16.mxu0 0
        %1066 = vmatmul.mubr.bf16.gmra.mxu0 %v988
        %v1067 = vpop.f32.mrf.mxu0
        %v1068 = vadd.f32 %v854, %v1067
        %v1069 = vpop.f32.mrf.mxu0
        %v1070 = vadd.f32 %v854, %v1069
        %v1071 = vpop.f32.mrf.mxu0
        %v1072 = vadd.f32 %v859, %v1071
        %v1073 = vpop.f32.mrf.mxu0
        %v1074 = vadd.f32 %v859, %v1073
        %1075 = vdwg.mxu0
        %1076 = vmatprep.subr.bf16.mxu0 0
        %1077 = vmatpush1.bf16.msra.mxu0 0
        %1078 = vmatprep.subr.bf16.mxu0 0
        %1079 = vmatpush1.bf16.msra.mxu0 0
        %1080 = vmatprep.subr.bf16.mxu0 0
        %1081 = vmatpush1.bf16.msra.mxu0 0
        %1082 = vmatprep.subr.bf16.mxu0 0
        %1083 = vmatpush1.bf16.msra.mxu0 0
        %1084 = vmatprep.subr.bf16.mxu0 0
        %1085 = vmatpush1.bf16.msra.mxu0 0
        %1086 = vmatprep.subr.bf16.mxu0 %v959
        %1087 = vmatpush1.bf16.msra.mxu0 %v958
        %1088 = vmatprep.subr.bf16.mxu0 %v951
        %1089 = vmatpush1.bf16.msra.mxu0 %v950
        %1090 = vmatprep.subr.bf16.mxu0 %v943
        %1091 = vmatpush1.bf16.msra.mxu0 %v942
        %1092 = vmatprep.subr.bf16.mxu0 0
        %1093 = vmatpush2.bf16.msra.mxu0 0
        %1094 = vmatprep.subr.bf16.mxu0 0
        %1095 = vmatpush2.bf16.msra.mxu0 0
        %1096 = vmatprep.subr.bf16.mxu0 0
        %1097 = vmatpush2.bf16.msra.mxu0 0
        %1098 = vmatprep.subr.bf16.mxu0 0
        %1099 = vmatpush2.bf16.msra.mxu0 0
        %1100 = vmatprep.subr.bf16.mxu0 0
        %1101 = vmatpush2.bf16.msra.mxu0 0
        %1102 = vmatprep.subr.bf16.mxu0 0
        %1103 = vmatpush2.bf16.msra.mxu0 0
        %1104 = vmatprep.subr.bf16.mxu0 0
        %1105 = vmatpush2.bf16.msra.mxu0 0
        %1106 = vmatprep.subr.bf16.mxu0 0
        %1107 = vmatpush2.bf16.msra.mxu0 0
        %1108 = vmatprep.mubr.bf16.mxu0 0
        %1109 = vmatmul.mubr.bf16.gmra.mxu0 %v988
        %v1110 = vpop.f32.mrf.mxu0
        %v1111 = vadd.f32 %v854, %v1110
        %v1112 = vpop.f32.mrf.mxu0
        %v1113 = vadd.f32 %v854, %v1112
        %v1114 = vpop.f32.mrf.mxu0
        %v1115 = vadd.f32 %v859, %v1114
        %v1116 = vpop.f32.mrf.mxu0
        %v1117 = vadd.f32 %v859, %v1116
        %1118 = vdwg.mxu0
        %1119 = vmatprep.subr.bf16.mxu0 0
        %1120 = vmatpush1.bf16.msra.mxu0 0
        %1121 = vmatprep.subr.bf16.mxu0 0
        %1122 = vmatpush1.bf16.msra.mxu0 0
        %1123 = vmatprep.subr.bf16.mxu0 0
        %1124 = vmatpush1.bf16.msra.mxu0 0
        %1125 = vmatprep.subr.bf16.mxu0 0
        %1126 = vmatpush1.bf16.msra.mxu0 0
        %1127 = vmatprep.subr.bf16.mxu0 0
        %1128 = vmatpush1.bf16.msra.mxu0 0
        %1129 = vmatprep.subr.bf16.mxu0 %v961
        %1130 = vmatpush1.bf16.msra.mxu0 %v960
        %1131 = vmatprep.subr.bf16.mxu0 %v953
        %1132 = vmatpush1.bf16.msra.mxu0 %v952
        %1133 = vmatprep.subr.bf16.mxu0 %v945
        %1134 = vmatpush1.bf16.msra.mxu0 %v944
        %1135 = vmatprep.subr.bf16.mxu0 0
        %1136 = vmatpush2.bf16.msra.mxu0 0
        %1137 = vmatprep.subr.bf16.mxu0 0
        %1138 = vmatpush2.bf16.msra.mxu0 0
        %1139 = vmatprep.subr.bf16.mxu0 0
        %1140 = vmatpush2.bf16.msra.mxu0 0
        %1141 = vmatprep.subr.bf16.mxu0 0
        %1142 = vmatpush2.bf16.msra.mxu0 0
        %1143 = vmatprep.subr.bf16.mxu0 0
        %1144 = vmatpush2.bf16.msra.mxu0 0
        %1145 = vmatprep.subr.bf16.mxu0 0
        %1146 = vmatpush2.bf16.msra.mxu0 0
        %1147 = vmatprep.subr.bf16.mxu0 0
        %1148 = vmatpush2.bf16.msra.mxu0 0
        %1149 = vmatprep.subr.bf16.mxu0 0
        %1150 = vmatpush2.bf16.msra.mxu0 0
        %1151 = vmatprep.mubr.bf16.mxu0 0
        %1152 = vmatmul.mubr.bf16.gmra.mxu0 %v988
        %v1153 = vpop.f32.mrf.mxu0
        %v1154 = vadd.f32 %v854, %v1153
        %v1155 = vpop.f32.mrf.mxu0
        %v1156 = vadd.f32 %v854, %v1155
        %v1157 = vpop.f32.mrf.mxu0
        %v1158 = vadd.f32 %v859, %v1157
        %v1159 = vpop.f32.mrf.mxu0
        %v1160 = vadd.f32 %v859, %v1159
        %1161 = vdwg.mxu0
        %v1162 = vmul.f32 %v1025, 0.2
        %v1163 = vmul.f32 %v1027, 0.2
        %v1164 = vmul.f32 %v1068, 0.2
        %v1165 = vmul.f32 %v1070, 0.2
        %v1166 = vmul.f32 %v1111, 0.2
        %v1167 = vmul.f32 %v1113, 0.2
        %v1168 = vmul.f32 %v1154, 0.2
        %v1169 = vmul.f32 %v1156, 0.2
        %v1170 = vmul.f32 %v1029, 0.2
        %v1171 = vmul.f32 %v1031, 0.2
        %v1172 = vmul.f32 %v1072, 0.2
        %v1173 = vmul.f32 %v1074, 0.2
        %v1174 = vmul.f32 %v1115, 0.2
        %v1175 = vmul.f32 %v1117, 0.2
        %v1176 = vmul.f32 %v1158, 0.2
        %v1177 = vmul.f32 %v1160, 0.2
        %v1178 = vmax.f32 %v1025, %v1162
        %v1179 = vmax.f32 %v1027, %v1163
        %v1180 = vmax.f32 %v1068, %v1164
        %v1181 = vmax.f32 %v1070, %v1165
        %v1182 = vmax.f32 %v1111, %v1166
        %v1183 = vmax.f32 %v1113, %v1167
        %v1184 = vmax.f32 %v1154, %v1168
        %v1185 = vmax.f32 %v1156, %v1169
        %v1186 = vmax.f32 %v1029, %v1170
        %v1187 = vmax.f32 %v1031, %v1171
        %v1188 = vmax.f32 %v1072, %v1172
        %v1189 = vmax.f32 %v1074, %v1173
        %v1190 = vmax.f32 %v1115, %v1174
        %v1191 = vmax.f32 %v1117, %v1175
        %v1192 = vmax.f32 %v1158, %v1176
        %v1193 = vmax.f32 %v1160, %v1177
        %s1194 = scalar_lea.vmem %s792, 192 [#allocation2]
        %v1195 = vld [vmem:[%s1194] sm:$0xff]
        %v1196 = vld [vmem:[%s1194 + $0x8] sm:$0xff]
        %v1197 = vld [vmem:[%s1194 + $0x10] sm:$0xff]
        %v1198 = vld [vmem:[%s1194 + $0x18] sm:$0xff]
        %v1199 = vld [vmem:[%s1194 + $0x20] sm:$0xff]
        %v1200 = vld [vmem:[%s1194 + $0x28] sm:$0xff]
        %v1201 = vld [vmem:[%s1194 + $0x30] sm:$0xff]
        %v1202 = vld [vmem:[%s1194 + $0x38] sm:$0xff]
        %v1203 = vld [vmem:[%s1194 + $0x40] sm:$0xff]
        %v1204 = vld [vmem:[%s1194 + $0x48] sm:$0xff]
        %v1205 = vld [vmem:[%s1194 + $0x50] sm:$0xff]
        %v1206 = vld [vmem:[%s1194 + $0x58] sm:$0xff]
        %v1207 = vld [vmem:[%s1194 + $0x60] sm:$0xff]
        %v1208 = vld [vmem:[%s1194 + $0x68] sm:$0xff]
        %v1209 = vld [vmem:[%s1194 + $0x70] sm:$0xff]
        %v1210 = vld [vmem:[%s1194 + $0x78] sm:$0xff]
        %v1211 = vld [vmem:[%s1194 + $0x80] sm:$0xff]
        %v1212 = vld [vmem:[%s1194 + $0x88] sm:$0xff]
        %v1213 = vld [vmem:[%s1194 + $0x90] sm:$0xff]
        %v1214 = vld [vmem:[%s1194 + $0x98] sm:$0xff]
        %v1215 = vld [vmem:[%s1194 + $0xa0] sm:$0xff]
        %v1216 = vld [vmem:[%s1194 + $0xa8] sm:$0xff]
        %v1217 = vld [vmem:[%s1194 + $0xb0] sm:$0xff]
        %v1218 = vld [vmem:[%s1194 + $0xb8] sm:$0xff]
        %v1243 = vunpack.c.l.b16 %v1195
        %v1244 = vunpack.c.h.b16 %v1195
        %v1245 = vunpack.c.l.b16 %v1196
        %v1246 = vunpack.c.h.b16 %v1196
        %v1247 = vunpack.c.l.b16 %v1197
        %v1248 = vunpack.c.h.b16 %v1197
        %v1249 = vunpack.c.l.b16 %v1198
        %v1250 = vunpack.c.h.b16 %v1198
        %v1251 = vunpack.c.l.b16 %v1199
        %v1252 = vunpack.c.h.b16 %v1199
        %v1253 = vunpack.c.l.b16 %v1200
        %v1254 = vunpack.c.h.b16 %v1200
        %v1255 = vunpack.c.l.b16 %v1201
        %v1256 = vunpack.c.h.b16 %v1201
        %v1257 = vunpack.c.l.b16 %v1202
        %v1258 = vunpack.c.h.b16 %v1202
        %v1259 = vunpack.c.l.b16 %v1203
        %v1260 = vunpack.c.h.b16 %v1203
        %v1261 = vunpack.c.l.b16 %v1204
        %v1262 = vunpack.c.h.b16 %v1204
        %v1263 = vunpack.c.l.b16 %v1205
        %v1264 = vunpack.c.h.b16 %v1205
        %v1265 = vunpack.c.l.b16 %v1206
        %v1266 = vunpack.c.h.b16 %v1206
        %v1267 = vunpack.c.l.b16 %v1207
        %v1268 = vunpack.c.h.b16 %v1207
        %v1269 = vunpack.c.l.b16 %v1208
        %v1270 = vunpack.c.h.b16 %v1208
        %v1271 = vunpack.c.l.b16 %v1209
        %v1272 = vunpack.c.h.b16 %v1209
        %v1273 = vunpack.c.l.b16 %v1210
        %v1274 = vunpack.c.h.b16 %v1210
        %v1275 = vunpack.c.l.b16 %v1211
        %v1276 = vunpack.c.h.b16 %v1211
        %v1277 = vunpack.c.l.b16 %v1212
        %v1278 = vunpack.c.h.b16 %v1212
        %v1279 = vunpack.c.l.b16 %v1213
        %v1280 = vunpack.c.h.b16 %v1213
        %v1281 = vunpack.c.l.b16 %v1214
        %v1282 = vunpack.c.h.b16 %v1214
        %v1283 = vunpack.c.l.b16 %v1215
        %v1284 = vunpack.c.h.b16 %v1215
        %v1285 = vunpack.c.l.b16 %v1216
        %v1286 = vunpack.c.h.b16 %v1216
        %v1287 = vunpack.c.l.b16 %v1217
        %v1288 = vunpack.c.h.b16 %v1217
        %v1289 = vunpack.c.l.b16 %v1218
        %v1290 = vunpack.c.h.b16 %v1218
        %v1291 = vpack.c.b16 %v1251, %v1243
        %v1292 = vpack.c.b16 %v1252, %v1244
        %v1293 = vpack.c.b16 %v1253, %v1245
        %v1294 = vpack.c.b16 %v1254, %v1246
        %v1295 = vpack.c.b16 %v1255, %v1247
        %v1296 = vpack.c.b16 %v1256, %v1248
        %v1297 = vpack.c.b16 %v1257, %v1249
        %v1298 = vpack.c.b16 %v1258, %v1250
        %v1299 = vpack.c.b16 %v1267, %v1259
        %v1300 = vpack.c.b16 %v1268, %v1260
        %v1301 = vpack.c.b16 %v1269, %v1261
        %v1302 = vpack.c.b16 %v1270, %v1262
        %v1303 = vpack.c.b16 %v1271, %v1263
        %v1304 = vpack.c.b16 %v1272, %v1264
        %v1305 = vpack.c.b16 %v1273, %v1265
        %v1306 = vpack.c.b16 %v1274, %v1266
        %v1307 = vpack.c.b16 %v1283, %v1275
        %v1308 = vpack.c.b16 %v1284, %v1276
        %v1309 = vpack.c.b16 %v1285, %v1277
        %v1310 = vpack.c.b16 %v1286, %v1278
        %v1311 = vpack.c.b16 %v1287, %v1279
        %v1312 = vpack.c.b16 %v1288, %v1280
        %v1313 = vpack.c.b16 %v1289, %v1281
        %v1314 = vpack.c.b16 %v1290, %v1282
        %1339 = vmatprep.subr.bf16.mxu0 0
        %1340 = vmatpush1.bf16.msra.mxu0 0
        %1341 = vmatprep.subr.bf16.mxu0 0
        %1342 = vmatpush1.bf16.msra.mxu0 0
        %1343 = vmatprep.subr.bf16.mxu0 0
        %1344 = vmatpush1.bf16.msra.mxu0 0
        %1345 = vmatprep.subr.bf16.mxu0 0
        %1346 = vmatpush1.bf16.msra.mxu0 0
        %1347 = vmatprep.subr.bf16.mxu0 0
        %1348 = vmatpush1.bf16.msra.mxu0 0
        %1349 = vmatprep.subr.bf16.mxu0 %v1308
        %1350 = vmatpush1.bf16.msra.mxu0 %v1307
        %1351 = vmatprep.subr.bf16.mxu0 %v1300
        %1352 = vmatpush1.bf16.msra.mxu0 %v1299
        %1353 = vmatprep.subr.bf16.mxu0 %v1292
        %1354 = vmatpush1.bf16.msra.mxu0 %v1291
        %1355 = vmatprep.subr.bf16.mxu0 0
        %1356 = vmatpush2.bf16.msra.mxu0 0
        %1357 = vmatprep.subr.bf16.mxu0 0
        %1358 = vmatpush2.bf16.msra.mxu0 0
        %1359 = vmatprep.subr.bf16.mxu0 0
        %1360 = vmatpush2.bf16.msra.mxu0 0
        %1361 = vmatprep.subr.bf16.mxu0 0
        %1362 = vmatpush2.bf16.msra.mxu0 0
        %1363 = vmatprep.subr.bf16.mxu0 0
        %1364 = vmatpush2.bf16.msra.mxu0 0
        %1365 = vmatprep.subr.bf16.mxu0 0
        %1366 = vmatpush2.bf16.msra.mxu0 0
        %1367 = vmatprep.subr.bf16.mxu0 0
        %1368 = vmatpush2.bf16.msra.mxu0 0
        %1369 = vmatprep.subr.bf16.mxu0 0
        %1370 = vmatpush2.bf16.msra.mxu0 0
        %1371 = vmatprep.mubr.bf16.mxu0 0
        %1372 = vmatmul.mubr.bf16.gmra.mxu0 %v988
        %v1373 = vpop.f32.mrf.mxu0
        %v1374 = vadd.f32 %v854, %v1373
        %v1375 = vpop.f32.mrf.mxu0
        %v1376 = vadd.f32 %v854, %v1375
        %v1377 = vpop.f32.mrf.mxu0
        %v1378 = vadd.f32 %v859, %v1377
        %v1379 = vpop.f32.mrf.mxu0
        %v1380 = vadd.f32 %v859, %v1379
        %1381 = vdwg.mxu0
        %1382 = vmatprep.subr.bf16.mxu0 0
        %1383 = vmatpush1.bf16.msra.mxu0 0
        %1384 = vmatprep.subr.bf16.mxu0 0
        %1385 = vmatpush1.bf16.msra.mxu0 0
        %1386 = vmatprep.subr.bf16.mxu0 0
        %1387 = vmatpush1.bf16.msra.mxu0 0
        %1388 = vmatprep.subr.bf16.mxu0 0
        %1389 = vmatpush1.bf16.msra.mxu0 0
        %1390 = vmatprep.subr.bf16.mxu0 0
        %1391 = vmatpush1.bf16.msra.mxu0 0
        %1392 = vmatprep.subr.bf16.mxu0 %v1310
        %1393 = vmatpush1.bf16.msra.mxu0 %v1309
        %1394 = vmatprep.subr.bf16.mxu0 %v1302
        %1395 = vmatpush1.bf16.msra.mxu0 %v1301
        %1396 = vmatprep.subr.bf16.mxu0 %v1294
        %1397 = vmatpush1.bf16.msra.mxu0 %v1293
        %1398 = vmatprep.subr.bf16.mxu0 0
        %1399 = vmatpush2.bf16.msra.mxu0 0
        %1400 = vmatprep.subr.bf16.mxu0 0
        %1401 = vmatpush2.bf16.msra.mxu0 0
        %1402 = vmatprep.subr.bf16.mxu0 0
        %1403 = vmatpush2.bf16.msra.mxu0 0
        %1404 = vmatprep.subr.bf16.mxu0 0
        %1405 = vmatpush2.bf16.msra.mxu0 0
        %1406 = vmatprep.subr.bf16.mxu0 0
        %1407 = vmatpush2.bf16.msra.mxu0 0
        %1408 = vmatprep.subr.bf16.mxu0 0
        %1409 = vmatpush2.bf16.msra.mxu0 0
        %1410 = vmatprep.subr.bf16.mxu0 0
        %1411 = vmatpush2.bf16.msra.mxu0 0
        %1412 = vmatprep.subr.bf16.mxu0 0
        %1413 = vmatpush2.bf16.msra.mxu0 0
        %1414 = vmatprep.mubr.bf16.mxu0 0
        %1415 = vmatmul.mubr.bf16.gmra.mxu0 %v988
        %v1416 = vpop.f32.mrf.mxu0
        %v1417 = vadd.f32 %v854, %v1416
        %v1418 = vpop.f32.mrf.mxu0
        %v1419 = vadd.f32 %v854, %v1418
        %v1420 = vpop.f32.mrf.mxu0
        %v1421 = vadd.f32 %v859, %v1420
        %v1422 = vpop.f32.mrf.mxu0
        %v1423 = vadd.f32 %v859, %v1422
        %1424 = vdwg.mxu0
        %1425 = vmatprep.subr.bf16.mxu0 0
        %1426 = vmatpush1.bf16.msra.mxu0 0
        %1427 = vmatprep.subr.bf16.mxu0 0
        %1428 = vmatpush1.bf16.msra.mxu0 0
        %1429 = vmatprep.subr.bf16.mxu0 0
        %1430 = vmatpush1.bf16.msra.mxu0 0
        %1431 = vmatprep.subr.bf16.mxu0 0
        %1432 = vmatpush1.bf16.msra.mxu0 0
        %1433 = vmatprep.subr.bf16.mxu0 0
        %1434 = vmatpush1.bf16.msra.mxu0 0
        %1435 = vmatprep.subr.bf16.mxu0 %v1312
        %1436 = vmatpush1.bf16.msra.mxu0 %v1311
        %1437 = vmatprep.subr.bf16.mxu0 %v1304
        %1438 = vmatpush1.bf16.msra.mxu0 %v1303
        %1439 = vmatprep.subr.bf16.mxu0 %v1296
        %1440 = vmatpush1.bf16.msra.mxu0 %v1295
        %1441 = vmatprep.subr.bf16.mxu0 0
        %1442 = vmatpush2.bf16.msra.mxu0 0
        %1443 = vmatprep.subr.bf16.mxu0 0
        %1444 = vmatpush2.bf16.msra.mxu0 0
        %1445 = vmatprep.subr.bf16.mxu0 0
        %1446 = vmatpush2.bf16.msra.mxu0 0
        %1447 = vmatprep.subr.bf16.mxu0 0
        %1448 = vmatpush2.bf16.msra.mxu0 0
        %1449 = vmatprep.subr.bf16.mxu0 0
        %1450 = vmatpush2.bf16.msra.mxu0 0
        %1451 = vmatprep.subr.bf16.mxu0 0
        %1452 = vmatpush2.bf16.msra.mxu0 0
        %1453 = vmatprep.subr.bf16.mxu0 0
        %1454 = vmatpush2.bf16.msra.mxu0 0
        %1455 = vmatprep.subr.bf16.mxu0 0
        %1456 = vmatpush2.bf16.msra.mxu0 0
        %1457 = vmatprep.mubr.bf16.mxu0 0
        %1458 = vmatmul.mubr.bf16.gmra.mxu0 %v988
        %v1459 = vpop.f32.mrf.mxu0
        %v1460 = vadd.f32 %v854, %v1459
        %v1461 = vpop.f32.mrf.mxu0
        %v1462 = vadd.f32 %v854, %v1461
        %v1463 = vpop.f32.mrf.mxu0
        %v1464 = vadd.f32 %v859, %v1463
        %v1465 = vpop.f32.mrf.mxu0
        %v1466 = vadd.f32 %v859, %v1465
        %1467 = vdwg.mxu0
        %1468 = vmatprep.subr.bf16.mxu0 0
        %1469 = vmatpush1.bf16.msra.mxu0 0
        %1470 = vmatprep.subr.bf16.mxu0 0
        %1471 = vmatpush1.bf16.msra.mxu0 0
        %1472 = vmatprep.subr.bf16.mxu0 0
        %1473 = vmatpush1.bf16.msra.mxu0 0
        %1474 = vmatprep.subr.bf16.mxu0 0
        %1475 = vmatpush1.bf16.msra.mxu0 0
        %1476 = vmatprep.subr.bf16.mxu0 0
        %1477 = vmatpush1.bf16.msra.mxu0 0
        %1478 = vmatprep.subr.bf16.mxu0 %v1314
        %1479 = vmatpush1.bf16.msra.mxu0 %v1313
        %1480 = vmatprep.subr.bf16.mxu0 %v1306
        %1481 = vmatpush1.bf16.msra.mxu0 %v1305
        %1482 = vmatprep.subr.bf16.mxu0 %v1298
        %1483 = vmatpush1.bf16.msra.mxu0 %v1297
        %1484 = vmatprep.subr.bf16.mxu0 0
        %1485 = vmatpush2.bf16.msra.mxu0 0
        %1486 = vmatprep.subr.bf16.mxu0 0
        %1487 = vmatpush2.bf16.msra.mxu0 0
        %1488 = vmatprep.subr.bf16.mxu0 0
        %1489 = vmatpush2.bf16.msra.mxu0 0
        %1490 = vmatprep.subr.bf16.mxu0 0
        %1491 = vmatpush2.bf16.msra.mxu0 0
        %1492 = vmatprep.subr.bf16.mxu0 0
        %1493 = vmatpush2.bf16.msra.mxu0 0
        %1494 = vmatprep.subr.bf16.mxu0 0
        %1495 = vmatpush2.bf16.msra.mxu0 0
        %1496 = vmatprep.subr.bf16.mxu0 0
        %1497 = vmatpush2.bf16.msra.mxu0 0
        %1498 = vmatprep.subr.bf16.mxu0 0
        %1499 = vmatpush2.bf16.msra.mxu0 0
        %1500 = vmatprep.mubr.bf16.mxu0 0
        %1501 = vmatmul.mubr.bf16.gmra.mxu0 %v988
        %v1502 = vpop.f32.mrf.mxu0
        %v1503 = vadd.f32 %v854, %v1502
        %v1504 = vpop.f32.mrf.mxu0
        %v1505 = vadd.f32 %v854, %v1504
        %v1506 = vpop.f32.mrf.mxu0
        %v1507 = vadd.f32 %v859, %v1506
        %v1508 = vpop.f32.mrf.mxu0
        %v1509 = vadd.f32 %v859, %v1508
        %1510 = vdwg.mxu0
        %v1511 = vmul.f32 %v1374, 0.2
        %v1512 = vmul.f32 %v1376, 0.2
        %v1513 = vmul.f32 %v1417, 0.2
        %v1514 = vmul.f32 %v1419, 0.2
        %v1515 = vmul.f32 %v1460, 0.2
        %v1516 = vmul.f32 %v1462, 0.2
        %v1517 = vmul.f32 %v1503, 0.2
        %v1518 = vmul.f32 %v1505, 0.2
        %v1519 = vmul.f32 %v1378, 0.2
        %v1520 = vmul.f32 %v1380, 0.2
        %v1521 = vmul.f32 %v1421, 0.2
        %v1522 = vmul.f32 %v1423, 0.2
        %v1523 = vmul.f32 %v1464, 0.2
        %v1524 = vmul.f32 %v1466, 0.2
        %v1525 = vmul.f32 %v1507, 0.2
        %v1526 = vmul.f32 %v1509, 0.2
        %v1527 = vmax.f32 %v1374, %v1511
        %v1528 = vmax.f32 %v1376, %v1512
        %v1529 = vmax.f32 %v1417, %v1513
        %v1530 = vmax.f32 %v1419, %v1514
        %v1531 = vmax.f32 %v1460, %v1515
        %v1532 = vmax.f32 %v1462, %v1516
        %v1533 = vmax.f32 %v1503, %v1517
        %v1534 = vmax.f32 %v1505, %v1518
        %v1535 = vmax.f32 %v1378, %v1519
        %v1536 = vmax.f32 %v1380, %v1520
        %v1537 = vmax.f32 %v1421, %v1521
        %v1538 = vmax.f32 %v1423, %v1522
        %v1539 = vmax.f32 %v1464, %v1523
        %v1540 = vmax.f32 %v1466, %v1524
        %v1541 = vmax.f32 %v1507, %v1525
        %v1542 = vmax.f32 %v1509, %v1526
        %v1543 = vadd.f32 %v1178, %v1527
        %v1544 = vadd.f32 %v1179, %v1528
        %v1545 = vadd.f32 %v1180, %v1529
        %v1546 = vadd.f32 %v1181, %v1530
        %v1547 = vadd.f32 %v1182, %v1531
        %v1548 = vadd.f32 %v1183, %v1532
        %v1549 = vadd.f32 %v1184, %v1533
        %v1550 = vadd.f32 %v1185, %v1534
        %v1551 = vadd.f32 %v1186, %v1535
        %v1552 = vadd.f32 %v1187, %v1536
        %v1553 = vadd.f32 %v1188, %v1537
        %v1554 = vadd.f32 %v1189, %v1538
        %v1555 = vadd.f32 %v1190, %v1539
        %v1556 = vadd.f32 %v1191, %v1540
        %v1557 = vadd.f32 %v1192, %v1541
        %v1558 = vadd.f32 %v1193, %v1542
        %s1559 = scalar_lea.vmem %s792, 384 [#allocation2]
        %v1560 = vld [vmem:[%s1559] sm:$0xff]
        %v1561 = vld [vmem:[%s1559 + $0x8] sm:$0xff]
        %v1562 = vld [vmem:[%s1559 + $0x10] sm:$0xff]
        %v1563 = vld [vmem:[%s1559 + $0x18] sm:$0xff]
        %v1564 = vld [vmem:[%s1559 + $0x20] sm:$0xff]
        %v1565 = vld [vmem:[%s1559 + $0x28] sm:$0xff]
        %v1566 = vld [vmem:[%s1559 + $0x30] sm:$0xff]
        %v1567 = vld [vmem:[%s1559 + $0x38] sm:$0xff]
        %v1568 = vld [vmem:[%s1559 + $0x40] sm:$0xff]
        %v1569 = vld [vmem:[%s1559 + $0x48] sm:$0xff]
        %v1570 = vld [vmem:[%s1559 + $0x50] sm:$0xff]
        %v1571 = vld [vmem:[%s1559 + $0x58] sm:$0xff]
        %v1572 = vld [vmem:[%s1559 + $0x60] sm:$0xff]
        %v1573 = vld [vmem:[%s1559 + $0x68] sm:$0xff]
        %v1574 = vld [vmem:[%s1559 + $0x70] sm:$0xff]
        %v1575 = vld [vmem:[%s1559 + $0x78] sm:$0xff]
        %v1576 = vld [vmem:[%s1559 + $0x80] sm:$0xff]
        %v1577 = vld [vmem:[%s1559 + $0x88] sm:$0xff]
        %v1578 = vld [vmem:[%s1559 + $0x90] sm:$0xff]
        %v1579 = vld [vmem:[%s1559 + $0x98] sm:$0xff]
        %v1580 = vld [vmem:[%s1559 + $0xa0] sm:$0xff]
        %v1581 = vld [vmem:[%s1559 + $0xa8] sm:$0xff]
        %v1582 = vld [vmem:[%s1559 + $0xb0] sm:$0xff]
        %v1583 = vld [vmem:[%s1559 + $0xb8] sm:$0xff]
        %v1608 = vunpack.c.l.b16 %v1560
        %v1609 = vunpack.c.h.b16 %v1560
        %v1610 = vunpack.c.l.b16 %v1561
        %v1611 = vunpack.c.h.b16 %v1561
        %v1612 = vunpack.c.l.b16 %v1562
        %v1613 = vunpack.c.h.b16 %v1562
        %v1614 = vunpack.c.l.b16 %v1563
        %v1615 = vunpack.c.h.b16 %v1563
        %v1616 = vunpack.c.l.b16 %v1564
        %v1617 = vunpack.c.h.b16 %v1564
        %v1618 = vunpack.c.l.b16 %v1565
        %v1619 = vunpack.c.h.b16 %v1565
        %v1620 = vunpack.c.l.b16 %v1566
        %v1621 = vunpack.c.h.b16 %v1566
        %v1622 = vunpack.c.l.b16 %v1567
        %v1623 = vunpack.c.h.b16 %v1567
        %v1624 = vunpack.c.l.b16 %v1568
        %v1625 = vunpack.c.h.b16 %v1568
        %v1626 = vunpack.c.l.b16 %v1569
        %v1627 = vunpack.c.h.b16 %v1569
        %v1628 = vunpack.c.l.b16 %v1570
        %v1629 = vunpack.c.h.b16 %v1570
        %v1630 = vunpack.c.l.b16 %v1571
        %v1631 = vunpack.c.h.b16 %v1571
        %v1632 = vunpack.c.l.b16 %v1572
        %v1633 = vunpack.c.h.b16 %v1572
        %v1634 = vunpack.c.l.b16 %v1573
        %v1635 = vunpack.c.h.b16 %v1573
        %v1636 = vunpack.c.l.b16 %v1574
        %v1637 = vunpack.c.h.b16 %v1574
        %v1638 = vunpack.c.l.b16 %v1575
        %v1639 = vunpack.c.h.b16 %v1575
        %v1640 = vunpack.c.l.b16 %v1576
        %v1641 = vunpack.c.h.b16 %v1576
        %v1642 = vunpack.c.l.b16 %v1577
        %v1643 = vunpack.c.h.b16 %v1577
        %v1644 = vunpack.c.l.b16 %v1578
        %v1645 = vunpack.c.h.b16 %v1578
        %v1646 = vunpack.c.l.b16 %v1579
        %v1647 = vunpack.c.h.b16 %v1579
        %v1648 = vunpack.c.l.b16 %v1580
        %v1649 = vunpack.c.h.b16 %v1580
        %v1650 = vunpack.c.l.b16 %v1581
        %v1651 = vunpack.c.h.b16 %v1581
        %v1652 = vunpack.c.l.b16 %v1582
        %v1653 = vunpack.c.h.b16 %v1582
        %v1654 = vunpack.c.l.b16 %v1583
        %v1655 = vunpack.c.h.b16 %v1583
        %v1656 = vpack.c.b16 %v1616, %v1608
        %v1657 = vpack.c.b16 %v1617, %v1609
        %v1658 = vpack.c.b16 %v1618, %v1610
        %v1659 = vpack.c.b16 %v1619, %v1611
        %v1660 = vpack.c.b16 %v1620, %v1612
        %v1661 = vpack.c.b16 %v1621, %v1613
        %v1662 = vpack.c.b16 %v1622, %v1614
        %v1663 = vpack.c.b16 %v1623, %v1615
        %v1664 = vpack.c.b16 %v1632, %v1624
        %v1665 = vpack.c.b16 %v1633, %v1625
        %v1666 = vpack.c.b16 %v1634, %v1626
        %v1667 = vpack.c.b16 %v1635, %v1627
        %v1668 = vpack.c.b16 %v1636, %v1628
        %v1669 = vpack.c.b16 %v1637, %v1629
        %v1670 = vpack.c.b16 %v1638, %v1630
        %v1671 = vpack.c.b16 %v1639, %v1631
        %v1672 = vpack.c.b16 %v1648, %v1640
        %v1673 = vpack.c.b16 %v1649, %v1641
        %v1674 = vpack.c.b16 %v1650, %v1642
        %v1675 = vpack.c.b16 %v1651, %v1643
        %v1676 = vpack.c.b16 %v1652, %v1644
        %v1677 = vpack.c.b16 %v1653, %v1645
        %v1678 = vpack.c.b16 %v1654, %v1646
        %v1679 = vpack.c.b16 %v1655, %v1647
        %1704 = vmatprep.subr.bf16.mxu0 0
        %1705 = vmatpush1.bf16.msra.mxu0 0
        %1706 = vmatprep.subr.bf16.mxu0 0
        %1707 = vmatpush1.bf16.msra.mxu0 0
        %1708 = vmatprep.subr.bf16.mxu0 0
        %1709 = vmatpush1.bf16.msra.mxu0 0
        %1710 = vmatprep.subr.bf16.mxu0 0
        %1711 = vmatpush1.bf16.msra.mxu0 0
        %1712 = vmatprep.subr.bf16.mxu0 0
        %1713 = vmatpush1.bf16.msra.mxu0 0
        %1714 = vmatprep.subr.bf16.mxu0 %v1673
        %1715 = vmatpush1.bf16.msra.mxu0 %v1672
        %1716 = vmatprep.subr.bf16.mxu0 %v1665
        %1717 = vmatpush1.bf16.msra.mxu0 %v1664
        %1718 = vmatprep.subr.bf16.mxu0 %v1657
        %1719 = vmatpush1.bf16.msra.mxu0 %v1656
        %1720 = vmatprep.subr.bf16.mxu0 0
        %1721 = vmatpush2.bf16.msra.mxu0 0
        %1722 = vmatprep.subr.bf16.mxu0 0
        %1723 = vmatpush2.bf16.msra.mxu0 0
        %1724 = vmatprep.subr.bf16.mxu0 0
        %1725 = vmatpush2.bf16.msra.mxu0 0
        %1726 = vmatprep.subr.bf16.mxu0 0
        %1727 = vmatpush2.bf16.msra.mxu0 0
        %1728 = vmatprep.subr.bf16.mxu0 0
        %1729 = vmatpush2.bf16.msra.mxu0 0
        %1730 = vmatprep.subr.bf16.mxu0 0
        %1731 = vmatpush2.bf16.msra.mxu0 0
        %1732 = vmatprep.subr.bf16.mxu0 0
        %1733 = vmatpush2.bf16.msra.mxu0 0
        %1734 = vmatprep.subr.bf16.mxu0 0
        %1735 = vmatpush2.bf16.msra.mxu0 0
        %1736 = vmatprep.mubr.bf16.mxu0 0
        %1737 = vmatmul.mubr.bf16.gmra.mxu0 %v988
        %v1738 = vpop.f32.mrf.mxu0
        %v1739 = vadd.f32 %v854, %v1738
        %v1740 = vpop.f32.mrf.mxu0
        %v1741 = vadd.f32 %v854, %v1740
        %v1742 = vpop.f32.mrf.mxu0
        %v1743 = vadd.f32 %v859, %v1742
        %v1744 = vpop.f32.mrf.mxu0
        %v1745 = vadd.f32 %v859, %v1744
        %1746 = vdwg.mxu0
        %1747 = vmatprep.subr.bf16.mxu0 0
        %1748 = vmatpush1.bf16.msra.mxu0 0
        %1749 = vmatprep.subr.bf16.mxu0 0
        %1750 = vmatpush1.bf16.msra.mxu0 0
        %1751 = vmatprep.subr.bf16.mxu0 0
        %1752 = vmatpush1.bf16.msra.mxu0 0
        %1753 = vmatprep.subr.bf16.mxu0 0
        %1754 = vmatpush1.bf16.msra.mxu0 0
        %1755 = vmatprep.subr.bf16.mxu0 0
        %1756 = vmatpush1.bf16.msra.mxu0 0
        %1757 = vmatprep.subr.bf16.mxu0 %v1675
        %1758 = vmatpush1.bf16.msra.mxu0 %v1674
        %1759 = vmatprep.subr.bf16.mxu0 %v1667
        %1760 = vmatpush1.bf16.msra.mxu0 %v1666
        %1761 = vmatprep.subr.bf16.mxu0 %v1659
        %1762 = vmatpush1.bf16.msra.mxu0 %v1658
        %1763 = vmatprep.subr.bf16.mxu0 0
        %1764 = vmatpush2.bf16.msra.mxu0 0
        %1765 = vmatprep.subr.bf16.mxu0 0
        %1766 = vmatpush2.bf16.msra.mxu0 0
        %1767 = vmatprep.subr.bf16.mxu0 0
        %1768 = vmatpush2.bf16.msra.mxu0 0
        %1769 = vmatprep.subr.bf16.mxu0 0
        %1770 = vmatpush2.bf16.msra.mxu0 0
        %1771 = vmatprep.subr.bf16.mxu0 0
        %1772 = vmatpush2.bf16.msra.mxu0 0
        %1773 = vmatprep.subr.bf16.mxu0 0
        %1774 = vmatpush2.bf16.msra.mxu0 0
        %1775 = vmatprep.subr.bf16.mxu0 0
        %1776 = vmatpush2.bf16.msra.mxu0 0
        %1777 = vmatprep.subr.bf16.mxu0 0
        %1778 = vmatpush2.bf16.msra.mxu0 0
        %1779 = vmatprep.mubr.bf16.mxu0 0
        %1780 = vmatmul.mubr.bf16.gmra.mxu0 %v988
        %v1781 = vpop.f32.mrf.mxu0
        %v1782 = vadd.f32 %v854, %v1781
        %v1783 = vpop.f32.mrf.mxu0
        %v1784 = vadd.f32 %v854, %v1783
        %v1785 = vpop.f32.mrf.mxu0
        %v1786 = vadd.f32 %v859, %v1785
        %v1787 = vpop.f32.mrf.mxu0
        %v1788 = vadd.f32 %v859, %v1787
        %1789 = vdwg.mxu0
        %1790 = vmatprep.subr.bf16.mxu0 0
        %1791 = vmatpush1.bf16.msra.mxu0 0
        %1792 = vmatprep.subr.bf16.mxu0 0
        %1793 = vmatpush1.bf16.msra.mxu0 0
        %1794 = vmatprep.subr.bf16.mxu0 0
        %1795 = vmatpush1.bf16.msra.mxu0 0
        %1796 = vmatprep.subr.bf16.mxu0 0
        %1797 = vmatpush1.bf16.msra.mxu0 0
        %1798 = vmatprep.subr.bf16.mxu0 0
        %1799 = vmatpush1.bf16.msra.mxu0 0
        %1800 = vmatprep.subr.bf16.mxu0 %v1677
        %1801 = vmatpush1.bf16.msra.mxu0 %v1676
        %1802 = vmatprep.subr.bf16.mxu0 %v1669
        %1803 = vmatpush1.bf16.msra.mxu0 %v1668
        %1804 = vmatprep.subr.bf16.mxu0 %v1661
        %1805 = vmatpush1.bf16.msra.mxu0 %v1660
        %1806 = vmatprep.subr.bf16.mxu0 0
        %1807 = vmatpush2.bf16.msra.mxu0 0
        %1808 = vmatprep.subr.bf16.mxu0 0
        %1809 = vmatpush2.bf16.msra.mxu0 0
        %1810 = vmatprep.subr.bf16.mxu0 0
        %1811 = vmatpush2.bf16.msra.mxu0 0
        %1812 = vmatprep.subr.bf16.mxu0 0
        %1813 = vmatpush2.bf16.msra.mxu0 0
        %1814 = vmatprep.subr.bf16.mxu0 0
        %1815 = vmatpush2.bf16.msra.mxu0 0
        %1816 = vmatprep.subr.bf16.mxu0 0
        %1817 = vmatpush2.bf16.msra.mxu0 0
        %1818 = vmatprep.subr.bf16.mxu0 0
        %1819 = vmatpush2.bf16.msra.mxu0 0
        %1820 = vmatprep.subr.bf16.mxu0 0
        %1821 = vmatpush2.bf16.msra.mxu0 0
        %1822 = vmatprep.mubr.bf16.mxu0 0
        %1823 = vmatmul.mubr.bf16.gmra.mxu0 %v988
        %v1824 = vpop.f32.mrf.mxu0
        %v1825 = vadd.f32 %v854, %v1824
        %v1826 = vpop.f32.mrf.mxu0
        %v1827 = vadd.f32 %v854, %v1826
        %v1828 = vpop.f32.mrf.mxu0
        %v1829 = vadd.f32 %v859, %v1828
        %v1830 = vpop.f32.mrf.mxu0
        %v1831 = vadd.f32 %v859, %v1830
        %1832 = vdwg.mxu0
        %1833 = vmatprep.subr.bf16.mxu0 0
        %1834 = vmatpush1.bf16.msra.mxu0 0
        %1835 = vmatprep.subr.bf16.mxu0 0
        %1836 = vmatpush1.bf16.msra.mxu0 0
        %1837 = vmatprep.subr.bf16.mxu0 0
        %1838 = vmatpush1.bf16.msra.mxu0 0
        %1839 = vmatprep.subr.bf16.mxu0 0
        %1840 = vmatpush1.bf16.msra.mxu0 0
        %1841 = vmatprep.subr.bf16.mxu0 0
        %1842 = vmatpush1.bf16.msra.mxu0 0
        %1843 = vmatprep.subr.bf16.mxu0 %v1679
        %1844 = vmatpush1.bf16.msra.mxu0 %v1678
        %1845 = vmatprep.subr.bf16.mxu0 %v1671
        %1846 = vmatpush1.bf16.msra.mxu0 %v1670
        %1847 = vmatprep.subr.bf16.mxu0 %v1663
        %1848 = vmatpush1.bf16.msra.mxu0 %v1662
        %1849 = vmatprep.subr.bf16.mxu0 0
        %1850 = vmatpush2.bf16.msra.mxu0 0
        %1851 = vmatprep.subr.bf16.mxu0 0
        %1852 = vmatpush2.bf16.msra.mxu0 0
        %1853 = vmatprep.subr.bf16.mxu0 0
        %1854 = vmatpush2.bf16.msra.mxu0 0
        %1855 = vmatprep.subr.bf16.mxu0 0
        %1856 = vmatpush2.bf16.msra.mxu0 0
        %1857 = vmatprep.subr.bf16.mxu0 0
        %1858 = vmatpush2.bf16.msra.mxu0 0
        %1859 = vmatprep.subr.bf16.mxu0 0
        %1860 = vmatpush2.bf16.msra.mxu0 0
        %1861 = vmatprep.subr.bf16.mxu0 0
        %1862 = vmatpush2.bf16.msra.mxu0 0
        %1863 = vmatprep.subr.bf16.mxu0 0
        %1864 = vmatpush2.bf16.msra.mxu0 0
        %1865 = vmatprep.mubr.bf16.mxu0 0
        %1866 = vmatmul.mubr.bf16.gmra.mxu0 %v988
        %v1867 = vpop.f32.mrf.mxu0
        %v1868 = vadd.f32 %v854, %v1867
        %v1869 = vpop.f32.mrf.mxu0
        %v1870 = vadd.f32 %v854, %v1869
        %v1871 = vpop.f32.mrf.mxu0
        %v1872 = vadd.f32 %v859, %v1871
        %v1873 = vpop.f32.mrf.mxu0
        %v1874 = vadd.f32 %v859, %v1873
        %1875 = vdwg.mxu0
        %v1876 = vmul.f32 %v1739, 0.2
        %v1877 = vmul.f32 %v1741, 0.2
        %v1878 = vmul.f32 %v1782, 0.2
        %v1879 = vmul.f32 %v1784, 0.2
        %v1880 = vmul.f32 %v1825, 0.2
        %v1881 = vmul.f32 %v1827, 0.2
        %v1882 = vmul.f32 %v1868, 0.2
        %v1883 = vmul.f32 %v1870, 0.2
        %v1884 = vmul.f32 %v1743, 0.2
        %v1885 = vmul.f32 %v1745, 0.2
        %v1886 = vmul.f32 %v1786, 0.2
        %v1887 = vmul.f32 %v1788, 0.2
        %v1888 = vmul.f32 %v1829, 0.2
        %v1889 = vmul.f32 %v1831, 0.2
        %v1890 = vmul.f32 %v1872, 0.2
        %v1891 = vmul.f32 %v1874, 0.2
        %v1892 = vmax.f32 %v1739, %v1876
        %v1893 = vmax.f32 %v1741, %v1877
        %v1894 = vmax.f32 %v1782, %v1878
        %v1895 = vmax.f32 %v1784, %v1879
        %v1896 = vmax.f32 %v1825, %v1880
        %v1897 = vmax.f32 %v1827, %v1881
        %v1898 = vmax.f32 %v1868, %v1882
        %v1899 = vmax.f32 %v1870, %v1883
        %v1900 = vmax.f32 %v1743, %v1884
        %v1901 = vmax.f32 %v1745, %v1885
        %v1902 = vmax.f32 %v1786, %v1886
        %v1903 = vmax.f32 %v1788, %v1887
        %v1904 = vmax.f32 %v1829, %v1888
        %v1905 = vmax.f32 %v1831, %v1889
        %v1906 = vmax.f32 %v1872, %v1890
        %v1907 = vmax.f32 %v1874, %v1891
        %v1908 = vadd.f32 %v1543, %v1892
        %v1909 = vadd.f32 %v1544, %v1893
        %v1910 = vadd.f32 %v1545, %v1894
        %v1911 = vadd.f32 %v1546, %v1895
        %v1912 = vadd.f32 %v1547, %v1896
        %v1913 = vadd.f32 %v1548, %v1897
        %v1914 = vadd.f32 %v1549, %v1898
        %v1915 = vadd.f32 %v1550, %v1899
        %v1916 = vadd.f32 %v1551, %v1900
        %v1917 = vadd.f32 %v1552, %v1901
        %v1918 = vadd.f32 %v1553, %v1902
        %v1919 = vadd.f32 %v1554, %v1903
        %v1920 = vadd.f32 %v1555, %v1904
        %v1921 = vadd.f32 %v1556, %v1905
        %v1922 = vadd.f32 %v1557, %v1906
        %v1923 = vadd.f32 %v1558, %v1907
        %s1924 = scalar_lea.vmem %s792, 576 [#allocation2]
        %v1925 = vld [vmem:[%s1924] sm:$0xff]
        %v1926 = vld [vmem:[%s1924 + $0x8] sm:$0xff]
        %v1927 = vld [vmem:[%s1924 + $0x10] sm:$0xff]
        %v1928 = vld [vmem:[%s1924 + $0x18] sm:$0xff]
        %v1929 = vld [vmem:[%s1924 + $0x20] sm:$0xff]
        %v1930 = vld [vmem:[%s1924 + $0x28] sm:$0xff]
        %v1931 = vld [vmem:[%s1924 + $0x30] sm:$0xff]
        %v1932 = vld [vmem:[%s1924 + $0x38] sm:$0xff]
        %v1933 = vld [vmem:[%s1924 + $0x40] sm:$0xff]
        %v1934 = vld [vmem:[%s1924 + $0x48] sm:$0xff]
        %v1935 = vld [vmem:[%s1924 + $0x50] sm:$0xff]
        %v1936 = vld [vmem:[%s1924 + $0x58] sm:$0xff]
        %v1937 = vld [vmem:[%s1924 + $0x60] sm:$0xff]
        %v1938 = vld [vmem:[%s1924 + $0x68] sm:$0xff]
        %v1939 = vld [vmem:[%s1924 + $0x70] sm:$0xff]
        %v1940 = vld [vmem:[%s1924 + $0x78] sm:$0xff]
        %v1941 = vld [vmem:[%s1924 + $0x80] sm:$0xff]
        %v1942 = vld [vmem:[%s1924 + $0x88] sm:$0xff]
        %v1943 = vld [vmem:[%s1924 + $0x90] sm:$0xff]
        %v1944 = vld [vmem:[%s1924 + $0x98] sm:$0xff]
        %v1945 = vld [vmem:[%s1924 + $0xa0] sm:$0xff]
        %v1946 = vld [vmem:[%s1924 + $0xa8] sm:$0xff]
        %v1947 = vld [vmem:[%s1924 + $0xb0] sm:$0xff]
        %v1948 = vld [vmem:[%s1924 + $0xb8] sm:$0xff]
        %v1973 = vunpack.c.l.b16 %v1925
        %v1974 = vunpack.c.h.b16 %v1925
        %v1975 = vunpack.c.l.b16 %v1926
        %v1976 = vunpack.c.h.b16 %v1926
        %v1977 = vunpack.c.l.b16 %v1927
        %v1978 = vunpack.c.h.b16 %v1927
        %v1979 = vunpack.c.l.b16 %v1928
        %v1980 = vunpack.c.h.b16 %v1928
        %v1981 = vunpack.c.l.b16 %v1929
        %v1982 = vunpack.c.h.b16 %v1929
        %v1983 = vunpack.c.l.b16 %v1930
        %v1984 = vunpack.c.h.b16 %v1930
        %v1985 = vunpack.c.l.b16 %v1931
        %v1986 = vunpack.c.h.b16 %v1931
        %v1987 = vunpack.c.l.b16 %v1932
        %v1988 = vunpack.c.h.b16 %v1932
        %v1989 = vunpack.c.l.b16 %v1933
        %v1990 = vunpack.c.h.b16 %v1933
        %v1991 = vunpack.c.l.b16 %v1934
        %v1992 = vunpack.c.h.b16 %v1934
        %v1993 = vunpack.c.l.b16 %v1935
        %v1994 = vunpack.c.h.b16 %v1935
        %v1995 = vunpack.c.l.b16 %v1936
        %v1996 = vunpack.c.h.b16 %v1936
        %v1997 = vunpack.c.l.b16 %v1937
        %v1998 = vunpack.c.h.b16 %v1937
        %v1999 = vunpack.c.l.b16 %v1938
        %v2000 = vunpack.c.h.b16 %v1938
        %v2001 = vunpack.c.l.b16 %v1939
        %v2002 = vunpack.c.h.b16 %v1939
        %v2003 = vunpack.c.l.b16 %v1940
        %v2004 = vunpack.c.h.b16 %v1940
        %v2005 = vunpack.c.l.b16 %v1941
        %v2006 = vunpack.c.h.b16 %v1941
        %v2007 = vunpack.c.l.b16 %v1942
        %v2008 = vunpack.c.h.b16 %v1942
        %v2009 = vunpack.c.l.b16 %v1943
        %v2010 = vunpack.c.h.b16 %v1943
        %v2011 = vunpack.c.l.b16 %v1944
        %v2012 = vunpack.c.h.b16 %v1944
        %v2013 = vunpack.c.l.b16 %v1945
        %v2014 = vunpack.c.h.b16 %v1945
        %v2015 = vunpack.c.l.b16 %v1946
        %v2016 = vunpack.c.h.b16 %v1946
        %v2017 = vunpack.c.l.b16 %v1947
        %v2018 = vunpack.c.h.b16 %v1947
        %v2019 = vunpack.c.l.b16 %v1948
        %v2020 = vunpack.c.h.b16 %v1948
        %v2021 = vpack.c.b16 %v1981, %v1973
        %v2022 = vpack.c.b16 %v1982, %v1974
        %v2023 = vpack.c.b16 %v1983, %v1975
        %v2024 = vpack.c.b16 %v1984, %v1976
        %v2025 = vpack.c.b16 %v1985, %v1977
        %v2026 = vpack.c.b16 %v1986, %v1978
        %v2027 = vpack.c.b16 %v1987, %v1979
        %v2028 = vpack.c.b16 %v1988, %v1980
        %v2029 = vpack.c.b16 %v1997, %v1989
        %v2030 = vpack.c.b16 %v1998, %v1990
        %v2031 = vpack.c.b16 %v1999, %v1991
        %v2032 = vpack.c.b16 %v2000, %v1992
        %v2033 = vpack.c.b16 %v2001, %v1993
        %v2034 = vpack.c.b16 %v2002, %v1994
        %v2035 = vpack.c.b16 %v2003, %v1995
        %v2036 = vpack.c.b16 %v2004, %v1996
        %v2037 = vpack.c.b16 %v2013, %v2005
        %v2038 = vpack.c.b16 %v2014, %v2006
        %v2039 = vpack.c.b16 %v2015, %v2007
        %v2040 = vpack.c.b16 %v2016, %v2008
        %v2041 = vpack.c.b16 %v2017, %v2009
        %v2042 = vpack.c.b16 %v2018, %v2010
        %v2043 = vpack.c.b16 %v2019, %v2011
        %v2044 = vpack.c.b16 %v2020, %v2012
        %2069 = vmatprep.subr.bf16.mxu0 0
        %2070 = vmatpush1.bf16.msra.mxu0 0
        %2071 = vmatprep.subr.bf16.mxu0 0
        %2072 = vmatpush1.bf16.msra.mxu0 0
        %2073 = vmatprep.subr.bf16.mxu0 0
        %2074 = vmatpush1.bf16.msra.mxu0 0
        %2075 = vmatprep.subr.bf16.mxu0 0
        %2076 = vmatpush1.bf16.msra.mxu0 0
        %2077 = vmatprep.subr.bf16.mxu0 0
        %2078 = vmatpush1.bf16.msra.mxu0 0
        %2079 = vmatprep.subr.bf16.mxu0 %v2038
        %2080 = vmatpush1.bf16.msra.mxu0 %v2037
        %2081 = vmatprep.subr.bf16.mxu0 %v2030
        %2082 = vmatpush1.bf16.msra.mxu0 %v2029
        %2083 = vmatprep.subr.bf16.mxu0 %v2022
        %2084 = vmatpush1.bf16.msra.mxu0 %v2021
        %2085 = vmatprep.subr.bf16.mxu0 0
        %2086 = vmatpush2.bf16.msra.mxu0 0
        %2087 = vmatprep.subr.bf16.mxu0 0
        %2088 = vmatpush2.bf16.msra.mxu0 0
        %2089 = vmatprep.subr.bf16.mxu0 0
        %2090 = vmatpush2.bf16.msra.mxu0 0
        %2091 = vmatprep.subr.bf16.mxu0 0
        %2092 = vmatpush2.bf16.msra.mxu0 0
        %2093 = vmatprep.subr.bf16.mxu0 0
        %2094 = vmatpush2.bf16.msra.mxu0 0
        %2095 = vmatprep.subr.bf16.mxu0 0
        %2096 = vmatpush2.bf16.msra.mxu0 0
        %2097 = vmatprep.subr.bf16.mxu0 0
        %2098 = vmatpush2.bf16.msra.mxu0 0
        %2099 = vmatprep.subr.bf16.mxu0 0
        %2100 = vmatpush2.bf16.msra.mxu0 0
        %2101 = vmatprep.mubr.bf16.mxu0 0
        %2102 = vmatmul.mubr.bf16.gmra.mxu0 %v988
        %v2103 = vpop.f32.mrf.mxu0
        %v2104 = vadd.f32 %v854, %v2103
        %v2105 = vpop.f32.mrf.mxu0
        %v2106 = vadd.f32 %v854, %v2105
        %v2107 = vpop.f32.mrf.mxu0
        %v2108 = vadd.f32 %v859, %v2107
        %v2109 = vpop.f32.mrf.mxu0
        %v2110 = vadd.f32 %v859, %v2109
        %2111 = vdwg.mxu0
        %2112 = vmatprep.subr.bf16.mxu0 0
        %2113 = vmatpush1.bf16.msra.mxu0 0
        %2114 = vmatprep.subr.bf16.mxu0 0
        %2115 = vmatpush1.bf16.msra.mxu0 0
        %2116 = vmatprep.subr.bf16.mxu0 0
        %2117 = vmatpush1.bf16.msra.mxu0 0
        %2118 = vmatprep.subr.bf16.mxu0 0
        %2119 = vmatpush1.bf16.msra.mxu0 0
        %2120 = vmatprep.subr.bf16.mxu0 0
        %2121 = vmatpush1.bf16.msra.mxu0 0
        %2122 = vmatprep.subr.bf16.mxu0 %v2040
        %2123 = vmatpush1.bf16.msra.mxu0 %v2039
        %2124 = vmatprep.subr.bf16.mxu0 %v2032
        %2125 = vmatpush1.bf16.msra.mxu0 %v2031
        %2126 = vmatprep.subr.bf16.mxu0 %v2024
        %2127 = vmatpush1.bf16.msra.mxu0 %v2023
        %2128 = vmatprep.subr.bf16.mxu0 0
        %2129 = vmatpush2.bf16.msra.mxu0 0
        %2130 = vmatprep.subr.bf16.mxu0 0
        %2131 = vmatpush2.bf16.msra.mxu0 0
        %2132 = vmatprep.subr.bf16.mxu0 0
        %2133 = vmatpush2.bf16.msra.mxu0 0
        %2134 = vmatprep.subr.bf16.mxu0 0
        %2135 = vmatpush2.bf16.msra.mxu0 0
        %2136 = vmatprep.subr.bf16.mxu0 0
        %2137 = vmatpush2.bf16.msra.mxu0 0
        %2138 = vmatprep.subr.bf16.mxu0 0
        %2139 = vmatpush2.bf16.msra.mxu0 0
        %2140 = vmatprep.subr.bf16.mxu0 0
        %2141 = vmatpush2.bf16.msra.mxu0 0
        %2142 = vmatprep.subr.bf16.mxu0 0
        %2143 = vmatpush2.bf16.msra.mxu0 0
        %2144 = vmatprep.mubr.bf16.mxu0 0
        %2145 = vmatmul.mubr.bf16.gmra.mxu0 %v988
        %v2146 = vpop.f32.mrf.mxu0
        %v2147 = vadd.f32 %v854, %v2146
        %v2148 = vpop.f32.mrf.mxu0
        %v2149 = vadd.f32 %v854, %v2148
        %v2150 = vpop.f32.mrf.mxu0
        %v2151 = vadd.f32 %v859, %v2150
        %v2152 = vpop.f32.mrf.mxu0
        %v2153 = vadd.f32 %v859, %v2152
        %2154 = vdwg.mxu0
        %2155 = vmatprep.subr.bf16.mxu0 0
        %2156 = vmatpush1.bf16.msra.mxu0 0
        %2157 = vmatprep.subr.bf16.mxu0 0
        %2158 = vmatpush1.bf16.msra.mxu0 0
        %2159 = vmatprep.subr.bf16.mxu0 0
        %2160 = vmatpush1.bf16.msra.mxu0 0
        %2161 = vmatprep.subr.bf16.mxu0 0
        %2162 = vmatpush1.bf16.msra.mxu0 0
        %2163 = vmatprep.subr.bf16.mxu0 0
        %2164 = vmatpush1.bf16.msra.mxu0 0
        %2165 = vmatprep.subr.bf16.mxu0 %v2042
        %2166 = vmatpush1.bf16.msra.mxu0 %v2041
        %2167 = vmatprep.subr.bf16.mxu0 %v2034
        %2168 = vmatpush1.bf16.msra.mxu0 %v2033
        %2169 = vmatprep.subr.bf16.mxu0 %v2026
        %2170 = vmatpush1.bf16.msra.mxu0 %v2025
        %2171 = vmatprep.subr.bf16.mxu0 0
        %2172 = vmatpush2.bf16.msra.mxu0 0
        %2173 = vmatprep.subr.bf16.mxu0 0
        %2174 = vmatpush2.bf16.msra.mxu0 0
        %2175 = vmatprep.subr.bf16.mxu0 0
        %2176 = vmatpush2.bf16.msra.mxu0 0
        %2177 = vmatprep.subr.bf16.mxu0 0
        %2178 = vmatpush2.bf16.msra.mxu0 0
        %2179 = vmatprep.subr.bf16.mxu0 0
        %2180 = vmatpush2.bf16.msra.mxu0 0
        %2181 = vmatprep.subr.bf16.mxu0 0
        %2182 = vmatpush2.bf16.msra.mxu0 0
        %2183 = vmatprep.subr.bf16.mxu0 0
        %2184 = vmatpush2.bf16.msra.mxu0 0
        %2185 = vmatprep.subr.bf16.mxu0 0
        %2186 = vmatpush2.bf16.msra.mxu0 0
        %2187 = vmatprep.mubr.bf16.mxu0 0
        %2188 = vmatmul.mubr.bf16.gmra.mxu0 %v988
        %v2189 = vpop.f32.mrf.mxu0
        %v2190 = vadd.f32 %v854, %v2189
        %v2191 = vpop.f32.mrf.mxu0
        %v2192 = vadd.f32 %v854, %v2191
        %v2193 = vpop.f32.mrf.mxu0
        %v2194 = vadd.f32 %v859, %v2193
        %v2195 = vpop.f32.mrf.mxu0
        %v2196 = vadd.f32 %v859, %v2195
        %2197 = vdwg.mxu0
        %2198 = vmatprep.subr.bf16.mxu0 0
        %2199 = vmatpush1.bf16.msra.mxu0 0
        %2200 = vmatprep.subr.bf16.mxu0 0
        %2201 = vmatpush1.bf16.msra.mxu0 0
        %2202 = vmatprep.subr.bf16.mxu0 0
        %2203 = vmatpush1.bf16.msra.mxu0 0
        %2204 = vmatprep.subr.bf16.mxu0 0
        %2205 = vmatpush1.bf16.msra.mxu0 0
        %2206 = vmatprep.subr.bf16.mxu0 0
        %2207 = vmatpush1.bf16.msra.mxu0 0
        %2208 = vmatprep.subr.bf16.mxu0 %v2044
        %2209 = vmatpush1.bf16.msra.mxu0 %v2043
        %2210 = vmatprep.subr.bf16.mxu0 %v2036
        %2211 = vmatpush1.bf16.msra.mxu0 %v2035
        %2212 = vmatprep.subr.bf16.mxu0 %v2028
        %2213 = vmatpush1.bf16.msra.mxu0 %v2027
        %2214 = vmatprep.subr.bf16.mxu0 0
        %2215 = vmatpush2.bf16.msra.mxu0 0
        %2216 = vmatprep.subr.bf16.mxu0 0
        %2217 = vmatpush2.bf16.msra.mxu0 0
        %2218 = vmatprep.subr.bf16.mxu0 0
        %2219 = vmatpush2.bf16.msra.mxu0 0
        %2220 = vmatprep.subr.bf16.mxu0 0
        %2221 = vmatpush2.bf16.msra.mxu0 0
        %2222 = vmatprep.subr.bf16.mxu0 0
        %2223 = vmatpush2.bf16.msra.mxu0 0
        %2224 = vmatprep.subr.bf16.mxu0 0
        %2225 = vmatpush2.bf16.msra.mxu0 0
        %2226 = vmatprep.subr.bf16.mxu0 0
        %2227 = vmatpush2.bf16.msra.mxu0 0
        %2228 = vmatprep.subr.bf16.mxu0 0
        %2229 = vmatpush2.bf16.msra.mxu0 0
        %2230 = vmatprep.mubr.bf16.mxu0 0
        %2231 = vmatmul.mubr.bf16.gmra.mxu0 %v988
        %v2232 = vpop.f32.mrf.mxu0
        %v2233 = vadd.f32 %v854, %v2232
        %v2234 = vpop.f32.mrf.mxu0
        %v2235 = vadd.f32 %v854, %v2234
        %v2236 = vpop.f32.mrf.mxu0
        %v2237 = vadd.f32 %v859, %v2236
        %v2238 = vpop.f32.mrf.mxu0
        %v2239 = vadd.f32 %v859, %v2238
        %2240 = vdwg.mxu0
        %v2241 = vmul.f32 %v2104, 0.2
        %v2242 = vmul.f32 %v2106, 0.2
        %v2243 = vmul.f32 %v2147, 0.2
        %v2244 = vmul.f32 %v2149, 0.2
        %v2245 = vmul.f32 %v2190, 0.2
        %v2246 = vmul.f32 %v2192, 0.2
        %v2247 = vmul.f32 %v2233, 0.2
        %v2248 = vmul.f32 %v2235, 0.2
        %v2249 = vmul.f32 %v2108, 0.2
        %v2250 = vmul.f32 %v2110, 0.2
        %v2251 = vmul.f32 %v2151, 0.2
        %v2252 = vmul.f32 %v2153, 0.2
        %v2253 = vmul.f32 %v2194, 0.2
        %v2254 = vmul.f32 %v2196, 0.2
        %v2255 = vmul.f32 %v2237, 0.2
        %v2256 = vmul.f32 %v2239, 0.2
        %v2257 = vmax.f32 %v2104, %v2241
        %v2258 = vmax.f32 %v2106, %v2242
        %v2259 = vmax.f32 %v2147, %v2243
        %v2260 = vmax.f32 %v2149, %v2244
        %v2261 = vmax.f32 %v2190, %v2245
        %v2262 = vmax.f32 %v2192, %v2246
        %v2263 = vmax.f32 %v2233, %v2247
        %v2264 = vmax.f32 %v2235, %v2248
        %v2265 = vmax.f32 %v2108, %v2249
        %v2266 = vmax.f32 %v2110, %v2250
        %v2267 = vmax.f32 %v2151, %v2251
        %v2268 = vmax.f32 %v2153, %v2252
        %v2269 = vmax.f32 %v2194, %v2253
        %v2270 = vmax.f32 %v2196, %v2254
        %v2271 = vmax.f32 %v2237, %v2255
        %v2272 = vmax.f32 %v2239, %v2256
        %v2273 = vadd.f32 %v1908, %v2257
        %v2274 = vadd.f32 %v1909, %v2258
        %v2275 = vadd.f32 %v1910, %v2259
        %v2276 = vadd.f32 %v1911, %v2260
        %v2277 = vadd.f32 %v1912, %v2261
        %v2278 = vadd.f32 %v1913, %v2262
        %v2279 = vadd.f32 %v1914, %v2263
        %v2280 = vadd.f32 %v1915, %v2264
        %v2281 = vadd.f32 %v1916, %v2265
        %v2282 = vadd.f32 %v1917, %v2266
        %v2283 = vadd.f32 %v1918, %v2267
        %v2284 = vadd.f32 %v1919, %v2268
        %v2285 = vadd.f32 %v1920, %v2269
        %v2286 = vadd.f32 %v1921, %v2270
        %v2287 = vadd.f32 %v1922, %v2271
        %v2288 = vadd.f32 %v1923, %v2272
        %v2289 = vmul.f32 %v2273, 0.25
        %v2290 = vmul.f32 %v2274, 0.25
        %v2291 = vmul.f32 %v2275, 0.25
        %v2292 = vmul.f32 %v2276, 0.25
        %v2293 = vmul.f32 %v2277, 0.25
        %v2294 = vmul.f32 %v2278, 0.25
        %v2295 = vmul.f32 %v2279, 0.25
        %v2296 = vmul.f32 %v2280, 0.25
        %v2297 = vmul.f32 %v2281, 0.25
        %v2298 = vmul.f32 %v2282, 0.25
        %v2299 = vmul.f32 %v2283, 0.25
        %v2300 = vmul.f32 %v2284, 0.25
        %v2301 = vmul.f32 %v2285, 0.25
        %v2302 = vmul.f32 %v2286, 0.25
        %v2303 = vmul.f32 %v2287, 0.25
        %v2304 = vmul.f32 %v2288, 0.25
        %v2305 = vpack.c.bf16 %v2297, %v2289
        %v2306 = vpack.c.bf16 %v2298, %v2290
        %v2307 = vpack.c.bf16 %v2299, %v2291
        %v2308 = vpack.c.bf16 %v2300, %v2292
        %v2309 = vpack.c.bf16 %v2301, %v2293
        %v2310 = vpack.c.bf16 %v2302, %v2294
        %v2311 = vpack.c.bf16 %v2303, %v2295
        %v2312 = vpack.c.bf16 %v2304, %v2296
        %v2321 = vunpack.c.l.b16 %v2305
        %v2322 = vunpack.c.l.b16 %v2306
        %v2323 = vunpack.c.l.b16 %v2307
        %v2324 = vunpack.c.l.b16 %v2308
        %v2325 = vunpack.c.l.b16 %v2309
        %v2326 = vunpack.c.l.b16 %v2310
        %v2327 = vunpack.c.l.b16 %v2311
        %v2328 = vunpack.c.l.b16 %v2312
        %v2329 = vunpack.c.h.b16 %v2305
        %v2330 = vunpack.c.h.b16 %v2306
        %v2331 = vunpack.c.h.b16 %v2307
        %v2332 = vunpack.c.h.b16 %v2308
        %v2333 = vunpack.c.h.b16 %v2309
        %v2334 = vunpack.c.h.b16 %v2310
        %v2335 = vunpack.c.h.b16 %v2311
        %v2336 = vunpack.c.h.b16 %v2312
        %v2337 = vpack.c.b16 %v2322, %v2321
        %v2338 = vpack.c.b16 %v2324, %v2323
        %v2339 = vpack.c.b16 %v2326, %v2325
        %v2340 = vpack.c.b16 %v2328, %v2327
        %v2341 = vpack.c.b16 %v2330, %v2329
        %v2342 = vpack.c.b16 %v2332, %v2331
        %v2343 = vpack.c.b16 %v2334, %v2333
        %v2344 = vpack.c.b16 %v2336, %v2335
        %2353 = vst [vmem:[%s811] sm:$0xff] %v2337
        %2354 = vst [vmem:[%s811 + $0x8] sm:$0xff] %v2338
        %2355 = vst [vmem:[%s811 + $0x10] sm:$0xff] %v2339
        %2356 = vst [vmem:[%s811 + $0x18] sm:$0xff] %v2340
        %2357 = vst [vmem:[%s811 + $0x20] sm:$0xff] %v2341
        %2358 = vst [vmem:[%s811 + $0x28] sm:$0xff] %v2342
        %2359 = vst [vmem:[%s811 + $0x30] sm:$0xff] %v2343
        %2360 = vst [vmem:[%s811 + $0x38] sm:$0xff] %v2344
        %s2361 = sand.u32 %s106, 1
        %s2362 = sand.u32 %s106, 1
        %s2363 = smul.addr %s2362, 64
        %s2364 = scalar_lea.vmem [#allocation3], %s2363
        // Predicated region
        $region99: #{discriminator_forward.3} parent=93 // pred_check
          %p2365 = pneg %p116
        $region100: #{discriminator_forward.3} parent=93 // pred_check_branch
          %2367 = sbr.rel (%p2365) target = $region102
        $region101: #{discriminator_forward.3} parent=93 // pred_region
          %s2368 = smul.u32 8, %s19
          %s2369 = ssub.s32 15, %s2368
          %p2370 = scmp.lt.s32.totalorder %s2369, 8
          %s2371 = scalar_select %p2370, %s2369, 8
          %s2372 = smul.u32 128, %s2371
          %p2373 = scmp.ne.s32.totalorder 0, %s2372
          %s2374 = smul.addr %s18, 30
          %s2375 = sadd.s32 %s2368, %s2374
          %s2376 = smul.addr %s2375, 4
          %s2377 = scalar_lea.vmem %s3, %s2376
          %s2378 = smul.u32 %s2371, 4
          // Predicated region
          $region103: #{discriminator_forward.3} parent=101 // pred_check
            %p2379 = pneg %p2373
          $region104: #{discriminator_forward.3} parent=101 // pred_check_branch
            %2381 = sbr.rel (%p2379) target = $region106
          $region105: #{discriminator_forward.3} parent=101 // pred_region
            %p2382 = scmp.lt.u32.totalorder %s2378, 8
            %p2383 = pneg %p2382
            // Predicated region
            $region107: #{discriminator_forward.3} parent=105 // pred_check
              _
            $region108: #{discriminator_forward.3} parent=105 // pred_check_branch
              %2385 = sbr.rel (%p2382) target = $region110
            $region109: #{discriminator_forward.3} parent=105 // pred_region
              %s2403 = sand.u32 %s2378, 7
              %p2404 = scmp.eq.s32.totalorder %s2403, 0
              // Predicated region
              $region122: #{discriminator_forward.3} parent=109 // pred_check
                %p2405 = pneg %p2404
              $region123: #{discriminator_forward.3} parent=109 // pred_check_branch
                %2407 = sbr.rel (%p2405) target = $region125
              $region124: #{discriminator_forward.3} parent=109 // pred_region
                %s2408 = sshrl.u32 %s2378, 3
                %s2409 = sshrl.u32 %s2408, 5
                // While loop
                $region126: #{discriminator_forward.3} parent=124 // loop_pre_header
                  _
                $region127: #{discriminator_forward.3} parent=124 // loop_header
                  %s2413 = sphi 0, %s2415
                  %p2414 = scmp.ge.s32.totalorder %s2413, %s2409
                  %s2418 = sphi 0, %s2551
                  %s2419 = sphi %s2364, %s2554
                  %s2420 = sphi %s2377, %s2555
                $region128: #{discriminator_forward.3} parent=124 // loop_header_branch
                  %2417 = sbr.rel (%p2414) target = $region132
                $region129: #{discriminator_forward.3} parent=124 // loop_body
                  %v2421 = vld [vmem:[%s2419] sm:$0xff]
                  %2422 = vst [vmem:[%s2420] sm:$0xff] %v2421
                  %v2423 = vld [vmem:[%s2419 + $0x8] sm:$0xff]
                  %2424 = vst [vmem:[%s2420 + $0x8] sm:$0xff] %v2423
                  %v2425 = vld [vmem:[%s2419 + $0x10] sm:$0xff]
                  %2426 = vst [vmem:[%s2420 + $0x10] sm:$0xff] %v2425
                  %v2427 = vld [vmem:[%s2419 + $0x18] sm:$0xff]
                  %2428 = vst [vmem:[%s2420 + $0x18] sm:$0xff] %v2427
                  %v2429 = vld [vmem:[%s2419 + $0x20] sm:$0xff]
                  %2430 = vst [vmem:[%s2420 + $0x20] sm:$0xff] %v2429
                  %v2431 = vld [vmem:[%s2419 + $0x28] sm:$0xff]
                  %2432 = vst [vmem:[%s2420 + $0x28] sm:$0xff] %v2431
                  %v2433 = vld [vmem:[%s2419 + $0x30] sm:$0xff]
                  %2434 = vst [vmem:[%s2420 + $0x30] sm:$0xff] %v2433
                  %v2435 = vld [vmem:[%s2419 + $0x38] sm:$0xff]
                  %2436 = vst [vmem:[%s2420 + $0x38] sm:$0xff] %v2435
                  %v2437 = vld [vmem:[%s2419 + $0x40] sm:$0xff]
                  %2438 = vst [vmem:[%s2420 + $0x40] sm:$0xff] %v2437
                  %v2439 = vld [vmem:[%s2419 + $0x48] sm:$0xff]
                  %2440 = vst [vmem:[%s2420 + $0x48] sm:$0xff] %v2439
                  %v2441 = vld [vmem:[%s2419 + $0x50] sm:$0xff]
                  %2442 = vst [vmem:[%s2420 + $0x50] sm:$0xff] %v2441
                  %v2443 = vld [vmem:[%s2419 + $0x58] sm:$0xff]
                  %2444 = vst [vmem:[%s2420 + $0x58] sm:$0xff] %v2443
                  %v2445 = vld [vmem:[%s2419 + $0x60] sm:$0xff]
                  %2446 = vst [vmem:[%s2420 + $0x60] sm:$0xff] %v2445
                  %v2447 = vld [vmem:[%s2419 + $0x68] sm:$0xff]
                  %2448 = vst [vmem:[%s2420 + $0x68] sm:$0xff] %v2447
                  %v2449 = vld [vmem:[%s2419 + $0x70] sm:$0xff]
                  %2450 = vst [vmem:[%s2420 + $0x70] sm:$0xff] %v2449
                  %v2451 = vld [vmem:[%s2419 + $0x78] sm:$0xff]
                  %2452 = vst [vmem:[%s2420 + $0x78] sm:$0xff] %v2451
                  %v2453 = vld [vmem:[%s2419 + $0x80] sm:$0xff]
                  %2454 = vst [vmem:[%s2420 + $0x80] sm:$0xff] %v2453
                  %v2455 = vld [vmem:[%s2419 + $0x88] sm:$0xff]
                  %2456 = vst [vmem:[%s2420 + $0x88] sm:$0xff] %v2455
                  %v2457 = vld [vmem:[%s2419 + $0x90] sm:$0xff]
                  %2458 = vst [vmem:[%s2420 + $0x90] sm:$0xff] %v2457
                  %v2459 = vld [vmem:[%s2419 + $0x98] sm:$0xff]
                  %2460 = vst [vmem:[%s2420 + $0x98] sm:$0xff] %v2459
                  %v2461 = vld [vmem:[%s2419 + $0xa0] sm:$0xff]
                  %2462 = vst [vmem:[%s2420 + $0xa0] sm:$0xff] %v2461
                  %v2463 = vld [vmem:[%s2419 + $0xa8] sm:$0xff]
                  %2464 = vst [vmem:[%s2420 + $0xa8] sm:$0xff] %v2463
                  %v2465 = vld [vmem:[%s2419 + $0xb0] sm:$0xff]
                  %2466 = vst [vmem:[%s2420 + $0xb0] sm:$0xff] %v2465
                  %v2467 = vld [vmem:[%s2419 + $0xb8] sm:$0xff]
                  %2468 = vst [vmem:[%s2420 + $0xb8] sm:$0xff] %v2467
                  %v2469 = vld [vmem:[%s2419 + $0xc0] sm:$0xff]
                  %2470 = vst [vmem:[%s2420 + $0xc0] sm:$0xff] %v2469
                  %v2471 = vld [vmem:[%s2419 + $0xc8] sm:$0xff]
                  %2472 = vst [vmem:[%s2420 + $0xc8] sm:$0xff] %v2471
                  %v2473 = vld [vmem:[%s2419 + $0xd0] sm:$0xff]
                  %2474 = vst [vmem:[%s2420 + $0xd0] sm:$0xff] %v2473
                  %v2475 = vld [vmem:[%s2419 + $0xd8] sm:$0xff]
                  %2476 = vst [vmem:[%s2420 + $0xd8] sm:$0xff] %v2475
                  %v2477 = vld [vmem:[%s2419 + $0xe0] sm:$0xff]
                  %2478 = vst [vmem:[%s2420 + $0xe0] sm:$0xff] %v2477
                  %v2479 = vld [vmem:[%s2419 + $0xe8] sm:$0xff]
                  %2480 = vst [vmem:[%s2420 + $0xe8] sm:$0xff] %v2479
                  %v2481 = vld [vmem:[%s2419 + $0xf0] sm:$0xff]
                  %2482 = vst [vmem:[%s2420 + $0xf0] sm:$0xff] %v2481
                  %v2483 = vld [vmem:[%s2419 + $0xf8] sm:$0xff]
                  %2484 = vst [vmem:[%s2420 + $0xf8] sm:$0xff] %v2483
                  %v2485 = vld [vmem:[%s2419 + $0x20] sm:$0xff]
                  %2486 = vst [vmem:[%s2420 + $0x3c] sm:$0xff] %v2485
                  %v2487 = vld [vmem:[%s2419 + $0x28] sm:$0xff]
                  %2488 = vst [vmem:[%s2420 + $0x44] sm:$0xff] %v2487
                  %v2489 = vld [vmem:[%s2419 + $0x30] sm:$0xff]
                  %2490 = vst [vmem:[%s2420 + $0x4c] sm:$0xff] %v2489
                  %v2491 = vld [vmem:[%s2419 + $0x38] sm:$0xff]
                  %2492 = vst [vmem:[%s2420 + $0x54] sm:$0xff] %v2491
                  %v2493 = vld [vmem:[%s2419 + $0x40] sm:$0xff]
                  %2494 = vst [vmem:[%s2420 + $0x5c] sm:$0xff] %v2493
                  %v2495 = vld [vmem:[%s2419 + $0x48] sm:$0xff]
                  %2496 = vst [vmem:[%s2420 + $0x64] sm:$0xff] %v2495
                  %v2497 = vld [vmem:[%s2419 + $0x50] sm:$0xff]
                  %2498 = vst [vmem:[%s2420 + $0x6c] sm:$0xff] %v2497
                  %v2499 = vld [vmem:[%s2419 + $0x58] sm:$0xff]
                  %2500 = vst [vmem:[%s2420 + $0x74] sm:$0xff] %v2499
                  %v2501 = vld [vmem:[%s2419 + $0x60] sm:$0xff]
                  %2502 = vst [vmem:[%s2420 + $0x7c] sm:$0xff] %v2501
                  %v2503 = vld [vmem:[%s2419 + $0x68] sm:$0xff]
                  %2504 = vst [vmem:[%s2420 + $0x84] sm:$0xff] %v2503
                  %v2505 = vld [vmem:[%s2419 + $0x70] sm:$0xff]
                  %2506 = vst [vmem:[%s2420 + $0x8c] sm:$0xff] %v2505
                  %v2507 = vld [vmem:[%s2419 + $0x78] sm:$0xff]
                  %2508 = vst [vmem:[%s2420 + $0x94] sm:$0xff] %v2507
                  %v2509 = vld [vmem:[%s2419 + $0x80] sm:$0xff]
                  %2510 = vst [vmem:[%s2420 + $0x9c] sm:$0xff] %v2509
                  %v2511 = vld [vmem:[%s2419 + $0x88] sm:$0xff]
                  %2512 = vst [vmem:[%s2420 + $0xa4] sm:$0xff] %v2511
                  %v2513 = vld [vmem:[%s2419 + $0x90] sm:$0xff]
                  %2514 = vst [vmem:[%s2420 + $0xac] sm:$0xff] %v2513
                  %v2515 = vld [vmem:[%s2419 + $0x98] sm:$0xff]
                  %2516 = vst [vmem:[%s2420 + $0xb4] sm:$0xff] %v2515
                  %v2517 = vld [vmem:[%s2419 + $0xa0] sm:$0xff]
                  %2518 = vst [vmem:[%s2420 + $0xbc] sm:$0xff] %v2517
                  %v2519 = vld [vmem:[%s2419 + $0xa8] sm:$0xff]
                  %2520 = vst [vmem:[%s2420 + $0xc4] sm:$0xff] %v2519
                  %v2521 = vld [vmem:[%s2419 + $0xb0] sm:$0xff]
                  %2522 = vst [vmem:[%s2420 + $0xcc] sm:$0xff] %v2521
                  %v2523 = vld [vmem:[%s2419 + $0xb8] sm:$0xff]
                  %2524 = vst [vmem:[%s2420 + $0xd4] sm:$0xff] %v2523
                  %v2525 = vld [vmem:[%s2419 + $0xc0] sm:$0xff]
                  %2526 = vst [vmem:[%s2420 + $0xdc] sm:$0xff] %v2525
                  %v2527 = vld [vmem:[%s2419 + $0xc8] sm:$0xff]
                  %2528 = vst [vmem:[%s2420 + $0xe4] sm:$0xff] %v2527
                  %v2529 = vld [vmem:[%s2419 + $0xd0] sm:$0xff]
                  %2530 = vst [vmem:[%s2420 + $0xec] sm:$0xff] %v2529
                  %v2531 = vld [vmem:[%s2419 + $0xd8] sm:$0xff]
                  %2532 = vst [vmem:[%s2420 + $0xf4] sm:$0xff] %v2531
                  %v2533 = vld [vmem:[%s2419 + $0xe0] sm:$0xff]
                  %2534 = vst [vmem:[%s2420 + $0xfc] sm:$0xff] %v2533
                  %v2535 = vld [vmem:[%s2419 + $0xe8] sm:$0xff]
                  %2536 = vst [vmem:[%s2420 + $0x104] sm:$0xff] %v2535
                  %v2537 = vld [vmem:[%s2419 + $0xf0] sm:$0xff]
                  %2538 = vst [vmem:[%s2420 + $0x10c] sm:$0xff] %v2537
                  %v2539 = vld [vmem:[%s2419 + $0xf8] sm:$0xff]
                  %2540 = vst [vmem:[%s2420 + $0x114] sm:$0xff] %v2539
                  %v2541 = vld [vmem:[%s2419 + $0x100] sm:$0xff]
                  %2542 = vst [vmem:[%s2420 + $0x11c] sm:$0xff] %v2541
                  %v2543 = vld [vmem:[%s2419 + $0x108] sm:$0xff]
                  %2544 = vst [vmem:[%s2420 + $0x124] sm:$0xff] %v2543
                  %v2545 = vld [vmem:[%s2419 + $0x110] sm:$0xff]
                  %2546 = vst [vmem:[%s2420 + $0x12c] sm:$0xff] %v2545
                  %v2547 = vld [vmem:[%s2419 + $0x118] sm:$0xff]
                  %2548 = vst [vmem:[%s2420 + $0x134] sm:$0xff] %v2547
                  %s2549 = sadd.s32 1, %s2418
                  %p2550 = scmp.ge.s32.totalorder %s2549, %s2409
                  %s2551 = scalar_select %p2550, 0, %s2549
                  %s2552 = smul.u32 %s2551, 256
                  %s2553 = smul.u32 %s2551, 256
                  %s2554 = scalar_lea.vmem %s2364, %s2552 [#allocation3]
                  %s2555 = scalar_lea.vmem %s2377, %s2553
                $region130: #{discriminator_forward.3} parent=124 // loop_footer
                  %s2415 = sadd.s32 %s2413, 1
                $region131: #{discriminator_forward.3} parent=124 // loop_footer_branch
                  %2412 = sbr.rel target = $region127
                $region132: #{discriminator_forward.3} parent=124 // loop_exit
                  _
                %s2556 = sshrl.u32 %s2408, 5
                %s2557 = sand.u32 %s2408, 31
                %s2558 = smul.u32 %s2556, 32
                %s2559 = smul.u32 128, %s2558
                %s2560 = sshra.s32 %s2559, 4
                %s2561 = scalar_lea.vmem %s2364, %s2560 [#allocation3]
                %s2562 = smul.u32 128, %s2558
                %s2563 = sshra.s32 %s2562, 4
                %s2564 = scalar_lea.vmem %s2377, %s2563
                // While loop
                $region133: #{discriminator_forward.3} parent=124 // loop_pre_header
                  _
                $region134: #{discriminator_forward.3} parent=124 // loop_header
                  %s2568 = sphi 0, %s2570
                  %p2569 = scmp.ge.s32.totalorder %s2568, %s2557
                  %s2573 = sphi 0, %s2582
                  %s2574 = sphi %s2561, %s2585
                  %s2575 = sphi %s2564, %s2586
                $region135: #{discriminator_forward.3} parent=124 // loop_header_branch
                  %2572 = sbr.rel (%p2569) target = $region139
                $region136: #{discriminator_forward.3} parent=124 // loop_body
                  %v2576 = vld [vmem:[%s2574] sm:$0xff]
                  %2577 = vst [vmem:[%s2575] sm:$0xff] %v2576
                  %v2578 = vld [vmem:[%s2574 + $0x20] sm:$0xff]
                  %2579 = vst [vmem:[%s2575 + $0x3c] sm:$0xff] %v2578
                  %s2580 = sadd.s32 1, %s2573
                  %p2581 = scmp.ge.s32.totalorder %s2580, %s2557
                  %s2582 = scalar_select %p2581, 0, %s2580
                  %s2583 = smul.u32 %s2582, 8
                  %s2584 = smul.u32 %s2582, 8
                  %s2585 = scalar_lea.vmem %s2561, %s2583 [#allocation3]
                  %s2586 = scalar_lea.vmem %s2564, %s2584
                $region137: #{discriminator_forward.3} parent=124 // loop_footer
                  %s2570 = sadd.s32 %s2568, 1
                $region138: #{discriminator_forward.3} parent=124 // loop_footer_branch
                  %2567 = sbr.rel target = $region134
                $region139: #{discriminator_forward.3} parent=124 // loop_exit
                  _
              $region125: #{discriminator_forward.3} parent=109 // pred_fallthru
                _
              %p2587 = pneg %p2404
              // Predicated region
              $region140: #{discriminator_forward.3} parent=109 // pred_check
                _
              $region141: #{discriminator_forward.3} parent=109 // pred_check_branch
                %2589 = sbr.rel (%p2404) target = $region143
              $region142: #{discriminator_forward.3} parent=109 // pred_region
                %s2590 = sand.u32 %s2378, 7
                %s2591 = ssub.s32 %s2378, %s2590
                %s2592 = scalar_lea.vmem %s2364, %s2591 [#allocation3]
                %s2593 = ssub.s32 %s2378, %s2590
                %s2594 = scalar_lea.vmem %s2377, %s2593
                %s2595 = sshrl.u32 %s2378, 3
                %s2596 = sshrl.u32 %s2595, 5
                // While loop
                $region144: #{discriminator_forward.3} parent=142 // loop_pre_header
                  _
                $region145: #{discriminator_forward.3} parent=142 // loop_header
                  %s2600 = sphi 0, %s2602
                  %p2601 = scmp.ge.s32.totalorder %s2600, %s2596
                  %s2605 = sphi 0, %s2738
                  %s2606 = sphi %s2364, %s2741
                  %s2607 = sphi %s2377, %s2742
                $region146: #{discriminator_forward.3} parent=142 // loop_header_branch
                  %2604 = sbr.rel (%p2601) target = $region150
                $region147: #{discriminator_forward.3} parent=142 // loop_body
                  %v2608 = vld [vmem:[%s2606] sm:$0xff]
                  %2609 = vst [vmem:[%s2607] sm:$0xff] %v2608
                  %v2610 = vld [vmem:[%s2606 + $0x8] sm:$0xff]
                  %2611 = vst [vmem:[%s2607 + $0x8] sm:$0xff] %v2610
                  %v2612 = vld [vmem:[%s2606 + $0x10] sm:$0xff]
                  %2613 = vst [vmem:[%s2607 + $0x10] sm:$0xff] %v2612
                  %v2614 = vld [vmem:[%s2606 + $0x18] sm:$0xff]
                  %2615 = vst [vmem:[%s2607 + $0x18] sm:$0xff] %v2614
                  %v2616 = vld [vmem:[%s2606 + $0x20] sm:$0xff]
                  %2617 = vst [vmem:[%s2607 + $0x20] sm:$0xff] %v2616
                  %v2618 = vld [vmem:[%s2606 + $0x28] sm:$0xff]
                  %2619 = vst [vmem:[%s2607 + $0x28] sm:$0xff] %v2618
                  %v2620 = vld [vmem:[%s2606 + $0x30] sm:$0xff]
                  %2621 = vst [vmem:[%s2607 + $0x30] sm:$0xff] %v2620
                  %v2622 = vld [vmem:[%s2606 + $0x38] sm:$0xff]
                  %2623 = vst [vmem:[%s2607 + $0x38] sm:$0xff] %v2622
                  %v2624 = vld [vmem:[%s2606 + $0x40] sm:$0xff]
                  %2625 = vst [vmem:[%s2607 + $0x40] sm:$0xff] %v2624
                  %v2626 = vld [vmem:[%s2606 + $0x48] sm:$0xff]
                  %2627 = vst [vmem:[%s2607 + $0x48] sm:$0xff] %v2626
                  %v2628 = vld [vmem:[%s2606 + $0x50] sm:$0xff]
                  %2629 = vst [vmem:[%s2607 + $0x50] sm:$0xff] %v2628
                  %v2630 = vld [vmem:[%s2606 + $0x58] sm:$0xff]
                  %2631 = vst [vmem:[%s2607 + $0x58] sm:$0xff] %v2630
                  %v2632 = vld [vmem:[%s2606 + $0x60] sm:$0xff]
                  %2633 = vst [vmem:[%s2607 + $0x60] sm:$0xff] %v2632
                  %v2634 = vld [vmem:[%s2606 + $0x68] sm:$0xff]
                  %2635 = vst [vmem:[%s2607 + $0x68] sm:$0xff] %v2634
                  %v2636 = vld [vmem:[%s2606 + $0x70] sm:$0xff]
                  %2637 = vst [vmem:[%s2607 + $0x70] sm:$0xff] %v2636
                  %v2638 = vld [vmem:[%s2606 + $0x78] sm:$0xff]
                  %2639 = vst [vmem:[%s2607 + $0x78] sm:$0xff] %v2638
                  %v2640 = vld [vmem:[%s2606 + $0x80] sm:$0xff]
                  %2641 = vst [vmem:[%s2607 + $0x80] sm:$0xff] %v2640
                  %v2642 = vld [vmem:[%s2606 + $0x88] sm:$0xff]
                  %2643 = vst [vmem:[%s2607 + $0x88] sm:$0xff] %v2642
                  %v2644 = vld [vmem:[%s2606 + $0x90] sm:$0xff]
                  %2645 = vst [vmem:[%s2607 + $0x90] sm:$0xff] %v2644
                  %v2646 = vld [vmem:[%s2606 + $0x98] sm:$0xff]
                  %2647 = vst [vmem:[%s2607 + $0x98] sm:$0xff] %v2646
                  %v2648 = vld [vmem:[%s2606 + $0xa0] sm:$0xff]
                  %2649 = vst [vmem:[%s2607 + $0xa0] sm:$0xff] %v2648
                  %v2650 = vld [vmem:[%s2606 + $0xa8] sm:$0xff]
                  %2651 = vst [vmem:[%s2607 + $0xa8] sm:$0xff] %v2650
                  %v2652 = vld [vmem:[%s2606 + $0xb0] sm:$0xff]
                  %2653 = vst [vmem:[%s2607 + $0xb0] sm:$0xff] %v2652
                  %v2654 = vld [vmem:[%s2606 + $0xb8] sm:$0xff]
                  %2655 = vst [vmem:[%s2607 + $0xb8] sm:$0xff] %v2654
                  %v2656 = vld [vmem:[%s2606 + $0xc0] sm:$0xff]
                  %2657 = vst [vmem:[%s2607 + $0xc0] sm:$0xff] %v2656
                  %v2658 = vld [vmem:[%s2606 + $0xc8] sm:$0xff]
                  %2659 = vst [vmem:[%s2607 + $0xc8] sm:$0xff] %v2658
                  %v2660 = vld [vmem:[%s2606 + $0xd0] sm:$0xff]
                  %2661 = vst [vmem:[%s2607 + $0xd0] sm:$0xff] %v2660
                  %v2662 = vld [vmem:[%s2606 + $0xd8] sm:$0xff]
                  %2663 = vst [vmem:[%s2607 + $0xd8] sm:$0xff] %v2662
                  %v2664 = vld [vmem:[%s2606 + $0xe0] sm:$0xff]
                  %2665 = vst [vmem:[%s2607 + $0xe0] sm:$0xff] %v2664
                  %v2666 = vld [vmem:[%s2606 + $0xe8] sm:$0xff]
                  %2667 = vst [vmem:[%s2607 + $0xe8] sm:$0xff] %v2666
                  %v2668 = vld [vmem:[%s2606 + $0xf0] sm:$0xff]
                  %2669 = vst [vmem:[%s2607 + $0xf0] sm:$0xff] %v2668
                  %v2670 = vld [vmem:[%s2606 + $0xf8] sm:$0xff]
                  %2671 = vst [vmem:[%s2607 + $0xf8] sm:$0xff] %v2670
                  %v2672 = vld [vmem:[%s2606 + $0x20] sm:$0xff]
                  %2673 = vst [vmem:[%s2607 + $0x3c] sm:$0xff] %v2672
                  %v2674 = vld [vmem:[%s2606 + $0x28] sm:$0xff]
                  %2675 = vst [vmem:[%s2607 + $0x44] sm:$0xff] %v2674
                  %v2676 = vld [vmem:[%s2606 + $0x30] sm:$0xff]
                  %2677 = vst [vmem:[%s2607 + $0x4c] sm:$0xff] %v2676
                  %v2678 = vld [vmem:[%s2606 + $0x38] sm:$0xff]
                  %2679 = vst [vmem:[%s2607 + $0x54] sm:$0xff] %v2678
                  %v2680 = vld [vmem:[%s2606 + $0x40] sm:$0xff]
                  %2681 = vst [vmem:[%s2607 + $0x5c] sm:$0xff] %v2680
                  %v2682 = vld [vmem:[%s2606 + $0x48] sm:$0xff]
                  %2683 = vst [vmem:[%s2607 + $0x64] sm:$0xff] %v2682
                  %v2684 = vld [vmem:[%s2606 + $0x50] sm:$0xff]
                  %2685 = vst [vmem:[%s2607 + $0x6c] sm:$0xff] %v2684
                  %v2686 = vld [vmem:[%s2606 + $0x58] sm:$0xff]
                  %2687 = vst [vmem:[%s2607 + $0x74] sm:$0xff] %v2686
                  %v2688 = vld [vmem:[%s2606 + $0x60] sm:$0xff]
                  %2689 = vst [vmem:[%s2607 + $0x7c] sm:$0xff] %v2688
                  %v2690 = vld [vmem:[%s2606 + $0x68] sm:$0xff]
                  %2691 = vst [vmem:[%s2607 + $0x84] sm:$0xff] %v2690
                  %v2692 = vld [vmem:[%s2606 + $0x70] sm:$0xff]
                  %2693 = vst [vmem:[%s2607 + $0x8c] sm:$0xff] %v2692
                  %v2694 = vld [vmem:[%s2606 + $0x78] sm:$0xff]
                  %2695 = vst [vmem:[%s2607 + $0x94] sm:$0xff] %v2694
                  %v2696 = vld [vmem:[%s2606 + $0x80] sm:$0xff]
                  %2697 = vst [vmem:[%s2607 + $0x9c] sm:$0xff] %v2696
                  %v2698 = vld [vmem:[%s2606 + $0x88] sm:$0xff]
                  %2699 = vst [vmem:[%s2607 + $0xa4] sm:$0xff] %v2698
                  %v2700 = vld [vmem:[%s2606 + $0x90] sm:$0xff]
                  %2701 = vst [vmem:[%s2607 + $0xac] sm:$0xff] %v2700
                  %v2702 = vld [vmem:[%s2606 + $0x98] sm:$0xff]
                  %2703 = vst [vmem:[%s2607 + $0xb4] sm:$0xff] %v2702
                  %v2704 = vld [vmem:[%s2606 + $0xa0] sm:$0xff]
                  %2705 = vst [vmem:[%s2607 + $0xbc] sm:$0xff] %v2704
                  %v2706 = vld [vmem:[%s2606 + $0xa8] sm:$0xff]
                  %2707 = vst [vmem:[%s2607 + $0xc4] sm:$0xff] %v2706
                  %v2708 = vld [vmem:[%s2606 + $0xb0] sm:$0xff]
                  %2709 = vst [vmem:[%s2607 + $0xcc] sm:$0xff] %v2708
                  %v2710 = vld [vmem:[%s2606 + $0xb8] sm:$0xff]
                  %2711 = vst [vmem:[%s2607 + $0xd4] sm:$0xff] %v2710
                  %v2712 = vld [vmem:[%s2606 + $0xc0] sm:$0xff]
                  %2713 = vst [vmem:[%s2607 + $0xdc] sm:$0xff] %v2712
                  %v2714 = vld [vmem:[%s2606 + $0xc8] sm:$0xff]
                  %2715 = vst [vmem:[%s2607 + $0xe4] sm:$0xff] %v2714
                  %v2716 = vld [vmem:[%s2606 + $0xd0] sm:$0xff]
                  %2717 = vst [vmem:[%s2607 + $0xec] sm:$0xff] %v2716
                  %v2718 = vld [vmem:[%s2606 + $0xd8] sm:$0xff]
                  %2719 = vst [vmem:[%s2607 + $0xf4] sm:$0xff] %v2718
                  %v2720 = vld [vmem:[%s2606 + $0xe0] sm:$0xff]
                  %2721 = vst [vmem:[%s2607 + $0xfc] sm:$0xff] %v2720
                  %v2722 = vld [vmem:[%s2606 + $0xe8] sm:$0xff]
                  %2723 = vst [vmem:[%s2607 + $0x104] sm:$0xff] %v2722
                  %v2724 = vld [vmem:[%s2606 + $0xf0] sm:$0xff]
                  %2725 = vst [vmem:[%s2607 + $0x10c] sm:$0xff] %v2724
                  %v2726 = vld [vmem:[%s2606 + $0xf8] sm:$0xff]
                  %2727 = vst [vmem:[%s2607 + $0x114] sm:$0xff] %v2726
                  %v2728 = vld [vmem:[%s2606 + $0x100] sm:$0xff]
                  %2729 = vst [vmem:[%s2607 + $0x11c] sm:$0xff] %v2728
                  %v2730 = vld [vmem:[%s2606 + $0x108] sm:$0xff]
                  %2731 = vst [vmem:[%s2607 + $0x124] sm:$0xff] %v2730
                  %v2732 = vld [vmem:[%s2606 + $0x110] sm:$0xff]
                  %2733 = vst [vmem:[%s2607 + $0x12c] sm:$0xff] %v2732
                  %v2734 = vld [vmem:[%s2606 + $0x118] sm:$0xff]
                  %2735 = vst [vmem:[%s2607 + $0x134] sm:$0xff] %v2734
                  %s2736 = sadd.s32 1, %s2605
                  %p2737 = scmp.ge.s32.totalorder %s2736, %s2596
                  %s2738 = scalar_select %p2737, 0, %s2736
                  %s2739 = smul.u32 %s2738, 256
                  %s2740 = smul.u32 %s2738, 256
                  %s2741 = scalar_lea.vmem %s2364, %s2739 [#allocation3]
                  %s2742 = scalar_lea.vmem %s2377, %s2740
                $region148: #{discriminator_forward.3} parent=142 // loop_footer
                  %s2602 = sadd.s32 %s2600, 1
                $region149: #{discriminator_forward.3} parent=142 // loop_footer_branch
                  %2599 = sbr.rel target = $region145
                $region150: #{discriminator_forward.3} parent=142 // loop_exit
                  _
                %s2743 = sshrl.u32 %s2595, 5
                %s2744 = sand.u32 %s2595, 31
                %s2745 = smul.u32 %s2743, 32
                %s2746 = smul.u32 128, %s2745
                %s2747 = sshra.s32 %s2746, 4
                %s2748 = scalar_lea.vmem %s2364, %s2747 [#allocation3]
                %s2749 = smul.u32 128, %s2745
                %s2750 = sshra.s32 %s2749, 4
                %s2751 = scalar_lea.vmem %s2377, %s2750
                // While loop
                $region151: #{discriminator_forward.3} parent=142 // loop_pre_header
                  _
                $region152: #{discriminator_forward.3} parent=142 // loop_header
                  %s2755 = sphi 0, %s2757
                  %p2756 = scmp.ge.s32.totalorder %s2755, %s2744
                  %s2760 = sphi 0, %s2769
                  %s2761 = sphi %s2748, %s2772
                  %s2762 = sphi %s2751, %s2773
                $region153: #{discriminator_forward.3} parent=142 // loop_header_branch
                  %2759 = sbr.rel (%p2756) target = $region157
                $region154: #{discriminator_forward.3} parent=142 // loop_body
                  %v2763 = vld [vmem:[%s2761] sm:$0xff]
                  %2764 = vst [vmem:[%s2762] sm:$0xff] %v2763
                  %v2765 = vld [vmem:[%s2761 + $0x20] sm:$0xff]
                  %2766 = vst [vmem:[%s2762 + $0x3c] sm:$0xff] %v2765
                  %s2767 = sadd.s32 1, %s2760
                  %p2768 = scmp.ge.s32.totalorder %s2767, %s2744
                  %s2769 = scalar_select %p2768, 0, %s2767
                  %s2770 = smul.u32 %s2769, 8
                  %s2771 = smul.u32 %s2769, 8
                  %s2772 = scalar_lea.vmem %s2748, %s2770 [#allocation3]
                  %s2773 = scalar_lea.vmem %s2751, %s2771
                $region155: #{discriminator_forward.3} parent=142 // loop_footer
                  %s2757 = sadd.s32 %s2755, 1
                $region156: #{discriminator_forward.3} parent=142 // loop_footer_branch
                  %2754 = sbr.rel target = $region152
                $region157: #{discriminator_forward.3} parent=142 // loop_exit
                  _
                %s2774 = sshll.u32 1, %s2590
                %s2775 = ssub.s32 %s2774, 1
                loop: start=0, step=1, limit=1
                $region158: #{discriminator_forward.3} parent=142 // loop_pre_header
                  _
                $region159: #{discriminator_forward.3} parent=142 // loop_header
                  %s2777 = sphi 0, %s2781
                  %p2778 = scmp.ge.s32.totalorder %s2777, 1
                  %s2782 = sphi %s2592, %s2592
                  %s2783 = sphi %s2594, %s2594
                $region160: #{discriminator_forward.3} parent=142 // loop_header_branch
                  %2780 = sbr.rel (%p2778) target = $region164
                $region161: #{discriminator_forward.3} parent=142 // loop_body
                  %v2784 = vld [vmem:[%s2782] sm:%s2775]
                  %2785 = vst [vmem:[%s2783] sm:%s2775] %v2784
                  %v2786 = vld [vmem:[%s2782 + $0x20] sm:%s2775]
                  %2787 = vst [vmem:[%s2783 + $0x3c] sm:%s2775] %v2786
                $region162: #{discriminator_forward.3} parent=142 // loop_footer
                  %s2781 = sadd.s32 1, %s2777
                $region163: #{discriminator_forward.3} parent=142 // loop_footer_branch
                  %2776 = sbr.rel target = $region159
                $region164: #{discriminator_forward.3} parent=142 // loop_exit
                  _
              $region143: #{discriminator_forward.3} parent=109 // pred_fallthru
                _
            $region110: #{discriminator_forward.3} parent=105 // pred_fallthru
              _
            // Predicated region
            $region111: #{discriminator_forward.3} parent=105 // pred_check
              %p2386 = pneg %p2382
            $region112: #{discriminator_forward.3} parent=105 // pred_check_branch
              %2388 = sbr.rel (%p2386) target = $region114
            $region113: #{discriminator_forward.3} parent=105 // pred_region
              %s2389 = sshll.u32 1, %s2378
              %s2390 = ssub.s32 %s2389, 1
              loop: start=0, step=1, limit=1
              $region115: #{discriminator_forward.3} parent=113 // loop_pre_header
                _
              $region116: #{discriminator_forward.3} parent=113 // loop_header
                %s2392 = sphi 0, %s2396
                %p2393 = scmp.ge.s32.totalorder %s2392, 1
                %s2397 = sphi %s2364, %s2364
                %s2398 = sphi %s2377, %s2377
              $region117: #{discriminator_forward.3} parent=113 // loop_header_branch
                %2395 = sbr.rel (%p2393) target = $region121
              $region118: #{discriminator_forward.3} parent=113 // loop_body
                %v2399 = vld [vmem:[%s2397] sm:%s2390]
                %2400 = vst [vmem:[%s2398] sm:%s2390] %v2399
                %v2401 = vld [vmem:[%s2397 + $0x20] sm:%s2390]
                %2402 = vst [vmem:[%s2398 + $0x3c] sm:%s2390] %v2401
              $region119: #{discriminator_forward.3} parent=113 // loop_footer
                %s2396 = sadd.s32 1, %s2392
              $region120: #{discriminator_forward.3} parent=113 // loop_footer_branch
                %2391 = sbr.rel target = $region116
              $region121: #{discriminator_forward.3} parent=113 // loop_exit
                _
            $region114: #{discriminator_forward.3} parent=105 // pred_fallthru
              _
          $region106: #{discriminator_forward.3} parent=101 // pred_fallthru
            _
          %2788 = vnop
        $region102: #{discriminator_forward.3} parent=93 // pred_fallthru
          _
      $region94: #{discriminator_forward.3} parent=5 // pred_fallthru
        _
      %p2789 = scmp.le.s32.totalorder 2, %s9
      // Predicated region
      $region165: #{discriminator_forward.3} parent=5 // pred_check
        %p2790 = pneg %p2789
      $region166: #{discriminator_forward.3} parent=5 // pred_check_branch
        %2792 = sbr.rel (%p2790) target = $region168
      $region167: #{discriminator_forward.3} parent=5 // pred_region
        %s2793 = ssub.s32 %s9, 2
        // Predicated region
        $region169: #{discriminator_forward.3} parent=167 // pred_check
          %p2794 = pneg %p122
        $region170: #{discriminator_forward.3} parent=167 // pred_check_branch
          %2796 = sbr.rel (%p2794) target = $region172
        $region171: #{discriminator_forward.3} parent=167 // pred_region
          %s2797 = sand.u32 %s107, 1
          %s2798 = sand.u32 %s107, 1
          %s2799 = smul.addr %s2798, 64
          %s2800 = scalar_lea.vmem [#allocation3], %s2799
        $region172: #{discriminator_forward.3} parent=167 // pred_fallthru
          _
      $region168: #{discriminator_forward.3} parent=5 // pred_fallthru
        _
    $region6: #{discriminator_forward.3} parent=1 // loop_footer
      %s13 = sadd.s32 1, %s9
    $region7: #{discriminator_forward.3} parent=1 // loop_footer_branch
      %8 = sbr.rel target = $region3
    $region8: #{discriminator_forward.3} parent=1 // loop_exit
      _

// kernel: discriminator_forward.4
$region0: #{discriminator_forward.4}
  #allocation0 [shape = 'u32[]', space=smem, size = 0x4, offset = 0x4, fixed_abs, tag = 'smem constant byte address 0x4 - core index']
  #allocation1 [shape = 'u32[144,128]{1,0:T(1,128)}', space=vmem, size = 0x12000, scoped, tag = 'internal scratch']
  %s0 = inlined_call_operand.vmem [shape: bf16[2,256,1664], index: 0, kind: input, shape index: {}]
  %s1 = inlined_call_operand.vmem [shape: f32[1,1664], index: 1, kind: input, shape index: {}]
  %s2 = inlined_call_operand.vmem [shape: bf16[32,256], index: 2, kind: input, shape index: {}]
  %s3 = inlined_call_operand.vmem [shape: f32[32,1], index: 3, kind: input, shape index: {}]
  %s4 = inlined_call_operand.vmem [shape: f32[32,1], index: 4, kind: input, shape index: {}]
  %s5 = inlined_call_operand.vmem [shape: bf16[2,32,384], index: 5, kind: output, shape index: {}]
  %s6 = sld [smem:[#allocation0]]
  $region53: #{discriminator_forward.4} parent=0
    _
  %s8 = ssub.s32 1, %s6
  %s9 = scalar_select 0, %s8, %s6
  loop: start=0, step=1, limit=4
  $region2: #{discriminator_forward.4} parent=0 // loop_pre_header
    _
  $region3: #{discriminator_forward.4} parent=0 // loop_header
    %s11 = sphi 0, %s15
    %p12 = scmp.ge.s32.totalorder %s11, 4
    %s21 = sphi 0, %s23
    %s24 = sphi 0, %s21
    %s25 = sphi 0, %s24
    %s41 = sphi 0, %s25
    %s45 = sphi 0, %s45
    %s47 = sphi 0, %s45
    %s48 = sphi 0, %s47
    %s62 = sphi 0, %s48
    %s66 = sphi 0, %s66
    %s68 = sphi 0, %s66
    %s69 = sphi 0, %s68
    %s83 = sphi 0, %s69
    %s87 = sphi 0, %s87
    %s89 = sphi 0, %s87
    %s90 = sphi 0, %s89
    %s104 = sphi 0, %s90
    %s108 = sphi 0, %s108
    %s110 = sphi 0, %s108
    %s111 = sphi 0, %s110
    %s125 = sphi 0, %s111
    %s131 = sphi 0, %s133
    %s134 = sphi 0, %s131
    %s135 = sphi 0, %s134
    %s151 = sphi 0, %s135
  $region4: #{discriminator_forward.4} parent=0 // loop_header_branch
    %14 = sbr.rel (%p12) target = $region8
  $region5: #{discriminator_forward.4} parent=0 // loop_body
    %s16 = ssub.s32 %s11, 1
    %s17 = ssub.s32 %s11, 2
    %s18 = sadd.s32 %s11, 1
    %s19 = ssub.s32 %s11, %s18
    %p20 = scmp.eq.s32.totalorder %s19, 0
    %s22 = sadd.s32 %s21, 1
    %s23 = scalar_select %p20, %s21, %s22
    %p26 = pneg %p20
    %p27 = scmp.eq.s32.totalorder %s11, 1
    %p28 = por %p26, %p27
    %p29 = scmp.ne.s32.totalorder %s21, %s24
    %p30 = scmp.eq.s32.totalorder %s11, 0
    %p31 = por %p29, %p30
    %p32 = scmp.ne.s32.totalorder %s21, %s24
    %p33 = scmp.eq.s32.totalorder %s16, 1
    %p34 = por %p32, %p33
    %p35 = scmp.ne.s32.totalorder %s24, %s25
    %p36 = scmp.eq.s32.totalorder %s16, 0
    %p37 = por %p35, %p36
    %p38 = scmp.ne.s32.totalorder %s24, %s25
    %p39 = scmp.eq.s32.totalorder %s17, 1
    %p40 = por %p38, %p39
    %p42 = scmp.ne.s32.totalorder %s25, %s41
    %p43 = scmp.eq.s32.totalorder %s17, 0
    %p44 = por %p42, %p43
    %s46 = sadd.s32 %s45, 1
    %p49 = scmp.eq.s32.totalorder %s11, 1
    %p50 = scmp.ne.s32.totalorder %s45, %s47
    %p51 = scmp.eq.s32.totalorder %s11, 0
    %p52 = por %p50, %p51
    %p53 = scmp.ne.s32.totalorder %s45, %s47
    %p54 = scmp.eq.s32.totalorder %s16, 1
    %p55 = por %p53, %p54
    %p56 = scmp.ne.s32.totalorder %s47, %s48
    %p57 = scmp.eq.s32.totalorder %s16, 0
    %p58 = por %p56, %p57
    %p59 = scmp.ne.s32.totalorder %s47, %s48
    %p60 = scmp.eq.s32.totalorder %s17, 1
    %p61 = por %p59, %p60
    %p63 = scmp.ne.s32.totalorder %s48, %s62
    %p64 = scmp.eq.s32.totalorder %s17, 0
    %p65 = por %p63, %p64
    %s67 = sadd.s32 %s66, 1
    %p70 = scmp.eq.s32.totalorder %s11, 1
    %p71 = scmp.ne.s32.totalorder %s66, %s68
    %p72 = scmp.eq.s32.totalorder %s11, 0
    %p73 = por %p71, %p72
    %p74 = scmp.ne.s32.totalorder %s66, %s68
    %p75 = scmp.eq.s32.totalorder %s16, 1
    %p76 = por %p74, %p75
    %p77 = scmp.ne.s32.totalorder %s68, %s69
    %p78 = scmp.eq.s32.totalorder %s16, 0
    %p79 = por %p77, %p78
    %p80 = scmp.ne.s32.totalorder %s68, %s69
    %p81 = scmp.eq.s32.totalorder %s17, 1
    %p82 = por %p80, %p81
    %p84 = scmp.ne.s32.totalorder %s69, %s83
    %p85 = scmp.eq.s32.totalorder %s17, 0
    %p86 = por %p84, %p85
    %s88 = sadd.s32 %s87, 1
    %p91 = scmp.eq.s32.totalorder %s11, 1
    %p92 = scmp.ne.s32.totalorder %s87, %s89
    %p93 = scmp.eq.s32.totalorder %s11, 0
    %p94 = por %p92, %p93
    %p95 = scmp.ne.s32.totalorder %s87, %s89
    %p96 = scmp.eq.s32.totalorder %s16, 1
    %p97 = por %p95, %p96
    %p98 = scmp.ne.s32.totalorder %s89, %s90
    %p99 = scmp.eq.s32.totalorder %s16, 0
    %p100 = por %p98, %p99
    %p101 = scmp.ne.s32.totalorder %s89, %s90
    %p102 = scmp.eq.s32.totalorder %s17, 1
    %p103 = por %p101, %p102
    %p105 = scmp.ne.s32.totalorder %s90, %s104
    %p106 = scmp.eq.s32.totalorder %s17, 0
    %p107 = por %p105, %p106
    %s109 = sadd.s32 %s108, 1
    %p112 = scmp.eq.s32.totalorder %s11, 1
    %p113 = scmp.ne.s32.totalorder %s108, %s110
    %p114 = scmp.eq.s32.totalorder %s11, 0
    %p115 = por %p113, %p114
    %p116 = scmp.ne.s32.totalorder %s108, %s110
    %p117 = scmp.eq.s32.totalorder %s16, 1
    %p118 = por %p116, %p117
    %p119 = scmp.ne.s32.totalorder %s110, %s111
    %p120 = scmp.eq.s32.totalorder %s16, 0
    %p121 = por %p119, %p120
    %p122 = scmp.ne.s32.totalorder %s110, %s111
    %p123 = scmp.eq.s32.totalorder %s17, 1
    %p124 = por %p122, %p123
    %p126 = scmp.ne.s32.totalorder %s111, %s125
    %p127 = scmp.eq.s32.totalorder %s17, 0
    %p128 = por %p126, %p127
    %s129 = ssub.s32 %s11, %s18
    %p130 = scmp.eq.s32.totalorder %s129, 0
    %s132 = sadd.s32 %s131, 1
    %s133 = scalar_select %p130, %s131, %s132
    %p136 = pneg %p130
    %p137 = scmp.eq.s32.totalorder %s11, 1
    %p138 = por %p136, %p137
    %p139 = scmp.ne.s32.totalorder %s131, %s134
    %p140 = scmp.eq.s32.totalorder %s11, 0
    %p141 = por %p139, %p140
    %p142 = scmp.ne.s32.totalorder %s131, %s134
    %p143 = scmp.eq.s32.totalorder %s16, 1
    %p144 = por %p142, %p143
    %p145 = scmp.ne.s32.totalorder %s134, %s135
    %p146 = scmp.eq.s32.totalorder %s16, 0
    %p147 = por %p145, %p146
    %p148 = scmp.ne.s32.totalorder %s134, %s135
    %p149 = scmp.eq.s32.totalorder %s17, 1
    %p150 = por %p148, %p149
    %p152 = scmp.ne.s32.totalorder %s135, %s151
    %p153 = scmp.eq.s32.totalorder %s17, 0
    %p154 = por %p152, %p153
    %p155 = scmp.le.s32.totalorder 1, %s11
    %p156 = scmp.lt.s32.totalorder %s11, 3
    %p157 = pnand %p155, %p156
    %p158 = pneg %p157
    // Predicated region
    $region9: #{discriminator_forward.4} parent=5 // pred_check
      _
    $region10: #{discriminator_forward.4} parent=5 // pred_check_branch
      %160 = sbr.rel (%p157) target = $region12
    $region11: #{discriminator_forward.4} parent=5 // pred_region
      %s161 = ssub.s32 %s11, 1
      // Predicated region
      $region13: #{discriminator_forward.4} parent=11 // pred_check
        %p162 = pneg %p58
      $region14: #{discriminator_forward.4} parent=11 // pred_check_branch
        %164 = sbr.rel (%p162) target = $region16
      $region15: #{discriminator_forward.4} parent=11 // pred_region
        _
      $region16: #{discriminator_forward.4} parent=11 // pred_fallthru
        _
      // Predicated region
      $region17: #{discriminator_forward.4} parent=11 // pred_check
        %p165 = pneg %p79
      $region18: #{discriminator_forward.4} parent=11 // pred_check_branch
        %167 = sbr.rel (%p165) target = $region20
      $region19: #{discriminator_forward.4} parent=11 // pred_region
        _
      $region20: #{discriminator_forward.4} parent=11 // pred_fallthru
        _
      // Predicated region
      $region21: #{discriminator_forward.4} parent=11 // pred_check
        %p168 = pneg %p100
      $region22: #{discriminator_forward.4} parent=11 // pred_check_branch
        %170 = sbr.rel (%p168) target = $region24
      $region23: #{discriminator_forward.4} parent=11 // pred_region
        _
      $region24: #{discriminator_forward.4} parent=11 // pred_fallthru
        _
      // Predicated region
      $region25: #{discriminator_forward.4} parent=11 // pred_check
        %p171 = pneg %p121
      $region26: #{discriminator_forward.4} parent=11 // pred_check_branch
        %173 = sbr.rel (%p171) target = $region28
      $region27: #{discriminator_forward.4} parent=11 // pred_region
        _
      $region28: #{discriminator_forward.4} parent=11 // pred_fallthru
        _
    $region12: #{discriminator_forward.4} parent=5 // pred_fallthru
      _
    %p174 = scmp.lt.s32.totalorder %s11, 2
    // Predicated region
    $region29: #{discriminator_forward.4} parent=5 // pred_check
      %p175 = pneg %p174
    $region30: #{discriminator_forward.4} parent=5 // pred_check_branch
      %177 = sbr.rel (%p175) target = $region32
    $region31: #{discriminator_forward.4} parent=5 // pred_region
      // Predicated region
      $region33: #{discriminator_forward.4} parent=31 // pred_check
        %p178 = pneg %p31
      $region34: #{discriminator_forward.4} parent=31 // pred_check_branch
        %180 = sbr.rel (%p178) target = $region36
      $region35: #{discriminator_forward.4} parent=31 // pred_region
        %p181 = scmp.lt.s32.totalorder %s11, 1
        %s182 = scalar_select %p181, %s11, 1
        %s183 = smul.addr %s182, 416
        %s184 = smul.addr %s183, 4
        %s185 = scalar_lea.vmem %s0, %s184
      $region36: #{discriminator_forward.4} parent=31 // pred_fallthru
        _
    $region32: #{discriminator_forward.4} parent=5 // pred_fallthru
      _
    %p186 = scmp.le.s32.totalorder 1, %s11
    %p187 = scmp.lt.s32.totalorder %s11, 3
    %p188 = pnand %p186, %p187
    %p189 = pneg %p188
    // Predicated region
    $region37: #{discriminator_forward.4} parent=5 // pred_check
      _
    $region38: #{discriminator_forward.4} parent=5 // pred_check_branch
      %191 = sbr.rel (%p188) target = $region40
    $region39: #{discriminator_forward.4} parent=5 // pred_region
      %s192 = ssub.s32 %s11, 1
      %p193 = scmp.lt.s32.totalorder %s16, 1
      %s194 = scalar_select %p193, %s16, 1
      %s195 = smul.addr %s194, 416
      %s196 = smul.addr %s195, 4
      %s197 = scalar_lea.vmem %s0, %s196
      %p198 = pneg %p37
      %p199 = pneg %p34
      %p200 = pneg %p58
      %p201 = pneg %p55
      %p202 = pneg %p79
      %p203 = pneg %p76
      %p204 = pneg %p100
      %p205 = pneg %p97
      %p206 = pneg %p121
      %p207 = pneg %p118
      %p208 = pneg %p147
      %p209 = pneg %p144
      %p210 = scmp.lt.s32.totalorder %s16, 1
      %s211 = scalar_select %p210, %s16, 1
      %s212 = smul.addr %s211, 12
      %s213 = smul.addr %s212, 4
      %s214 = scalar_lea.vmem %s5, %s213
      %p215 = scmp.lt.s32.totalorder %s16, 1
      %s216 = scalar_select %p215, %s16, 1
      %s217 = smul.addr %s216, 416
      %s218 = smul.addr %s217, 4
      %s219 = scalar_lea.vmem %s0, %s218
      %p220 = scmp.lt.s32.totalorder %s16, 1
      %s221 = scalar_select %p220, %s16, 1
      %s222 = smul.addr %s221, 12
      %s223 = smul.addr %s222, 4
      %s224 = scalar_lea.vmem %s5, %s223
      %v226 = vld [vmem:[%s2] sm:$0xff]
      %v227 = vld [vmem:[%s2 + $0x8] sm:$0xff]
      %v228 = vld [vmem:[%s2 + $0x10] sm:$0xff]
      %v229 = vld [vmem:[%s2 + $0x18] sm:$0xff]
      %v230 = vld [vmem:[%s219] sm:$0xff]
      %v231 = vld [vmem:[%s219 + $0x8] sm:$0xff]
      %v232 = vld [vmem:[%s219 + $0x10] sm:$0xff]
      %v233 = vld [vmem:[%s219 + $0x18] sm:$0xff]
      %v234 = vld [vmem:[%s219 + $0x20] sm:$0xff]
      %v235 = vld [vmem:[%s219 + $0x28] sm:$0xff]
      %v236 = vld [vmem:[%s219 + $0x30] sm:$0xf]
      %v237 = vld [vmem:[%s219 + $0x34] sm:$0xff]
      %v238 = vld [vmem:[%s219 + $0x3c] sm:$0xff]
      %v239 = vld [vmem:[%s219 + $0x44] sm:$0xff]
      %v240 = vld [vmem:[%s219 + $0x4c] sm:$0xff]
      %v241 = vld [vmem:[%s219 + $0x54] sm:$0xff]
      %v242 = vld [vmem:[%s219 + $0x5c] sm:$0xff]
      %v243 = vld [vmem:[%s219 + $0x64] sm:$0xf]
      %v244 = vld [vmem:[%s219 + $0x68] sm:$0xff]
      %v245 = vld [vmem:[%s219 + $0x70] sm:$0xff]
      %v246 = vld [vmem:[%s219 + $0x78] sm:$0xff]
      %v247 = vld [vmem:[%s219 + $0x80] sm:$0xff]
      %v248 = vld [vmem:[%s219 + $0x88] sm:$0xff]
      %v249 = vld [vmem:[%s219 + $0x90] sm:$0xff]
      %v250 = vld [vmem:[%s219 + $0x98] sm:$0xf]
      %v251 = vld [vmem:[%s219 + $0x9c] sm:$0xff]
      %v252 = vld [vmem:[%s219 + $0xa4] sm:$0xff]
      %v253 = vld [vmem:[%s219 + $0xac] sm:$0xff]
      %v254 = vld [vmem:[%s219 + $0xb4] sm:$0xff]
      %v255 = vld [vmem:[%s219 + $0xbc] sm:$0xff]
      %v256 = vld [vmem:[%s219 + $0xc4] sm:$0xff]
      %v257 = vld [vmem:[%s219 + $0xcc] sm:$0xf]
      %v258 = vld [vmem:[%s219 + $0xd0] sm:$0xff]
      %v259 = vld [vmem:[%s219 + $0xd8] sm:$0xff]
      %v260 = vld [vmem:[%s219 + $0xe0] sm:$0xff]
      %v261 = vld [vmem:[%s219 + $0xe8] sm:$0xff]
      %v262 = vld [vmem:[%s219 + $0xf0] sm:$0xff]
      %v263 = vld [vmem:[%s219 + $0xf8] sm:$0xff]
      %v264 = vld [vmem:[%s219 + $0x100] sm:$0xf]
      %v265 = vld [vmem:[%s219 + $0x104] sm:$0xff]
      %v266 = vld [vmem:[%s219 + $0x10c] sm:$0xff]
      %v267 = vld [vmem:[%s219 + $0x114] sm:$0xff]
      %v268 = vld [vmem:[%s219 + $0x11c] sm:$0xff]
      %v269 = vld [vmem:[%s219 + $0x124] sm:$0xff]
      %v270 = vld [vmem:[%s219 + $0x12c] sm:$0xff]
      %v271 = vld [vmem:[%s219 + $0x134] sm:$0xf]
      %v272 = vld [vmem:[%s219 + $0x138] sm:$0xff]
      %v273 = vld [vmem:[%s219 + $0x140] sm:$0xff]
      %v274 = vld [vmem:[%s219 + $0x148] sm:$0xff]
      %v275 = vld [vmem:[%s219 + $0x150] sm:$0xff]
      %v276 = vld [vmem:[%s219 + $0x158] sm:$0xff]
      %v277 = vld [vmem:[%s219 + $0x160] sm:$0xff]
      %v278 = vld [vmem:[%s219 + $0x168] sm:$0xf]
      %v279 = vld [vmem:[%s219 + $0x16c] sm:$0xff]
      %v280 = vld [vmem:[%s219 + $0x174] sm:$0xff]
      %v281 = vld [vmem:[%s219 + $0x17c] sm:$0xff]
      %v282 = vld [vmem:[%s219 + $0x184] sm:$0xff]
      %v283 = vld [vmem:[%s219 + $0x18c] sm:$0xff]
      %v284 = vld [vmem:[%s219 + $0x194] sm:$0xff]
      %v285 = vld [vmem:[%s219 + $0x19c] sm:$0xf]
      %v286 = vld [vmem:[%s219 + $0x1a0] sm:$0xff]
      %v287 = vld [vmem:[%s219 + $0x1a8] sm:$0xff]
      %v288 = vld [vmem:[%s219 + $0x1b0] sm:$0xff]
      %v289 = vld [vmem:[%s219 + $0x1b8] sm:$0xff]
      %v290 = vld [vmem:[%s219 + $0x1c0] sm:$0xff]
      %v291 = vld [vmem:[%s219 + $0x1c8] sm:$0xff]
      %v292 = vld [vmem:[%s219 + $0x1d0] sm:$0xf]
      %v293 = vld [vmem:[%s219 + $0x1d4] sm:$0xff]
      %v294 = vld [vmem:[%s219 + $0x1dc] sm:$0xff]
      %v295 = vld [vmem:[%s219 + $0x1e4] sm:$0xff]
      %v296 = vld [vmem:[%s219 + $0x1ec] sm:$0xff]
      %v297 = vld [vmem:[%s219 + $0x1f4] sm:$0xff]
      %v298 = vld [vmem:[%s219 + $0x1fc] sm:$0xff]
      %v299 = vld [vmem:[%s219 + $0x204] sm:$0xf]
      %v300 = vld [vmem:[%s219 + $0x208] sm:$0xff]
      %v301 = vld [vmem:[%s219 + $0x210] sm:$0xff]
      %v302 = vld [vmem:[%s219 + $0x218] sm:$0xff]
      %v303 = vld [vmem:[%s219 + $0x220] sm:$0xff]
      %v304 = vld [vmem:[%s219 + $0x228] sm:$0xff]
      %v305 = vld [vmem:[%s219 + $0x230] sm:$0xff]
      %v306 = vld [vmem:[%s219 + $0x238] sm:$0xf]
      %v307 = vld [vmem:[%s219 + $0x23c] sm:$0xff]
      %v308 = vld [vmem:[%s219 + $0x244] sm:$0xff]
      %v309 = vld [vmem:[%s219 + $0x24c] sm:$0xff]
      %v310 = vld [vmem:[%s219 + $0x254] sm:$0xff]
      %v311 = vld [vmem:[%s219 + $0x25c] sm:$0xff]
      %v312 = vld [vmem:[%s219 + $0x264] sm:$0xff]
      %v313 = vld [vmem:[%s219 + $0x26c] sm:$0xf]
      %v314 = vld [vmem:[%s219 + $0x270] sm:$0xff]
      %v315 = vld [vmem:[%s219 + $0x278] sm:$0xff]
      %v316 = vld [vmem:[%s219 + $0x280] sm:$0xff]
      %v317 = vld [vmem:[%s219 + $0x288] sm:$0xff]
      %v318 = vld [vmem:[%s219 + $0x290] sm:$0xff]
      %v319 = vld [vmem:[%s219 + $0x298] sm:$0xff]
      %v320 = vld [vmem:[%s219 + $0x2a0] sm:$0xf]
      %v321 = vld [vmem:[%s219 + $0x2a4] sm:$0xff]
      %v322 = vld [vmem:[%s219 + $0x2ac] sm:$0xff]
      %v323 = vld [vmem:[%s219 + $0x2b4] sm:$0xff]
      %v324 = vld [vmem:[%s219 + $0x2bc] sm:$0xff]
      %v325 = vld [vmem:[%s219 + $0x2c4] sm:$0xff]
      %v326 = vld [vmem:[%s219 + $0x2cc] sm:$0xff]
      %v327 = vld [vmem:[%s219 + $0x2d4] sm:$0xf]
      %v328 = vld [vmem:[%s219 + $0x2d8] sm:$0xff]
      %v329 = vld [vmem:[%s219 + $0x2e0] sm:$0xff]
      %v330 = vld [vmem:[%s219 + $0x2e8] sm:$0xff]
      %v331 = vld [vmem:[%s219 + $0x2f0] sm:$0xff]
      %v332 = vld [vmem:[%s219 + $0x2f8] sm:$0xff]
      %v333 = vld [vmem:[%s219 + $0x300] sm:$0xff]
      %v334 = vld [vmem:[%s219 + $0x308] sm:$0xf]
      %v335 = vld [vmem:[%s219 + $0x30c] sm:$0xff]
      %v336 = vld [vmem:[%s219 + $0x314] sm:$0xff]
      %v337 = vld [vmem:[%s219 + $0x31c] sm:$0xff]
      %v338 = vld [vmem:[%s219 + $0x324] sm:$0xff]
      %v339 = vld [vmem:[%s219 + $0x32c] sm:$0xff]
      %v340 = vld [vmem:[%s219 + $0x334] sm:$0xff]
      %v341 = vld [vmem:[%s219 + $0x33c] sm:$0xf]
      %v342 = vld [vmem:[%s219 + $0x340] sm:$0xff]
      %v343 = vld [vmem:[%s219 + $0x348] sm:$0xff]
      %v344 = vld [vmem:[%s219 + $0x350] sm:$0xff]
      %v345 = vld [vmem:[%s219 + $0x358] sm:$0xff]
      %v346 = vld [vmem:[%s219 + $0x360] sm:$0xff]
      %v347 = vld [vmem:[%s219 + $0x368] sm:$0xff]
      %v348 = vld [vmem:[%s219 + $0x370] sm:$0xf]
      %v349 = vld [vmem:[%s219 + $0x374] sm:$0xff]
      %v350 = vld [vmem:[%s219 + $0x37c] sm:$0xff]
      %v351 = vld [vmem:[%s219 + $0x384] sm:$0xff]
      %v352 = vld [vmem:[%s219 + $0x38c] sm:$0xff]
      %v353 = vld [vmem:[%s219 + $0x394] sm:$0xff]
      %v354 = vld [vmem:[%s219 + $0x39c] sm:$0xff]
      %v355 = vld [vmem:[%s219 + $0x3a4] sm:$0xf]
      %v356 = vld [vmem:[%s219 + $0x3a8] sm:$0xff]
      %v357 = vld [vmem:[%s219 + $0x3b0] sm:$0xff]
      %v358 = vld [vmem:[%s219 + $0x3b8] sm:$0xff]
      %v359 = vld [vmem:[%s219 + $0x3c0] sm:$0xff]
      %v360 = vld [vmem:[%s219 + $0x3c8] sm:$0xff]
      %v361 = vld [vmem:[%s219 + $0x3d0] sm:$0xff]
      %v362 = vld [vmem:[%s219 + $0x3d8] sm:$0xf]
      %v363 = vld [vmem:[%s219 + $0x3dc] sm:$0xff]
      %v364 = vld [vmem:[%s219 + $0x3e4] sm:$0xff]
      %v365 = vld [vmem:[%s219 + $0x3ec] sm:$0xff]
      %v366 = vld [vmem:[%s219 + $0x3f4] sm:$0xff]
      %v367 = vld [vmem:[%s219 + $0x3fc] sm:$0xff]
      %v368 = vld [vmem:[%s219 + $0x404] sm:$0xff]
      %v369 = vld [vmem:[%s219 + $0x40c] sm:$0xf]
      %v370 = vld [vmem:[%s219 + $0x410] sm:$0xff]
      %v371 = vld [vmem:[%s219 + $0x418] sm:$0xff]
      %v372 = vld [vmem:[%s219 + $0x420] sm:$0xff]
      %v373 = vld [vmem:[%s219 + $0x428] sm:$0xff]
      %v374 = vld [vmem:[%s219 + $0x430] sm:$0xff]
      %v375 = vld [vmem:[%s219 + $0x438] sm:$0xff]
      %v376 = vld [vmem:[%s219 + $0x440] sm:$0xf]
      %v377 = vld [vmem:[%s219 + $0x444] sm:$0xff]
      %v378 = vld [vmem:[%s219 + $0x44c] sm:$0xff]
      %v379 = vld [vmem:[%s219 + $0x454] sm:$0xff]
      %v380 = vld [vmem:[%s219 + $0x45c] sm:$0xff]
      %v381 = vld [vmem:[%s219 + $0x464] sm:$0xff]
      %v382 = vld [vmem:[%s219 + $0x46c] sm:$0xff]
      %v383 = vld [vmem:[%s219 + $0x474] sm:$0xf]
      %v384 = vld [vmem:[%s219 + $0x478] sm:$0xff]
      %v385 = vld [vmem:[%s219 + $0x480] sm:$0xff]
      %v386 = vld [vmem:[%s219 + $0x488] sm:$0xff]
      %v387 = vld [vmem:[%s219 + $0x490] sm:$0xff]
      %v388 = vld [vmem:[%s219 + $0x498] sm:$0xff]
      %v389 = vld [vmem:[%s219 + $0x4a0] sm:$0xff]
      %v390 = vld [vmem:[%s219 + $0x4a8] sm:$0xf]
      %v391 = vld [vmem:[%s219 + $0x4ac] sm:$0xff]
      %v392 = vld [vmem:[%s219 + $0x4b4] sm:$0xff]
      %v393 = vld [vmem:[%s219 + $0x4bc] sm:$0xff]
      %v394 = vld [vmem:[%s219 + $0x4c4] sm:$0xff]
      %v395 = vld [vmem:[%s219 + $0x4cc] sm:$0xff]
      %v396 = vld [vmem:[%s219 + $0x4d4] sm:$0xff]
      %v397 = vld [vmem:[%s219 + $0x4dc] sm:$0xf]
      %v398 = vld [vmem:[%s219 + $0x4e0] sm:$0xff]
      %v399 = vld [vmem:[%s219 + $0x4e8] sm:$0xff]
      %v400 = vld [vmem:[%s219 + $0x4f0] sm:$0xff]
      %v401 = vld [vmem:[%s219 + $0x4f8] sm:$0xff]
      %v402 = vld [vmem:[%s219 + $0x500] sm:$0xff]
      %v403 = vld [vmem:[%s219 + $0x508] sm:$0xff]
      %v404 = vld [vmem:[%s219 + $0x510] sm:$0xf]
      %v405 = vld [vmem:[%s219 + $0x514] sm:$0xff]
      %v406 = vld [vmem:[%s219 + $0x51c] sm:$0xff]
      %v407 = vld [vmem:[%s219 + $0x524] sm:$0xff]
      %v408 = vld [vmem:[%s219 + $0x52c] sm:$0xff]
      %v409 = vld [vmem:[%s219 + $0x534] sm:$0xff]
      %v410 = vld [vmem:[%s219 + $0x53c] sm:$0xff]
      %v411 = vld [vmem:[%s219 + $0x544] sm:$0xf]
      %v412 = vld [vmem:[%s219 + $0x548] sm:$0xff]
      %v413 = vld [vmem:[%s219 + $0x550] sm:$0xff]
      %v414 = vld [vmem:[%s219 + $0x558] sm:$0xff]
      %v415 = vld [vmem:[%s219 + $0x560] sm:$0xff]
      %v416 = vld [vmem:[%s219 + $0x568] sm:$0xff]
      %v417 = vld [vmem:[%s219 + $0x570] sm:$0xff]
      %v418 = vld [vmem:[%s219 + $0x578] sm:$0xf]
      %v419 = vld [vmem:[%s219 + $0x57c] sm:$0xff]
      %v420 = vld [vmem:[%s219 + $0x584] sm:$0xff]
      %v421 = vld [vmem:[%s219 + $0x58c] sm:$0xff]
      %v422 = vld [vmem:[%s219 + $0x594] sm:$0xff]
      %v423 = vld [vmem:[%s219 + $0x59c] sm:$0xff]
      %v424 = vld [vmem:[%s219 + $0x5a4] sm:$0xff]
      %v425 = vld [vmem:[%s219 + $0x5ac] sm:$0xf]
      %v426 = vld [vmem:[%s219 + $0x5b0] sm:$0xff]
      %v427 = vld [vmem:[%s219 + $0x5b8] sm:$0xff]
      %v428 = vld [vmem:[%s219 + $0x5c0] sm:$0xff]
      %v429 = vld [vmem:[%s219 + $0x5c8] sm:$0xff]
      %v430 = vld [vmem:[%s219 + $0x5d0] sm:$0xff]
      %v431 = vld [vmem:[%s219 + $0x5d8] sm:$0xff]
      %v432 = vld [vmem:[%s219 + $0x5e0] sm:$0xf]
      %v433 = vld [vmem:[%s219 + $0x5e4] sm:$0xff]
      %v434 = vld [vmem:[%s219 + $0x5ec] sm:$0xff]
      %v435 = vld [vmem:[%s219 + $0x5f4] sm:$0xff]
      %v436 = vld [vmem:[%s219 + $0x5fc] sm:$0xff]
      %v437 = vld [vmem:[%s219 + $0x604] sm:$0xff]
      %v438 = vld [vmem:[%s219 + $0x60c] sm:$0xff]
      %v439 = vld [vmem:[%s219 + $0x614] sm:$0xf]
      %v440 = vld [vmem:[%s219 + $0x618] sm:$0xff]
      %v441 = vld [vmem:[%s219 + $0x620] sm:$0xff]
      %v442 = vld [vmem:[%s219 + $0x628] sm:$0xff]
      %v443 = vld [vmem:[%s219 + $0x630] sm:$0xff]
      %v444 = vld [vmem:[%s219 + $0x638] sm:$0xff]
      %v445 = vld [vmem:[%s219 + $0x640] sm:$0xff]
      %v446 = vld [vmem:[%s219 + $0x648] sm:$0xf]
      %v447 = vld [vmem:[%s219 + $0x64c] sm:$0xff]
      %v448 = vld [vmem:[%s219 + $0x654] sm:$0xff]
      %v449 = vld [vmem:[%s219 + $0x65c] sm:$0xff]
      %v450 = vld [vmem:[%s219 + $0x664] sm:$0xff]
      %v451 = vld [vmem:[%s219 + $0x66c] sm:$0xff]
      %v452 = vld [vmem:[%s219 + $0x674] sm:$0xff]
      %v453 = vld [vmem:[%s219 + $0x67c] sm:$0xf]
      %v458 = vunpack.c.l.b16 %v226
      %v459 = vunpack.c.h.b16 %v226
      %v460 = vunpack.c.l.b16 %v227
      %v461 = vunpack.c.h.b16 %v227
      %v462 = vunpack.c.l.b16 %v228
      %v463 = vunpack.c.h.b16 %v228
      %v464 = vunpack.c.l.b16 %v229
      %v465 = vunpack.c.h.b16 %v229
      %v466 = vpack.c.b16 %v460, %v458
      %v467 = vpack.c.b16 %v461, %v459
      %v468 = vpack.c.b16 %v464, %v462
      %v469 = vpack.c.b16 %v465, %v463
      %v698 = vunpack.c.l.b16 %v230
      %v699 = vunpack.c.h.b16 %v230
      %v700 = vunpack.c.l.b16 %v231
      %v701 = vunpack.c.h.b16 %v231
      %v702 = vunpack.c.l.b16 %v232
      %v703 = vunpack.c.h.b16 %v232
      %v704 = vunpack.c.l.b16 %v233
      %v705 = vunpack.c.h.b16 %v233
      %v706 = vunpack.c.l.b16 %v234
      %v707 = vunpack.c.h.b16 %v234
      %v708 = vunpack.c.l.b16 %v235
      %v709 = vunpack.c.h.b16 %v235
      %v710 = vunpack.c.l.b16 %v236
      %v711 = vunpack.c.l.b16 %v237
      %v712 = vunpack.c.h.b16 %v237
      %v713 = vunpack.c.l.b16 %v238
      %v714 = vunpack.c.h.b16 %v238
      %v715 = vunpack.c.l.b16 %v239
      %v716 = vunpack.c.h.b16 %v239
      %v717 = vunpack.c.l.b16 %v240
      %v718 = vunpack.c.h.b16 %v240
      %v719 = vunpack.c.l.b16 %v241
      %v720 = vunpack.c.h.b16 %v241
      %v721 = vunpack.c.l.b16 %v242
      %v722 = vunpack.c.h.b16 %v242
      %v723 = vunpack.c.l.b16 %v243
      %v724 = vunpack.c.l.b16 %v244
      %v725 = vunpack.c.h.b16 %v244
      %v726 = vunpack.c.l.b16 %v245
      %v727 = vunpack.c.h.b16 %v245
      %v728 = vunpack.c.l.b16 %v246
      %v729 = vunpack.c.h.b16 %v246
      %v730 = vunpack.c.l.b16 %v247
      %v731 = vunpack.c.h.b16 %v247
      %v732 = vunpack.c.l.b16 %v248
      %v733 = vunpack.c.h.b16 %v248
      %v734 = vunpack.c.l.b16 %v249
      %v735 = vunpack.c.h.b16 %v249
      %v736 = vunpack.c.l.b16 %v250
      %v737 = vunpack.c.l.b16 %v251
      %v738 = vunpack.c.h.b16 %v251
      %v739 = vunpack.c.l.b16 %v252
      %v740 = vunpack.c.h.b16 %v252
      %v741 = vunpack.c.l.b16 %v253
      %v742 = vunpack.c.h.b16 %v253
      %v743 = vunpack.c.l.b16 %v254
      %v744 = vunpack.c.h.b16 %v254
      %v745 = vunpack.c.l.b16 %v255
      %v746 = vunpack.c.h.b16 %v255
      %v747 = vunpack.c.l.b16 %v256
      %v748 = vunpack.c.h.b16 %v256
      %v749 = vunpack.c.l.b16 %v257
      %v750 = vunpack.c.l.b16 %v258
      %v751 = vunpack.c.h.b16 %v258
      %v752 = vunpack.c.l.b16 %v259
      %v753 = vunpack.c.h.b16 %v259
      %v754 = vunpack.c.l.b16 %v260
      %v755 = vunpack.c.h.b16 %v260
      %v756 = vunpack.c.l.b16 %v261
      %v757 = vunpack.c.h.b16 %v261
      %v758 = vunpack.c.l.b16 %v262
      %v759 = vunpack.c.h.b16 %v262
      %v760 = vunpack.c.l.b16 %v263
      %v761 = vunpack.c.h.b16 %v263
      %v762 = vunpack.c.l.b16 %v264
      %v763 = vunpack.c.l.b16 %v265
      %v764 = vunpack.c.h.b16 %v265
      %v765 = vunpack.c.l.b16 %v266
      %v766 = vunpack.c.h.b16 %v266
      %v767 = vunpack.c.l.b16 %v267
      %v768 = vunpack.c.h.b16 %v267
      %v769 = vunpack.c.l.b16 %v268
      %v770 = vunpack.c.h.b16 %v268
      %v771 = vunpack.c.l.b16 %v269
      %v772 = vunpack.c.h.b16 %v269
      %v773 = vunpack.c.l.b16 %v270
      %v774 = vunpack.c.h.b16 %v270
      %v775 = vunpack.c.l.b16 %v271
      %v776 = vunpack.c.l.b16 %v272
      %v777 = vunpack.c.h.b16 %v272
      %v778 = vunpack.c.l.b16 %v273
      %v779 = vunpack.c.h.b16 %v273
      %v780 = vunpack.c.l.b16 %v274
      %v781 = vunpack.c.h.b16 %v274
      %v782 = vunpack.c.l.b16 %v275
      %v783 = vunpack.c.h.b16 %v275
      %v784 = vunpack.c.l.b16 %v276
      %v785 = vunpack.c.h.b16 %v276
      %v786 = vunpack.c.l.b16 %v277
      %v787 = vunpack.c.h.b16 %v277
      %v788 = vunpack.c.l.b16 %v278
      %v789 = vunpack.c.l.b16 %v279
      %v790 = vunpack.c.h.b16 %v279
      %v791 = vunpack.c.l.b16 %v280
      %v792 = vunpack.c.h.b16 %v280
      %v793 = vunpack.c.l.b16 %v281
      %v794 = vunpack.c.h.b16 %v281
      %v795 = vunpack.c.l.b16 %v282
      %v796 = vunpack.c.h.b16 %v282
      %v797 = vunpack.c.l.b16 %v283
      %v798 = vunpack.c.h.b16 %v283
      %v799 = vunpack.c.l.b16 %v284
      %v800 = vunpack.c.h.b16 %v284
      %v801 = vunpack.c.l.b16 %v285
      %v802 = vunpack.c.l.b16 %v286
      %v803 = vunpack.c.h.b16 %v286
      %v804 = vunpack.c.l.b16 %v287
      %v805 = vunpack.c.h.b16 %v287
      %v806 = vunpack.c.l.b16 %v288
      %v807 = vunpack.c.h.b16 %v288
      %v808 = vunpack.c.l.b16 %v289
      %v809 = vunpack.c.h.b16 %v289
      %v810 = vunpack.c.l.b16 %v290
      %v811 = vunpack.c.h.b16 %v290
      %v812 = vunpack.c.l.b16 %v291
      %v813 = vunpack.c.h.b16 %v291
      %v814 = vunpack.c.l.b16 %v292
      %v815 = vunpack.c.l.b16 %v293
      %v816 = vunpack.c.h.b16 %v293
      %v817 = vunpack.c.l.b16 %v294
      %v818 = vunpack.c.h.b16 %v294
      %v819 = vunpack.c.l.b16 %v295
      %v820 = vunpack.c.h.b16 %v295
      %v821 = vunpack.c.l.b16 %v296
      %v822 = vunpack.c.h.b16 %v296
      %v823 = vunpack.c.l.b16 %v297
      %v824 = vunpack.c.h.b16 %v297
      %v825 = vunpack.c.l.b16 %v298
      %v826 = vunpack.c.h.b16 %v298
      %v827 = vunpack.c.l.b16 %v299
      %v828 = vunpack.c.l.b16 %v300
      %v829 = vunpack.c.h.b16 %v300
      %v830 = vunpack.c.l.b16 %v301
      %v831 = vunpack.c.h.b16 %v301
      %v832 = vunpack.c.l.b16 %v302
      %v833 = vunpack.c.h.b16 %v302
      %v834 = vunpack.c.l.b16 %v303
      %v835 = vunpack.c.h.b16 %v303
      %v836 = vunpack.c.l.b16 %v304
      %v837 = vunpack.c.h.b16 %v304
      %v838 = vunpack.c.l.b16 %v305
      %v839 = vunpack.c.h.b16 %v305
      %v840 = vunpack.c.l.b16 %v306
      %v841 = vunpack.c.l.b16 %v307
      %v842 = vunpack.c.h.b16 %v307
      %v843 = vunpack.c.l.b16 %v308
      %v844 = vunpack.c.h.b16 %v308
      %v845 = vunpack.c.l.b16 %v309
      %v846 = vunpack.c.h.b16 %v309
      %v847 = vunpack.c.l.b16 %v310
      %v848 = vunpack.c.h.b16 %v310
      %v849 = vunpack.c.l.b16 %v311
      %v850 = vunpack.c.h.b16 %v311
      %v851 = vunpack.c.l.b16 %v312
      %v852 = vunpack.c.h.b16 %v312
      %v853 = vunpack.c.l.b16 %v313
      %v854 = vunpack.c.l.b16 %v314
      %v855 = vunpack.c.h.b16 %v314
      %v856 = vunpack.c.l.b16 %v315
      %v857 = vunpack.c.h.b16 %v315
      %v858 = vunpack.c.l.b16 %v316
      %v859 = vunpack.c.h.b16 %v316
      %v860 = vunpack.c.l.b16 %v317
      %v861 = vunpack.c.h.b16 %v317
      %v862 = vunpack.c.l.b16 %v318
      %v863 = vunpack.c.h.b16 %v318
      %v864 = vunpack.c.l.b16 %v319
      %v865 = vunpack.c.h.b16 %v319
      %v866 = vunpack.c.l.b16 %v320
      %v867 = vunpack.c.l.b16 %v321
      %v868 = vunpack.c.h.b16 %v321
      %v869 = vunpack.c.l.b16 %v322
      %v870 = vunpack.c.h.b16 %v322
      %v871 = vunpack.c.l.b16 %v323
      %v872 = vunpack.c.h.b16 %v323
      %v873 = vunpack.c.l.b16 %v324
      %v874 = vunpack.c.h.b16 %v324
      %v875 = vunpack.c.l.b16 %v325
      %v876 = vunpack.c.h.b16 %v325
      %v877 = vunpack.c.l.b16 %v326
      %v878 = vunpack.c.h.b16 %v326
      %v879 = vunpack.c.l.b16 %v327
      %v880 = vunpack.c.l.b16 %v328
      %v881 = vunpack.c.h.b16 %v328
      %v882 = vunpack.c.l.b16 %v329
      %v883 = vunpack.c.h.b16 %v329
      %v884 = vunpack.c.l.b16 %v330
      %v885 = vunpack.c.h.b16 %v330
      %v886 = vunpack.c.l.b16 %v331
      %v887 = vunpack.c.h.b16 %v331
      %v888 = vunpack.c.l.b16 %v332
      %v889 = vunpack.c.h.b16 %v332
      %v890 = vunpack.c.l.b16 %v333
      %v891 = vunpack.c.h.b16 %v333
      %v892 = vunpack.c.l.b16 %v334
      %v893 = vunpack.c.l.b16 %v335
      %v894 = vunpack.c.h.b16 %v335
      %v895 = vunpack.c.l.b16 %v336
      %v896 = vunpack.c.h.b16 %v336
      %v897 = vunpack.c.l.b16 %v337
      %v898 = vunpack.c.h.b16 %v337
      %v899 = vunpack.c.l.b16 %v338
      %v900 = vunpack.c.h.b16 %v338
      %v901 = vunpack.c.l.b16 %v339
      %v902 = vunpack.c.h.b16 %v339
      %v903 = vunpack.c.l.b16 %v340
      %v904 = vunpack.c.h.b16 %v340
      %v905 = vunpack.c.l.b16 %v341
      %v906 = vunpack.c.l.b16 %v342
      %v907 = vunpack.c.h.b16 %v342
      %v908 = vunpack.c.l.b16 %v343
      %v909 = vunpack.c.h.b16 %v343
      %v910 = vunpack.c.l.b16 %v344
      %v911 = vunpack.c.h.b16 %v344
      %v912 = vunpack.c.l.b16 %v345
      %v913 = vunpack.c.h.b16 %v345
      %v914 = vunpack.c.l.b16 %v346
      %v915 = vunpack.c.h.b16 %v346
      %v916 = vunpack.c.l.b16 %v347
      %v917 = vunpack.c.h.b16 %v347
      %v918 = vunpack.c.l.b16 %v348
      %v919 = vunpack.c.l.b16 %v349
      %v920 = vunpack.c.h.b16 %v349
      %v921 = vunpack.c.l.b16 %v350
      %v922 = vunpack.c.h.b16 %v350
      %v923 = vunpack.c.l.b16 %v351
      %v924 = vunpack.c.h.b16 %v351
      %v925 = vunpack.c.l.b16 %v352
      %v926 = vunpack.c.h.b16 %v352
      %v927 = vunpack.c.l.b16 %v353
      %v928 = vunpack.c.h.b16 %v353
      %v929 = vunpack.c.l.b16 %v354
      %v930 = vunpack.c.h.b16 %v354
      %v931 = vunpack.c.l.b16 %v355
      %v932 = vunpack.c.l.b16 %v356
      %v933 = vunpack.c.h.b16 %v356
      %v934 = vunpack.c.l.b16 %v357
      %v935 = vunpack.c.h.b16 %v357
      %v936 = vunpack.c.l.b16 %v358
      %v937 = vunpack.c.h.b16 %v358
      %v938 = vunpack.c.l.b16 %v359
      %v939 = vunpack.c.h.b16 %v359
      %v940 = vunpack.c.l.b16 %v360
      %v941 = vunpack.c.h.b16 %v360
      %v942 = vunpack.c.l.b16 %v361
      %v943 = vunpack.c.h.b16 %v361
      %v944 = vunpack.c.l.b16 %v362
      %v945 = vunpack.c.l.b16 %v363
      %v946 = vunpack.c.h.b16 %v363
      %v947 = vunpack.c.l.b16 %v364
      %v948 = vunpack.c.h.b16 %v364
      %v949 = vunpack.c.l.b16 %v365
      %v950 = vunpack.c.h.b16 %v365
      %v951 = vunpack.c.l.b16 %v366
      %v952 = vunpack.c.h.b16 %v366
      %v953 = vunpack.c.l.b16 %v367
      %v954 = vunpack.c.h.b16 %v367
      %v955 = vunpack.c.l.b16 %v368
      %v956 = vunpack.c.h.b16 %v368
      %v957 = vunpack.c.l.b16 %v369
      %v958 = vunpack.c.l.b16 %v370
      %v959 = vunpack.c.h.b16 %v370
      %v960 = vunpack.c.l.b16 %v371
      %v961 = vunpack.c.h.b16 %v371
      %v962 = vunpack.c.l.b16 %v372
      %v963 = vunpack.c.h.b16 %v372
      %v964 = vunpack.c.l.b16 %v373
      %v965 = vunpack.c.h.b16 %v373
      %v966 = vunpack.c.l.b16 %v374
      %v967 = vunpack.c.h.b16 %v374
      %v968 = vunpack.c.l.b16 %v375
      %v969 = vunpack.c.h.b16 %v375
      %v970 = vunpack.c.l.b16 %v376
      %v971 = vunpack.c.l.b16 %v377
      %v972 = vunpack.c.h.b16 %v377
      %v973 = vunpack.c.l.b16 %v378
      %v974 = vunpack.c.h.b16 %v378
      %v975 = vunpack.c.l.b16 %v379
      %v976 = vunpack.c.h.b16 %v379
      %v977 = vunpack.c.l.b16 %v380
      %v978 = vunpack.c.h.b16 %v380
      %v979 = vunpack.c.l.b16 %v381
      %v980 = vunpack.c.h.b16 %v381
      %v981 = vunpack.c.l.b16 %v382
      %v982 = vunpack.c.h.b16 %v382
      %v983 = vunpack.c.l.b16 %v383
      %v984 = vunpack.c.l.b16 %v384
      %v985 = vunpack.c.h.b16 %v384
      %v986 = vunpack.c.l.b16 %v385
      %v987 = vunpack.c.h.b16 %v385
      %v988 = vunpack.c.l.b16 %v386
      %v989 = vunpack.c.h.b16 %v386
      %v990 = vunpack.c.l.b16 %v387
      %v991 = vunpack.c.h.b16 %v387
      %v992 = vunpack.c.l.b16 %v388
      %v993 = vunpack.c.h.b16 %v388
      %v994 = vunpack.c.l.b16 %v389
      %v995 = vunpack.c.h.b16 %v389
      %v996 = vunpack.c.l.b16 %v390
      %v997 = vunpack.c.l.b16 %v391
      %v998 = vunpack.c.h.b16 %v391
      %v999 = vunpack.c.l.b16 %v392
      %v1000 = vunpack.c.h.b16 %v392
      %v1001 = vunpack.c.l.b16 %v393
      %v1002 = vunpack.c.h.b16 %v393
      %v1003 = vunpack.c.l.b16 %v394
      %v1004 = vunpack.c.h.b16 %v394
      %v1005 = vunpack.c.l.b16 %v395
      %v1006 = vunpack.c.h.b16 %v395
      %v1007 = vunpack.c.l.b16 %v396
      %v1008 = vunpack.c.h.b16 %v396
      %v1009 = vunpack.c.l.b16 %v397
      %v1010 = vunpack.c.l.b16 %v398
      %v1011 = vunpack.c.h.b16 %v398
      %v1012 = vunpack.c.l.b16 %v399
      %v1013 = vunpack.c.h.b16 %v399
      %v1014 = vunpack.c.l.b16 %v400
      %v1015 = vunpack.c.h.b16 %v400
      %v1016 = vunpack.c.l.b16 %v401
      %v1017 = vunpack.c.h.b16 %v401
      %v1018 = vunpack.c.l.b16 %v402
      %v1019 = vunpack.c.h.b16 %v402
      %v1020 = vunpack.c.l.b16 %v403
      %v1021 = vunpack.c.h.b16 %v403
      %v1022 = vunpack.c.l.b16 %v404
      %v1023 = vunpack.c.l.b16 %v405
      %v1024 = vunpack.c.h.b16 %v405
      %v1025 = vunpack.c.l.b16 %v406
      %v1026 = vunpack.c.h.b16 %v406
      %v1027 = vunpack.c.l.b16 %v407
      %v1028 = vunpack.c.h.b16 %v407
      %v1029 = vunpack.c.l.b16 %v408
      %v1030 = vunpack.c.h.b16 %v408
      %v1031 = vunpack.c.l.b16 %v409
      %v1032 = vunpack.c.h.b16 %v409
      %v1033 = vunpack.c.l.b16 %v410
      %v1034 = vunpack.c.h.b16 %v410
      %v1035 = vunpack.c.l.b16 %v411
      %v1036 = vunpack.c.l.b16 %v412
      %v1037 = vunpack.c.h.b16 %v412
      %v1038 = vunpack.c.l.b16 %v413
      %v1039 = vunpack.c.h.b16 %v413
      %v1040 = vunpack.c.l.b16 %v414
      %v1041 = vunpack.c.h.b16 %v414
      %v1042 = vunpack.c.l.b16 %v415
      %v1043 = vunpack.c.h.b16 %v415
      %v1044 = vunpack.c.l.b16 %v416
      %v1045 = vunpack.c.h.b16 %v416
      %v1046 = vunpack.c.l.b16 %v417
      %v1047 = vunpack.c.h.b16 %v417
      %v1048 = vunpack.c.l.b16 %v418
      %v1049 = vunpack.c.l.b16 %v419
      %v1050 = vunpack.c.h.b16 %v419
      %v1051 = vunpack.c.l.b16 %v420
      %v1052 = vunpack.c.h.b16 %v420
      %v1053 = vunpack.c.l.b16 %v421
      %v1054 = vunpack.c.h.b16 %v421
      %v1055 = vunpack.c.l.b16 %v422
      %v1056 = vunpack.c.h.b16 %v422
      %v1057 = vunpack.c.l.b16 %v423
      %v1058 = vunpack.c.h.b16 %v423
      %v1059 = vunpack.c.l.b16 %v424
      %v1060 = vunpack.c.h.b16 %v424
      %v1061 = vunpack.c.l.b16 %v425
      %v1062 = vunpack.c.l.b16 %v426
      %v1063 = vunpack.c.h.b16 %v426
      %v1064 = vunpack.c.l.b16 %v427
      %v1065 = vunpack.c.h.b16 %v427
      %v1066 = vunpack.c.l.b16 %v428
      %v1067 = vunpack.c.h.b16 %v428
      %v1068 = vunpack.c.l.b16 %v429
      %v1069 = vunpack.c.h.b16 %v429
      %v1070 = vunpack.c.l.b16 %v430
      %v1071 = vunpack.c.h.b16 %v430
      %v1072 = vunpack.c.l.b16 %v431
      %v1073 = vunpack.c.h.b16 %v431
      %v1074 = vunpack.c.l.b16 %v432
      %v1075 = vunpack.c.l.b16 %v433
      %v1076 = vunpack.c.h.b16 %v433
      %v1077 = vunpack.c.l.b16 %v434
      %v1078 = vunpack.c.h.b16 %v434
      %v1079 = vunpack.c.l.b16 %v435
      %v1080 = vunpack.c.h.b16 %v435
      %v1081 = vunpack.c.l.b16 %v436
      %v1082 = vunpack.c.h.b16 %v436
      %v1083 = vunpack.c.l.b16 %v437
      %v1084 = vunpack.c.h.b16 %v437
      %v1085 = vunpack.c.l.b16 %v438
      %v1086 = vunpack.c.h.b16 %v438
      %v1087 = vunpack.c.l.b16 %v439
      %v1088 = vunpack.c.l.b16 %v440
      %v1089 = vunpack.c.h.b16 %v440
      %v1090 = vunpack.c.l.b16 %v441
      %v1091 = vunpack.c.h.b16 %v441
      %v1092 = vunpack.c.l.b16 %v442
      %v1093 = vunpack.c.h.b16 %v442
      %v1094 = vunpack.c.l.b16 %v443
      %v1095 = vunpack.c.h.b16 %v443
      %v1096 = vunpack.c.l.b16 %v444
      %v1097 = vunpack.c.h.b16 %v444
      %v1098 = vunpack.c.l.b16 %v445
      %v1099 = vunpack.c.h.b16 %v445
      %v1100 = vunpack.c.l.b16 %v446
      %v1101 = vunpack.c.l.b16 %v447
      %v1102 = vunpack.c.h.b16 %v447
      %v1103 = vunpack.c.l.b16 %v448
      %v1104 = vunpack.c.h.b16 %v448
      %v1105 = vunpack.c.l.b16 %v449
      %v1106 = vunpack.c.h.b16 %v449
      %v1107 = vunpack.c.l.b16 %v450
      %v1108 = vunpack.c.h.b16 %v450
      %v1109 = vunpack.c.l.b16 %v451
      %v1110 = vunpack.c.h.b16 %v451
      %v1111 = vunpack.c.l.b16 %v452
      %v1112 = vunpack.c.h.b16 %v452
      %v1113 = vunpack.c.l.b16 %v453
      %v1114 = vpack.c.b16 %v711, %v698
      %v1115 = vpack.c.b16 %v712, %v699
      %v1116 = vpack.c.b16 %v713, %v700
      %v1117 = vpack.c.b16 %v714, %v701
      %v1118 = vpack.c.b16 %v715, %v702
      %v1119 = vpack.c.b16 %v716, %v703
      %v1120 = vpack.c.b16 %v717, %v704
      %v1121 = vpack.c.b16 %v718, %v705
      %v1122 = vpack.c.b16 %v719, %v706
      %v1123 = vpack.c.b16 %v720, %v707
      %v1124 = vpack.c.b16 %v721, %v708
      %v1125 = vpack.c.b16 %v722, %v709
      %v1126 = vpack.c.b16 %v723, %v710
      %v1127 = vpack.c.b16 %v737, %v724
      %v1128 = vpack.c.b16 %v738, %v725
      %v1129 = vpack.c.b16 %v739, %v726
      %v1130 = vpack.c.b16 %v740, %v727
      %v1131 = vpack.c.b16 %v741, %v728
      %v1132 = vpack.c.b16 %v742, %v729
      %v1133 = vpack.c.b16 %v743, %v730
      %v1134 = vpack.c.b16 %v744, %v731
      %v1135 = vpack.c.b16 %v745, %v732
      %v1136 = vpack.c.b16 %v746, %v733
      %v1137 = vpack.c.b16 %v747, %v734
      %v1138 = vpack.c.b16 %v748, %v735
      %v1139 = vpack.c.b16 %v749, %v736
      %v1140 = vpack.c.b16 %v763, %v750
      %v1141 = vpack.c.b16 %v764, %v751
      %v1142 = vpack.c.b16 %v765, %v752
      %v1143 = vpack.c.b16 %v766, %v753
      %v1144 = vpack.c.b16 %v767, %v754
      %v1145 = vpack.c.b16 %v768, %v755
      %v1146 = vpack.c.b16 %v769, %v756
      %v1147 = vpack.c.b16 %v770, %v757
      %v1148 = vpack.c.b16 %v771, %v758
      %v1149 = vpack.c.b16 %v772, %v759
      %v1150 = vpack.c.b16 %v773, %v760
      %v1151 = vpack.c.b16 %v774, %v761
      %v1152 = vpack.c.b16 %v775, %v762
      %v1153 = vpack.c.b16 %v789, %v776
      %v1154 = vpack.c.b16 %v790, %v777
      %v1155 = vpack.c.b16 %v791, %v778
      %v1156 = vpack.c.b16 %v792, %v779
      %v1157 = vpack.c.b16 %v793, %v780
      %v1158 = vpack.c.b16 %v794, %v781
      %v1159 = vpack.c.b16 %v795, %v782
      %v1160 = vpack.c.b16 %v796, %v783
      %v1161 = vpack.c.b16 %v797, %v784
      %v1162 = vpack.c.b16 %v798, %v785
      %v1163 = vpack.c.b16 %v799, %v786
      %v1164 = vpack.c.b16 %v800, %v787
      %v1165 = vpack.c.b16 %v801, %v788
      %v1166 = vpack.c.b16 %v815, %v802
      %v1167 = vpack.c.b16 %v816, %v803
      %v1168 = vpack.c.b16 %v817, %v804
      %v1169 = vpack.c.b16 %v818, %v805
      %v1170 = vpack.c.b16 %v819, %v806
      %v1171 = vpack.c.b16 %v820, %v807
      %v1172 = vpack.c.b16 %v821, %v808
      %v1173 = vpack.c.b16 %v822, %v809
      %v1174 = vpack.c.b16 %v823, %v810
      %v1175 = vpack.c.b16 %v824, %v811
      %v1176 = vpack.c.b16 %v825, %v812
      %v1177 = vpack.c.b16 %v826, %v813
      %v1178 = vpack.c.b16 %v827, %v814
      %v1179 = vpack.c.b16 %v841, %v828
      %v1180 = vpack.c.b16 %v842, %v829
      %v1181 = vpack.c.b16 %v843, %v830
      %v1182 = vpack.c.b16 %v844, %v831
      %v1183 = vpack.c.b16 %v845, %v832
      %v1184 = vpack.c.b16 %v846, %v833
      %v1185 = vpack.c.b16 %v847, %v834
      %v1186 = vpack.c.b16 %v848, %v835
      %v1187 = vpack.c.b16 %v849, %v836
      %v1188 = vpack.c.b16 %v850, %v837
      %v1189 = vpack.c.b16 %v851, %v838
      %v1190 = vpack.c.b16 %v852, %v839
      %v1191 = vpack.c.b16 %v853, %v840
      %v1192 = vpack.c.b16 %v867, %v854
      %v1193 = vpack.c.b16 %v868, %v855
      %v1194 = vpack.c.b16 %v869, %v856
      %v1195 = vpack.c.b16 %v870, %v857
      %v1196 = vpack.c.b16 %v871, %v858
      %v1197 = vpack.c.b16 %v872, %v859
      %v1198 = vpack.c.b16 %v873, %v860
      %v1199 = vpack.c.b16 %v874, %v861
      %v1200 = vpack.c.b16 %v875, %v862
      %v1201 = vpack.c.b16 %v876, %v863
      %v1202 = vpack.c.b16 %v877, %v864
      %v1203 = vpack.c.b16 %v878, %v865
      %v1204 = vpack.c.b16 %v879, %v866
      %v1205 = vpack.c.b16 %v893, %v880
      %v1206 = vpack.c.b16 %v894, %v881
      %v1207 = vpack.c.b16 %v895, %v882
      %v1208 = vpack.c.b16 %v896, %v883
      %v1209 = vpack.c.b16 %v897, %v884
      %v1210 = vpack.c.b16 %v898, %v885
      %v1211 = vpack.c.b16 %v899, %v886
      %v1212 = vpack.c.b16 %v900, %v887
      %v1213 = vpack.c.b16 %v901, %v888
      %v1214 = vpack.c.b16 %v902, %v889
      %v1215 = vpack.c.b16 %v903, %v890
      %v1216 = vpack.c.b16 %v904, %v891
      %v1217 = vpack.c.b16 %v905, %v892
      %v1218 = vpack.c.b16 %v919, %v906
      %v1219 = vpack.c.b16 %v920, %v907
      %v1220 = vpack.c.b16 %v921, %v908
      %v1221 = vpack.c.b16 %v922, %v909
      %v1222 = vpack.c.b16 %v923, %v910
      %v1223 = vpack.c.b16 %v924, %v911
      %v1224 = vpack.c.b16 %v925, %v912
      %v1225 = vpack.c.b16 %v926, %v913
      %v1226 = vpack.c.b16 %v927, %v914
      %v1227 = vpack.c.b16 %v928, %v915
      %v1228 = vpack.c.b16 %v929, %v916
      %v1229 = vpack.c.b16 %v930, %v917
      %v1230 = vpack.c.b16 %v931, %v918
      %v1231 = vpack.c.b16 %v945, %v932
      %v1232 = vpack.c.b16 %v946, %v933
      %v1233 = vpack.c.b16 %v947, %v934
      %v1234 = vpack.c.b16 %v948, %v935
      %v1235 = vpack.c.b16 %v949, %v936
      %v1236 = vpack.c.b16 %v950, %v937
      %v1237 = vpack.c.b16 %v951, %v938
      %v1238 = vpack.c.b16 %v952, %v939
      %v1239 = vpack.c.b16 %v953, %v940
      %v1240 = vpack.c.b16 %v954, %v941
      %v1241 = vpack.c.b16 %v955, %v942
      %v1242 = vpack.c.b16 %v956, %v943
      %v1243 = vpack.c.b16 %v957, %v944
      %v1244 = vpack.c.b16 %v971, %v958
      %v1245 = vpack.c.b16 %v972, %v959
      %v1246 = vpack.c.b16 %v973, %v960
      %v1247 = vpack.c.b16 %v974, %v961
      %v1248 = vpack.c.b16 %v975, %v962
      %v1249 = vpack.c.b16 %v976, %v963
      %v1250 = vpack.c.b16 %v977, %v964
      %v1251 = vpack.c.b16 %v978, %v965
      %v1252 = vpack.c.b16 %v979, %v966
      %v1253 = vpack.c.b16 %v980, %v967
      %v1254 = vpack.c.b16 %v981, %v968
      %v1255 = vpack.c.b16 %v982, %v969
      %v1256 = vpack.c.b16 %v983, %v970
      %v1257 = vpack.c.b16 %v997, %v984
      %v1258 = vpack.c.b16 %v998, %v985
      %v1259 = vpack.c.b16 %v999, %v986
      %v1260 = vpack.c.b16 %v1000, %v987
      %v1261 = vpack.c.b16 %v1001, %v988
      %v1262 = vpack.c.b16 %v1002, %v989
      %v1263 = vpack.c.b16 %v1003, %v990
      %v1264 = vpack.c.b16 %v1004, %v991
      %v1265 = vpack.c.b16 %v1005, %v992
      %v1266 = vpack.c.b16 %v1006, %v993
      %v1267 = vpack.c.b16 %v1007, %v994
      %v1268 = vpack.c.b16 %v1008, %v995
      %v1269 = vpack.c.b16 %v1009, %v996
      %v1270 = vpack.c.b16 %v1023, %v1010
      %v1271 = vpack.c.b16 %v1024, %v1011
      %v1272 = vpack.c.b16 %v1025, %v1012
      %v1273 = vpack.c.b16 %v1026, %v1013
      %v1274 = vpack.c.b16 %v1027, %v1014
      %v1275 = vpack.c.b16 %v1028, %v1015
      %v1276 = vpack.c.b16 %v1029, %v1016
      %v1277 = vpack.c.b16 %v1030, %v1017
      %v1278 = vpack.c.b16 %v1031, %v1018
      %v1279 = vpack.c.b16 %v1032, %v1019
      %v1280 = vpack.c.b16 %v1033, %v1020
      %v1281 = vpack.c.b16 %v1034, %v1021
      %v1282 = vpack.c.b16 %v1035, %v1022
      %v1283 = vpack.c.b16 %v1049, %v1036
      %v1284 = vpack.c.b16 %v1050, %v1037
      %v1285 = vpack.c.b16 %v1051, %v1038
      %v1286 = vpack.c.b16 %v1052, %v1039
      %v1287 = vpack.c.b16 %v1053, %v1040
      %v1288 = vpack.c.b16 %v1054, %v1041
      %v1289 = vpack.c.b16 %v1055, %v1042
      %v1290 = vpack.c.b16 %v1056, %v1043
      %v1291 = vpack.c.b16 %v1057, %v1044
      %v1292 = vpack.c.b16 %v1058, %v1045
      %v1293 = vpack.c.b16 %v1059, %v1046
      %v1294 = vpack.c.b16 %v1060, %v1047
      %v1295 = vpack.c.b16 %v1061, %v1048
      %v1296 = vpack.c.b16 %v1075, %v1062
      %v1297 = vpack.c.b16 %v1076, %v1063
      %v1298 = vpack.c.b16 %v1077, %v1064
      %v1299 = vpack.c.b16 %v1078, %v1065
      %v1300 = vpack.c.b16 %v1079, %v1066
      %v1301 = vpack.c.b16 %v1080, %v1067
      %v1302 = vpack.c.b16 %v1081, %v1068
      %v1303 = vpack.c.b16 %v1082, %v1069
      %v1304 = vpack.c.b16 %v1083, %v1070
      %v1305 = vpack.c.b16 %v1084, %v1071
      %v1306 = vpack.c.b16 %v1085, %v1072
      %v1307 = vpack.c.b16 %v1086, %v1073
      %v1308 = vpack.c.b16 %v1087, %v1074
      %v1309 = vpack.c.b16 %v1101, %v1088
      %v1310 = vpack.c.b16 %v1102, %v1089
      %v1311 = vpack.c.b16 %v1103, %v1090
      %v1312 = vpack.c.b16 %v1104, %v1091
      %v1313 = vpack.c.b16 %v1105, %v1092
      %v1314 = vpack.c.b16 %v1106, %v1093
      %v1315 = vpack.c.b16 %v1107, %v1094
      %v1316 = vpack.c.b16 %v1108, %v1095
      %v1317 = vpack.c.b16 %v1109, %v1096
      %v1318 = vpack.c.b16 %v1110, %v1097
      %v1319 = vpack.c.b16 %v1111, %v1098
      %v1320 = vpack.c.b16 %v1112, %v1099
      %v1321 = vpack.c.b16 %v1113, %v1100
      %1530 = vmatprep.subr.bf16.mxu0 %v1206
      %1531 = vmatpush1.bf16.msra.mxu0 %v1205
      %1532 = vmatprep.subr.bf16.mxu0 %v1193
      %1533 = vmatpush1.bf16.msra.mxu0 %v1192
      %1534 = vmatprep.subr.bf16.mxu0 %v1180
      %1535 = vmatpush1.bf16.msra.mxu0 %v1179
      %1536 = vmatprep.subr.bf16.mxu0 %v1167
      %1537 = vmatpush1.bf16.msra.mxu0 %v1166
      %1538 = vmatprep.subr.bf16.mxu0 %v1154
      %1539 = vmatpush1.bf16.msra.mxu0 %v1153
      %1540 = vmatprep.subr.bf16.mxu0 %v1141
      %1541 = vmatpush1.bf16.msra.mxu0 %v1140
      %1542 = vmatprep.subr.bf16.mxu0 %v1128
      %1543 = vmatpush1.bf16.msra.mxu0 %v1127
      %1544 = vmatprep.subr.bf16.mxu0 %v1115
      %1545 = vmatpush1.bf16.msra.mxu0 %v1114
      %1546 = vmatprep.subr.bf16.mxu0 %v1310
      %1547 = vmatpush2.bf16.msra.mxu0 %v1309
      %1548 = vmatprep.subr.bf16.mxu0 %v1297
      %1549 = vmatpush2.bf16.msra.mxu0 %v1296
      %1550 = vmatprep.subr.bf16.mxu0 %v1284
      %1551 = vmatpush2.bf16.msra.mxu0 %v1283
      %1552 = vmatprep.subr.bf16.mxu0 %v1271
      %1553 = vmatpush2.bf16.msra.mxu0 %v1270
      %1554 = vmatprep.subr.bf16.mxu0 %v1258
      %1555 = vmatpush2.bf16.msra.mxu0 %v1257
      %1556 = vmatprep.subr.bf16.mxu0 %v1245
      %1557 = vmatpush2.bf16.msra.mxu0 %v1244
      %1558 = vmatprep.subr.bf16.mxu0 %v1232
      %1559 = vmatpush2.bf16.msra.mxu0 %v1231
      %1560 = vmatprep.subr.bf16.mxu0 %v1219
      %1561 = vmatpush2.bf16.msra.mxu0 %v1218
      %1562 = vmatprep.mubr.bf16.mxu0 %v467
      %1563 = vmatmul.mubr.bf16.gmra.mxu0 %v466
      %v1564 = vpop.f32.mrf.mxu0
      %v1565 = vadd.f32 0.0, %v1564
      %v1566 = vpop.f32.mrf.mxu0
      %v1567 = vadd.f32 0.0, %v1566
      %v1568 = vpop.f32.mrf.mxu0
      %v1569 = vadd.f32 0.0, %v1568
      %v1570 = vpop.f32.mrf.mxu0
      %v1571 = vadd.f32 0.0, %v1570
      %1572 = vmatprep.mubr.bf16.mxu0 %v469
      %1573 = vmatmul.mubr.bf16.gmra.mxu0 %v468
      %v1574 = vpop.f32.mrf.mxu0
      %v1575 = vadd.f32 0.0, %v1574
      %v1576 = vpop.f32.mrf.mxu0
      %v1577 = vadd.f32 0.0, %v1576
      %v1578 = vpop.f32.mrf.mxu0
      %v1579 = vadd.f32 0.0, %v1578
      %v1580 = vpop.f32.mrf.mxu0
      %v1581 = vadd.f32 0.0, %v1580
      %1582 = vdwg.mxu0
      %1583 = vmatprep.subr.bf16.mxu0 %v1208
      %1584 = vmatpush1.bf16.msra.mxu0 %v1207
      %1585 = vmatprep.subr.bf16.mxu0 %v1195
      %1586 = vmatpush1.bf16.msra.mxu0 %v1194
      %1587 = vmatprep.subr.bf16.mxu0 %v1182
      %1588 = vmatpush1.bf16.msra.mxu0 %v1181
      %1589 = vmatprep.subr.bf16.mxu0 %v1169
      %1590 = vmatpush1.bf16.msra.mxu0 %v1168
      %1591 = vmatprep.subr.bf16.mxu0 %v1156
      %1592 = vmatpush1.bf16.msra.mxu0 %v1155
      %1593 = vmatprep.subr.bf16.mxu0 %v1143
      %1594 = vmatpush1.bf16.msra.mxu0 %v1142
      %1595 = vmatprep.subr.bf16.mxu0 %v1130
      %1596 = vmatpush1.bf16.msra.mxu0 %v1129
      %1597 = vmatprep.subr.bf16.mxu0 %v1117
      %1598 = vmatpush1.bf16.msra.mxu0 %v1116
      %1599 = vmatprep.subr.bf16.mxu0 %v1312
      %1600 = vmatpush2.bf16.msra.mxu0 %v1311
      %1601 = vmatprep.subr.bf16.mxu0 %v1299
      %1602 = vmatpush2.bf16.msra.mxu0 %v1298
      %1603 = vmatprep.subr.bf16.mxu0 %v1286
      %1604 = vmatpush2.bf16.msra.mxu0 %v1285
      %1605 = vmatprep.subr.bf16.mxu0 %v1273
      %1606 = vmatpush2.bf16.msra.mxu0 %v1272
      %1607 = vmatprep.subr.bf16.mxu0 %v1260
      %1608 = vmatpush2.bf16.msra.mxu0 %v1259
      %1609 = vmatprep.subr.bf16.mxu0 %v1247
      %1610 = vmatpush2.bf16.msra.mxu0 %v1246
      %1611 = vmatprep.subr.bf16.mxu0 %v1234
      %1612 = vmatpush2.bf16.msra.mxu0 %v1233
      %1613 = vmatprep.subr.bf16.mxu0 %v1221
      %1614 = vmatpush2.bf16.msra.mxu0 %v1220
      %1615 = vmatprep.mubr.bf16.mxu0 %v467
      %1616 = vmatmul.mubr.bf16.gmra.mxu0 %v466
      %v1617 = vpop.f32.mrf.mxu0
      %v1618 = vadd.f32 0.0, %v1617
      %v1619 = vpop.f32.mrf.mxu0
      %v1620 = vadd.f32 0.0, %v1619
      %v1621 = vpop.f32.mrf.mxu0
      %v1622 = vadd.f32 0.0, %v1621
      %v1623 = vpop.f32.mrf.mxu0
      %v1624 = vadd.f32 0.0, %v1623
      %1625 = vmatprep.mubr.bf16.mxu0 %v469
      %1626 = vmatmul.mubr.bf16.gmra.mxu0 %v468
      %v1627 = vpop.f32.mrf.mxu0
      %v1628 = vadd.f32 0.0, %v1627
      %v1629 = vpop.f32.mrf.mxu0
      %v1630 = vadd.f32 0.0, %v1629
      %v1631 = vpop.f32.mrf.mxu0
      %v1632 = vadd.f32 0.0, %v1631
      %v1633 = vpop.f32.mrf.mxu0
      %v1634 = vadd.f32 0.0, %v1633
      %1635 = vdwg.mxu0
      %1636 = vmatprep.subr.bf16.mxu0 %v1210
      %1637 = vmatpush1.bf16.msra.mxu0 %v1209
      %1638 = vmatprep.subr.bf16.mxu0 %v1197
      %1639 = vmatpush1.bf16.msra.mxu0 %v1196
      %1640 = vmatprep.subr.bf16.mxu0 %v1184
      %1641 = vmatpush1.bf16.msra.mxu0 %v1183
      %1642 = vmatprep.subr.bf16.mxu0 %v1171
      %1643 = vmatpush1.bf16.msra.mxu0 %v1170
      %1644 = vmatprep.subr.bf16.mxu0 %v1158
      %1645 = vmatpush1.bf16.msra.mxu0 %v1157
      %1646 = vmatprep.subr.bf16.mxu0 %v1145
      %1647 = vmatpush1.bf16.msra.mxu0 %v1144
      %1648 = vmatprep.subr.bf16.mxu0 %v1132
      %1649 = vmatpush1.bf16.msra.mxu0 %v1131
      %1650 = vmatprep.subr.bf16.mxu0 %v1119
      %1651 = vmatpush1.bf16.msra.mxu0 %v1118
      %1652 = vmatprep.subr.bf16.mxu0 %v1314
      %1653 = vmatpush2.bf16.msra.mxu0 %v1313
      %1654 = vmatprep.subr.bf16.mxu0 %v1301
      %1655 = vmatpush2.bf16.msra.mxu0 %v1300
      %1656 = vmatprep.subr.bf16.mxu0 %v1288
      %1657 = vmatpush2.bf16.msra.mxu0 %v1287
      %1658 = vmatprep.subr.bf16.mxu0 %v1275
      %1659 = vmatpush2.bf16.msra.mxu0 %v1274
      %1660 = vmatprep.subr.bf16.mxu0 %v1262
      %1661 = vmatpush2.bf16.msra.mxu0 %v1261
      %1662 = vmatprep.subr.bf16.mxu0 %v1249
      %1663 = vmatpush2.bf16.msra.mxu0 %v1248
      %1664 = vmatprep.subr.bf16.mxu0 %v1236
      %1665 = vmatpush2.bf16.msra.mxu0 %v1235
      %1666 = vmatprep.subr.bf16.mxu0 %v1223
      %1667 = vmatpush2.bf16.msra.mxu0 %v1222
      %1668 = vmatprep.mubr.bf16.mxu0 %v467
      %1669 = vmatmul.mubr.bf16.gmra.mxu0 %v466
      %v1670 = vpop.f32.mrf.mxu0
      %v1671 = vadd.f32 0.0, %v1670
      %v1672 = vpop.f32.mrf.mxu0
      %v1673 = vadd.f32 0.0, %v1672
      %v1674 = vpop.f32.mrf.mxu0
      %v1675 = vadd.f32 0.0, %v1674
      %v1676 = vpop.f32.mrf.mxu0
      %v1677 = vadd.f32 0.0, %v1676
      %1678 = vmatprep.mubr.bf16.mxu0 %v469
      %1679 = vmatmul.mubr.bf16.gmra.mxu0 %v468
      %v1680 = vpop.f32.mrf.mxu0
      %v1681 = vadd.f32 0.0, %v1680
      %v1682 = vpop.f32.mrf.mxu0
      %v1683 = vadd.f32 0.0, %v1682
      %v1684 = vpop.f32.mrf.mxu0
      %v1685 = vadd.f32 0.0, %v1684
      %v1686 = vpop.f32.mrf.mxu0
      %v1687 = vadd.f32 0.0, %v1686
      %1688 = vdwg.mxu0
      %1689 = vmatprep.subr.bf16.mxu0 %v1212
      %1690 = vmatpush1.bf16.msra.mxu0 %v1211
      %1691 = vmatprep.subr.bf16.mxu0 %v1199
      %1692 = vmatpush1.bf16.msra.mxu0 %v1198
      %1693 = vmatprep.subr.bf16.mxu0 %v1186
      %1694 = vmatpush1.bf16.msra.mxu0 %v1185
      %1695 = vmatprep.subr.bf16.mxu0 %v1173
      %1696 = vmatpush1.bf16.msra.mxu0 %v1172
      %1697 = vmatprep.subr.bf16.mxu0 %v1160
      %1698 = vmatpush1.bf16.msra.mxu0 %v1159
      %1699 = vmatprep.subr.bf16.mxu0 %v1147
      %1700 = vmatpush1.bf16.msra.mxu0 %v1146
      %1701 = vmatprep.subr.bf16.mxu0 %v1134
      %1702 = vmatpush1.bf16.msra.mxu0 %v1133
      %1703 = vmatprep.subr.bf16.mxu0 %v1121
      %1704 = vmatpush1.bf16.msra.mxu0 %v1120
      %1705 = vmatprep.subr.bf16.mxu0 %v1316
      %1706 = vmatpush2.bf16.msra.mxu0 %v1315
      %1707 = vmatprep.subr.bf16.mxu0 %v1303
      %1708 = vmatpush2.bf16.msra.mxu0 %v1302
      %1709 = vmatprep.subr.bf16.mxu0 %v1290
      %1710 = vmatpush2.bf16.msra.mxu0 %v1289
      %1711 = vmatprep.subr.bf16.mxu0 %v1277
      %1712 = vmatpush2.bf16.msra.mxu0 %v1276
      %1713 = vmatprep.subr.bf16.mxu0 %v1264
      %1714 = vmatpush2.bf16.msra.mxu0 %v1263
      %1715 = vmatprep.subr.bf16.mxu0 %v1251
      %1716 = vmatpush2.bf16.msra.mxu0 %v1250
      %1717 = vmatprep.subr.bf16.mxu0 %v1238
      %1718 = vmatpush2.bf16.msra.mxu0 %v1237
      %1719 = vmatprep.subr.bf16.mxu0 %v1225
      %1720 = vmatpush2.bf16.msra.mxu0 %v1224
      %1721 = vmatprep.mubr.bf16.mxu0 %v467
      %1722 = vmatmul.mubr.bf16.gmra.mxu0 %v466
      %v1723 = vpop.f32.mrf.mxu0
      %v1724 = vadd.f32 0.0, %v1723
      %v1725 = vpop.f32.mrf.mxu0
      %v1726 = vadd.f32 0.0, %v1725
      %v1727 = vpop.f32.mrf.mxu0
      %v1728 = vadd.f32 0.0, %v1727
      %v1729 = vpop.f32.mrf.mxu0
      %v1730 = vadd.f32 0.0, %v1729
      %1731 = vmatprep.mubr.bf16.mxu0 %v469
      %1732 = vmatmul.mubr.bf16.gmra.mxu0 %v468
      %v1733 = vpop.f32.mrf.mxu0
      %v1734 = vadd.f32 0.0, %v1733
      %v1735 = vpop.f32.mrf.mxu0
      %v1736 = vadd.f32 0.0, %v1735
      %v1737 = vpop.f32.mrf.mxu0
      %v1738 = vadd.f32 0.0, %v1737
      %v1739 = vpop.f32.mrf.mxu0
      %v1740 = vadd.f32 0.0, %v1739
      %1741 = vdwg.mxu0
      %1742 = vmatprep.subr.bf16.mxu0 %v1214
      %1743 = vmatpush1.bf16.msra.mxu0 %v1213
      %1744 = vmatprep.subr.bf16.mxu0 %v1201
      %1745 = vmatpush1.bf16.msra.mxu0 %v1200
      %1746 = vmatprep.subr.bf16.mxu0 %v1188
      %1747 = vmatpush1.bf16.msra.mxu0 %v1187
      %1748 = vmatprep.subr.bf16.mxu0 %v1175
      %1749 = vmatpush1.bf16.msra.mxu0 %v1174
      %1750 = vmatprep.subr.bf16.mxu0 %v1162
      %1751 = vmatpush1.bf16.msra.mxu0 %v1161
      %1752 = vmatprep.subr.bf16.mxu0 %v1149
      %1753 = vmatpush1.bf16.msra.mxu0 %v1148
      %1754 = vmatprep.subr.bf16.mxu0 %v1136
      %1755 = vmatpush1.bf16.msra.mxu0 %v1135
      %1756 = vmatprep.subr.bf16.mxu0 %v1123
      %1757 = vmatpush1.bf16.msra.mxu0 %v1122
      %1758 = vmatprep.subr.bf16.mxu0 %v1318
      %1759 = vmatpush2.bf16.msra.mxu0 %v1317
      %1760 = vmatprep.subr.bf16.mxu0 %v1305
      %1761 = vmatpush2.bf16.msra.mxu0 %v1304
      %1762 = vmatprep.subr.bf16.mxu0 %v1292
      %1763 = vmatpush2.bf16.msra.mxu0 %v1291
      %1764 = vmatprep.subr.bf16.mxu0 %v1279
      %1765 = vmatpush2.bf16.msra.mxu0 %v1278
      %1766 = vmatprep.subr.bf16.mxu0 %v1266
      %1767 = vmatpush2.bf16.msra.mxu0 %v1265
      %1768 = vmatprep.subr.bf16.mxu0 %v1253
      %1769 = vmatpush2.bf16.msra.mxu0 %v1252
      %1770 = vmatprep.subr.bf16.mxu0 %v1240
      %1771 = vmatpush2.bf16.msra.mxu0 %v1239
      %1772 = vmatprep.subr.bf16.mxu0 %v1227
      %1773 = vmatpush2.bf16.msra.mxu0 %v1226
      %1774 = vmatprep.mubr.bf16.mxu0 %v467
      %1775 = vmatmul.mubr.bf16.gmra.mxu0 %v466
      %v1776 = vpop.f32.mrf.mxu0
      %v1777 = vadd.f32 0.0, %v1776
      %v1778 = vpop.f32.mrf.mxu0
      %v1779 = vadd.f32 0.0, %v1778
      %v1780 = vpop.f32.mrf.mxu0
      %v1781 = vadd.f32 0.0, %v1780
      %v1782 = vpop.f32.mrf.mxu0
      %v1783 = vadd.f32 0.0, %v1782
      %1784 = vmatprep.mubr.bf16.mxu0 %v469
      %1785 = vmatmul.mubr.bf16.gmra.mxu0 %v468
      %v1786 = vpop.f32.mrf.mxu0
      %v1787 = vadd.f32 0.0, %v1786
      %v1788 = vpop.f32.mrf.mxu0
      %v1789 = vadd.f32 0.0, %v1788
      %v1790 = vpop.f32.mrf.mxu0
      %v1791 = vadd.f32 0.0, %v1790
      %v1792 = vpop.f32.mrf.mxu0
      %v1793 = vadd.f32 0.0, %v1792
      %1794 = vdwg.mxu0
      %1795 = vmatprep.subr.bf16.mxu0 %v1216
      %1796 = vmatpush1.bf16.msra.mxu0 %v1215
      %1797 = vmatprep.subr.bf16.mxu0 %v1203
      %1798 = vmatpush1.bf16.msra.mxu0 %v1202
      %1799 = vmatprep.subr.bf16.mxu0 %v1190
      %1800 = vmatpush1.bf16.msra.mxu0 %v1189
      %1801 = vmatprep.subr.bf16.mxu0 %v1177
      %1802 = vmatpush1.bf16.msra.mxu0 %v1176
      %1803 = vmatprep.subr.bf16.mxu0 %v1164
      %1804 = vmatpush1.bf16.msra.mxu0 %v1163
      %1805 = vmatprep.subr.bf16.mxu0 %v1151
      %1806 = vmatpush1.bf16.msra.mxu0 %v1150
      %1807 = vmatprep.subr.bf16.mxu0 %v1138
      %1808 = vmatpush1.bf16.msra.mxu0 %v1137
      %1809 = vmatprep.subr.bf16.mxu0 %v1125
      %1810 = vmatpush1.bf16.msra.mxu0 %v1124
      %1811 = vmatprep.subr.bf16.mxu0 %v1320
      %1812 = vmatpush2.bf16.msra.mxu0 %v1319
      %1813 = vmatprep.subr.bf16.mxu0 %v1307
      %1814 = vmatpush2.bf16.msra.mxu0 %v1306
      %1815 = vmatprep.subr.bf16.mxu0 %v1294
      %1816 = vmatpush2.bf16.msra.mxu0 %v1293
      %1817 = vmatprep.subr.bf16.mxu0 %v1281
      %1818 = vmatpush2.bf16.msra.mxu0 %v1280
      %1819 = vmatprep.subr.bf16.mxu0 %v1268
      %1820 = vmatpush2.bf16.msra.mxu0 %v1267
      %1821 = vmatprep.subr.bf16.mxu0 %v1255
      %1822 = vmatpush2.bf16.msra.mxu0 %v1254
      %1823 = vmatprep.subr.bf16.mxu0 %v1242
      %1824 = vmatpush2.bf16.msra.mxu0 %v1241
      %1825 = vmatprep.subr.bf16.mxu0 %v1229
      %1826 = vmatpush2.bf16.msra.mxu0 %v1228
      %1827 = vmatprep.mubr.bf16.mxu0 %v467
      %1828 = vmatmul.mubr.bf16.gmra.mxu0 %v466
      %v1829 = vpop.f32.mrf.mxu0
      %v1830 = vadd.f32 0.0, %v1829
      %v1831 = vpop.f32.mrf.mxu0
      %v1832 = vadd.f32 0.0, %v1831
      %v1833 = vpop.f32.mrf.mxu0
      %v1834 = vadd.f32 0.0, %v1833
      %v1835 = vpop.f32.mrf.mxu0
      %v1836 = vadd.f32 0.0, %v1835
      %1837 = vmatprep.mubr.bf16.mxu0 %v469
      %1838 = vmatmul.mubr.bf16.gmra.mxu0 %v468
      %v1839 = vpop.f32.mrf.mxu0
      %v1840 = vadd.f32 0.0, %v1839
      %v1841 = vpop.f32.mrf.mxu0
      %v1842 = vadd.f32 0.0, %v1841
      %v1843 = vpop.f32.mrf.mxu0
      %v1844 = vadd.f32 0.0, %v1843
      %v1845 = vpop.f32.mrf.mxu0
      %v1846 = vadd.f32 0.0, %v1845
      %1847 = vdwg.mxu0
      %1848 = vmatprep.subr.bf16.mxu0 0
      %1849 = vmatpush1.bf16.msra.mxu0 %v1217
      %1850 = vmatprep.subr.bf16.mxu0 0
      %1851 = vmatpush1.bf16.msra.mxu0 %v1204
      %1852 = vmatprep.subr.bf16.mxu0 0
      %1853 = vmatpush1.bf16.msra.mxu0 %v1191
      %1854 = vmatprep.subr.bf16.mxu0 0
      %1855 = vmatpush1.bf16.msra.mxu0 %v1178
      %1856 = vmatprep.subr.bf16.mxu0 0
      %1857 = vmatpush1.bf16.msra.mxu0 %v1165
      %1858 = vmatprep.subr.bf16.mxu0 0
      %1859 = vmatpush1.bf16.msra.mxu0 %v1152
      %1860 = vmatprep.subr.bf16.mxu0 0
      %1861 = vmatpush1.bf16.msra.mxu0 %v1139
      %1862 = vmatprep.subr.bf16.mxu0 0
      %1863 = vmatpush1.bf16.msra.mxu0 %v1126
      %1864 = vmatprep.subr.bf16.mxu0 0
      %1865 = vmatpush2.bf16.msra.mxu0 %v1321
      %1866 = vmatprep.subr.bf16.mxu0 0
      %1867 = vmatpush2.bf16.msra.mxu0 %v1308
      %1868 = vmatprep.subr.bf16.mxu0 0
      %1869 = vmatpush2.bf16.msra.mxu0 %v1295
      %1870 = vmatprep.subr.bf16.mxu0 0
      %1871 = vmatpush2.bf16.msra.mxu0 %v1282
      %1872 = vmatprep.subr.bf16.mxu0 0
      %1873 = vmatpush2.bf16.msra.mxu0 %v1269
      %1874 = vmatprep.subr.bf16.mxu0 0
      %1875 = vmatpush2.bf16.msra.mxu0 %v1256
      %1876 = vmatprep.subr.bf16.mxu0 0
      %1877 = vmatpush2.bf16.msra.mxu0 %v1243
      %1878 = vmatprep.subr.bf16.mxu0 0
      %1879 = vmatpush2.bf16.msra.mxu0 %v1230
      %1880 = vmatprep.mubr.bf16.mxu0 %v467
      %1881 = vmatmul.mubr.bf16.gmra.mxu0 %v466
      %v1882 = vpop.f32.mrf.mxu0
      %v1883 = vadd.f32 0.0, %v1882
      %v1884 = vpop.f32.mrf.mxu0
      %v1885 = vpop.f32.mrf.mxu0
      %v1886 = vadd.f32 0.0, %v1885
      %v1887 = vpop.f32.mrf.mxu0
      %1888 = vmatprep.mubr.bf16.mxu0 %v469
      %1889 = vmatmul.mubr.bf16.gmra.mxu0 %v468
      %v1890 = vpop.f32.mrf.mxu0
      %v1891 = vadd.f32 0.0, %v1890
      %v1892 = vpop.f32.mrf.mxu0
      %v1893 = vpop.f32.mrf.mxu0
      %v1894 = vadd.f32 0.0, %v1893
      %v1895 = vpop.f32.mrf.mxu0
      %1896 = vdwg.mxu0
      %v1897 = vadd.f32 %v1565, %v1567
      %v1898 = vadd.f32 %v1897, %v1618
      %v1899 = vadd.f32 %v1898, %v1620
      %v1900 = vadd.f32 %v1899, %v1671
      %v1901 = vadd.f32 %v1900, %v1673
      %v1902 = vadd.f32 %v1901, %v1724
      %v1903 = vadd.f32 %v1902, %v1726
      %v1904 = vadd.f32 %v1903, %v1777
      %v1905 = vadd.f32 %v1904, %v1779
      %v1906 = vadd.f32 %v1905, %v1830
      %v1907 = vadd.f32 %v1906, %v1832
      %v1908 = vadd.f32 %v1907, %v1883
      %1909 = vadd.xlane.f32.xlu0 %v1908
      %v1910 = vpop.xlane.xlu0 %1909
      %v1911 = vadd.f32 %v1569, %v1571
      %v1912 = vadd.f32 %v1911, %v1622
      %v1913 = vadd.f32 %v1912, %v1624
      %v1914 = vadd.f32 %v1913, %v1675
      %v1915 = vadd.f32 %v1914, %v1677
      %v1916 = vadd.f32 %v1915, %v1728
      %v1917 = vadd.f32 %v1916, %v1730
      %v1918 = vadd.f32 %v1917, %v1781
      %v1919 = vadd.f32 %v1918, %v1783
      %v1920 = vadd.f32 %v1919, %v1834
      %v1921 = vadd.f32 %v1920, %v1836
      %v1922 = vadd.f32 %v1921, %v1886
      %1923 = vadd.xlane.f32.xlu0 %v1922
      %v1924 = vpop.xlane.xlu0 %1923
      %v1925 = vadd.f32 %v1575, %v1577
      %v1926 = vadd.f32 %v1925, %v1628
      %v1927 = vadd.f32 %v1926, %v1630
      %v1928 = vadd.f32 %v1927, %v1681
      %v1929 = vadd.f32 %v1928, %v1683
      %v1930 = vadd.f32 %v1929, %v1734
      %v1931 = vadd.f32 %v1930, %v1736
      %v1932 = vadd.f32 %v1931, %v1787
      %v1933 = vadd.f32 %v1932, %v1789
      %v1934 = vadd.f32 %v1933, %v1840
      %v1935 = vadd.f32 %v1934, %v1842
      %v1936 = vadd.f32 %v1935, %v1891
      %1937 = vadd.xlane.f32.xlu0 %v1936
      %v1938 = vpop.xlane.xlu0 %1937
      %v1939 = vadd.f32 %v1579, %v1581
      %v1940 = vadd.f32 %v1939, %v1632
      %v1941 = vadd.f32 %v1940, %v1634
      %v1942 = vadd.f32 %v1941, %v1685
      %v1943 = vadd.f32 %v1942, %v1687
      %v1944 = vadd.f32 %v1943, %v1738
      %v1945 = vadd.f32 %v1944, %v1740
      %v1946 = vadd.f32 %v1945, %v1791
      %v1947 = vadd.f32 %v1946, %v1793
      %v1948 = vadd.f32 %v1947, %v1844
      %v1949 = vadd.f32 %v1948, %v1846
      %v1950 = vadd.f32 %v1949, %v1894
      %1951 = vadd.xlane.f32.xlu0 %v1950
      %v1952 = vpop.xlane.xlu0 %1951
      %v1953 = vmul.f32 %v1910, 0.00068587105
      %v1954 = vmul.f32 %v1924, 0.00068587105
      %v1955 = vmul.f32 %v1938, 0.00068587105
      %v1956 = vmul.f32 %v1952, 0.00068587105
      %v1957 = vsub.f32 %v1565, %v1953
      %v1958 = vsub.f32 %v1567, %v1953
      %v1959 = vsub.f32 %v1618, %v1953
      %v1960 = vsub.f32 %v1620, %v1953
      %v1961 = vsub.f32 %v1671, %v1953
      %v1962 = vsub.f32 %v1673, %v1953
      %v1963 = vsub.f32 %v1724, %v1953
      %v1964 = vsub.f32 %v1726, %v1953
      %v1965 = vsub.f32 %v1777, %v1953
      %v1966 = vsub.f32 %v1779, %v1953
      %v1967 = vsub.f32 %v1830, %v1953
      %v1968 = vsub.f32 %v1832, %v1953
      %v1969 = vsub.f32 %v1883, %v1953
      %v1970 = vsub.f32 %v1569, %v1954
      %v1971 = vsub.f32 %v1571, %v1954
      %v1972 = vsub.f32 %v1622, %v1954
      %v1973 = vsub.f32 %v1624, %v1954
      %v1974 = vsub.f32 %v1675, %v1954
      %v1975 = vsub.f32 %v1677, %v1954
      %v1976 = vsub.f32 %v1728, %v1954
      %v1977 = vsub.f32 %v1730, %v1954
      %v1978 = vsub.f32 %v1781, %v1954
      %v1979 = vsub.f32 %v1783, %v1954
      %v1980 = vsub.f32 %v1834, %v1954
      %v1981 = vsub.f32 %v1836, %v1954
      %v1982 = vsub.f32 %v1886, %v1954
      %v1983 = vsub.f32 %v1575, %v1955
      %v1984 = vsub.f32 %v1577, %v1955
      %v1985 = vsub.f32 %v1628, %v1955
      %v1986 = vsub.f32 %v1630, %v1955
      %v1987 = vsub.f32 %v1681, %v1955
      %v1988 = vsub.f32 %v1683, %v1955
      %v1989 = vsub.f32 %v1734, %v1955
      %v1990 = vsub.f32 %v1736, %v1955
      %v1991 = vsub.f32 %v1787, %v1955
      %v1992 = vsub.f32 %v1789, %v1955
      %v1993 = vsub.f32 %v1840, %v1955
      %v1994 = vsub.f32 %v1842, %v1955
      %v1995 = vsub.f32 %v1891, %v1955
      %v1996 = vsub.f32 %v1579, %v1956
      %v1997 = vsub.f32 %v1581, %v1956
      %v1998 = vsub.f32 %v1632, %v1956
      %v1999 = vsub.f32 %v1634, %v1956
      %v2000 = vsub.f32 %v1685, %v1956
      %v2001 = vsub.f32 %v1687, %v1956
      %v2002 = vsub.f32 %v1738, %v1956
      %v2003 = vsub.f32 %v1740, %v1956
      %v2004 = vsub.f32 %v1791, %v1956
      %v2005 = vsub.f32 %v1793, %v1956
      %v2006 = vsub.f32 %v1844, %v1956
      %v2007 = vsub.f32 %v1846, %v1956
      %v2008 = vsub.f32 %v1894, %v1956
      %v2009 = vld [vmem:[%s1] sm:$0xff]
      %v2010 = vld [vmem:[%s1 + $0x8] sm:$0x1f]
      %v2013 = vlaneseq
      %v2014 = vshrl.u32 %v2013, 7
      %v2015 = vsub.s32 0, %v2014
      %v2016 = vrot.slane %v2009, %v2015
      %v2017 = vlaneseq
      %v2018 = vshrl.u32 %v2017, 7
      %v2019 = vsub.s32 1, %v2018
      %v2020 = vrot.slane %v2009, %v2019
      %v2021 = vlaneseq
      %v2022 = vshrl.u32 %v2021, 7
      %v2023 = vsub.s32 2, %v2022
      %v2024 = vrot.slane %v2009, %v2023
      %v2025 = vlaneseq
      %v2026 = vshrl.u32 %v2025, 7
      %v2027 = vsub.s32 3, %v2026
      %v2028 = vrot.slane %v2009, %v2027
      %v2029 = vlaneseq
      %v2030 = vshrl.u32 %v2029, 7
      %v2031 = vsub.s32 4, %v2030
      %v2032 = vrot.slane %v2009, %v2031
      %v2033 = vlaneseq
      %v2034 = vshrl.u32 %v2033, 7
      %v2035 = vsub.s32 5, %v2034
      %v2036 = vrot.slane %v2009, %v2035
      %v2037 = vlaneseq
      %v2038 = vshrl.u32 %v2037, 7
      %v2039 = vsub.s32 6, %v2038
      %v2040 = vrot.slane %v2009, %v2039
      %v2041 = vlaneseq
      %v2042 = vshrl.u32 %v2041, 7
      %v2043 = vsub.s32 7, %v2042
      %v2044 = vrot.slane %v2009, %v2043
      %v2045 = vlaneseq
      %v2046 = vshrl.u32 %v2045, 7
      %v2047 = vsub.s32 0, %v2046
      %v2048 = vrot.slane %v2010, %v2047
      %v2049 = vlaneseq
      %v2050 = vshrl.u32 %v2049, 7
      %v2051 = vsub.s32 1, %v2050
      %v2052 = vrot.slane %v2010, %v2051
      %v2053 = vlaneseq
      %v2054 = vshrl.u32 %v2053, 7
      %v2055 = vsub.s32 2, %v2054
      %v2056 = vrot.slane %v2010, %v2055
      %v2057 = vlaneseq
      %v2058 = vshrl.u32 %v2057, 7
      %v2059 = vsub.s32 3, %v2058
      %v2060 = vrot.slane %v2010, %v2059
      %v2061 = vlaneseq
      %v2062 = vshrl.u32 %v2061, 7
      %v2063 = vsub.s32 4, %v2062
      %v2064 = vrot.slane %v2010, %v2063
      %v2078 = vmul.f32 %v1957, %v2016
      %v2079 = vmul.f32 %v1958, %v2020
      %v2080 = vmul.f32 %v1959, %v2024
      %v2081 = vmul.f32 %v1960, %v2028
      %v2082 = vmul.f32 %v1961, %v2032
      %v2083 = vmul.f32 %v1962, %v2036
      %v2084 = vmul.f32 %v1963, %v2040
      %v2085 = vmul.f32 %v1964, %v2044
      %v2086 = vmul.f32 %v1965, %v2048
      %v2087 = vmul.f32 %v1966, %v2052
      %v2088 = vmul.f32 %v1967, %v2056
      %v2089 = vmul.f32 %v1968, %v2060
      %v2090 = vmul.f32 %v1969, %v2064
      %v2091 = vmul.f32 %v1970, %v2016
      %v2092 = vmul.f32 %v1971, %v2020
      %v2093 = vmul.f32 %v1972, %v2024
      %v2094 = vmul.f32 %v1973, %v2028
      %v2095 = vmul.f32 %v1974, %v2032
      %v2096 = vmul.f32 %v1975, %v2036
      %v2097 = vmul.f32 %v1976, %v2040
      %v2098 = vmul.f32 %v1977, %v2044
      %v2099 = vmul.f32 %v1978, %v2048
      %v2100 = vmul.f32 %v1979, %v2052
      %v2101 = vmul.f32 %v1980, %v2056
      %v2102 = vmul.f32 %v1981, %v2060
      %v2103 = vmul.f32 %v1982, %v2064
      %v2104 = vmul.f32 %v1983, %v2016
      %v2105 = vmul.f32 %v1984, %v2020
      %v2106 = vmul.f32 %v1985, %v2024
      %v2107 = vmul.f32 %v1986, %v2028
      %v2108 = vmul.f32 %v1987, %v2032
      %v2109 = vmul.f32 %v1988, %v2036
      %v2110 = vmul.f32 %v1989, %v2040
      %v2111 = vmul.f32 %v1990, %v2044
      %v2112 = vmul.f32 %v1991, %v2048
      %v2113 = vmul.f32 %v1992, %v2052
      %v2114 = vmul.f32 %v1993, %v2056
      %v2115 = vmul.f32 %v1994, %v2060
      %v2116 = vmul.f32 %v1995, %v2064
      %v2117 = vmul.f32 %v1996, %v2016
      %v2118 = vmul.f32 %v1997, %v2020
      %v2119 = vmul.f32 %v1998, %v2024
      %v2120 = vmul.f32 %v1999, %v2028
      %v2121 = vmul.f32 %v2000, %v2032
      %v2122 = vmul.f32 %v2001, %v2036
      %v2123 = vmul.f32 %v2002, %v2040
      %v2124 = vmul.f32 %v2003, %v2044
      %v2125 = vmul.f32 %v2004, %v2048
      %v2126 = vmul.f32 %v2005, %v2052
      %v2127 = vmul.f32 %v2006, %v2056
      %v2128 = vmul.f32 %v2007, %v2060
      %v2129 = vmul.f32 %v2008, %v2064
      %v2130 = vmul.f32 %v2078, %v2078
      %v2131 = vmul.f32 %v2079, %v2079
      %v2132 = vmul.f32 %v2080, %v2080
      %v2133 = vmul.f32 %v2081, %v2081
      %v2134 = vmul.f32 %v2082, %v2082
      %v2135 = vmul.f32 %v2083, %v2083
      %v2136 = vmul.f32 %v2084, %v2084
      %v2137 = vmul.f32 %v2085, %v2085
      %v2138 = vmul.f32 %v2086, %v2086
      %v2139 = vmul.f32 %v2087, %v2087
      %v2140 = vmul.f32 %v2088, %v2088
      %v2141 = vmul.f32 %v2089, %v2089
      %v2142 = vmul.f32 %v2090, %v2090
      %v2143 = vmul.f32 %v2091, %v2091
      %v2144 = vmul.f32 %v2092, %v2092
      %v2145 = vmul.f32 %v2093, %v2093
      %v2146 = vmul.f32 %v2094, %v2094
      %v2147 = vmul.f32 %v2095, %v2095
      %v2148 = vmul.f32 %v2096, %v2096
      %v2149 = vmul.f32 %v2097, %v2097
      %v2150 = vmul.f32 %v2098, %v2098
      %v2151 = vmul.f32 %v2099, %v2099
      %v2152 = vmul.f32 %v2100, %v2100
      %v2153 = vmul.f32 %v2101, %v2101
      %v2154 = vmul.f32 %v2102, %v2102
      %v2155 = vmul.f32 %v2103, %v2103
      %v2156 = vmul.f32 %v2104, %v2104
      %v2157 = vmul.f32 %v2105, %v2105
      %v2158 = vmul.f32 %v2106, %v2106
      %v2159 = vmul.f32 %v2107, %v2107
      %v2160 = vmul.f32 %v2108, %v2108
      %v2161 = vmul.f32 %v2109, %v2109
      %v2162 = vmul.f32 %v2110, %v2110
      %v2163 = vmul.f32 %v2111, %v2111
      %v2164 = vmul.f32 %v2112, %v2112
      %v2165 = vmul.f32 %v2113, %v2113
      %v2166 = vmul.f32 %v2114, %v2114
      %v2167 = vmul.f32 %v2115, %v2115
      %v2168 = vmul.f32 %v2116, %v2116
      %v2169 = vmul.f32 %v2117, %v2117
      %v2170 = vmul.f32 %v2118, %v2118
      %v2171 = vmul.f32 %v2119, %v2119
      %v2172 = vmul.f32 %v2120, %v2120
      %v2173 = vmul.f32 %v2121, %v2121
      %v2174 = vmul.f32 %v2122, %v2122
      %v2175 = vmul.f32 %v2123, %v2123
      %v2176 = vmul.f32 %v2124, %v2124
      %v2177 = vmul.f32 %v2125, %v2125
      %v2178 = vmul.f32 %v2126, %v2126
      %v2179 = vmul.f32 %v2127, %v2127
      %v2180 = vmul.f32 %v2128, %v2128
      %v2181 = vmul.f32 %v2129, %v2129
      %v2182 = vadd.f32 %v2130, %v2131
      %v2183 = vadd.f32 %v2182, %v2132
      %v2184 = vadd.f32 %v2183, %v2133
      %v2185 = vadd.f32 %v2184, %v2134
      %v2186 = vadd.f32 %v2185, %v2135
      %v2187 = vadd.f32 %v2186, %v2136
      %v2188 = vadd.f32 %v2187, %v2137
      %v2189 = vadd.f32 %v2188, %v2138
      %v2190 = vadd.f32 %v2189, %v2139
      %v2191 = vadd.f32 %v2190, %v2140
      %v2192 = vadd.f32 %v2191, %v2141
      %v2193 = vadd.f32 %v2192, %v2142
      %2194 = vadd.xlane.f32.xlu0 %v2193
      %v2195 = vpop.xlane.xlu0 %2194
      %v2196 = vadd.f32 %v2143, %v2144
      %v2197 = vadd.f32 %v2196, %v2145
      %v2198 = vadd.f32 %v2197, %v2146
      %v2199 = vadd.f32 %v2198, %v2147
      %v2200 = vadd.f32 %v2199, %v2148
      %v2201 = vadd.f32 %v2200, %v2149
      %v2202 = vadd.f32 %v2201, %v2150
      %v2203 = vadd.f32 %v2202, %v2151
      %v2204 = vadd.f32 %v2203, %v2152
      %v2205 = vadd.f32 %v2204, %v2153
      %v2206 = vadd.f32 %v2205, %v2154
      %v2207 = vadd.f32 %v2206, %v2155
      %2208 = vadd.xlane.f32.xlu0 %v2207
      %v2209 = vpop.xlane.xlu0 %2208
      %v2210 = vadd.f32 %v2156, %v2157
      %v2211 = vadd.f32 %v2210, %v2158
      %v2212 = vadd.f32 %v2211, %v2159
      %v2213 = vadd.f32 %v2212, %v2160
      %v2214 = vadd.f32 %v2213, %v2161
      %v2215 = vadd.f32 %v2214, %v2162
      %v2216 = vadd.f32 %v2215, %v2163
      %v2217 = vadd.f32 %v2216, %v2164
      %v2218 = vadd.f32 %v2217, %v2165
      %v2219 = vadd.f32 %v2218, %v2166
      %v2220 = vadd.f32 %v2219, %v2167
      %v2221 = vadd.f32 %v2220, %v2168
      %2222 = vadd.xlane.f32.xlu0 %v2221
      %v2223 = vpop.xlane.xlu0 %2222
      %v2224 = vadd.f32 %v2169, %v2170
      %v2225 = vadd.f32 %v2224, %v2171
      %v2226 = vadd.f32 %v2225, %v2172
      %v2227 = vadd.f32 %v2226, %v2173
      %v2228 = vadd.f32 %v2227, %v2174
      %v2229 = vadd.f32 %v2228, %v2175
      %v2230 = vadd.f32 %v2229, %v2176
      %v2231 = vadd.f32 %v2230, %v2177
      %v2232 = vadd.f32 %v2231, %v2178
      %v2233 = vadd.f32 %v2232, %v2179
      %v2234 = vadd.f32 %v2233, %v2180
      %v2235 = vadd.f32 %v2234, %v2181
      %2236 = vadd.xlane.f32.xlu0 %v2235
      %v2237 = vpop.xlane.xlu0 %2236
      %v2238 = vmul.f32 %v2195, 0.00068587105
      %v2239 = vmul.f32 %v2209, 0.00068587105
      %v2240 = vmul.f32 %v2223, 0.00068587105
      %v2241 = vmul.f32 %v2237, 0.00068587105
      %v2242 = vadd.f32 %v2238, 1e-05
      %v2243 = vadd.f32 %v2239, 1e-05
      %v2244 = vadd.f32 %v2240, 1e-05
      %v2245 = vadd.f32 %v2241, 1e-05
      %v2246 = vrsqrt.pop %v2242
      %v2247 = vrsqrt.pop %v2243
      %v2248 = vrsqrt.pop %v2244
      %v2249 = vrsqrt.pop %v2245
      %v2250 = vld [vmem:[%s3] sm:$0xff]
      %v2251 = vld [vmem:[%s3 + $0x8] sm:$0xff]
      %v2252 = vld [vmem:[%s3 + $0x10] sm:$0xff]
      %v2253 = vld [vmem:[%s3 + $0x18] sm:$0xff]
      %v2254 = vmul.f32 %v2246, %v2250
      %v2255 = vmul.f32 %v2247, %v2251
      %v2256 = vmul.f32 %v2248, %v2252
      %v2257 = vmul.f32 %v2249, %v2253
      %v2258 = vld [vmem:[%s4] sm:$0xff]
      %v2259 = vld [vmem:[%s4 + $0x8] sm:$0xff]
      %v2260 = vld [vmem:[%s4 + $0x10] sm:$0xff]
      %v2261 = vld [vmem:[%s4 + $0x18] sm:$0xff]
      %v2262 = vmul.f32 %v1953, %v2254
      %v2263 = vmul.f32 %v1954, %v2255
      %v2264 = vmul.f32 %v1955, %v2256
      %v2265 = vmul.f32 %v1956, %v2257
      %v2266 = vsub.f32 %v2258, %v2262
      %v2267 = vsub.f32 %v2259, %v2263
      %v2268 = vsub.f32 %v2260, %v2264
      %v2269 = vsub.f32 %v2261, %v2265
      %2271 = vset.pattern.permute.xlu0 0
      %2272 = vperm.xlu0 %2271, %v2254
      %v2273 = vpop.permute.xlu0 %2272
      %2276 = vset.pattern.permute.xlu0 0
      %2277 = vperm.xlu0 %2276, %v2255
      %v2278 = vpop.permute.xlu0 %2277
      %2281 = vset.pattern.permute.xlu0 0
      %2282 = vperm.xlu0 %2281, %v2256
      %v2283 = vpop.permute.xlu0 %2282
      %2286 = vset.pattern.permute.xlu0 0
      %2287 = vperm.xlu0 %2286, %v2257
      %v2288 = vpop.permute.xlu0 %2287
      %v2290 = vmul.f32 %v1565, %v2273
      %v2291 = vmul.f32 %v1567, %v2273
      %v2292 = vmul.f32 %v1618, %v2273
      %v2293 = vmul.f32 %v1620, %v2273
      %v2294 = vmul.f32 %v1671, %v2273
      %v2295 = vmul.f32 %v1673, %v2273
      %v2296 = vmul.f32 %v1724, %v2273
      %v2297 = vmul.f32 %v1726, %v2273
      %v2298 = vmul.f32 %v1777, %v2273
      %v2299 = vmul.f32 %v1779, %v2273
      %v2300 = vmul.f32 %v1830, %v2273
      %v2301 = vmul.f32 %v1832, %v2273
      %v2302 = vmul.f32 %v1569, %v2278
      %v2303 = vmul.f32 %v1571, %v2278
      %v2304 = vmul.f32 %v1622, %v2278
      %v2305 = vmul.f32 %v1624, %v2278
      %v2306 = vmul.f32 %v1675, %v2278
      %v2307 = vmul.f32 %v1677, %v2278
      %v2308 = vmul.f32 %v1728, %v2278
      %v2309 = vmul.f32 %v1730, %v2278
      %v2310 = vmul.f32 %v1781, %v2278
      %v2311 = vmul.f32 %v1783, %v2278
      %v2312 = vmul.f32 %v1834, %v2278
      %v2313 = vmul.f32 %v1836, %v2278
      %v2314 = vmul.f32 %v1575, %v2283
      %v2315 = vmul.f32 %v1577, %v2283
      %v2316 = vmul.f32 %v1628, %v2283
      %v2317 = vmul.f32 %v1630, %v2283
      %v2318 = vmul.f32 %v1681, %v2283
      %v2319 = vmul.f32 %v1683, %v2283
      %v2320 = vmul.f32 %v1734, %v2283
      %v2321 = vmul.f32 %v1736, %v2283
      %v2322 = vmul.f32 %v1787, %v2283
      %v2323 = vmul.f32 %v1789, %v2283
      %v2324 = vmul.f32 %v1840, %v2283
      %v2325 = vmul.f32 %v1842, %v2283
      %v2326 = vmul.f32 %v1579, %v2288
      %v2327 = vmul.f32 %v1581, %v2288
      %v2328 = vmul.f32 %v1632, %v2288
      %v2329 = vmul.f32 %v1634, %v2288
      %v2330 = vmul.f32 %v1685, %v2288
      %v2331 = vmul.f32 %v1687, %v2288
      %v2332 = vmul.f32 %v1738, %v2288
      %v2333 = vmul.f32 %v1740, %v2288
      %v2334 = vmul.f32 %v1791, %v2288
      %v2335 = vmul.f32 %v1793, %v2288
      %v2336 = vmul.f32 %v1844, %v2288
      %v2337 = vmul.f32 %v1846, %v2288
      %2339 = vset.pattern.permute.xlu0 0
      %2340 = vperm.xlu0 %2339, %v2266
      %v2341 = vpop.permute.xlu0 %2340
      %2344 = vset.pattern.permute.xlu0 0
      %2345 = vperm.xlu0 %2344, %v2267
      %v2346 = vpop.permute.xlu0 %2345
      %2349 = vset.pattern.permute.xlu0 0
      %2350 = vperm.xlu0 %2349, %v2268
      %v2351 = vpop.permute.xlu0 %2350
      %2354 = vset.pattern.permute.xlu0 0
      %2355 = vperm.xlu0 %2354, %v2269
      %v2356 = vpop.permute.xlu0 %2355
      %v2358 = vadd.f32 %v2290, %v2341
      %v2359 = vadd.f32 %v2291, %v2341
      %v2360 = vadd.f32 %v2292, %v2341
      %v2361 = vadd.f32 %v2293, %v2341
      %v2362 = vadd.f32 %v2294, %v2341
      %v2363 = vadd.f32 %v2295, %v2341
      %v2364 = vadd.f32 %v2296, %v2341
      %v2365 = vadd.f32 %v2297, %v2341
      %v2366 = vadd.f32 %v2298, %v2341
      %v2367 = vadd.f32 %v2299, %v2341
      %v2368 = vadd.f32 %v2300, %v2341
      %v2369 = vadd.f32 %v2301, %v2341
      %v2370 = vadd.f32 %v2302, %v2346
      %v2371 = vadd.f32 %v2303, %v2346
      %v2372 = vadd.f32 %v2304, %v2346
      %v2373 = vadd.f32 %v2305, %v2346
      %v2374 = vadd.f32 %v2306, %v2346
      %v2375 = vadd.f32 %v2307, %v2346
      %v2376 = vadd.f32 %v2308, %v2346
      %v2377 = vadd.f32 %v2309, %v2346
      %v2378 = vadd.f32 %v2310, %v2346
      %v2379 = vadd.f32 %v2311, %v2346
      %v2380 = vadd.f32 %v2312, %v2346
      %v2381 = vadd.f32 %v2313, %v2346
      %v2382 = vadd.f32 %v2314, %v2351
      %v2383 = vadd.f32 %v2315, %v2351
      %v2384 = vadd.f32 %v2316, %v2351
      %v2385 = vadd.f32 %v2317, %v2351
      %v2386 = vadd.f32 %v2318, %v2351
      %v2387 = vadd.f32 %v2319, %v2351
      %v2388 = vadd.f32 %v2320, %v2351
      %v2389 = vadd.f32 %v2321, %v2351
      %v2390 = vadd.f32 %v2322, %v2351
      %v2391 = vadd.f32 %v2323, %v2351
      %v2392 = vadd.f32 %v2324, %v2351
      %v2393 = vadd.f32 %v2325, %v2351
      %v2394 = vadd.f32 %v2326, %v2356
      %v2395 = vadd.f32 %v2327, %v2356
      %v2396 = vadd.f32 %v2328, %v2356
      %v2397 = vadd.f32 %v2329, %v2356
      %v2398 = vadd.f32 %v2330, %v2356
      %v2399 = vadd.f32 %v2331, %v2356
      %v2400 = vadd.f32 %v2332, %v2356
      %v2401 = vadd.f32 %v2333, %v2356
      %v2402 = vadd.f32 %v2334, %v2356
      %v2403 = vadd.f32 %v2335, %v2356
      %v2404 = vadd.f32 %v2336, %v2356
      %v2405 = vadd.f32 %v2337, %v2356
      %v2406 = vmul.f32 %v2358, 0.2
      %v2407 = vmul.f32 %v2359, 0.2
      %v2408 = vmul.f32 %v2360, 0.2
      %v2409 = vmul.f32 %v2361, 0.2
      %v2410 = vmul.f32 %v2362, 0.2
      %v2411 = vmul.f32 %v2363, 0.2
      %v2412 = vmul.f32 %v2364, 0.2
      %v2413 = vmul.f32 %v2365, 0.2
      %v2414 = vmul.f32 %v2366, 0.2
      %v2415 = vmul.f32 %v2367, 0.2
      %v2416 = vmul.f32 %v2368, 0.2
      %v2417 = vmul.f32 %v2369, 0.2
      %v2418 = vmul.f32 %v2370, 0.2
      %v2419 = vmul.f32 %v2371, 0.2
      %v2420 = vmul.f32 %v2372, 0.2
      %v2421 = vmul.f32 %v2373, 0.2
      %v2422 = vmul.f32 %v2374, 0.2
      %v2423 = vmul.f32 %v2375, 0.2
      %v2424 = vmul.f32 %v2376, 0.2
      %v2425 = vmul.f32 %v2377, 0.2
      %v2426 = vmul.f32 %v2378, 0.2
      %v2427 = vmul.f32 %v2379, 0.2
      %v2428 = vmul.f32 %v2380, 0.2
      %v2429 = vmul.f32 %v2381, 0.2
      %v2430 = vmul.f32 %v2382, 0.2
      %v2431 = vmul.f32 %v2383, 0.2
      %v2432 = vmul.f32 %v2384, 0.2
      %v2433 = vmul.f32 %v2385, 0.2
      %v2434 = vmul.f32 %v2386, 0.2
      %v2435 = vmul.f32 %v2387, 0.2
      %v2436 = vmul.f32 %v2388, 0.2
      %v2437 = vmul.f32 %v2389, 0.2
      %v2438 = vmul.f32 %v2390, 0.2
      %v2439 = vmul.f32 %v2391, 0.2
      %v2440 = vmul.f32 %v2392, 0.2
      %v2441 = vmul.f32 %v2393, 0.2
      %v2442 = vmul.f32 %v2394, 0.2
      %v2443 = vmul.f32 %v2395, 0.2
      %v2444 = vmul.f32 %v2396, 0.2
      %v2445 = vmul.f32 %v2397, 0.2
      %v2446 = vmul.f32 %v2398, 0.2
      %v2447 = vmul.f32 %v2399, 0.2
      %v2448 = vmul.f32 %v2400, 0.2
      %v2449 = vmul.f32 %v2401, 0.2
      %v2450 = vmul.f32 %v2402, 0.2
      %v2451 = vmul.f32 %v2403, 0.2
      %v2452 = vmul.f32 %v2404, 0.2
      %v2453 = vmul.f32 %v2405, 0.2
      %v2454 = vmax.f32 %v2358, %v2406
      %v2455 = vmax.f32 %v2359, %v2407
      %v2456 = vmax.f32 %v2360, %v2408
      %v2457 = vmax.f32 %v2361, %v2409
      %v2458 = vmax.f32 %v2362, %v2410
      %v2459 = vmax.f32 %v2363, %v2411
      %v2460 = vmax.f32 %v2364, %v2412
      %v2461 = vmax.f32 %v2365, %v2413
      %v2462 = vmax.f32 %v2366, %v2414
      %v2463 = vmax.f32 %v2367, %v2415
      %v2464 = vmax.f32 %v2368, %v2416
      %v2465 = vmax.f32 %v2369, %v2417
      %v2466 = vmax.f32 %v2370, %v2418
      %v2467 = vmax.f32 %v2371, %v2419
      %v2468 = vmax.f32 %v2372, %v2420
      %v2469 = vmax.f32 %v2373, %v2421
      %v2470 = vmax.f32 %v2374, %v2422
      %v2471 = vmax.f32 %v2375, %v2423
      %v2472 = vmax.f32 %v2376, %v2424
      %v2473 = vmax.f32 %v2377, %v2425
      %v2474 = vmax.f32 %v2378, %v2426
      %v2475 = vmax.f32 %v2379, %v2427
      %v2476 = vmax.f32 %v2380, %v2428
      %v2477 = vmax.f32 %v2381, %v2429
      %v2478 = vmax.f32 %v2382, %v2430
      %v2479 = vmax.f32 %v2383, %v2431
      %v2480 = vmax.f32 %v2384, %v2432
      %v2481 = vmax.f32 %v2385, %v2433
      %v2482 = vmax.f32 %v2386, %v2434
      %v2483 = vmax.f32 %v2387, %v2435
      %v2484 = vmax.f32 %v2388, %v2436
      %v2485 = vmax.f32 %v2389, %v2437
      %v2486 = vmax.f32 %v2390, %v2438
      %v2487 = vmax.f32 %v2391, %v2439
      %v2488 = vmax.f32 %v2392, %v2440
      %v2489 = vmax.f32 %v2393, %v2441
      %v2490 = vmax.f32 %v2394, %v2442
      %v2491 = vmax.f32 %v2395, %v2443
      %v2492 = vmax.f32 %v2396, %v2444
      %v2493 = vmax.f32 %v2397, %v2445
      %v2494 = vmax.f32 %v2398, %v2446
      %v2495 = vmax.f32 %v2399, %v2447
      %v2496 = vmax.f32 %v2400, %v2448
      %v2497 = vmax.f32 %v2401, %v2449
      %v2498 = vmax.f32 %v2402, %v2450
      %v2499 = vmax.f32 %v2403, %v2451
      %v2500 = vmax.f32 %v2404, %v2452
      %v2501 = vmax.f32 %v2405, %v2453
      %v2502 = vadd.f32 %v2454, %v2457
      %v2503 = vadd.f32 %v2455, %v2458
      %v2504 = vadd.f32 %v2456, %v2459
      %v2505 = vadd.f32 %v2466, %v2469
      %v2506 = vadd.f32 %v2467, %v2470
      %v2507 = vadd.f32 %v2468, %v2471
      %v2508 = vadd.f32 %v2478, %v2481
      %v2509 = vadd.f32 %v2479, %v2482
      %v2510 = vadd.f32 %v2480, %v2483
      %v2511 = vadd.f32 %v2490, %v2493
      %v2512 = vadd.f32 %v2491, %v2494
      %v2513 = vadd.f32 %v2492, %v2495
      %v2514 = vadd.f32 %v2502, %v2460
      %v2515 = vadd.f32 %v2503, %v2461
      %v2516 = vadd.f32 %v2504, %v2462
      %v2517 = vadd.f32 %v2505, %v2472
      %v2518 = vadd.f32 %v2506, %v2473
      %v2519 = vadd.f32 %v2507, %v2474
      %v2520 = vadd.f32 %v2508, %v2484
      %v2521 = vadd.f32 %v2509, %v2485
      %v2522 = vadd.f32 %v2510, %v2486
      %v2523 = vadd.f32 %v2511, %v2496
      %v2524 = vadd.f32 %v2512, %v2497
      %v2525 = vadd.f32 %v2513, %v2498
      %v2526 = vadd.f32 %v2514, %v2463
      %v2527 = vadd.f32 %v2515, %v2464
      %v2528 = vadd.f32 %v2516, %v2465
      %v2529 = vadd.f32 %v2517, %v2475
      %v2530 = vadd.f32 %v2518, %v2476
      %v2531 = vadd.f32 %v2519, %v2477
      %v2532 = vadd.f32 %v2520, %v2487
      %v2533 = vadd.f32 %v2521, %v2488
      %v2534 = vadd.f32 %v2522, %v2489
      %v2535 = vadd.f32 %v2523, %v2499
      %v2536 = vadd.f32 %v2524, %v2500
      %v2537 = vadd.f32 %v2525, %v2501
      %v2538 = vmul.f32 %v2526, 0.25
      %v2539 = vmul.f32 %v2527, 0.25
      %v2540 = vmul.f32 %v2528, 0.25
      %v2541 = vmul.f32 %v2529, 0.25
      %v2542 = vmul.f32 %v2530, 0.25
      %v2543 = vmul.f32 %v2531, 0.25
      %v2544 = vmul.f32 %v2532, 0.25
      %v2545 = vmul.f32 %v2533, 0.25
      %v2546 = vmul.f32 %v2534, 0.25
      %v2547 = vmul.f32 %v2535, 0.25
      %v2548 = vmul.f32 %v2536, 0.25
      %v2549 = vmul.f32 %v2537, 0.25
      %v2550 = vpack.c.bf16 %v2541, %v2538
      %v2551 = vpack.c.bf16 %v2542, %v2539
      %v2552 = vpack.c.bf16 %v2543, %v2540
      %v2553 = vpack.c.bf16 %v2547, %v2544
      %v2554 = vpack.c.bf16 %v2548, %v2545
      %v2555 = vpack.c.bf16 %v2549, %v2546
      %v2562 = vunpack.c.l.b16 %v2550
      %v2563 = vunpack.c.l.b16 %v2551
      %v2564 = vunpack.c.l.b16 %v2552
      %v2565 = vunpack.c.h.b16 %v2550
      %v2566 = vunpack.c.h.b16 %v2551
      %v2567 = vunpack.c.h.b16 %v2552
      %v2568 = vunpack.c.l.b16 %v2553
      %v2569 = vunpack.c.l.b16 %v2554
      %v2570 = vunpack.c.l.b16 %v2555
      %v2571 = vunpack.c.h.b16 %v2553
      %v2572 = vunpack.c.h.b16 %v2554
      %v2573 = vunpack.c.h.b16 %v2555
      %v2574 = vpack.c.b16 %v2563, %v2562
      %v2575 = vpack.c.b16 %v2564, %v2564
      %v2576 = vpack.c.b16 %v2566, %v2565
      %v2577 = vpack.c.b16 %v2567, %v2567
      %v2578 = vpack.c.b16 %v2569, %v2568
      %v2579 = vpack.c.b16 %v2570, %v2570
      %v2580 = vpack.c.b16 %v2572, %v2571
      %v2581 = vpack.c.b16 %v2573, %v2573
      %2590 = vst [vmem:[%s224] sm:$0xff] %v2574
      %2591 = vst [vmem:[%s224 + $0x8] sm:$0xf] %v2575
      %2592 = vst [vmem:[%s224 + $0xc] sm:$0xff] %v2576
      %2593 = vst [vmem:[%s224 + $0x14] sm:$0xf] %v2577
      %2594 = vst [vmem:[%s224 + $0x18] sm:$0xff] %v2578
      %2595 = vst [vmem:[%s224 + $0x20] sm:$0xf] %v2579
      %2596 = vst [vmem:[%s224 + $0x24] sm:$0xff] %v2580
      %2597 = vst [vmem:[%s224 + $0x2c] sm:$0xf] %v2581
      %p2598 = scmp.lt.s32.totalorder %s16, 1
      %s2599 = scalar_select %p2598, %s16, 1
      %s2600 = smul.addr %s2599, 12
      %s2601 = smul.addr %s2600, 4
      %s2602 = scalar_lea.vmem %s5, %s2601
      // Predicated region
      $region41: #{discriminator_forward.4} parent=39 // pred_check
        %p2603 = pneg %p144
      $region42: #{discriminator_forward.4} parent=39 // pred_check_branch
        %2605 = sbr.rel (%p2603) target = $region44
      $region43: #{discriminator_forward.4} parent=39 // pred_region
        _
      $region44: #{discriminator_forward.4} parent=39 // pred_fallthru
        _
    $region40: #{discriminator_forward.4} parent=5 // pred_fallthru
      _
    %p2606 = scmp.le.s32.totalorder 2, %s11
    // Predicated region
    $region45: #{discriminator_forward.4} parent=5 // pred_check
      %p2607 = pneg %p2606
    $region46: #{discriminator_forward.4} parent=5 // pred_check_branch
      %2609 = sbr.rel (%p2607) target = $region48
    $region47: #{discriminator_forward.4} parent=5 // pred_region
      %s2610 = ssub.s32 %s11, 2
      // Predicated region
      $region49: #{discriminator_forward.4} parent=47 // pred_check
        %p2611 = pneg %p150
      $region50: #{discriminator_forward.4} parent=47 // pred_check_branch
        %2613 = sbr.rel (%p2611) target = $region52
      $region51: #{discriminator_forward.4} parent=47 // pred_region
        %p2614 = scmp.lt.s32.totalorder %s17, 1
        %s2615 = scalar_select %p2614, %s17, 1
        %s2616 = smul.addr %s2615, 12
        %s2617 = smul.addr %s2616, 4
        %s2618 = scalar_lea.vmem %s5, %s2617
      $region52: #{discriminator_forward.4} parent=47 // pred_fallthru
        _
    $region48: #{discriminator_forward.4} parent=5 // pred_fallthru
      _
  $region6: #{discriminator_forward.4} parent=0 // loop_footer
    %s15 = sadd.s32 1, %s11
  $region7: #{discriminator_forward.4} parent=0 // loop_footer_branch
    %10 = sbr.rel target = $region3
  $region8: #{discriminator_forward.4} parent=0 // loop_exit
    _

// kernel: discriminator_forward.5
$region0: #{discriminator_forward.5}
  #allocation0 [shape = 'u32[]', space=smem, size = 0x4, offset = 0x4, fixed_abs, tag = 'smem constant byte address 0x4 - core index']
  #allocation1 [shape = 'u32[144,128]{1,0:T(1,128)}', space=vmem, size = 0x12000, scoped, tag = 'internal scratch']
  #allocation2 [shape = 'f32[1,1]{1,0:T(1,128)S(1)}', space=vmem, size = 0x200, scoped, tag = 'scoped memory for discriminator_forward.5']
  %s0 = inlined_call_operand.vmem [shape: bf16[2,512,512], index: 0, kind: input, shape index: {}]
  %s1 = inlined_call_operand.vmem [shape: f32[1,512], index: 1, kind: input, shape index: {}]
  %s2 = inlined_call_operand.vmem [shape: bf16[32,512], index: 2, kind: input, shape index: {}]
  %s3 = inlined_call_operand.vmem [shape: f32[32,1], index: 3, kind: input, shape index: {}]
  %s4 = inlined_call_operand.vmem [shape: f32[32,1], index: 4, kind: input, shape index: {}]
  %s5 = inlined_call_operand.vmem [shape: bf16[16,128,8], index: 5, kind: input, shape index: {}]
  %s6 = inlined_call_operand.vmem [shape: bf16[16,32,32], index: 6, kind: input, shape index: {}]
  %s7 = inlined_call_operand.vmem [shape: f32[32,1], index: 7, kind: input, shape index: {}]
  %s8 = inlined_call_operand.vmem [shape: f32[32,1], index: 8, kind: input, shape index: {}]
  %s9 = inlined_call_operand.vmem [shape: f32[1,32], index: 9, kind: input, shape index: {}]
  %s10 = inlined_call_operand.<no memory space> [shape: f32[1,1], index: 10, kind: input, shape index: {}]
  %s11 = inlined_call_operand.vmem [shape: bf16[2,32,128], index: 11, kind: output, shape index: {0}]
  %s12 = inlined_call_operand.vmem [shape: bf16[2,32,8], index: 12, kind: output, shape index: {1}]
  %s13 = inlined_call_operand.vmem [shape: f32[2,1,8], index: 13, kind: output, shape index: {2}]
  %14 = xla_tuple %s11, %s12, %s13
  %s15 = sld [smem:[#allocation0]]
  $region93: #{discriminator_forward.5} parent=0
    _
  %s17 = ssub.s32 1, %s15
  %s18 = scalar_select 0, %s17, %s15
  %v19 = vstv %s10
  %20 = vst [vmem:[#allocation2] sm:$0x1] %v19
  loop: start=0, step=1, limit=4
  $region2: #{discriminator_forward.5} parent=0 // loop_pre_header
    _
  $region3: #{discriminator_forward.5} parent=0 // loop_header
    %s22 = sphi 0, %s26
    %p23 = scmp.ge.s32.totalorder %s22, 4
    %s32 = sphi 0, %s34
    %s35 = sphi 0, %s32
    %s36 = sphi 0, %s35
    %s52 = sphi 0, %s36
    %s56 = sphi 0, %s56
    %s58 = sphi 0, %s56
    %s59 = sphi 0, %s58
    %s73 = sphi 0, %s59
    %s77 = sphi 0, %s77
    %s79 = sphi 0, %s77
    %s80 = sphi 0, %s79
    %s94 = sphi 0, %s80
    %s98 = sphi 0, %s98
    %s100 = sphi 0, %s98
    %s101 = sphi 0, %s100
    %s115 = sphi 0, %s101
    %s119 = sphi 0, %s119
    %s121 = sphi 0, %s119
    %s122 = sphi 0, %s121
    %s136 = sphi 0, %s122
    %s140 = sphi 0, %s140
    %s142 = sphi 0, %s140
    %s143 = sphi 0, %s142
    %s157 = sphi 0, %s143
    %s161 = sphi 0, %s161
    %s163 = sphi 0, %s161
    %s164 = sphi 0, %s163
    %s178 = sphi 0, %s164
    %s182 = sphi 0, %s182
    %s184 = sphi 0, %s182
    %s185 = sphi 0, %s184
    %s199 = sphi 0, %s185
    %s203 = sphi 0, %s203
    %s205 = sphi 0, %s203
    %s206 = sphi 0, %s205
    %s220 = sphi 0, %s206
    %s224 = sphi 0, %s224
    %s226 = sphi 0, %s224
    %s227 = sphi 0, %s226
    %s241 = sphi 0, %s227
    %s245 = sphi 0, %s245
    %s247 = sphi 0, %s245
    %s248 = sphi 0, %s247
    %s262 = sphi 0, %s248
    %s268 = sphi 0, %s270
    %s271 = sphi 0, %s268
    %s272 = sphi 0, %s271
    %s288 = sphi 0, %s272
    %s294 = sphi 0, %s296
    %s297 = sphi 0, %s294
    %s298 = sphi 0, %s297
    %s314 = sphi 0, %s298
    %s320 = sphi 0, %s322
    %s323 = sphi 0, %s320
    %s324 = sphi 0, %s323
    %s340 = sphi 0, %s324
  $region4: #{discriminator_forward.5} parent=0 // loop_header_branch
    %25 = sbr.rel (%p23) target = $region8
  $region5: #{discriminator_forward.5} parent=0 // loop_body
    %s27 = ssub.s32 %s22, 1
    %s28 = ssub.s32 %s22, 2
    %s29 = sadd.s32 %s22, 1
    %s30 = ssub.s32 %s22, %s29
    %p31 = scmp.eq.s32.totalorder %s30, 0
    %s33 = sadd.s32 %s32, 1
    %s34 = scalar_select %p31, %s32, %s33
    %p37 = pneg %p31
    %p38 = scmp.eq.s32.totalorder %s22, 1
    %p39 = por %p37, %p38
    %p40 = scmp.ne.s32.totalorder %s32, %s35
    %p41 = scmp.eq.s32.totalorder %s22, 0
    %p42 = por %p40, %p41
    %p43 = scmp.ne.s32.totalorder %s32, %s35
    %p44 = scmp.eq.s32.totalorder %s27, 1
    %p45 = por %p43, %p44
    %p46 = scmp.ne.s32.totalorder %s35, %s36
    %p47 = scmp.eq.s32.totalorder %s27, 0
    %p48 = por %p46, %p47
    %p49 = scmp.ne.s32.totalorder %s35, %s36
    %p50 = scmp.eq.s32.totalorder %s28, 1
    %p51 = por %p49, %p50
    %p53 = scmp.ne.s32.totalorder %s36, %s52
    %p54 = scmp.eq.s32.totalorder %s28, 0
    %p55 = por %p53, %p54
    %s57 = sadd.s32 %s56, 1
    %p60 = scmp.eq.s32.totalorder %s22, 1
    %p61 = scmp.ne.s32.totalorder %s56, %s58
    %p62 = scmp.eq.s32.totalorder %s22, 0
    %p63 = por %p61, %p62
    %p64 = scmp.ne.s32.totalorder %s56, %s58
    %p65 = scmp.eq.s32.totalorder %s27, 1
    %p66 = por %p64, %p65
    %p67 = scmp.ne.s32.totalorder %s58, %s59
    %p68 = scmp.eq.s32.totalorder %s27, 0
    %p69 = por %p67, %p68
    %p70 = scmp.ne.s32.totalorder %s58, %s59
    %p71 = scmp.eq.s32.totalorder %s28, 1
    %p72 = por %p70, %p71
    %p74 = scmp.ne.s32.totalorder %s59, %s73
    %p75 = scmp.eq.s32.totalorder %s28, 0
    %p76 = por %p74, %p75
    %s78 = sadd.s32 %s77, 1
    %p81 = scmp.eq.s32.totalorder %s22, 1
    %p82 = scmp.ne.s32.totalorder %s77, %s79
    %p83 = scmp.eq.s32.totalorder %s22, 0
    %p84 = por %p82, %p83
    %p85 = scmp.ne.s32.totalorder %s77, %s79
    %p86 = scmp.eq.s32.totalorder %s27, 1
    %p87 = por %p85, %p86
    %p88 = scmp.ne.s32.totalorder %s79, %s80
    %p89 = scmp.eq.s32.totalorder %s27, 0
    %p90 = por %p88, %p89
    %p91 = scmp.ne.s32.totalorder %s79, %s80
    %p92 = scmp.eq.s32.totalorder %s28, 1
    %p93 = por %p91, %p92
    %p95 = scmp.ne.s32.totalorder %s80, %s94
    %p96 = scmp.eq.s32.totalorder %s28, 0
    %p97 = por %p95, %p96
    %s99 = sadd.s32 %s98, 1
    %p102 = scmp.eq.s32.totalorder %s22, 1
    %p103 = scmp.ne.s32.totalorder %s98, %s100
    %p104 = scmp.eq.s32.totalorder %s22, 0
    %p105 = por %p103, %p104
    %p106 = scmp.ne.s32.totalorder %s98, %s100
    %p107 = scmp.eq.s32.totalorder %s27, 1
    %p108 = por %p106, %p107
    %p109 = scmp.ne.s32.totalorder %s100, %s101
    %p110 = scmp.eq.s32.totalorder %s27, 0
    %p111 = por %p109, %p110
    %p112 = scmp.ne.s32.totalorder %s100, %s101
    %p113 = scmp.eq.s32.totalorder %s28, 1
    %p114 = por %p112, %p113
    %p116 = scmp.ne.s32.totalorder %s101, %s115
    %p117 = scmp.eq.s32.totalorder %s28, 0
    %p118 = por %p116, %p117
    %s120 = sadd.s32 %s119, 1
    %p123 = scmp.eq.s32.totalorder %s22, 1
    %p124 = scmp.ne.s32.totalorder %s119, %s121
    %p125 = scmp.eq.s32.totalorder %s22, 0
    %p126 = por %p124, %p125
    %p127 = scmp.ne.s32.totalorder %s119, %s121
    %p128 = scmp.eq.s32.totalorder %s27, 1
    %p129 = por %p127, %p128
    %p130 = scmp.ne.s32.totalorder %s121, %s122
    %p131 = scmp.eq.s32.totalorder %s27, 0
    %p132 = por %p130, %p131
    %p133 = scmp.ne.s32.totalorder %s121, %s122
    %p134 = scmp.eq.s32.totalorder %s28, 1
    %p135 = por %p133, %p134
    %p137 = scmp.ne.s32.totalorder %s122, %s136
    %p138 = scmp.eq.s32.totalorder %s28, 0
    %p139 = por %p137, %p138
    %s141 = sadd.s32 %s140, 1
    %p144 = scmp.eq.s32.totalorder %s22, 1
    %p145 = scmp.ne.s32.totalorder %s140, %s142
    %p146 = scmp.eq.s32.totalorder %s22, 0
    %p147 = por %p145, %p146
    %p148 = scmp.ne.s32.totalorder %s140, %s142
    %p149 = scmp.eq.s32.totalorder %s27, 1
    %p150 = por %p148, %p149
    %p151 = scmp.ne.s32.totalorder %s142, %s143
    %p152 = scmp.eq.s32.totalorder %s27, 0
    %p153 = por %p151, %p152
    %p154 = scmp.ne.s32.totalorder %s142, %s143
    %p155 = scmp.eq.s32.totalorder %s28, 1
    %p156 = por %p154, %p155
    %p158 = scmp.ne.s32.totalorder %s143, %s157
    %p159 = scmp.eq.s32.totalorder %s28, 0
    %p160 = por %p158, %p159
    %s162 = sadd.s32 %s161, 1
    %p165 = scmp.eq.s32.totalorder %s22, 1
    %p166 = scmp.ne.s32.totalorder %s161, %s163
    %p167 = scmp.eq.s32.totalorder %s22, 0
    %p168 = por %p166, %p167
    %p169 = scmp.ne.s32.totalorder %s161, %s163
    %p170 = scmp.eq.s32.totalorder %s27, 1
    %p171 = por %p169, %p170
    %p172 = scmp.ne.s32.totalorder %s163, %s164
    %p173 = scmp.eq.s32.totalorder %s27, 0
    %p174 = por %p172, %p173
    %p175 = scmp.ne.s32.totalorder %s163, %s164
    %p176 = scmp.eq.s32.totalorder %s28, 1
    %p177 = por %p175, %p176
    %p179 = scmp.ne.s32.totalorder %s164, %s178
    %p180 = scmp.eq.s32.totalorder %s28, 0
    %p181 = por %p179, %p180
    %s183 = sadd.s32 %s182, 1
    %p186 = scmp.eq.s32.totalorder %s22, 1
    %p187 = scmp.ne.s32.totalorder %s182, %s184
    %p188 = scmp.eq.s32.totalorder %s22, 0
    %p189 = por %p187, %p188
    %p190 = scmp.ne.s32.totalorder %s182, %s184
    %p191 = scmp.eq.s32.totalorder %s27, 1
    %p192 = por %p190, %p191
    %p193 = scmp.ne.s32.totalorder %s184, %s185
    %p194 = scmp.eq.s32.totalorder %s27, 0
    %p195 = por %p193, %p194
    %p196 = scmp.ne.s32.totalorder %s184, %s185
    %p197 = scmp.eq.s32.totalorder %s28, 1
    %p198 = por %p196, %p197
    %p200 = scmp.ne.s32.totalorder %s185, %s199
    %p201 = scmp.eq.s32.totalorder %s28, 0
    %p202 = por %p200, %p201
    %s204 = sadd.s32 %s203, 1
    %p207 = scmp.eq.s32.totalorder %s22, 1
    %p208 = scmp.ne.s32.totalorder %s203, %s205
    %p209 = scmp.eq.s32.totalorder %s22, 0
    %p210 = por %p208, %p209
    %p211 = scmp.ne.s32.totalorder %s203, %s205
    %p212 = scmp.eq.s32.totalorder %s27, 1
    %p213 = por %p211, %p212
    %p214 = scmp.ne.s32.totalorder %s205, %s206
    %p215 = scmp.eq.s32.totalorder %s27, 0
    %p216 = por %p214, %p215
    %p217 = scmp.ne.s32.totalorder %s205, %s206
    %p218 = scmp.eq.s32.totalorder %s28, 1
    %p219 = por %p217, %p218
    %p221 = scmp.ne.s32.totalorder %s206, %s220
    %p222 = scmp.eq.s32.totalorder %s28, 0
    %p223 = por %p221, %p222
    %s225 = sadd.s32 %s224, 1
    %p228 = scmp.eq.s32.totalorder %s22, 1
    %p229 = scmp.ne.s32.totalorder %s224, %s226
    %p230 = scmp.eq.s32.totalorder %s22, 0
    %p231 = por %p229, %p230
    %p232 = scmp.ne.s32.totalorder %s224, %s226
    %p233 = scmp.eq.s32.totalorder %s27, 1
    %p234 = por %p232, %p233
    %p235 = scmp.ne.s32.totalorder %s226, %s227
    %p236 = scmp.eq.s32.totalorder %s27, 0
    %p237 = por %p235, %p236
    %p238 = scmp.ne.s32.totalorder %s226, %s227
    %p239 = scmp.eq.s32.totalorder %s28, 1
    %p240 = por %p238, %p239
    %p242 = scmp.ne.s32.totalorder %s227, %s241
    %p243 = scmp.eq.s32.totalorder %s28, 0
    %p244 = por %p242, %p243
    %s246 = sadd.s32 %s245, 1
    %p249 = scmp.eq.s32.totalorder %s22, 1
    %p250 = scmp.ne.s32.totalorder %s245, %s247
    %p251 = scmp.eq.s32.totalorder %s22, 0
    %p252 = por %p250, %p251
    %p253 = scmp.ne.s32.totalorder %s245, %s247
    %p254 = scmp.eq.s32.totalorder %s27, 1
    %p255 = por %p253, %p254
    %p256 = scmp.ne.s32.totalorder %s247, %s248
    %p257 = scmp.eq.s32.totalorder %s27, 0
    %p258 = por %p256, %p257
    %p259 = scmp.ne.s32.totalorder %s247, %s248
    %p260 = scmp.eq.s32.totalorder %s28, 1
    %p261 = por %p259, %p260
    %p263 = scmp.ne.s32.totalorder %s248, %s262
    %p264 = scmp.eq.s32.totalorder %s28, 0
    %p265 = por %p263, %p264
    %s266 = ssub.s32 %s22, %s29
    %p267 = scmp.eq.s32.totalorder %s266, 0
    %s269 = sadd.s32 %s268, 1
    %s270 = scalar_select %p267, %s268, %s269
    %p273 = pneg %p267
    %p274 = scmp.eq.s32.totalorder %s22, 1
    %p275 = por %p273, %p274
    %p276 = scmp.ne.s32.totalorder %s268, %s271
    %p277 = scmp.eq.s32.totalorder %s22, 0
    %p278 = por %p276, %p277
    %p279 = scmp.ne.s32.totalorder %s268, %s271
    %p280 = scmp.eq.s32.totalorder %s27, 1
    %p281 = por %p279, %p280
    %p282 = scmp.ne.s32.totalorder %s271, %s272
    %p283 = scmp.eq.s32.totalorder %s27, 0
    %p284 = por %p282, %p283
    %p285 = scmp.ne.s32.totalorder %s271, %s272
    %p286 = scmp.eq.s32.totalorder %s28, 1
    %p287 = por %p285, %p286
    %p289 = scmp.ne.s32.totalorder %s272, %s288
    %p290 = scmp.eq.s32.totalorder %s28, 0
    %p291 = por %p289, %p290
    %s292 = ssub.s32 %s22, %s29
    %p293 = scmp.eq.s32.totalorder %s292, 0
    %s295 = sadd.s32 %s294, 1
    %s296 = scalar_select %p293, %s294, %s295
    %p299 = pneg %p293
    %p300 = scmp.eq.s32.totalorder %s22, 1
    %p301 = por %p299, %p300
    %p302 = scmp.ne.s32.totalorder %s294, %s297
    %p303 = scmp.eq.s32.totalorder %s22, 0
    %p304 = por %p302, %p303
    %p305 = scmp.ne.s32.totalorder %s294, %s297
    %p306 = scmp.eq.s32.totalorder %s27, 1
    %p307 = por %p305, %p306
    %p308 = scmp.ne.s32.totalorder %s297, %s298
    %p309 = scmp.eq.s32.totalorder %s27, 0
    %p310 = por %p308, %p309
    %p311 = scmp.ne.s32.totalorder %s297, %s298
    %p312 = scmp.eq.s32.totalorder %s28, 1
    %p313 = por %p311, %p312
    %p315 = scmp.ne.s32.totalorder %s298, %s314
    %p316 = scmp.eq.s32.totalorder %s28, 0
    %p317 = por %p315, %p316
    %s318 = ssub.s32 %s22, %s29
    %p319 = scmp.eq.s32.totalorder %s318, 0
    %s321 = sadd.s32 %s320, 1
    %s322 = scalar_select %p319, %s320, %s321
    %p325 = pneg %p319
    %p326 = scmp.eq.s32.totalorder %s22, 1
    %p327 = por %p325, %p326
    %p328 = scmp.ne.s32.totalorder %s320, %s323
    %p329 = scmp.eq.s32.totalorder %s22, 0
    %p330 = por %p328, %p329
    %p331 = scmp.ne.s32.totalorder %s320, %s323
    %p332 = scmp.eq.s32.totalorder %s27, 1
    %p333 = por %p331, %p332
    %p334 = scmp.ne.s32.totalorder %s323, %s324
    %p335 = scmp.eq.s32.totalorder %s27, 0
    %p336 = por %p334, %p335
    %p337 = scmp.ne.s32.totalorder %s323, %s324
    %p338 = scmp.eq.s32.totalorder %s28, 1
    %p339 = por %p337, %p338
    %p341 = scmp.ne.s32.totalorder %s324, %s340
    %p342 = scmp.eq.s32.totalorder %s28, 0
    %p343 = por %p341, %p342
    %p344 = scmp.le.s32.totalorder 1, %s22
    %p345 = scmp.lt.s32.totalorder %s22, 3
    %p346 = pnand %p344, %p345
    %p347 = pneg %p346
    // Predicated region
    $region9: #{discriminator_forward.5} parent=5 // pred_check
      _
    $region10: #{discriminator_forward.5} parent=5 // pred_check_branch
      %349 = sbr.rel (%p346) target = $region12
    $region11: #{discriminator_forward.5} parent=5 // pred_region
      %s350 = ssub.s32 %s22, 1
      // Predicated region
      $region13: #{discriminator_forward.5} parent=11 // pred_check
        %p351 = pneg %p69
      $region14: #{discriminator_forward.5} parent=11 // pred_check_branch
        %353 = sbr.rel (%p351) target = $region16
      $region15: #{discriminator_forward.5} parent=11 // pred_region
        _
      $region16: #{discriminator_forward.5} parent=11 // pred_fallthru
        _
      // Predicated region
      $region17: #{discriminator_forward.5} parent=11 // pred_check
        %p354 = pneg %p90
      $region18: #{discriminator_forward.5} parent=11 // pred_check_branch
        %356 = sbr.rel (%p354) target = $region20
      $region19: #{discriminator_forward.5} parent=11 // pred_region
        _
      $region20: #{discriminator_forward.5} parent=11 // pred_fallthru
        _
      // Predicated region
      $region21: #{discriminator_forward.5} parent=11 // pred_check
        %p357 = pneg %p111
      $region22: #{discriminator_forward.5} parent=11 // pred_check_branch
        %359 = sbr.rel (%p357) target = $region24
      $region23: #{discriminator_forward.5} parent=11 // pred_region
        _
      $region24: #{discriminator_forward.5} parent=11 // pred_fallthru
        _
      // Predicated region
      $region25: #{discriminator_forward.5} parent=11 // pred_check
        %p360 = pneg %p132
      $region26: #{discriminator_forward.5} parent=11 // pred_check_branch
        %362 = sbr.rel (%p360) target = $region28
      $region27: #{discriminator_forward.5} parent=11 // pred_region
        _
      $region28: #{discriminator_forward.5} parent=11 // pred_fallthru
        _
      // Predicated region
      $region29: #{discriminator_forward.5} parent=11 // pred_check
        %p363 = pneg %p153
      $region30: #{discriminator_forward.5} parent=11 // pred_check_branch
        %365 = sbr.rel (%p363) target = $region32
      $region31: #{discriminator_forward.5} parent=11 // pred_region
        _
      $region32: #{discriminator_forward.5} parent=11 // pred_fallthru
        _
      // Predicated region
      $region33: #{discriminator_forward.5} parent=11 // pred_check
        %p366 = pneg %p174
      $region34: #{discriminator_forward.5} parent=11 // pred_check_branch
        %368 = sbr.rel (%p366) target = $region36
      $region35: #{discriminator_forward.5} parent=11 // pred_region
        _
      $region36: #{discriminator_forward.5} parent=11 // pred_fallthru
        _
      // Predicated region
      $region37: #{discriminator_forward.5} parent=11 // pred_check
        %p369 = pneg %p195
      $region38: #{discriminator_forward.5} parent=11 // pred_check_branch
        %371 = sbr.rel (%p369) target = $region40
      $region39: #{discriminator_forward.5} parent=11 // pred_region
        _
      $region40: #{discriminator_forward.5} parent=11 // pred_fallthru
        _
      // Predicated region
      $region41: #{discriminator_forward.5} parent=11 // pred_check
        %p372 = pneg %p216
      $region42: #{discriminator_forward.5} parent=11 // pred_check_branch
        %374 = sbr.rel (%p372) target = $region44
      $region43: #{discriminator_forward.5} parent=11 // pred_region
        _
      $region44: #{discriminator_forward.5} parent=11 // pred_fallthru
        _
      // Predicated region
      $region45: #{discriminator_forward.5} parent=11 // pred_check
        %p375 = pneg %p237
      $region46: #{discriminator_forward.5} parent=11 // pred_check_branch
        %377 = sbr.rel (%p375) target = $region48
      $region47: #{discriminator_forward.5} parent=11 // pred_region
        _
      $region48: #{discriminator_forward.5} parent=11 // pred_fallthru
        _
      // Predicated region
      $region49: #{discriminator_forward.5} parent=11 // pred_check
        %p378 = pneg %p258
      $region50: #{discriminator_forward.5} parent=11 // pred_check_branch
        %380 = sbr.rel (%p378) target = $region52
      $region51: #{discriminator_forward.5} parent=11 // pred_region
        _
      $region52: #{discriminator_forward.5} parent=11 // pred_fallthru
        _
    $region12: #{discriminator_forward.5} parent=5 // pred_fallthru
      _
    %p381 = scmp.lt.s32.totalorder %s22, 2
    // Predicated region
    $region53: #{discriminator_forward.5} parent=5 // pred_check
      %p382 = pneg %p381
    $region54: #{discriminator_forward.5} parent=5 // pred_check_branch
      %384 = sbr.rel (%p382) target = $region56
    $region55: #{discriminator_forward.5} parent=5 // pred_region
      // Predicated region
      $region57: #{discriminator_forward.5} parent=55 // pred_check
        %p385 = pneg %p42
      $region58: #{discriminator_forward.5} parent=55 // pred_check_branch
        %387 = sbr.rel (%p385) target = $region60
      $region59: #{discriminator_forward.5} parent=55 // pred_region
        %p388 = scmp.lt.s32.totalorder %s22, 1
        %s389 = scalar_select %p388, %s22, 1
        %s390 = smul.addr %s389, 256
        %s391 = smul.addr %s390, 4
        %s392 = scalar_lea.vmem %s0, %s391
      $region60: #{discriminator_forward.5} parent=55 // pred_fallthru
        _
    $region56: #{discriminator_forward.5} parent=5 // pred_fallthru
      _
    %p393 = scmp.le.s32.totalorder 1, %s22
    %p394 = scmp.lt.s32.totalorder %s22, 3
    %p395 = pnand %p393, %p394
    %p396 = pneg %p395
    // Predicated region
    $region61: #{discriminator_forward.5} parent=5 // pred_check
      _
    $region62: #{discriminator_forward.5} parent=5 // pred_check_branch
      %398 = sbr.rel (%p395) target = $region64
    $region63: #{discriminator_forward.5} parent=5 // pred_region
      %s399 = ssub.s32 %s22, 1
      %p400 = scmp.lt.s32.totalorder %s27, 1
      %s401 = scalar_select %p400, %s27, 1
      %s402 = smul.addr %s401, 256
      %s403 = smul.addr %s402, 4
      %s404 = scalar_lea.vmem %s0, %s403
      %p405 = pneg %p48
      %p406 = pneg %p45
      %p407 = pneg %p69
      %p408 = pneg %p66
      %p409 = pneg %p90
      %p410 = pneg %p87
      %p411 = pneg %p111
      %p412 = pneg %p108
      %p413 = pneg %p132
      %p414 = pneg %p129
      %p415 = pneg %p153
      %p416 = pneg %p150
      %p417 = pneg %p174
      %p418 = pneg %p171
      %p419 = pneg %p195
      %p420 = pneg %p192
      %p421 = pneg %p216
      %p422 = pneg %p213
      %p423 = pneg %p237
      %p424 = pneg %p234
      %p425 = pneg %p258
      %p426 = pneg %p255
      %p427 = pneg %p284
      %p428 = pneg %p281
      %p429 = scmp.lt.s32.totalorder %s27, 1
      %s430 = scalar_select %p429, %s27, 1
      %s431 = smul.addr %s430, 4
      %s432 = smul.addr %s431, 4
      %s433 = scalar_lea.vmem %s11, %s432
      %p434 = pneg %p310
      %p435 = pneg %p307
      %p436 = scmp.lt.s32.totalorder %s27, 1
      %s437 = scalar_select %p436, %s27, 1
      %s438 = smul.addr %s437, 4
      %s439 = smul.addr %s438, 4
      %s440 = scalar_lea.vmem %s12, %s439
      %p441 = pneg %p336
      %p442 = pneg %p333
      %p443 = scmp.lt.s32.totalorder %s27, 1
      %s444 = scalar_select %p443, %s27, 1
      %s445 = scalar_lea.vmem %s13, %s444
      %p446 = scmp.lt.s32.totalorder %s27, 1
      %s447 = scalar_select %p446, %s27, 1
      %s448 = smul.addr %s447, 256
      %s449 = smul.addr %s448, 4
      %s450 = scalar_lea.vmem %s0, %s449
      %p451 = scmp.lt.s32.totalorder %s27, 1
      %s452 = scalar_select %p451, %s27, 1
      %s453 = smul.addr %s452, 4
      %s454 = smul.addr %s453, 4
      %s455 = scalar_lea.vmem %s11, %s454
      %p456 = scmp.lt.s32.totalorder %s27, 1
      %s457 = scalar_select %p456, %s27, 1
      %s458 = smul.addr %s457, 4
      %s459 = smul.addr %s458, 4
      %s460 = scalar_lea.vmem %s12, %s459
      %p461 = scmp.lt.s32.totalorder %s27, 1
      %s462 = scalar_select %p461, %s27, 1
      %s463 = scalar_lea.vmem %s13, %s462
      %v465 = vld [vmem:[%s2] sm:$0xff]
      %v466 = vld [vmem:[%s2 + $0x8] sm:$0xff]
      %v467 = vld [vmem:[%s2 + $0x10] sm:$0xff]
      %v468 = vld [vmem:[%s2 + $0x18] sm:$0xff]
      %v469 = vld [vmem:[%s2 + $0x20] sm:$0xff]
      %v470 = vld [vmem:[%s2 + $0x28] sm:$0xff]
      %v471 = vld [vmem:[%s2 + $0x30] sm:$0xff]
      %v472 = vld [vmem:[%s2 + $0x38] sm:$0xff]
      %v473 = vld [vmem:[%s450] sm:$0xff]
      %v474 = vld [vmem:[%s450 + $0x8] sm:$0xff]
      %v475 = vld [vmem:[%s450 + $0x10] sm:$0xff]
      %v476 = vld [vmem:[%s450 + $0x18] sm:$0xff]
      %v477 = vld [vmem:[%s450 + $0x20] sm:$0xff]
      %v478 = vld [vmem:[%s450 + $0x28] sm:$0xff]
      %v479 = vld [vmem:[%s450 + $0x30] sm:$0xff]
      %v480 = vld [vmem:[%s450 + $0x38] sm:$0xff]
      %v481 = vld [vmem:[%s450 + $0x40] sm:$0xff]
      %v482 = vld [vmem:[%s450 + $0x48] sm:$0xff]
      %v483 = vld [vmem:[%s450 + $0x50] sm:$0xff]
      %v484 = vld [vmem:[%s450 + $0x58] sm:$0xff]
      %v485 = vld [vmem:[%s450 + $0x60] sm:$0xff]
      %v486 = vld [vmem:[%s450 + $0x68] sm:$0xff]
      %v487 = vld [vmem:[%s450 + $0x70] sm:$0xff]
      %v488 = vld [vmem:[%s450 + $0x78] sm:$0xff]
      %v489 = vld [vmem:[%s450 + $0x80] sm:$0xff]
      %v490 = vld [vmem:[%s450 + $0x88] sm:$0xff]
      %v491 = vld [vmem:[%s450 + $0x90] sm:$0xff]
      %v492 = vld [vmem:[%s450 + $0x98] sm:$0xff]
      %v493 = vld [vmem:[%s450 + $0xa0] sm:$0xff]
      %v494 = vld [vmem:[%s450 + $0xa8] sm:$0xff]
      %v495 = vld [vmem:[%s450 + $0xb0] sm:$0xff]
      %v496 = vld [vmem:[%s450 + $0xb8] sm:$0xff]
      %v497 = vld [vmem:[%s450 + $0xc0] sm:$0xff]
      %v498 = vld [vmem:[%s450 + $0xc8] sm:$0xff]
      %v499 = vld [vmem:[%s450 + $0xd0] sm:$0xff]
      %v500 = vld [vmem:[%s450 + $0xd8] sm:$0xff]
      %v501 = vld [vmem:[%s450 + $0xe0] sm:$0xff]
      %v502 = vld [vmem:[%s450 + $0xe8] sm:$0xff]
      %v503 = vld [vmem:[%s450 + $0xf0] sm:$0xff]
      %v504 = vld [vmem:[%s450 + $0xf8] sm:$0xff]
      %v505 = vld [vmem:[%s450 + $0x100] sm:$0xff]
      %v506 = vld [vmem:[%s450 + $0x108] sm:$0xff]
      %v507 = vld [vmem:[%s450 + $0x110] sm:$0xff]
      %v508 = vld [vmem:[%s450 + $0x118] sm:$0xff]
      %v509 = vld [vmem:[%s450 + $0x120] sm:$0xff]
      %v510 = vld [vmem:[%s450 + $0x128] sm:$0xff]
      %v511 = vld [vmem:[%s450 + $0x130] sm:$0xff]
      %v512 = vld [vmem:[%s450 + $0x138] sm:$0xff]
      %v513 = vld [vmem:[%s450 + $0x140] sm:$0xff]
      %v514 = vld [vmem:[%s450 + $0x148] sm:$0xff]
      %v515 = vld [vmem:[%s450 + $0x150] sm:$0xff]
      %v516 = vld [vmem:[%s450 + $0x158] sm:$0xff]
      %v517 = vld [vmem:[%s450 + $0x160] sm:$0xff]
      %v518 = vld [vmem:[%s450 + $0x168] sm:$0xff]
      %v519 = vld [vmem:[%s450 + $0x170] sm:$0xff]
      %v520 = vld [vmem:[%s450 + $0x178] sm:$0xff]
      %v521 = vld [vmem:[%s450 + $0x180] sm:$0xff]
      %v522 = vld [vmem:[%s450 + $0x188] sm:$0xff]
      %v523 = vld [vmem:[%s450 + $0x190] sm:$0xff]
      %v524 = vld [vmem:[%s450 + $0x198] sm:$0xff]
      %v525 = vld [vmem:[%s450 + $0x1a0] sm:$0xff]
      %v526 = vld [vmem:[%s450 + $0x1a8] sm:$0xff]
      %v527 = vld [vmem:[%s450 + $0x1b0] sm:$0xff]
      %v528 = vld [vmem:[%s450 + $0x1b8] sm:$0xff]
      %v529 = vld [vmem:[%s450 + $0x1c0] sm:$0xff]
      %v530 = vld [vmem:[%s450 + $0x1c8] sm:$0xff]
      %v531 = vld [vmem:[%s450 + $0x1d0] sm:$0xff]
      %v532 = vld [vmem:[%s450 + $0x1d8] sm:$0xff]
      %v533 = vld [vmem:[%s450 + $0x1e0] sm:$0xff]
      %v534 = vld [vmem:[%s450 + $0x1e8] sm:$0xff]
      %v535 = vld [vmem:[%s450 + $0x1f0] sm:$0xff]
      %v536 = vld [vmem:[%s450 + $0x1f8] sm:$0xff]
      %v537 = vld [vmem:[%s450 + $0x200] sm:$0xff]
      %v538 = vld [vmem:[%s450 + $0x208] sm:$0xff]
      %v539 = vld [vmem:[%s450 + $0x210] sm:$0xff]
      %v540 = vld [vmem:[%s450 + $0x218] sm:$0xff]
      %v541 = vld [vmem:[%s450 + $0x220] sm:$0xff]
      %v542 = vld [vmem:[%s450 + $0x228] sm:$0xff]
      %v543 = vld [vmem:[%s450 + $0x230] sm:$0xff]
      %v544 = vld [vmem:[%s450 + $0x238] sm:$0xff]
      %v545 = vld [vmem:[%s450 + $0x240] sm:$0xff]
      %v546 = vld [vmem:[%s450 + $0x248] sm:$0xff]
      %v547 = vld [vmem:[%s450 + $0x250] sm:$0xff]
      %v548 = vld [vmem:[%s450 + $0x258] sm:$0xff]
      %v549 = vld [vmem:[%s450 + $0x260] sm:$0xff]
      %v550 = vld [vmem:[%s450 + $0x268] sm:$0xff]
      %v551 = vld [vmem:[%s450 + $0x270] sm:$0xff]
      %v552 = vld [vmem:[%s450 + $0x278] sm:$0xff]
      %v553 = vld [vmem:[%s450 + $0x280] sm:$0xff]
      %v554 = vld [vmem:[%s450 + $0x288] sm:$0xff]
      %v555 = vld [vmem:[%s450 + $0x290] sm:$0xff]
      %v556 = vld [vmem:[%s450 + $0x298] sm:$0xff]
      %v557 = vld [vmem:[%s450 + $0x2a0] sm:$0xff]
      %v558 = vld [vmem:[%s450 + $0x2a8] sm:$0xff]
      %v559 = vld [vmem:[%s450 + $0x2b0] sm:$0xff]
      %v560 = vld [vmem:[%s450 + $0x2b8] sm:$0xff]
      %v561 = vld [vmem:[%s450 + $0x2c0] sm:$0xff]
      %v562 = vld [vmem:[%s450 + $0x2c8] sm:$0xff]
      %v563 = vld [vmem:[%s450 + $0x2d0] sm:$0xff]
      %v564 = vld [vmem:[%s450 + $0x2d8] sm:$0xff]
      %v565 = vld [vmem:[%s450 + $0x2e0] sm:$0xff]
      %v566 = vld [vmem:[%s450 + $0x2e8] sm:$0xff]
      %v567 = vld [vmem:[%s450 + $0x2f0] sm:$0xff]
      %v568 = vld [vmem:[%s450 + $0x2f8] sm:$0xff]
      %v569 = vld [vmem:[%s450 + $0x300] sm:$0xff]
      %v570 = vld [vmem:[%s450 + $0x308] sm:$0xff]
      %v571 = vld [vmem:[%s450 + $0x310] sm:$0xff]
      %v572 = vld [vmem:[%s450 + $0x318] sm:$0xff]
      %v573 = vld [vmem:[%s450 + $0x320] sm:$0xff]
      %v574 = vld [vmem:[%s450 + $0x328] sm:$0xff]
      %v575 = vld [vmem:[%s450 + $0x330] sm:$0xff]
      %v576 = vld [vmem:[%s450 + $0x338] sm:$0xff]
      %v577 = vld [vmem:[%s450 + $0x340] sm:$0xff]
      %v578 = vld [vmem:[%s450 + $0x348] sm:$0xff]
      %v579 = vld [vmem:[%s450 + $0x350] sm:$0xff]
      %v580 = vld [vmem:[%s450 + $0x358] sm:$0xff]
      %v581 = vld [vmem:[%s450 + $0x360] sm:$0xff]
      %v582 = vld [vmem:[%s450 + $0x368] sm:$0xff]
      %v583 = vld [vmem:[%s450 + $0x370] sm:$0xff]
      %v584 = vld [vmem:[%s450 + $0x378] sm:$0xff]
      %v585 = vld [vmem:[%s450 + $0x380] sm:$0xff]
      %v586 = vld [vmem:[%s450 + $0x388] sm:$0xff]
      %v587 = vld [vmem:[%s450 + $0x390] sm:$0xff]
      %v588 = vld [vmem:[%s450 + $0x398] sm:$0xff]
      %v589 = vld [vmem:[%s450 + $0x3a0] sm:$0xff]
      %v590 = vld [vmem:[%s450 + $0x3a8] sm:$0xff]
      %v591 = vld [vmem:[%s450 + $0x3b0] sm:$0xff]
      %v592 = vld [vmem:[%s450 + $0x3b8] sm:$0xff]
      %v593 = vld [vmem:[%s450 + $0x3c0] sm:$0xff]
      %v594 = vld [vmem:[%s450 + $0x3c8] sm:$0xff]
      %v595 = vld [vmem:[%s450 + $0x3d0] sm:$0xff]
      %v596 = vld [vmem:[%s450 + $0x3d8] sm:$0xff]
      %v597 = vld [vmem:[%s450 + $0x3e0] sm:$0xff]
      %v598 = vld [vmem:[%s450 + $0x3e8] sm:$0xff]
      %v599 = vld [vmem:[%s450 + $0x3f0] sm:$0xff]
      %v600 = vld [vmem:[%s450 + $0x3f8] sm:$0xff]
      %v609 = vunpack.c.l.b16 %v465
      %v610 = vunpack.c.h.b16 %v465
      %v611 = vunpack.c.l.b16 %v466
      %v612 = vunpack.c.h.b16 %v466
      %v613 = vunpack.c.l.b16 %v467
      %v614 = vunpack.c.h.b16 %v467
      %v615 = vunpack.c.l.b16 %v468
      %v616 = vunpack.c.h.b16 %v468
      %v617 = vunpack.c.l.b16 %v469
      %v618 = vunpack.c.h.b16 %v469
      %v619 = vunpack.c.l.b16 %v470
      %v620 = vunpack.c.h.b16 %v470
      %v621 = vunpack.c.l.b16 %v471
      %v622 = vunpack.c.h.b16 %v471
      %v623 = vunpack.c.l.b16 %v472
      %v624 = vunpack.c.h.b16 %v472
      %v625 = vpack.c.b16 %v613, %v609
      %v626 = vpack.c.b16 %v614, %v610
      %v627 = vpack.c.b16 %v615, %v611
      %v628 = vpack.c.b16 %v616, %v612
      %v629 = vpack.c.b16 %v621, %v617
      %v630 = vpack.c.b16 %v622, %v618
      %v631 = vpack.c.b16 %v623, %v619
      %v632 = vpack.c.b16 %v624, %v620
      %v769 = vunpack.c.l.b16 %v473
      %v770 = vunpack.c.h.b16 %v473
      %v771 = vunpack.c.l.b16 %v474
      %v772 = vunpack.c.h.b16 %v474
      %v773 = vunpack.c.l.b16 %v475
      %v774 = vunpack.c.h.b16 %v475
      %v775 = vunpack.c.l.b16 %v476
      %v776 = vunpack.c.h.b16 %v476
      %v777 = vunpack.c.l.b16 %v477
      %v778 = vunpack.c.h.b16 %v477
      %v779 = vunpack.c.l.b16 %v478
      %v780 = vunpack.c.h.b16 %v478
      %v781 = vunpack.c.l.b16 %v479
      %v782 = vunpack.c.h.b16 %v479
      %v783 = vunpack.c.l.b16 %v480
      %v784 = vunpack.c.h.b16 %v480
      %v785 = vunpack.c.l.b16 %v481
      %v786 = vunpack.c.h.b16 %v481
      %v787 = vunpack.c.l.b16 %v482
      %v788 = vunpack.c.h.b16 %v482
      %v789 = vunpack.c.l.b16 %v483
      %v790 = vunpack.c.h.b16 %v483
      %v791 = vunpack.c.l.b16 %v484
      %v792 = vunpack.c.h.b16 %v484
      %v793 = vunpack.c.l.b16 %v485
      %v794 = vunpack.c.h.b16 %v485
      %v795 = vunpack.c.l.b16 %v486
      %v796 = vunpack.c.h.b16 %v486
      %v797 = vunpack.c.l.b16 %v487
      %v798 = vunpack.c.h.b16 %v487
      %v799 = vunpack.c.l.b16 %v488
      %v800 = vunpack.c.h.b16 %v488
      %v801 = vunpack.c.l.b16 %v489
      %v802 = vunpack.c.h.b16 %v489
      %v803 = vunpack.c.l.b16 %v490
      %v804 = vunpack.c.h.b16 %v490
      %v805 = vunpack.c.l.b16 %v491
      %v806 = vunpack.c.h.b16 %v491
      %v807 = vunpack.c.l.b16 %v492
      %v808 = vunpack.c.h.b16 %v492
      %v809 = vunpack.c.l.b16 %v493
      %v810 = vunpack.c.h.b16 %v493
      %v811 = vunpack.c.l.b16 %v494
      %v812 = vunpack.c.h.b16 %v494
      %v813 = vunpack.c.l.b16 %v495
      %v814 = vunpack.c.h.b16 %v495
      %v815 = vunpack.c.l.b16 %v496
      %v816 = vunpack.c.h.b16 %v496
      %v817 = vunpack.c.l.b16 %v497
      %v818 = vunpack.c.h.b16 %v497
      %v819 = vunpack.c.l.b16 %v498
      %v820 = vunpack.c.h.b16 %v498
      %v821 = vunpack.c.l.b16 %v499
      %v822 = vunpack.c.h.b16 %v499
      %v823 = vunpack.c.l.b16 %v500
      %v824 = vunpack.c.h.b16 %v500
      %v825 = vunpack.c.l.b16 %v501
      %v826 = vunpack.c.h.b16 %v501
      %v827 = vunpack.c.l.b16 %v502
      %v828 = vunpack.c.h.b16 %v502
      %v829 = vunpack.c.l.b16 %v503
      %v830 = vunpack.c.h.b16 %v503
      %v831 = vunpack.c.l.b16 %v504
      %v832 = vunpack.c.h.b16 %v504
      %v833 = vunpack.c.l.b16 %v505
      %v834 = vunpack.c.h.b16 %v505
      %v835 = vunpack.c.l.b16 %v506
      %v836 = vunpack.c.h.b16 %v506
      %v837 = vunpack.c.l.b16 %v507
      %v838 = vunpack.c.h.b16 %v507
      %v839 = vunpack.c.l.b16 %v508
      %v840 = vunpack.c.h.b16 %v508
      %v841 = vunpack.c.l.b16 %v509
      %v842 = vunpack.c.h.b16 %v509
      %v843 = vunpack.c.l.b16 %v510
      %v844 = vunpack.c.h.b16 %v510
      %v845 = vunpack.c.l.b16 %v511
      %v846 = vunpack.c.h.b16 %v511
      %v847 = vunpack.c.l.b16 %v512
      %v848 = vunpack.c.h.b16 %v512
      %v849 = vunpack.c.l.b16 %v513
      %v850 = vunpack.c.h.b16 %v513
      %v851 = vunpack.c.l.b16 %v514
      %v852 = vunpack.c.h.b16 %v514
      %v853 = vunpack.c.l.b16 %v515
      %v854 = vunpack.c.h.b16 %v515
      %v855 = vunpack.c.l.b16 %v516
      %v856 = vunpack.c.h.b16 %v516
      %v857 = vunpack.c.l.b16 %v517
      %v858 = vunpack.c.h.b16 %v517
      %v859 = vunpack.c.l.b16 %v518
      %v860 = vunpack.c.h.b16 %v518
      %v861 = vunpack.c.l.b16 %v519
      %v862 = vunpack.c.h.b16 %v519
      %v863 = vunpack.c.l.b16 %v520
      %v864 = vunpack.c.h.b16 %v520
      %v865 = vunpack.c.l.b16 %v521
      %v866 = vunpack.c.h.b16 %v521
      %v867 = vunpack.c.l.b16 %v522
      %v868 = vunpack.c.h.b16 %v522
      %v869 = vunpack.c.l.b16 %v523
      %v870 = vunpack.c.h.b16 %v523
      %v871 = vunpack.c.l.b16 %v524
      %v872 = vunpack.c.h.b16 %v524
      %v873 = vunpack.c.l.b16 %v525
      %v874 = vunpack.c.h.b16 %v525
      %v875 = vunpack.c.l.b16 %v526
      %v876 = vunpack.c.h.b16 %v526
      %v877 = vunpack.c.l.b16 %v527
      %v878 = vunpack.c.h.b16 %v527
      %v879 = vunpack.c.l.b16 %v528
      %v880 = vunpack.c.h.b16 %v528
      %v881 = vunpack.c.l.b16 %v529
      %v882 = vunpack.c.h.b16 %v529
      %v883 = vunpack.c.l.b16 %v530
      %v884 = vunpack.c.h.b16 %v530
      %v885 = vunpack.c.l.b16 %v531
      %v886 = vunpack.c.h.b16 %v531
      %v887 = vunpack.c.l.b16 %v532
      %v888 = vunpack.c.h.b16 %v532
      %v889 = vunpack.c.l.b16 %v533
      %v890 = vunpack.c.h.b16 %v533
      %v891 = vunpack.c.l.b16 %v534
      %v892 = vunpack.c.h.b16 %v534
      %v893 = vunpack.c.l.b16 %v535
      %v894 = vunpack.c.h.b16 %v535
      %v895 = vunpack.c.l.b16 %v536
      %v896 = vunpack.c.h.b16 %v536
      %v897 = vunpack.c.l.b16 %v537
      %v898 = vunpack.c.h.b16 %v537
      %v899 = vunpack.c.l.b16 %v538
      %v900 = vunpack.c.h.b16 %v538
      %v901 = vunpack.c.l.b16 %v539
      %v902 = vunpack.c.h.b16 %v539
      %v903 = vunpack.c.l.b16 %v540
      %v904 = vunpack.c.h.b16 %v540
      %v905 = vunpack.c.l.b16 %v541
      %v906 = vunpack.c.h.b16 %v541
      %v907 = vunpack.c.l.b16 %v542
      %v908 = vunpack.c.h.b16 %v542
      %v909 = vunpack.c.l.b16 %v543
      %v910 = vunpack.c.h.b16 %v543
      %v911 = vunpack.c.l.b16 %v544
      %v912 = vunpack.c.h.b16 %v544
      %v913 = vunpack.c.l.b16 %v545
      %v914 = vunpack.c.h.b16 %v545
      %v915 = vunpack.c.l.b16 %v546
      %v916 = vunpack.c.h.b16 %v546
      %v917 = vunpack.c.l.b16 %v547
      %v918 = vunpack.c.h.b16 %v547
      %v919 = vunpack.c.l.b16 %v548
      %v920 = vunpack.c.h.b16 %v548
      %v921 = vunpack.c.l.b16 %v549
      %v922 = vunpack.c.h.b16 %v549
      %v923 = vunpack.c.l.b16 %v550
      %v924 = vunpack.c.h.b16 %v550
      %v925 = vunpack.c.l.b16 %v551
      %v926 = vunpack.c.h.b16 %v551
      %v927 = vunpack.c.l.b16 %v552
      %v928 = vunpack.c.h.b16 %v552
      %v929 = vunpack.c.l.b16 %v553
      %v930 = vunpack.c.h.b16 %v553
      %v931 = vunpack.c.l.b16 %v554
      %v932 = vunpack.c.h.b16 %v554
      %v933 = vunpack.c.l.b16 %v555
      %v934 = vunpack.c.h.b16 %v555
      %v935 = vunpack.c.l.b16 %v556
      %v936 = vunpack.c.h.b16 %v556
      %v937 = vunpack.c.l.b16 %v557
      %v938 = vunpack.c.h.b16 %v557
      %v939 = vunpack.c.l.b16 %v558
      %v940 = vunpack.c.h.b16 %v558
      %v941 = vunpack.c.l.b16 %v559
      %v942 = vunpack.c.h.b16 %v559
      %v943 = vunpack.c.l.b16 %v560
      %v944 = vunpack.c.h.b16 %v560
      %v945 = vunpack.c.l.b16 %v561
      %v946 = vunpack.c.h.b16 %v561
      %v947 = vunpack.c.l.b16 %v562
      %v948 = vunpack.c.h.b16 %v562
      %v949 = vunpack.c.l.b16 %v563
      %v950 = vunpack.c.h.b16 %v563
      %v951 = vunpack.c.l.b16 %v564
      %v952 = vunpack.c.h.b16 %v564
      %v953 = vunpack.c.l.b16 %v565
      %v954 = vunpack.c.h.b16 %v565
      %v955 = vunpack.c.l.b16 %v566
      %v956 = vunpack.c.h.b16 %v566
      %v957 = vunpack.c.l.b16 %v567
      %v958 = vunpack.c.h.b16 %v567
      %v959 = vunpack.c.l.b16 %v568
      %v960 = vunpack.c.h.b16 %v568
      %v961 = vunpack.c.l.b16 %v569
      %v962 = vunpack.c.h.b16 %v569
      %v963 = vunpack.c.l.b16 %v570
      %v964 = vunpack.c.h.b16 %v570
      %v965 = vunpack.c.l.b16 %v571
      %v966 = vunpack.c.h.b16 %v571
      %v967 = vunpack.c.l.b16 %v572
      %v968 = vunpack.c.h.b16 %v572
      %v969 = vunpack.c.l.b16 %v573
      %v970 = vunpack.c.h.b16 %v573
      %v971 = vunpack.c.l.b16 %v574
      %v972 = vunpack.c.h.b16 %v574
      %v973 = vunpack.c.l.b16 %v575
      %v974 = vunpack.c.h.b16 %v575
      %v975 = vunpack.c.l.b16 %v576
      %v976 = vunpack.c.h.b16 %v576
      %v977 = vunpack.c.l.b16 %v577
      %v978 = vunpack.c.h.b16 %v577
      %v979 = vunpack.c.l.b16 %v578
      %v980 = vunpack.c.h.b16 %v578
      %v981 = vunpack.c.l.b16 %v579
      %v982 = vunpack.c.h.b16 %v579
      %v983 = vunpack.c.l.b16 %v580
      %v984 = vunpack.c.h.b16 %v580
      %v985 = vunpack.c.l.b16 %v581
      %v986 = vunpack.c.h.b16 %v581
      %v987 = vunpack.c.l.b16 %v582
      %v988 = vunpack.c.h.b16 %v582
      %v989 = vunpack.c.l.b16 %v583
      %v990 = vunpack.c.h.b16 %v583
      %v991 = vunpack.c.l.b16 %v584
      %v992 = vunpack.c.h.b16 %v584
      %v993 = vunpack.c.l.b16 %v585
      %v994 = vunpack.c.h.b16 %v585
      %v995 = vunpack.c.l.b16 %v586
      %v996 = vunpack.c.h.b16 %v586
      %v997 = vunpack.c.l.b16 %v587
      %v998 = vunpack.c.h.b16 %v587
      %v999 = vunpack.c.l.b16 %v588
      %v1000 = vunpack.c.h.b16 %v588
      %v1001 = vunpack.c.l.b16 %v589
      %v1002 = vunpack.c.h.b16 %v589
      %v1003 = vunpack.c.l.b16 %v590
      %v1004 = vunpack.c.h.b16 %v590
      %v1005 = vunpack.c.l.b16 %v591
      %v1006 = vunpack.c.h.b16 %v591
      %v1007 = vunpack.c.l.b16 %v592
      %v1008 = vunpack.c.h.b16 %v592
      %v1009 = vunpack.c.l.b16 %v593
      %v1010 = vunpack.c.h.b16 %v593
      %v1011 = vunpack.c.l.b16 %v594
      %v1012 = vunpack.c.h.b16 %v594
      %v1013 = vunpack.c.l.b16 %v595
      %v1014 = vunpack.c.h.b16 %v595
      %v1015 = vunpack.c.l.b16 %v596
      %v1016 = vunpack.c.h.b16 %v596
      %v1017 = vunpack.c.l.b16 %v597
      %v1018 = vunpack.c.h.b16 %v597
      %v1019 = vunpack.c.l.b16 %v598
      %v1020 = vunpack.c.h.b16 %v598
      %v1021 = vunpack.c.l.b16 %v599
      %v1022 = vunpack.c.h.b16 %v599
      %v1023 = vunpack.c.l.b16 %v600
      %v1024 = vunpack.c.h.b16 %v600
      %v1025 = vpack.c.b16 %v773, %v769
      %v1026 = vpack.c.b16 %v774, %v770
      %v1027 = vpack.c.b16 %v775, %v771
      %v1028 = vpack.c.b16 %v776, %v772
      %v1029 = vpack.c.b16 %v781, %v777
      %v1030 = vpack.c.b16 %v782, %v778
      %v1031 = vpack.c.b16 %v783, %v779
      %v1032 = vpack.c.b16 %v784, %v780
      %v1033 = vpack.c.b16 %v789, %v785
      %v1034 = vpack.c.b16 %v790, %v786
      %v1035 = vpack.c.b16 %v791, %v787
      %v1036 = vpack.c.b16 %v792, %v788
      %v1037 = vpack.c.b16 %v797, %v793
      %v1038 = vpack.c.b16 %v798, %v794
      %v1039 = vpack.c.b16 %v799, %v795
      %v1040 = vpack.c.b16 %v800, %v796
      %v1041 = vpack.c.b16 %v805, %v801
      %v1042 = vpack.c.b16 %v806, %v802
      %v1043 = vpack.c.b16 %v807, %v803
      %v1044 = vpack.c.b16 %v808, %v804
      %v1045 = vpack.c.b16 %v813, %v809
      %v1046 = vpack.c.b16 %v814, %v810
      %v1047 = vpack.c.b16 %v815, %v811
      %v1048 = vpack.c.b16 %v816, %v812
      %v1049 = vpack.c.b16 %v821, %v817
      %v1050 = vpack.c.b16 %v822, %v818
      %v1051 = vpack.c.b16 %v823, %v819
      %v1052 = vpack.c.b16 %v824, %v820
      %v1053 = vpack.c.b16 %v829, %v825
      %v1054 = vpack.c.b16 %v830, %v826
      %v1055 = vpack.c.b16 %v831, %v827
      %v1056 = vpack.c.b16 %v832, %v828
      %v1057 = vpack.c.b16 %v837, %v833
      %v1058 = vpack.c.b16 %v838, %v834
      %v1059 = vpack.c.b16 %v839, %v835
      %v1060 = vpack.c.b16 %v840, %v836
      %v1061 = vpack.c.b16 %v845, %v841
      %v1062 = vpack.c.b16 %v846, %v842
      %v1063 = vpack.c.b16 %v847, %v843
      %v1064 = vpack.c.b16 %v848, %v844
      %v1065 = vpack.c.b16 %v853, %v849
      %v1066 = vpack.c.b16 %v854, %v850
      %v1067 = vpack.c.b16 %v855, %v851
      %v1068 = vpack.c.b16 %v856, %v852
      %v1069 = vpack.c.b16 %v861, %v857
      %v1070 = vpack.c.b16 %v862, %v858
      %v1071 = vpack.c.b16 %v863, %v859
      %v1072 = vpack.c.b16 %v864, %v860
      %v1073 = vpack.c.b16 %v869, %v865
      %v1074 = vpack.c.b16 %v870, %v866
      %v1075 = vpack.c.b16 %v871, %v867
      %v1076 = vpack.c.b16 %v872, %v868
      %v1077 = vpack.c.b16 %v877, %v873
      %v1078 = vpack.c.b16 %v878, %v874
      %v1079 = vpack.c.b16 %v879, %v875
      %v1080 = vpack.c.b16 %v880, %v876
      %v1081 = vpack.c.b16 %v885, %v881
      %v1082 = vpack.c.b16 %v886, %v882
      %v1083 = vpack.c.b16 %v887, %v883
      %v1084 = vpack.c.b16 %v888, %v884
      %v1085 = vpack.c.b16 %v893, %v889
      %v1086 = vpack.c.b16 %v894, %v890
      %v1087 = vpack.c.b16 %v895, %v891
      %v1088 = vpack.c.b16 %v896, %v892
      %v1089 = vpack.c.b16 %v901, %v897
      %v1090 = vpack.c.b16 %v902, %v898
      %v1091 = vpack.c.b16 %v903, %v899
      %v1092 = vpack.c.b16 %v904, %v900
      %v1093 = vpack.c.b16 %v909, %v905
      %v1094 = vpack.c.b16 %v910, %v906
      %v1095 = vpack.c.b16 %v911, %v907
      %v1096 = vpack.c.b16 %v912, %v908
      %v1097 = vpack.c.b16 %v917, %v913
      %v1098 = vpack.c.b16 %v918, %v914
      %v1099 = vpack.c.b16 %v919, %v915
      %v1100 = vpack.c.b16 %v920, %v916
      %v1101 = vpack.c.b16 %v925, %v921
      %v1102 = vpack.c.b16 %v926, %v922
      %v1103 = vpack.c.b16 %v927, %v923
      %v1104 = vpack.c.b16 %v928, %v924
      %v1105 = vpack.c.b16 %v933, %v929
      %v1106 = vpack.c.b16 %v934, %v930
      %v1107 = vpack.c.b16 %v935, %v931
      %v1108 = vpack.c.b16 %v936, %v932
      %v1109 = vpack.c.b16 %v941, %v937
      %v1110 = vpack.c.b16 %v942, %v938
      %v1111 = vpack.c.b16 %v943, %v939
      %v1112 = vpack.c.b16 %v944, %v940
      %v1113 = vpack.c.b16 %v949, %v945
      %v1114 = vpack.c.b16 %v950, %v946
      %v1115 = vpack.c.b16 %v951, %v947
      %v1116 = vpack.c.b16 %v952, %v948
      %v1117 = vpack.c.b16 %v957, %v953
      %v1118 = vpack.c.b16 %v958, %v954
      %v1119 = vpack.c.b16 %v959, %v955
      %v1120 = vpack.c.b16 %v960, %v956
      %v1121 = vpack.c.b16 %v965, %v961
      %v1122 = vpack.c.b16 %v966, %v962
      %v1123 = vpack.c.b16 %v967, %v963
      %v1124 = vpack.c.b16 %v968, %v964
      %v1125 = vpack.c.b16 %v973, %v969
      %v1126 = vpack.c.b16 %v974, %v970
      %v1127 = vpack.c.b16 %v975, %v971
      %v1128 = vpack.c.b16 %v976, %v972
      %v1129 = vpack.c.b16 %v981, %v977
      %v1130 = vpack.c.b16 %v982, %v978
      %v1131 = vpack.c.b16 %v983, %v979
      %v1132 = vpack.c.b16 %v984, %v980
      %v1133 = vpack.c.b16 %v989, %v985
      %v1134 = vpack.c.b16 %v990, %v986
      %v1135 = vpack.c.b16 %v991, %v987
      %v1136 = vpack.c.b16 %v992, %v988
      %v1137 = vpack.c.b16 %v997, %v993
      %v1138 = vpack.c.b16 %v998, %v994
      %v1139 = vpack.c.b16 %v999, %v995
      %v1140 = vpack.c.b16 %v1000, %v996
      %v1141 = vpack.c.b16 %v1005, %v1001
      %v1142 = vpack.c.b16 %v1006, %v1002
      %v1143 = vpack.c.b16 %v1007, %v1003
      %v1144 = vpack.c.b16 %v1008, %v1004
      %v1145 = vpack.c.b16 %v1013, %v1009
      %v1146 = vpack.c.b16 %v1014, %v1010
      %v1147 = vpack.c.b16 %v1015, %v1011
      %v1148 = vpack.c.b16 %v1016, %v1012
      %v1149 = vpack.c.b16 %v1021, %v1017
      %v1150 = vpack.c.b16 %v1022, %v1018
      %v1151 = vpack.c.b16 %v1023, %v1019
      %v1152 = vpack.c.b16 %v1024, %v1020
      %1281 = vmatprep.subr.bf16.mxu0 %v1054
      %1282 = vmatpush1.bf16.msra.mxu0 %v1053
      %1283 = vmatprep.subr.bf16.mxu0 %v1050
      %1284 = vmatpush1.bf16.msra.mxu0 %v1049
      %1285 = vmatprep.subr.bf16.mxu0 %v1046
      %1286 = vmatpush1.bf16.msra.mxu0 %v1045
      %1287 = vmatprep.subr.bf16.mxu0 %v1042
      %1288 = vmatpush1.bf16.msra.mxu0 %v1041
      %1289 = vmatprep.subr.bf16.mxu0 %v1038
      %1290 = vmatpush1.bf16.msra.mxu0 %v1037
      %1291 = vmatprep.subr.bf16.mxu0 %v1034
      %1292 = vmatpush1.bf16.msra.mxu0 %v1033
      %1293 = vmatprep.subr.bf16.mxu0 %v1030
      %1294 = vmatpush1.bf16.msra.mxu0 %v1029
      %1295 = vmatprep.subr.bf16.mxu0 %v1026
      %1296 = vmatpush1.bf16.msra.mxu0 %v1025
      %1297 = vmatprep.subr.bf16.mxu0 %v1086
      %1298 = vmatpush2.bf16.msra.mxu0 %v1085
      %1299 = vmatprep.subr.bf16.mxu0 %v1082
      %1300 = vmatpush2.bf16.msra.mxu0 %v1081
      %1301 = vmatprep.subr.bf16.mxu0 %v1078
      %1302 = vmatpush2.bf16.msra.mxu0 %v1077
      %1303 = vmatprep.subr.bf16.mxu0 %v1074
      %1304 = vmatpush2.bf16.msra.mxu0 %v1073
      %1305 = vmatprep.subr.bf16.mxu0 %v1070
      %1306 = vmatpush2.bf16.msra.mxu0 %v1069
      %1307 = vmatprep.subr.bf16.mxu0 %v1066
      %1308 = vmatpush2.bf16.msra.mxu0 %v1065
      %1309 = vmatprep.subr.bf16.mxu0 %v1062
      %1310 = vmatpush2.bf16.msra.mxu0 %v1061
      %1311 = vmatprep.subr.bf16.mxu0 %v1058
      %1312 = vmatpush2.bf16.msra.mxu0 %v1057
      %1313 = vmatprep.mubr.bf16.mxu0 %v626
      %1314 = vmatmul.mubr.bf16.gmra.mxu0 %v625
      %v1315 = vpop.f32.mrf.mxu0
      %v1316 = vadd.f32 0.0, %v1315
      %v1317 = vpop.f32.mrf.mxu0
      %v1318 = vadd.f32 0.0, %v1317
      %v1319 = vpop.f32.mrf.mxu0
      %v1320 = vadd.f32 0.0, %v1319
      %v1321 = vpop.f32.mrf.mxu0
      %v1322 = vadd.f32 0.0, %v1321
      %1323 = vmatprep.mubr.bf16.mxu0 %v630
      %1324 = vmatmul.mubr.bf16.gmra.mxu0 %v629
      %v1325 = vpop.f32.mrf.mxu0
      %v1326 = vadd.f32 0.0, %v1325
      %v1327 = vpop.f32.mrf.mxu0
      %v1328 = vadd.f32 0.0, %v1327
      %v1329 = vpop.f32.mrf.mxu0
      %v1330 = vadd.f32 0.0, %v1329
      %v1331 = vpop.f32.mrf.mxu0
      %v1332 = vadd.f32 0.0, %v1331
      %1333 = vdwg.mxu0
      %1334 = vmatprep.subr.bf16.mxu0 %v1118
      %1335 = vmatpush1.bf16.msra.mxu0 %v1117
      %1336 = vmatprep.subr.bf16.mxu0 %v1114
      %1337 = vmatpush1.bf16.msra.mxu0 %v1113
      %1338 = vmatprep.subr.bf16.mxu0 %v1110
      %1339 = vmatpush1.bf16.msra.mxu0 %v1109
      %1340 = vmatprep.subr.bf16.mxu0 %v1106
      %1341 = vmatpush1.bf16.msra.mxu0 %v1105
      %1342 = vmatprep.subr.bf16.mxu0 %v1102
      %1343 = vmatpush1.bf16.msra.mxu0 %v1101
      %1344 = vmatprep.subr.bf16.mxu0 %v1098
      %1345 = vmatpush1.bf16.msra.mxu0 %v1097
      %1346 = vmatprep.subr.bf16.mxu0 %v1094
      %1347 = vmatpush1.bf16.msra.mxu0 %v1093
      %1348 = vmatprep.subr.bf16.mxu0 %v1090
      %1349 = vmatpush1.bf16.msra.mxu0 %v1089
      %1350 = vmatprep.subr.bf16.mxu0 %v1150
      %1351 = vmatpush2.bf16.msra.mxu0 %v1149
      %1352 = vmatprep.subr.bf16.mxu0 %v1146
      %1353 = vmatpush2.bf16.msra.mxu0 %v1145
      %1354 = vmatprep.subr.bf16.mxu0 %v1142
      %1355 = vmatpush2.bf16.msra.mxu0 %v1141
      %1356 = vmatprep.subr.bf16.mxu0 %v1138
      %1357 = vmatpush2.bf16.msra.mxu0 %v1137
      %1358 = vmatprep.subr.bf16.mxu0 %v1134
      %1359 = vmatpush2.bf16.msra.mxu0 %v1133
      %1360 = vmatprep.subr.bf16.mxu0 %v1130
      %1361 = vmatpush2.bf16.msra.mxu0 %v1129
      %1362 = vmatprep.subr.bf16.mxu0 %v1126
      %1363 = vmatpush2.bf16.msra.mxu0 %v1125
      %1364 = vmatprep.subr.bf16.mxu0 %v1122
      %1365 = vmatpush2.bf16.msra.mxu0 %v1121
      %1366 = vmatprep.mubr.bf16.mxu0 %v628
      %1367 = vmatmul.mubr.bf16.gmra.mxu0 %v627
      %v1368 = vpop.f32.mrf.mxu0
      %v1369 = vadd.f32 %v1316, %v1368
      %v1370 = vpop.f32.mrf.mxu0
      %v1371 = vadd.f32 %v1318, %v1370
      %v1372 = vpop.f32.mrf.mxu0
      %v1373 = vadd.f32 %v1320, %v1372
      %v1374 = vpop.f32.mrf.mxu0
      %v1375 = vadd.f32 %v1322, %v1374
      %1376 = vmatprep.mubr.bf16.mxu0 %v632
      %1377 = vmatmul.mubr.bf16.gmra.mxu0 %v631
      %v1378 = vpop.f32.mrf.mxu0
      %v1379 = vadd.f32 %v1326, %v1378
      %v1380 = vpop.f32.mrf.mxu0
      %v1381 = vadd.f32 %v1328, %v1380
      %v1382 = vpop.f32.mrf.mxu0
      %v1383 = vadd.f32 %v1330, %v1382
      %v1384 = vpop.f32.mrf.mxu0
      %v1385 = vadd.f32 %v1332, %v1384
      %1386 = vdwg.mxu0
      %1387 = vmatprep.subr.bf16.mxu0 %v1056
      %1388 = vmatpush1.bf16.msra.mxu0 %v1055
      %1389 = vmatprep.subr.bf16.mxu0 %v1052
      %1390 = vmatpush1.bf16.msra.mxu0 %v1051
      %1391 = vmatprep.subr.bf16.mxu0 %v1048
      %1392 = vmatpush1.bf16.msra.mxu0 %v1047
      %1393 = vmatprep.subr.bf16.mxu0 %v1044
      %1394 = vmatpush1.bf16.msra.mxu0 %v1043
      %1395 = vmatprep.subr.bf16.mxu0 %v1040
      %1396 = vmatpush1.bf16.msra.mxu0 %v1039
      %1397 = vmatprep.subr.bf16.mxu0 %v1036
      %1398 = vmatpush1.bf16.msra.mxu0 %v1035
      %1399 = vmatprep.subr.bf16.mxu0 %v1032
      %1400 = vmatpush1.bf16.msra.mxu0 %v1031
      %1401 = vmatprep.subr.bf16.mxu0 %v1028
      %1402 = vmatpush1.bf16.msra.mxu0 %v1027
      %1403 = vmatprep.subr.bf16.mxu0 %v1088
      %1404 = vmatpush2.bf16.msra.mxu0 %v1087
      %1405 = vmatprep.subr.bf16.mxu0 %v1084
      %1406 = vmatpush2.bf16.msra.mxu0 %v1083
      %1407 = vmatprep.subr.bf16.mxu0 %v1080
      %1408 = vmatpush2.bf16.msra.mxu0 %v1079
      %1409 = vmatprep.subr.bf16.mxu0 %v1076
      %1410 = vmatpush2.bf16.msra.mxu0 %v1075
      %1411 = vmatprep.subr.bf16.mxu0 %v1072
      %1412 = vmatpush2.bf16.msra.mxu0 %v1071
      %1413 = vmatprep.subr.bf16.mxu0 %v1068
      %1414 = vmatpush2.bf16.msra.mxu0 %v1067
      %1415 = vmatprep.subr.bf16.mxu0 %v1064
      %1416 = vmatpush2.bf16.msra.mxu0 %v1063
      %1417 = vmatprep.subr.bf16.mxu0 %v1060
      %1418 = vmatpush2.bf16.msra.mxu0 %v1059
      %1419 = vmatprep.mubr.bf16.mxu0 %v626
      %1420 = vmatmul.mubr.bf16.gmra.mxu0 %v625
      %v1421 = vpop.f32.mrf.mxu0
      %v1422 = vadd.f32 0.0, %v1421
      %v1423 = vpop.f32.mrf.mxu0
      %v1424 = vadd.f32 0.0, %v1423
      %v1425 = vpop.f32.mrf.mxu0
      %v1426 = vadd.f32 0.0, %v1425
      %v1427 = vpop.f32.mrf.mxu0
      %v1428 = vadd.f32 0.0, %v1427
      %1429 = vmatprep.mubr.bf16.mxu0 %v630
      %1430 = vmatmul.mubr.bf16.gmra.mxu0 %v629
      %v1431 = vpop.f32.mrf.mxu0
      %v1432 = vadd.f32 0.0, %v1431
      %v1433 = vpop.f32.mrf.mxu0
      %v1434 = vadd.f32 0.0, %v1433
      %v1435 = vpop.f32.mrf.mxu0
      %v1436 = vadd.f32 0.0, %v1435
      %v1437 = vpop.f32.mrf.mxu0
      %v1438 = vadd.f32 0.0, %v1437
      %1439 = vdwg.mxu0
      %1440 = vmatprep.subr.bf16.mxu0 %v1120
      %1441 = vmatpush1.bf16.msra.mxu0 %v1119
      %1442 = vmatprep.subr.bf16.mxu0 %v1116
      %1443 = vmatpush1.bf16.msra.mxu0 %v1115
      %1444 = vmatprep.subr.bf16.mxu0 %v1112
      %1445 = vmatpush1.bf16.msra.mxu0 %v1111
      %1446 = vmatprep.subr.bf16.mxu0 %v1108
      %1447 = vmatpush1.bf16.msra.mxu0 %v1107
      %1448 = vmatprep.subr.bf16.mxu0 %v1104
      %1449 = vmatpush1.bf16.msra.mxu0 %v1103
      %1450 = vmatprep.subr.bf16.mxu0 %v1100
      %1451 = vmatpush1.bf16.msra.mxu0 %v1099
      %1452 = vmatprep.subr.bf16.mxu0 %v1096
      %1453 = vmatpush1.bf16.msra.mxu0 %v1095
      %1454 = vmatprep.subr.bf16.mxu0 %v1092
      %1455 = vmatpush1.bf16.msra.mxu0 %v1091
      %1456 = vmatprep.subr.bf16.mxu0 %v1152
      %1457 = vmatpush2.bf16.msra.mxu0 %v1151
      %1458 = vmatprep.subr.bf16.mxu0 %v1148
      %1459 = vmatpush2.bf16.msra.mxu0 %v1147
      %1460 = vmatprep.subr.bf16.mxu0 %v1144
      %1461 = vmatpush2.bf16.msra.mxu0 %v1143
      %1462 = vmatprep.subr.bf16.mxu0 %v1140
      %1463 = vmatpush2.bf16.msra.mxu0 %v1139
      %1464 = vmatprep.subr.bf16.mxu0 %v1136
      %1465 = vmatpush2.bf16.msra.mxu0 %v1135
      %1466 = vmatprep.subr.bf16.mxu0 %v1132
      %1467 = vmatpush2.bf16.msra.mxu0 %v1131
      %1468 = vmatprep.subr.bf16.mxu0 %v1128
      %1469 = vmatpush2.bf16.msra.mxu0 %v1127
      %1470 = vmatprep.subr.bf16.mxu0 %v1124
      %1471 = vmatpush2.bf16.msra.mxu0 %v1123
      %1472 = vmatprep.mubr.bf16.mxu0 %v628
      %1473 = vmatmul.mubr.bf16.gmra.mxu0 %v627
      %v1474 = vpop.f32.mrf.mxu0
      %v1475 = vadd.f32 %v1422, %v1474
      %v1476 = vpop.f32.mrf.mxu0
      %v1477 = vadd.f32 %v1424, %v1476
      %v1478 = vpop.f32.mrf.mxu0
      %v1479 = vadd.f32 %v1426, %v1478
      %v1480 = vpop.f32.mrf.mxu0
      %v1481 = vadd.f32 %v1428, %v1480
      %1482 = vmatprep.mubr.bf16.mxu0 %v632
      %1483 = vmatmul.mubr.bf16.gmra.mxu0 %v631
      %v1484 = vpop.f32.mrf.mxu0
      %v1485 = vadd.f32 %v1432, %v1484
      %v1486 = vpop.f32.mrf.mxu0
      %v1487 = vadd.f32 %v1434, %v1486
      %v1488 = vpop.f32.mrf.mxu0
      %v1489 = vadd.f32 %v1436, %v1488
      %v1490 = vpop.f32.mrf.mxu0
      %v1491 = vadd.f32 %v1438, %v1490
      %1492 = vdwg.mxu0
      %v1493 = vadd.f32 %v1369, %v1371
      %v1494 = vadd.f32 %v1493, %v1475
      %v1495 = vadd.f32 %v1494, %v1477
      %1496 = vadd.xlane.f32.xlu0 %v1495
      %v1497 = vpop.xlane.xlu0 %1496
      %v1498 = vadd.f32 %v1373, %v1375
      %v1499 = vadd.f32 %v1498, %v1479
      %v1500 = vadd.f32 %v1499, %v1481
      %1501 = vadd.xlane.f32.xlu0 %v1500
      %v1502 = vpop.xlane.xlu0 %1501
      %v1503 = vadd.f32 %v1379, %v1381
      %v1504 = vadd.f32 %v1503, %v1485
      %v1505 = vadd.f32 %v1504, %v1487
      %1506 = vadd.xlane.f32.xlu0 %v1505
      %v1507 = vpop.xlane.xlu0 %1506
      %v1508 = vadd.f32 %v1383, %v1385
      %v1509 = vadd.f32 %v1508, %v1489
      %v1510 = vadd.f32 %v1509, %v1491
      %1511 = vadd.xlane.f32.xlu0 %v1510
      %v1512 = vpop.xlane.xlu0 %1511
      %v1513 = vmul.f32 %v1497, 0.005
      %v1514 = vmul.f32 %v1502, 0.005
      %v1515 = vmul.f32 %v1507, 0.005
      %v1516 = vmul.f32 %v1512, 0.005
      %v1517 = vsub.f32 %v1369, %v1513
      %v1518 = vsub.f32 %v1371, %v1513
      %v1519 = vsub.f32 %v1475, %v1513
      %v1520 = vsub.f32 %v1477, %v1513
      %v1521 = vsub.f32 %v1373, %v1514
      %v1522 = vsub.f32 %v1375, %v1514
      %v1523 = vsub.f32 %v1479, %v1514
      %v1524 = vsub.f32 %v1481, %v1514
      %v1525 = vsub.f32 %v1379, %v1515
      %v1526 = vsub.f32 %v1381, %v1515
      %v1527 = vsub.f32 %v1485, %v1515
      %v1528 = vsub.f32 %v1487, %v1515
      %v1529 = vsub.f32 %v1383, %v1516
      %v1530 = vsub.f32 %v1385, %v1516
      %v1531 = vsub.f32 %v1489, %v1516
      %v1532 = vsub.f32 %v1491, %v1516
      %v1533 = vld [vmem:[%s1] sm:$0xf]
      %v1535 = vlaneseq
      %v1536 = vshrl.u32 %v1535, 7
      %v1537 = vsub.s32 0, %v1536
      %v1538 = vrot.slane %v1533, %v1537
      %v1539 = vlaneseq
      %v1540 = vshrl.u32 %v1539, 7
      %v1541 = vsub.s32 1, %v1540
      %v1542 = vrot.slane %v1533, %v1541
      %v1543 = vlaneseq
      %v1544 = vshrl.u32 %v1543, 7
      %v1545 = vsub.s32 2, %v1544
      %v1546 = vrot.slane %v1533, %v1545
      %v1547 = vlaneseq
      %v1548 = vshrl.u32 %v1547, 7
      %v1549 = vsub.s32 3, %v1548
      %v1550 = vrot.slane %v1533, %v1549
      %v1555 = vmul.f32 %v1517, %v1538
      %v1556 = vmul.f32 %v1518, %v1542
      %v1557 = vmul.f32 %v1519, %v1546
      %v1558 = vmul.f32 %v1520, %v1550
      %v1559 = vmul.f32 %v1521, %v1538
      %v1560 = vmul.f32 %v1522, %v1542
      %v1561 = vmul.f32 %v1523, %v1546
      %v1562 = vmul.f32 %v1524, %v1550
      %v1563 = vmul.f32 %v1525, %v1538
      %v1564 = vmul.f32 %v1526, %v1542
      %v1565 = vmul.f32 %v1527, %v1546
      %v1566 = vmul.f32 %v1528, %v1550
      %v1567 = vmul.f32 %v1529, %v1538
      %v1568 = vmul.f32 %v1530, %v1542
      %v1569 = vmul.f32 %v1531, %v1546
      %v1570 = vmul.f32 %v1532, %v1550
      %v1571 = vmul.f32 %v1555, %v1555
      %v1572 = vmul.f32 %v1556, %v1556
      %v1573 = vmul.f32 %v1557, %v1557
      %v1574 = vmul.f32 %v1558, %v1558
      %v1575 = vmul.f32 %v1559, %v1559
      %v1576 = vmul.f32 %v1560, %v1560
      %v1577 = vmul.f32 %v1561, %v1561
      %v1578 = vmul.f32 %v1562, %v1562
      %v1579 = vmul.f32 %v1563, %v1563
      %v1580 = vmul.f32 %v1564, %v1564
      %v1581 = vmul.f32 %v1565, %v1565
      %v1582 = vmul.f32 %v1566, %v1566
      %v1583 = vmul.f32 %v1567, %v1567
      %v1584 = vmul.f32 %v1568, %v1568
      %v1585 = vmul.f32 %v1569, %v1569
      %v1586 = vmul.f32 %v1570, %v1570
      %v1587 = vadd.f32 %v1571, %v1572
      %v1588 = vadd.f32 %v1587, %v1573
      %v1589 = vadd.f32 %v1588, %v1574
      %1590 = vadd.xlane.f32.xlu0 %v1589
      %v1591 = vpop.xlane.xlu0 %1590
      %v1592 = vadd.f32 %v1575, %v1576
      %v1593 = vadd.f32 %v1592, %v1577
      %v1594 = vadd.f32 %v1593, %v1578
      %1595 = vadd.xlane.f32.xlu0 %v1594
      %v1596 = vpop.xlane.xlu0 %1595
      %v1597 = vadd.f32 %v1579, %v1580
      %v1598 = vadd.f32 %v1597, %v1581
      %v1599 = vadd.f32 %v1598, %v1582
      %1600 = vadd.xlane.f32.xlu0 %v1599
      %v1601 = vpop.xlane.xlu0 %1600
      %v1602 = vadd.f32 %v1583, %v1584
      %v1603 = vadd.f32 %v1602, %v1585
      %v1604 = vadd.f32 %v1603, %v1586
      %1605 = vadd.xlane.f32.xlu0 %v1604
      %v1606 = vpop.xlane.xlu0 %1605
      %v1607 = vmul.f32 %v1591, 0.005
      %v1608 = vmul.f32 %v1596, 0.005
      %v1609 = vmul.f32 %v1601, 0.005
      %v1610 = vmul.f32 %v1606, 0.005
      %v1611 = vadd.f32 %v1607, 1e-05
      %v1612 = vadd.f32 %v1608, 1e-05
      %v1613 = vadd.f32 %v1609, 1e-05
      %v1614 = vadd.f32 %v1610, 1e-05
      %v1615 = vrsqrt.pop %v1611
      %v1616 = vrsqrt.pop %v1612
      %v1617 = vrsqrt.pop %v1613
      %v1618 = vrsqrt.pop %v1614
      %v1619 = vld [vmem:[%s3] sm:$0xff]
      %v1620 = vld [vmem:[%s3 + $0x8] sm:$0xff]
      %v1621 = vld [vmem:[%s3 + $0x10] sm:$0xff]
      %v1622 = vld [vmem:[%s3 + $0x18] sm:$0xff]
      %v1623 = vmul.f32 %v1615, %v1619
      %v1624 = vmul.f32 %v1616, %v1620
      %v1625 = vmul.f32 %v1617, %v1621
      %v1626 = vmul.f32 %v1618, %v1622
      %v1627 = vld [vmem:[%s4] sm:$0xff]
      %v1628 = vld [vmem:[%s4 + $0x8] sm:$0xff]
      %v1629 = vld [vmem:[%s4 + $0x10] sm:$0xff]
      %v1630 = vld [vmem:[%s4 + $0x18] sm:$0xff]
      %v1631 = vmul.f32 %v1513, %v1623
      %v1632 = vmul.f32 %v1514, %v1624
      %v1633 = vmul.f32 %v1515, %v1625
      %v1634 = vmul.f32 %v1516, %v1626
      %v1635 = vsub.f32 %v1627, %v1631
      %v1636 = vsub.f32 %v1628, %v1632
      %v1637 = vsub.f32 %v1629, %v1633
      %v1638 = vsub.f32 %v1630, %v1634
      %1640 = vset.pattern.permute.xlu0 0
      %1641 = vperm.xlu0 %1640, %v1623
      %v1642 = vpop.permute.xlu0 %1641
      %1645 = vset.pattern.permute.xlu0 0
      %1646 = vperm.xlu0 %1645, %v1624
      %v1647 = vpop.permute.xlu0 %1646
      %1650 = vset.pattern.permute.xlu0 0
      %1651 = vperm.xlu0 %1650, %v1625
      %v1652 = vpop.permute.xlu0 %1651
      %1655 = vset.pattern.permute.xlu0 0
      %1656 = vperm.xlu0 %1655, %v1626
      %v1657 = vpop.permute.xlu0 %1656
      %v1659 = vmul.f32 %v1369, %v1642
      %v1660 = vmul.f32 %v1371, %v1642
      %v1661 = vmul.f32 %v1475, %v1642
      %v1662 = vmul.f32 %v1477, %v1642
      %v1663 = vmul.f32 %v1373, %v1647
      %v1664 = vmul.f32 %v1375, %v1647
      %v1665 = vmul.f32 %v1479, %v1647
      %v1666 = vmul.f32 %v1481, %v1647
      %v1667 = vmul.f32 %v1379, %v1652
      %v1668 = vmul.f32 %v1381, %v1652
      %v1669 = vmul.f32 %v1485, %v1652
      %v1670 = vmul.f32 %v1487, %v1652
      %v1671 = vmul.f32 %v1383, %v1657
      %v1672 = vmul.f32 %v1385, %v1657
      %v1673 = vmul.f32 %v1489, %v1657
      %v1674 = vmul.f32 %v1491, %v1657
      %1676 = vset.pattern.permute.xlu0 0
      %1677 = vperm.xlu0 %1676, %v1635
      %v1678 = vpop.permute.xlu0 %1677
      %1681 = vset.pattern.permute.xlu0 0
      %1682 = vperm.xlu0 %1681, %v1636
      %v1683 = vpop.permute.xlu0 %1682
      %1686 = vset.pattern.permute.xlu0 0
      %1687 = vperm.xlu0 %1686, %v1637
      %v1688 = vpop.permute.xlu0 %1687
      %1691 = vset.pattern.permute.xlu0 0
      %1692 = vperm.xlu0 %1691, %v1638
      %v1693 = vpop.permute.xlu0 %1692
      %v1695 = vadd.f32 %v1659, %v1678
      %v1696 = vadd.f32 %v1660, %v1678
      %v1697 = vadd.f32 %v1661, %v1678
      %v1698 = vadd.f32 %v1662, %v1678
      %v1699 = vadd.f32 %v1663, %v1683
      %v1700 = vadd.f32 %v1664, %v1683
      %v1701 = vadd.f32 %v1665, %v1683
      %v1702 = vadd.f32 %v1666, %v1683
      %v1703 = vadd.f32 %v1667, %v1688
      %v1704 = vadd.f32 %v1668, %v1688
      %v1705 = vadd.f32 %v1669, %v1688
      %v1706 = vadd.f32 %v1670, %v1688
      %v1707 = vadd.f32 %v1671, %v1693
      %v1708 = vadd.f32 %v1672, %v1693
      %v1709 = vadd.f32 %v1673, %v1693
      %v1710 = vadd.f32 %v1674, %v1693
      %v1711 = vmul.f32 %v1695, 0.2
      %v1712 = vmul.f32 %v1696, 0.2
      %v1713 = vmul.f32 %v1697, 0.2
      %v1714 = vmul.f32 %v1698, 0.2
      %v1715 = vmul.f32 %v1699, 0.2
      %v1716 = vmul.f32 %v1700, 0.2
      %v1717 = vmul.f32 %v1701, 0.2
      %v1718 = vmul.f32 %v1702, 0.2
      %v1719 = vmul.f32 %v1703, 0.2
      %v1720 = vmul.f32 %v1704, 0.2
      %v1721 = vmul.f32 %v1705, 0.2
      %v1722 = vmul.f32 %v1706, 0.2
      %v1723 = vmul.f32 %v1707, 0.2
      %v1724 = vmul.f32 %v1708, 0.2
      %v1725 = vmul.f32 %v1709, 0.2
      %v1726 = vmul.f32 %v1710, 0.2
      %v1727 = vmax.f32 %v1695, %v1711
      %v1728 = vmax.f32 %v1696, %v1712
      %v1729 = vmax.f32 %v1697, %v1713
      %v1730 = vmax.f32 %v1698, %v1714
      %v1731 = vmax.f32 %v1699, %v1715
      %v1732 = vmax.f32 %v1700, %v1716
      %v1733 = vmax.f32 %v1701, %v1717
      %v1734 = vmax.f32 %v1702, %v1718
      %v1735 = vmax.f32 %v1703, %v1719
      %v1736 = vmax.f32 %v1704, %v1720
      %v1737 = vmax.f32 %v1705, %v1721
      %v1738 = vmax.f32 %v1706, %v1722
      %v1739 = vmax.f32 %v1707, %v1723
      %v1740 = vmax.f32 %v1708, %v1724
      %v1741 = vmax.f32 %v1709, %v1725
      %v1742 = vmax.f32 %v1710, %v1726
      %v1743 = vadd.f32 %v1727, %v1728
      %v1744 = vadd.f32 %v1731, %v1732
      %v1745 = vadd.f32 %v1735, %v1736
      %v1746 = vadd.f32 %v1739, %v1740
      %v1747 = vadd.f32 %v1743, %v1729
      %v1748 = vadd.f32 %v1744, %v1733
      %v1749 = vadd.f32 %v1745, %v1737
      %v1750 = vadd.f32 %v1746, %v1741
      %v1751 = vadd.f32 %v1747, %v1730
      %v1752 = vadd.f32 %v1748, %v1734
      %v1753 = vadd.f32 %v1749, %v1738
      %v1754 = vadd.f32 %v1750, %v1742
      %v1755 = vmul.f32 %v1751, 0.25
      %v1756 = vmul.f32 %v1752, 0.25
      %v1757 = vmul.f32 %v1753, 0.25
      %v1758 = vmul.f32 %v1754, 0.25
      %v1759 = vpack.c.bf16 %v1756, %v1755
      %v1760 = vpack.c.bf16 %v1758, %v1757
      %v1763 = vunpack.c.l.b16 %v1759
      %v1764 = vunpack.c.h.b16 %v1759
      %v1765 = vunpack.c.l.b16 %v1760
      %v1766 = vunpack.c.h.b16 %v1760
      %v1767 = vpack.c.b16 %v1763, %v1763
      %v1768 = vpack.c.b16 %v1764, %v1764
      %v1769 = vpack.c.b16 %v1765, %v1765
      %v1770 = vpack.c.b16 %v1766, %v1766
      %1775 = vst [vmem:[%s455] sm:$0xf] %v1767
      %1776 = vst [vmem:[%s455 + $0x4] sm:$0xf] %v1768
      %1777 = vst [vmem:[%s455 + $0x8] sm:$0xf] %v1769
      %1778 = vst [vmem:[%s455 + $0xc] sm:$0xf] %v1770
      %v1779 = vld [vmem:[%s5] sm:$0xf]
      %v1780 = vld [vmem:[%s5 + $0x4] sm:$0xf]
      %v1781 = vld [vmem:[%s5 + $0x8] sm:$0xf]
      %v1782 = vld [vmem:[%s5 + $0xc] sm:$0xf]
      %v1783 = vld [vmem:[%s5 + $0x10] sm:$0xf]
      %v1784 = vld [vmem:[%s5 + $0x14] sm:$0xf]
      %v1785 = vld [vmem:[%s5 + $0x18] sm:$0xf]
      %v1786 = vld [vmem:[%s5 + $0x1c] sm:$0xf]
      %v1787 = vld [vmem:[%s5 + $0x20] sm:$0xf]
      %v1788 = vld [vmem:[%s5 + $0x24] sm:$0xf]
      %v1789 = vld [vmem:[%s5 + $0x28] sm:$0xf]
      %v1790 = vld [vmem:[%s5 + $0x2c] sm:$0xf]
      %v1791 = vld [vmem:[%s5 + $0x30] sm:$0xf]
      %v1792 = vld [vmem:[%s5 + $0x34] sm:$0xf]
      %v1793 = vld [vmem:[%s5 + $0x38] sm:$0xf]
      %v1794 = vld [vmem:[%s5 + $0x3c] sm:$0xf]
      %v1811 = vunpack.c.l.b16 %v1779
      %v1812 = vunpack.c.l.b16 %v1780
      %v1813 = vunpack.c.l.b16 %v1781
      %v1814 = vunpack.c.l.b16 %v1782
      %v1815 = vunpack.c.l.b16 %v1783
      %v1816 = vunpack.c.l.b16 %v1784
      %v1817 = vunpack.c.l.b16 %v1785
      %v1818 = vunpack.c.l.b16 %v1786
      %v1819 = vunpack.c.l.b16 %v1787
      %v1820 = vunpack.c.l.b16 %v1788
      %v1821 = vunpack.c.l.b16 %v1789
      %v1822 = vunpack.c.l.b16 %v1790
      %v1823 = vunpack.c.l.b16 %v1791
      %v1824 = vunpack.c.l.b16 %v1792
      %v1825 = vunpack.c.l.b16 %v1793
      %v1826 = vunpack.c.l.b16 %v1794
      %v1827 = vpack.c.b16 %v1812, %v1811
      %v1828 = vpack.c.b16 %v1814, %v1813
      %v1829 = vpack.c.b16 %v1816, %v1815
      %v1830 = vpack.c.b16 %v1818, %v1817
      %v1831 = vpack.c.b16 %v1820, %v1819
      %v1832 = vpack.c.b16 %v1822, %v1821
      %v1833 = vpack.c.b16 %v1824, %v1823
      %v1834 = vpack.c.b16 %v1826, %v1825
      %1843 = vmatprep.subr.bf16.mxu0 0
      %1844 = vmatpush1.bf16.msra.mxu0 %v1834
      %1845 = vmatprep.subr.bf16.mxu0 0
      %1846 = vmatpush1.bf16.msra.mxu0 %v1833
      %1847 = vmatprep.subr.bf16.mxu0 0
      %1848 = vmatpush1.bf16.msra.mxu0 %v1832
      %1849 = vmatprep.subr.bf16.mxu0 0
      %1850 = vmatpush1.bf16.msra.mxu0 %v1831
      %1851 = vmatprep.subr.bf16.mxu0 0
      %1852 = vmatpush1.bf16.msra.mxu0 %v1830
      %1853 = vmatprep.subr.bf16.mxu0 0
      %1854 = vmatpush1.bf16.msra.mxu0 %v1829
      %1855 = vmatprep.subr.bf16.mxu0 0
      %1856 = vmatpush1.bf16.msra.mxu0 %v1828
      %1857 = vmatprep.subr.bf16.mxu0 0
      %1858 = vmatpush1.bf16.msra.mxu0 %v1827
      %1859 = vmatprep.subr.bf16.mxu0 0
      %1860 = vmatpush2.bf16.msra.mxu0 0
      %1861 = vmatprep.subr.bf16.mxu0 0
      %1862 = vmatpush2.bf16.msra.mxu0 0
      %1863 = vmatprep.subr.bf16.mxu0 0
      %1864 = vmatpush2.bf16.msra.mxu0 0
      %1865 = vmatprep.subr.bf16.mxu0 0
      %1866 = vmatpush2.bf16.msra.mxu0 0
      %1867 = vmatprep.subr.bf16.mxu0 0
      %1868 = vmatpush2.bf16.msra.mxu0 0
      %1869 = vmatprep.subr.bf16.mxu0 0
      %1870 = vmatpush2.bf16.msra.mxu0 0
      %1871 = vmatprep.subr.bf16.mxu0 0
      %1872 = vmatpush2.bf16.msra.mxu0 0
      %1873 = vmatprep.subr.bf16.mxu0 0
      %1874 = vmatpush2.bf16.msra.mxu0 0
      %1875 = vmatprep.mubr.bf16.mxu0 0
      %1876 = vmatmul.mubr.bf16.gmra.mxu0 %v1759
      %v1877 = vpop.f32.mrf.mxu0
      %v1878 = vadd.f32 0.0, %v1877
      %v1879 = vpop.f32.mrf.mxu0
      %v1880 = vpop.f32.mrf.mxu0
      %v1881 = vadd.f32 0.0, %v1880
      %v1882 = vpop.f32.mrf.mxu0
      %1883 = vmatprep.mubr.bf16.mxu0 0
      %1884 = vmatmul.mubr.bf16.gmra.mxu0 %v1760
      %v1885 = vpop.f32.mrf.mxu0
      %v1886 = vadd.f32 0.0, %v1885
      %v1887 = vpop.f32.mrf.mxu0
      %v1888 = vpop.f32.mrf.mxu0
      %v1889 = vadd.f32 0.0, %v1888
      %v1890 = vpop.f32.mrf.mxu0
      %1891 = vdwg.mxu0
      %v1892 = vpack.c.bf16 %v1881, %v1878
      %v1893 = vpack.c.bf16 %v1889, %v1886
      %v1894 = vld [vmem:[%s6] sm:$0xf]
      %v1895 = vld [vmem:[%s6 + $0x4] sm:$0xf]
      %v1896 = vld [vmem:[%s6 + $0x8] sm:$0xf]
      %v1897 = vld [vmem:[%s6 + $0xc] sm:$0xf]
      %s1898 = scalar_lea.vmem %s5, 64
      %v1899 = vld [vmem:[%s1898] sm:$0xf]
      %v1900 = vld [vmem:[%s1898 + $0x4] sm:$0xf]
      %v1901 = vld [vmem:[%s1898 + $0x8] sm:$0xf]
      %v1902 = vld [vmem:[%s1898 + $0xc] sm:$0xf]
      %v1903 = vld [vmem:[%s1898 + $0x10] sm:$0xf]
      %v1904 = vld [vmem:[%s1898 + $0x14] sm:$0xf]
      %v1905 = vld [vmem:[%s1898 + $0x18] sm:$0xf]
      %v1906 = vld [vmem:[%s1898 + $0x1c] sm:$0xf]
      %v1907 = vld [vmem:[%s1898 + $0x20] sm:$0xf]
      %v1908 = vld [vmem:[%s1898 + $0x24] sm:$0xf]
      %v1909 = vld [vmem:[%s1898 + $0x28] sm:$0xf]
      %v1910 = vld [vmem:[%s1898 + $0x2c] sm:$0xf]
      %v1911 = vld [vmem:[%s1898 + $0x30] sm:$0xf]
      %v1912 = vld [vmem:[%s1898 + $0x34] sm:$0xf]
      %v1913 = vld [vmem:[%s1898 + $0x38] sm:$0xf]
      %v1914 = vld [vmem:[%s1898 + $0x3c] sm:$0xf]
      %v1931 = vunpack.c.l.b16 %v1899
      %v1932 = vunpack.c.l.b16 %v1900
      %v1933 = vunpack.c.l.b16 %v1901
      %v1934 = vunpack.c.l.b16 %v1902
      %v1935 = vunpack.c.l.b16 %v1903
      %v1936 = vunpack.c.l.b16 %v1904
      %v1937 = vunpack.c.l.b16 %v1905
      %v1938 = vunpack.c.l.b16 %v1906
      %v1939 = vunpack.c.l.b16 %v1907
      %v1940 = vunpack.c.l.b16 %v1908
      %v1941 = vunpack.c.l.b16 %v1909
      %v1942 = vunpack.c.l.b16 %v1910
      %v1943 = vunpack.c.l.b16 %v1911
      %v1944 = vunpack.c.l.b16 %v1912
      %v1945 = vunpack.c.l.b16 %v1913
      %v1946 = vunpack.c.l.b16 %v1914
      %v1947 = vpack.c.b16 %v1932, %v1931
      %v1948 = vpack.c.b16 %v1934, %v1933
      %v1949 = vpack.c.b16 %v1936, %v1935
      %v1950 = vpack.c.b16 %v1938, %v1937
      %v1951 = vpack.c.b16 %v1940, %v1939
      %v1952 = vpack.c.b16 %v1942, %v1941
      %v1953 = vpack.c.b16 %v1944, %v1943
      %v1954 = vpack.c.b16 %v1946, %v1945
      %1963 = vmatprep.subr.bf16.mxu0 0
      %1964 = vmatpush1.bf16.msra.mxu0 %v1954
      %1965 = vmatprep.subr.bf16.mxu0 0
      %1966 = vmatpush1.bf16.msra.mxu0 %v1953
      %1967 = vmatprep.subr.bf16.mxu0 0
      %1968 = vmatpush1.bf16.msra.mxu0 %v1952
      %1969 = vmatprep.subr.bf16.mxu0 0
      %1970 = vmatpush1.bf16.msra.mxu0 %v1951
      %1971 = vmatprep.subr.bf16.mxu0 0
      %1972 = vmatpush1.bf16.msra.mxu0 %v1950
      %1973 = vmatprep.subr.bf16.mxu0 0
      %1974 = vmatpush1.bf16.msra.mxu0 %v1949
      %1975 = vmatprep.subr.bf16.mxu0 0
      %1976 = vmatpush1.bf16.msra.mxu0 %v1948
      %1977 = vmatprep.subr.bf16.mxu0 0
      %1978 = vmatpush1.bf16.msra.mxu0 %v1947
      %1979 = vmatprep.subr.bf16.mxu0 0
      %1980 = vmatpush2.bf16.msra.mxu0 0
      %1981 = vmatprep.subr.bf16.mxu0 0
      %1982 = vmatpush2.bf16.msra.mxu0 0
      %1983 = vmatprep.subr.bf16.mxu0 0
      %1984 = vmatpush2.bf16.msra.mxu0 0
      %1985 = vmatprep.subr.bf16.mxu0 0
      %1986 = vmatpush2.bf16.msra.mxu0 0
      %1987 = vmatprep.subr.bf16.mxu0 0
      %1988 = vmatpush2.bf16.msra.mxu0 0
      %1989 = vmatprep.subr.bf16.mxu0 0
      %1990 = vmatpush2.bf16.msra.mxu0 0
      %1991 = vmatprep.subr.bf16.mxu0 0
      %1992 = vmatpush2.bf16.msra.mxu0 0
      %1993 = vmatprep.subr.bf16.mxu0 0
      %1994 = vmatpush2.bf16.msra.mxu0 0
      %1995 = vmatprep.mubr.bf16.mxu0 0
      %1996 = vmatmul.mubr.bf16.gmra.mxu0 %v1759
      %v1997 = vpop.f32.mrf.mxu0
      %v1998 = vadd.f32 0.0, %v1997
      %v1999 = vpop.f32.mrf.mxu0
      %v2000 = vpop.f32.mrf.mxu0
      %v2001 = vadd.f32 0.0, %v2000
      %v2002 = vpop.f32.mrf.mxu0
      %2003 = vmatprep.mubr.bf16.mxu0 0
      %2004 = vmatmul.mubr.bf16.gmra.mxu0 %v1760
      %v2005 = vpop.f32.mrf.mxu0
      %v2006 = vadd.f32 0.0, %v2005
      %v2007 = vpop.f32.mrf.mxu0
      %v2008 = vpop.f32.mrf.mxu0
      %v2009 = vadd.f32 0.0, %v2008
      %v2010 = vpop.f32.mrf.mxu0
      %2011 = vdwg.mxu0
      %v2012 = vpack.c.bf16 %v2001, %v1998
      %v2013 = vpack.c.bf16 %v2009, %v2006
      %s2014 = scalar_lea.vmem %s6, 16
      %v2015 = vld [vmem:[%s2014] sm:$0xf]
      %v2016 = vld [vmem:[%s2014 + $0x4] sm:$0xf]
      %v2017 = vld [vmem:[%s2014 + $0x8] sm:$0xf]
      %v2018 = vld [vmem:[%s2014 + $0xc] sm:$0xf]
      %v2023 = vunpack.c.l.b16 %v2015
      %v2024 = vunpack.c.l.b16 %v2016
      %v2025 = vunpack.c.l.b16 %v2017
      %v2026 = vunpack.c.l.b16 %v2018
      %v2027 = vpack.c.b16 %v2024, %v2023
      %v2028 = vpack.c.b16 %v2026, %v2025
      %vm2029 = vcmask 261120
      %v2031 = vsel %vm2029, %v2027, 0
      %v2034 = vsel %vm2029, %v2028, 0
      %2036 = vmatprep.subr.bf16.mxu0 0
      %2037 = vmatpush1.bf16.msra.mxu0 0
      %2038 = vmatprep.subr.bf16.mxu0 0
      %2039 = vmatpush1.bf16.msra.mxu0 0
      %2040 = vmatprep.subr.bf16.mxu0 0
      %2041 = vmatpush1.bf16.msra.mxu0 0
      %2042 = vmatprep.subr.bf16.mxu0 0
      %2043 = vmatpush1.bf16.msra.mxu0 0
      %2044 = vmatprep.subr.bf16.mxu0 0
      %2045 = vmatpush1.bf16.msra.mxu0 0
      %2046 = vmatprep.subr.bf16.mxu0 0
      %2047 = vmatpush1.bf16.msra.mxu0 0
      %2048 = vmatprep.subr.bf16.mxu0 0
      %2049 = vmatpush1.bf16.msra.mxu0 %v2013
      %2050 = vmatprep.subr.bf16.mxu0 0
      %2051 = vmatpush1.bf16.msra.mxu0 %v2012
      %2052 = vmatprep.subr.bf16.mxu0 0
      %2053 = vmatpush2.bf16.msra.mxu0 0
      %2054 = vmatprep.subr.bf16.mxu0 0
      %2055 = vmatpush2.bf16.msra.mxu0 0
      %2056 = vmatprep.subr.bf16.mxu0 0
      %2057 = vmatpush2.bf16.msra.mxu0 0
      %2058 = vmatprep.subr.bf16.mxu0 0
      %2059 = vmatpush2.bf16.msra.mxu0 0
      %2060 = vmatprep.subr.bf16.mxu0 0
      %2061 = vmatpush2.bf16.msra.mxu0 0
      %2062 = vmatprep.subr.bf16.mxu0 0
      %2063 = vmatpush2.bf16.msra.mxu0 0
      %2064 = vmatprep.subr.bf16.mxu0 0
      %2065 = vmatpush2.bf16.msra.mxu0 0
      %2066 = vmatprep.subr.bf16.mxu0 0
      %2067 = vmatpush2.bf16.msra.mxu0 0
      %2068 = vmatprep.mubr.bf16.mxu0 0
      %2069 = vmatmul.mubr.bf16.gmra.mxu0 %v2031
      %v2070 = vpop.f32.mrf.mxu0
      %v2071 = vadd.f32 0.0, %v2070
      %v2072 = vpop.f32.mrf.mxu0
      %v2073 = vpop.f32.mrf.mxu0
      %v2074 = vadd.f32 0.0, %v2073
      %v2075 = vpop.f32.mrf.mxu0
      %2076 = vmatprep.mubr.bf16.mxu0 0
      %2077 = vmatmul.mubr.bf16.gmra.mxu0 %v2034
      %v2078 = vpop.f32.mrf.mxu0
      %v2079 = vadd.f32 0.0, %v2078
      %v2080 = vpop.f32.mrf.mxu0
      %v2081 = vpop.f32.mrf.mxu0
      %v2082 = vadd.f32 0.0, %v2081
      %v2083 = vpop.f32.mrf.mxu0
      %2084 = vdwg.mxu0
      %v2089 = vunpack.c.l.b16 %v1894
      %v2090 = vunpack.c.l.b16 %v1895
      %v2091 = vunpack.c.l.b16 %v1896
      %v2092 = vunpack.c.l.b16 %v1897
      %v2093 = vpack.c.b16 %v2090, %v2089
      %v2094 = vpack.c.b16 %v2092, %v2091
      %v2096 = vsel %vm2029, %v2093, 0
      %v2099 = vsel %vm2029, %v2094, 0
      %2101 = vmatprep.subr.bf16.mxu0 0
      %2102 = vmatpush1.bf16.msra.mxu0 0
      %2103 = vmatprep.subr.bf16.mxu0 0
      %2104 = vmatpush1.bf16.msra.mxu0 0
      %2105 = vmatprep.subr.bf16.mxu0 0
      %2106 = vmatpush1.bf16.msra.mxu0 0
      %2107 = vmatprep.subr.bf16.mxu0 0
      %2108 = vmatpush1.bf16.msra.mxu0 0
      %2109 = vmatprep.subr.bf16.mxu0 0
      %2110 = vmatpush1.bf16.msra.mxu0 0
      %2111 = vmatprep.subr.bf16.mxu0 0
      %2112 = vmatpush1.bf16.msra.mxu0 0
      %2113 = vmatprep.subr.bf16.mxu0 0
      %2114 = vmatpush1.bf16.msra.mxu0 %v1893
      %2115 = vmatprep.subr.bf16.mxu0 0
      %2116 = vmatpush1.bf16.msra.mxu0 %v1892
      %2117 = vmatprep.subr.bf16.mxu0 0
      %2118 = vmatpush2.bf16.msra.mxu0 0
      %2119 = vmatprep.subr.bf16.mxu0 0
      %2120 = vmatpush2.bf16.msra.mxu0 0
      %2121 = vmatprep.subr.bf16.mxu0 0
      %2122 = vmatpush2.bf16.msra.mxu0 0
      %2123 = vmatprep.subr.bf16.mxu0 0
      %2124 = vmatpush2.bf16.msra.mxu0 0
      %2125 = vmatprep.subr.bf16.mxu0 0
      %2126 = vmatpush2.bf16.msra.mxu0 0
      %2127 = vmatprep.subr.bf16.mxu0 0
      %2128 = vmatpush2.bf16.msra.mxu0 0
      %2129 = vmatprep.subr.bf16.mxu0 0
      %2130 = vmatpush2.bf16.msra.mxu0 0
      %2131 = vmatprep.subr.bf16.mxu0 0
      %2132 = vmatpush2.bf16.msra.mxu0 0
      %2133 = vmatprep.mubr.bf16.mxu0 0
      %2134 = vmatmul.mubr.bf16.gmra.mxu0 %v2096
      %v2135 = vpop.f32.mrf.mxu0
      %v2136 = vadd.f32 %v2071, %v2135
      %v2137 = vpop.f32.mrf.mxu0
      %v2138 = vpop.f32.mrf.mxu0
      %v2139 = vadd.f32 %v2074, %v2138
      %v2140 = vpop.f32.mrf.mxu0
      %2141 = vmatprep.mubr.bf16.mxu0 0
      %2142 = vmatmul.mubr.bf16.gmra.mxu0 %v2099
      %v2143 = vpop.f32.mrf.mxu0
      %v2144 = vadd.f32 %v2079, %v2143
      %v2145 = vpop.f32.mrf.mxu0
      %v2146 = vpop.f32.mrf.mxu0
      %v2147 = vadd.f32 %v2082, %v2146
      %v2148 = vpop.f32.mrf.mxu0
      %2149 = vdwg.mxu0
      %s2150 = scalar_lea.vmem %s5, 128
      %v2151 = vld [vmem:[%s2150] sm:$0xf]
      %v2152 = vld [vmem:[%s2150 + $0x4] sm:$0xf]
      %v2153 = vld [vmem:[%s2150 + $0x8] sm:$0xf]
      %v2154 = vld [vmem:[%s2150 + $0xc] sm:$0xf]
      %v2155 = vld [vmem:[%s2150 + $0x10] sm:$0xf]
      %v2156 = vld [vmem:[%s2150 + $0x14] sm:$0xf]
      %v2157 = vld [vmem:[%s2150 + $0x18] sm:$0xf]
      %v2158 = vld [vmem:[%s2150 + $0x1c] sm:$0xf]
      %v2159 = vld [vmem:[%s2150 + $0x20] sm:$0xf]
      %v2160 = vld [vmem:[%s2150 + $0x24] sm:$0xf]
      %v2161 = vld [vmem:[%s2150 + $0x28] sm:$0xf]
      %v2162 = vld [vmem:[%s2150 + $0x2c] sm:$0xf]
      %v2163 = vld [vmem:[%s2150 + $0x30] sm:$0xf]
      %v2164 = vld [vmem:[%s2150 + $0x34] sm:$0xf]
      %v2165 = vld [vmem:[%s2150 + $0x38] sm:$0xf]
      %v2166 = vld [vmem:[%s2150 + $0x3c] sm:$0xf]
      %v2183 = vunpack.c.l.b16 %v2151
      %v2184 = vunpack.c.l.b16 %v2152
      %v2185 = vunpack.c.l.b16 %v2153
      %v2186 = vunpack.c.l.b16 %v2154
      %v2187 = vunpack.c.l.b16 %v2155
      %v2188 = vunpack.c.l.b16 %v2156
      %v2189 = vunpack.c.l.b16 %v2157
      %v2190 = vunpack.c.l.b16 %v2158
      %v2191 = vunpack.c.l.b16 %v2159
      %v2192 = vunpack.c.l.b16 %v2160
      %v2193 = vunpack.c.l.b16 %v2161
      %v2194 = vunpack.c.l.b16 %v2162
      %v2195 = vunpack.c.l.b16 %v2163
      %v2196 = vunpack.c.l.b16 %v2164
      %v2197 = vunpack.c.l.b16 %v2165
      %v2198 = vunpack.c.l.b16 %v2166
      %v2199 = vpack.c.b16 %v2184, %v2183
      %v2200 = vpack.c.b16 %v2186, %v2185
      %v2201 = vpack.c.b16 %v2188, %v2187
      %v2202 = vpack.c.b16 %v2190, %v2189
      %v2203 = vpack.c.b16 %v2192, %v2191
      %v2204 = vpack.c.b16 %v2194, %v2193
      %v2205 = vpack.c.b16 %v2196, %v2195
      %v2206 = vpack.c.b16 %v2198, %v2197
      %2215 = vmatprep.subr.bf16.mxu0 0
      %2216 = vmatpush1.bf16.msra.mxu0 %v2206
      %2217 = vmatprep.subr.bf16.mxu0 0
      %2218 = vmatpush1.bf16.msra.mxu0 %v2205
      %2219 = vmatprep.subr.bf16.mxu0 0
      %2220 = vmatpush1.bf16.msra.mxu0 %v2204
      %2221 = vmatprep.subr.bf16.mxu0 0
      %2222 = vmatpush1.bf16.msra.mxu0 %v2203
      %2223 = vmatprep.subr.bf16.mxu0 0
      %2224 = vmatpush1.bf16.msra.mxu0 %v2202
      %2225 = vmatprep.subr.bf16.mxu0 0
      %2226 = vmatpush1.bf16.msra.mxu0 %v2201
      %2227 = vmatprep.subr.bf16.mxu0 0
      %2228 = vmatpush1.bf16.msra.mxu0 %v2200
      %2229 = vmatprep.subr.bf16.mxu0 0
      %2230 = vmatpush1.bf16.msra.mxu0 %v2199
      %2231 = vmatprep.subr.bf16.mxu0 0
      %2232 = vmatpush2.bf16.msra.mxu0 0
      %2233 = vmatprep.subr.bf16.mxu0 0
      %2234 = vmatpush2.bf16.msra.mxu0 0
      %2235 = vmatprep.subr.bf16.mxu0 0
      %2236 = vmatpush2.bf16.msra.mxu0 0
      %2237 = vmatprep.subr.bf16.mxu0 0
      %2238 = vmatpush2.bf16.msra.mxu0 0
      %2239 = vmatprep.subr.bf16.mxu0 0
      %2240 = vmatpush2.bf16.msra.mxu0 0
      %2241 = vmatprep.subr.bf16.mxu0 0
      %2242 = vmatpush2.bf16.msra.mxu0 0
      %2243 = vmatprep.subr.bf16.mxu0 0
      %2244 = vmatpush2.bf16.msra.mxu0 0
      %2245 = vmatprep.subr.bf16.mxu0 0
      %2246 = vmatpush2.bf16.msra.mxu0 0
      %2247 = vmatprep.mubr.bf16.mxu0 0
      %2248 = vmatmul.mubr.bf16.gmra.mxu0 %v1759
      %v2249 = vpop.f32.mrf.mxu0
      %v2250 = vadd.f32 0.0, %v2249
      %v2251 = vpop.f32.mrf.mxu0
      %v2252 = vpop.f32.mrf.mxu0
      %v2253 = vadd.f32 0.0, %v2252
      %v2254 = vpop.f32.mrf.mxu0
      %2255 = vmatprep.mubr.bf16.mxu0 0
      %2256 = vmatmul.mubr.bf16.gmra.mxu0 %v1760
      %v2257 = vpop.f32.mrf.mxu0
      %v2258 = vadd.f32 0.0, %v2257
      %v2259 = vpop.f32.mrf.mxu0
      %v2260 = vpop.f32.mrf.mxu0
      %v2261 = vadd.f32 0.0, %v2260
      %v2262 = vpop.f32.mrf.mxu0
      %2263 = vdwg.mxu0
      %v2264 = vpack.c.bf16 %v2253, %v2250
      %v2265 = vpack.c.bf16 %v2261, %v2258
      %s2266 = scalar_lea.vmem %s6, 32
      %v2267 = vld [vmem:[%s2266] sm:$0xf]
      %v2268 = vld [vmem:[%s2266 + $0x4] sm:$0xf]
      %v2269 = vld [vmem:[%s2266 + $0x8] sm:$0xf]
      %v2270 = vld [vmem:[%s2266 + $0xc] sm:$0xf]
      %v2275 = vunpack.c.l.b16 %v2267
      %v2276 = vunpack.c.l.b16 %v2268
      %v2277 = vunpack.c.l.b16 %v2269
      %v2278 = vunpack.c.l.b16 %v2270
      %v2279 = vpack.c.b16 %v2276, %v2275
      %v2280 = vpack.c.b16 %v2278, %v2277
      %v2282 = vsel %vm2029, %v2279, 0
      %v2285 = vsel %vm2029, %v2280, 0
      %2287 = vmatprep.subr.bf16.mxu0 0
      %2288 = vmatpush1.bf16.msra.mxu0 0
      %2289 = vmatprep.subr.bf16.mxu0 0
      %2290 = vmatpush1.bf16.msra.mxu0 0
      %2291 = vmatprep.subr.bf16.mxu0 0
      %2292 = vmatpush1.bf16.msra.mxu0 0
      %2293 = vmatprep.subr.bf16.mxu0 0
      %2294 = vmatpush1.bf16.msra.mxu0 0
      %2295 = vmatprep.subr.bf16.mxu0 0
      %2296 = vmatpush1.bf16.msra.mxu0 0
      %2297 = vmatprep.subr.bf16.mxu0 0
      %2298 = vmatpush1.bf16.msra.mxu0 0
      %2299 = vmatprep.subr.bf16.mxu0 0
      %2300 = vmatpush1.bf16.msra.mxu0 %v2265
      %2301 = vmatprep.subr.bf16.mxu0 0
      %2302 = vmatpush1.bf16.msra.mxu0 %v2264
      %2303 = vmatprep.subr.bf16.mxu0 0
      %2304 = vmatpush2.bf16.msra.mxu0 0
      %2305 = vmatprep.subr.bf16.mxu0 0
      %2306 = vmatpush2.bf16.msra.mxu0 0
      %2307 = vmatprep.subr.bf16.mxu0 0
      %2308 = vmatpush2.bf16.msra.mxu0 0
      %2309 = vmatprep.subr.bf16.mxu0 0
      %2310 = vmatpush2.bf16.msra.mxu0 0
      %2311 = vmatprep.subr.bf16.mxu0 0
      %2312 = vmatpush2.bf16.msra.mxu0 0
      %2313 = vmatprep.subr.bf16.mxu0 0
      %2314 = vmatpush2.bf16.msra.mxu0 0
      %2315 = vmatprep.subr.bf16.mxu0 0
      %2316 = vmatpush2.bf16.msra.mxu0 0
      %2317 = vmatprep.subr.bf16.mxu0 0
      %2318 = vmatpush2.bf16.msra.mxu0 0
      %2319 = vmatprep.mubr.bf16.mxu0 0
      %2320 = vmatmul.mubr.bf16.gmra.mxu0 %v2282
      %v2321 = vpop.f32.mrf.mxu0
      %v2322 = vadd.f32 0.0, %v2321
      %v2323 = vpop.f32.mrf.mxu0
      %v2324 = vpop.f32.mrf.mxu0
      %v2325 = vadd.f32 0.0, %v2324
      %v2326 = vpop.f32.mrf.mxu0
      %2327 = vmatprep.mubr.bf16.mxu0 0
      %2328 = vmatmul.mubr.bf16.gmra.mxu0 %v2285
      %v2329 = vpop.f32.mrf.mxu0
      %v2330 = vadd.f32 0.0, %v2329
      %v2331 = vpop.f32.mrf.mxu0
      %v2332 = vpop.f32.mrf.mxu0
      %v2333 = vadd.f32 0.0, %v2332
      %v2334 = vpop.f32.mrf.mxu0
      %2335 = vdwg.mxu0
      %v2336 = vadd.f32 %v2136, %v2322
      %v2337 = vadd.f32 %v2139, %v2325
      %v2338 = vadd.f32 %v2144, %v2330
      %v2339 = vadd.f32 %v2147, %v2333
      %s2340 = scalar_lea.vmem %s5, 192
      %v2341 = vld [vmem:[%s2340] sm:$0xf]
      %v2342 = vld [vmem:[%s2340 + $0x4] sm:$0xf]
      %v2343 = vld [vmem:[%s2340 + $0x8] sm:$0xf]
      %v2344 = vld [vmem:[%s2340 + $0xc] sm:$0xf]
      %v2345 = vld [vmem:[%s2340 + $0x10] sm:$0xf]
      %v2346 = vld [vmem:[%s2340 + $0x14] sm:$0xf]
      %v2347 = vld [vmem:[%s2340 + $0x18] sm:$0xf]
      %v2348 = vld [vmem:[%s2340 + $0x1c] sm:$0xf]
      %v2349 = vld [vmem:[%s2340 + $0x20] sm:$0xf]
      %v2350 = vld [vmem:[%s2340 + $0x24] sm:$0xf]
      %v2351 = vld [vmem:[%s2340 + $0x28] sm:$0xf]
      %v2352 = vld [vmem:[%s2340 + $0x2c] sm:$0xf]
      %v2353 = vld [vmem:[%s2340 + $0x30] sm:$0xf]
      %v2354 = vld [vmem:[%s2340 + $0x34] sm:$0xf]
      %v2355 = vld [vmem:[%s2340 + $0x38] sm:$0xf]
      %v2356 = vld [vmem:[%s2340 + $0x3c] sm:$0xf]
      %v2373 = vunpack.c.l.b16 %v2341
      %v2374 = vunpack.c.l.b16 %v2342
      %v2375 = vunpack.c.l.b16 %v2343
      %v2376 = vunpack.c.l.b16 %v2344
      %v2377 = vunpack.c.l.b16 %v2345
      %v2378 = vunpack.c.l.b16 %v2346
      %v2379 = vunpack.c.l.b16 %v2347
      %v2380 = vunpack.c.l.b16 %v2348
      %v2381 = vunpack.c.l.b16 %v2349
      %v2382 = vunpack.c.l.b16 %v2350
      %v2383 = vunpack.c.l.b16 %v2351
      %v2384 = vunpack.c.l.b16 %v2352
      %v2385 = vunpack.c.l.b16 %v2353
      %v2386 = vunpack.c.l.b16 %v2354
      %v2387 = vunpack.c.l.b16 %v2355
      %v2388 = vunpack.c.l.b16 %v2356
      %v2389 = vpack.c.b16 %v2374, %v2373
      %v2390 = vpack.c.b16 %v2376, %v2375
      %v2391 = vpack.c.b16 %v2378, %v2377
      %v2392 = vpack.c.b16 %v2380, %v2379
      %v2393 = vpack.c.b16 %v2382, %v2381
      %v2394 = vpack.c.b16 %v2384, %v2383
      %v2395 = vpack.c.b16 %v2386, %v2385
      %v2396 = vpack.c.b16 %v2388, %v2387
      %2405 = vmatprep.subr.bf16.mxu0 0
      %2406 = vmatpush1.bf16.msra.mxu0 %v2396
      %2407 = vmatprep.subr.bf16.mxu0 0
      %2408 = vmatpush1.bf16.msra.mxu0 %v2395
      %2409 = vmatprep.subr.bf16.mxu0 0
      %2410 = vmatpush1.bf16.msra.mxu0 %v2394
      %2411 = vmatprep.subr.bf16.mxu0 0
      %2412 = vmatpush1.bf16.msra.mxu0 %v2393
      %2413 = vmatprep.subr.bf16.mxu0 0
      %2414 = vmatpush1.bf16.msra.mxu0 %v2392
      %2415 = vmatprep.subr.bf16.mxu0 0
      %2416 = vmatpush1.bf16.msra.mxu0 %v2391
      %2417 = vmatprep.subr.bf16.mxu0 0
      %2418 = vmatpush1.bf16.msra.mxu0 %v2390
      %2419 = vmatprep.subr.bf16.mxu0 0
      %2420 = vmatpush1.bf16.msra.mxu0 %v2389
      %2421 = vmatprep.subr.bf16.mxu0 0
      %2422 = vmatpush2.bf16.msra.mxu0 0
      %2423 = vmatprep.subr.bf16.mxu0 0
      %2424 = vmatpush2.bf16.msra.mxu0 0
      %2425 = vmatprep.subr.bf16.mxu0 0
      %2426 = vmatpush2.bf16.msra.mxu0 0
      %2427 = vmatprep.subr.bf16.mxu0 0
      %2428 = vmatpush2.bf16.msra.mxu0 0
      %2429 = vmatprep.subr.bf16.mxu0 0
      %2430 = vmatpush2.bf16.msra.mxu0 0
      %2431 = vmatprep.subr.bf16.mxu0 0
      %2432 = vmatpush2.bf16.msra.mxu0 0
      %2433 = vmatprep.subr.bf16.mxu0 0
      %2434 = vmatpush2.bf16.msra.mxu0 0
      %2435 = vmatprep.subr.bf16.mxu0 0
      %2436 = vmatpush2.bf16.msra.mxu0 0
      %2437 = vmatprep.mubr.bf16.mxu0 0
      %2438 = vmatmul.mubr.bf16.gmra.mxu0 %v1759
      %v2439 = vpop.f32.mrf.mxu0
      %v2440 = vadd.f32 0.0, %v2439
      %v2441 = vpop.f32.mrf.mxu0
      %v2442 = vpop.f32.mrf.mxu0
      %v2443 = vadd.f32 0.0, %v2442
      %v2444 = vpop.f32.mrf.mxu0
      %2445 = vmatprep.mubr.bf16.mxu0 0
      %2446 = vmatmul.mubr.bf16.gmra.mxu0 %v1760
      %v2447 = vpop.f32.mrf.mxu0
      %v2448 = vadd.f32 0.0, %v2447
      %v2449 = vpop.f32.mrf.mxu0
      %v2450 = vpop.f32.mrf.mxu0
      %v2451 = vadd.f32 0.0, %v2450
      %v2452 = vpop.f32.mrf.mxu0
      %2453 = vdwg.mxu0
      %v2454 = vpack.c.bf16 %v2443, %v2440
      %v2455 = vpack.c.bf16 %v2451, %v2448
      %s2456 = scalar_lea.vmem %s6, 48
      %v2457 = vld [vmem:[%s2456] sm:$0xf]
      %v2458 = vld [vmem:[%s2456 + $0x4] sm:$0xf]
      %v2459 = vld [vmem:[%s2456 + $0x8] sm:$0xf]
      %v2460 = vld [vmem:[%s2456 + $0xc] sm:$0xf]
      %v2465 = vunpack.c.l.b16 %v2457
      %v2466 = vunpack.c.l.b16 %v2458
      %v2467 = vunpack.c.l.b16 %v2459
      %v2468 = vunpack.c.l.b16 %v2460
      %v2469 = vpack.c.b16 %v2466, %v2465
      %v2470 = vpack.c.b16 %v2468, %v2467
      %v2472 = vsel %vm2029, %v2469, 0
      %v2475 = vsel %vm2029, %v2470, 0
      %2477 = vmatprep.subr.bf16.mxu0 0
      %2478 = vmatpush1.bf16.msra.mxu0 0
      %2479 = vmatprep.subr.bf16.mxu0 0
      %2480 = vmatpush1.bf16.msra.mxu0 0
      %2481 = vmatprep.subr.bf16.mxu0 0
      %2482 = vmatpush1.bf16.msra.mxu0 0
      %2483 = vmatprep.subr.bf16.mxu0 0
      %2484 = vmatpush1.bf16.msra.mxu0 0
      %2485 = vmatprep.subr.bf16.mxu0 0
      %2486 = vmatpush1.bf16.msra.mxu0 0
      %2487 = vmatprep.subr.bf16.mxu0 0
      %2488 = vmatpush1.bf16.msra.mxu0 0
      %2489 = vmatprep.subr.bf16.mxu0 0
      %2490 = vmatpush1.bf16.msra.mxu0 %v2455
      %2491 = vmatprep.subr.bf16.mxu0 0
      %2492 = vmatpush1.bf16.msra.mxu0 %v2454
      %2493 = vmatprep.subr.bf16.mxu0 0
      %2494 = vmatpush2.bf16.msra.mxu0 0
      %2495 = vmatprep.subr.bf16.mxu0 0
      %2496 = vmatpush2.bf16.msra.mxu0 0
      %2497 = vmatprep.subr.bf16.mxu0 0
      %2498 = vmatpush2.bf16.msra.mxu0 0
      %2499 = vmatprep.subr.bf16.mxu0 0
      %2500 = vmatpush2.bf16.msra.mxu0 0
      %2501 = vmatprep.subr.bf16.mxu0 0
      %2502 = vmatpush2.bf16.msra.mxu0 0
      %2503 = vmatprep.subr.bf16.mxu0 0
      %2504 = vmatpush2.bf16.msra.mxu0 0
      %2505 = vmatprep.subr.bf16.mxu0 0
      %2506 = vmatpush2.bf16.msra.mxu0 0
      %2507 = vmatprep.subr.bf16.mxu0 0
      %2508 = vmatpush2.bf16.msra.mxu0 0
      %2509 = vmatprep.mubr.bf16.mxu0 0
      %2510 = vmatmul.mubr.bf16.gmra.mxu0 %v2472
      %v2511 = vpop.f32.mrf.mxu0
      %v2512 = vadd.f32 0.0, %v2511
      %v2513 = vpop.f32.mrf.mxu0
      %v2514 = vpop.f32.mrf.mxu0
      %v2515 = vadd.f32 0.0, %v2514
      %v2516 = vpop.f32.mrf.mxu0
      %2517 = vmatprep.mubr.bf16.mxu0 0
      %2518 = vmatmul.mubr.bf16.gmra.mxu0 %v2475
      %v2519 = vpop.f32.mrf.mxu0
      %v2520 = vadd.f32 0.0, %v2519
      %v2521 = vpop.f32.mrf.mxu0
      %v2522 = vpop.f32.mrf.mxu0
      %v2523 = vadd.f32 0.0, %v2522
      %v2524 = vpop.f32.mrf.mxu0
      %2525 = vdwg.mxu0
      %v2526 = vadd.f32 %v2336, %v2512
      %v2527 = vadd.f32 %v2337, %v2515
      %v2528 = vadd.f32 %v2338, %v2520
      %v2529 = vadd.f32 %v2339, %v2523
      %s2530 = scalar_lea.vmem %s5, 256
      %v2531 = vld [vmem:[%s2530] sm:$0xf]
      %v2532 = vld [vmem:[%s2530 + $0x4] sm:$0xf]
      %v2533 = vld [vmem:[%s2530 + $0x8] sm:$0xf]
      %v2534 = vld [vmem:[%s2530 + $0xc] sm:$0xf]
      %v2535 = vld [vmem:[%s2530 + $0x10] sm:$0xf]
      %v2536 = vld [vmem:[%s2530 + $0x14] sm:$0xf]
      %v2537 = vld [vmem:[%s2530 + $0x18] sm:$0xf]
      %v2538 = vld [vmem:[%s2530 + $0x1c] sm:$0xf]
      %v2539 = vld [vmem:[%s2530 + $0x20] sm:$0xf]
      %v2540 = vld [vmem:[%s2530 + $0x24] sm:$0xf]
      %v2541 = vld [vmem:[%s2530 + $0x28] sm:$0xf]
      %v2542 = vld [vmem:[%s2530 + $0x2c] sm:$0xf]
      %v2543 = vld [vmem:[%s2530 + $0x30] sm:$0xf]
      %v2544 = vld [vmem:[%s2530 + $0x34] sm:$0xf]
      %v2545 = vld [vmem:[%s2530 + $0x38] sm:$0xf]
      %v2546 = vld [vmem:[%s2530 + $0x3c] sm:$0xf]
      %v2563 = vunpack.c.l.b16 %v2531
      %v2564 = vunpack.c.l.b16 %v2532
      %v2565 = vunpack.c.l.b16 %v2533
      %v2566 = vunpack.c.l.b16 %v2534
      %v2567 = vunpack.c.l.b16 %v2535
      %v2568 = vunpack.c.l.b16 %v2536
      %v2569 = vunpack.c.l.b16 %v2537
      %v2570 = vunpack.c.l.b16 %v2538
      %v2571 = vunpack.c.l.b16 %v2539
      %v2572 = vunpack.c.l.b16 %v2540
      %v2573 = vunpack.c.l.b16 %v2541
      %v2574 = vunpack.c.l.b16 %v2542
      %v2575 = vunpack.c.l.b16 %v2543
      %v2576 = vunpack.c.l.b16 %v2544
      %v2577 = vunpack.c.l.b16 %v2545
      %v2578 = vunpack.c.l.b16 %v2546
      %v2579 = vpack.c.b16 %v2564, %v2563
      %v2580 = vpack.c.b16 %v2566, %v2565
      %v2581 = vpack.c.b16 %v2568, %v2567
      %v2582 = vpack.c.b16 %v2570, %v2569
      %v2583 = vpack.c.b16 %v2572, %v2571
      %v2584 = vpack.c.b16 %v2574, %v2573
      %v2585 = vpack.c.b16 %v2576, %v2575
      %v2586 = vpack.c.b16 %v2578, %v2577
      %2595 = vmatprep.subr.bf16.mxu0 0
      %2596 = vmatpush1.bf16.msra.mxu0 %v2586
      %2597 = vmatprep.subr.bf16.mxu0 0
      %2598 = vmatpush1.bf16.msra.mxu0 %v2585
      %2599 = vmatprep.subr.bf16.mxu0 0
      %2600 = vmatpush1.bf16.msra.mxu0 %v2584
      %2601 = vmatprep.subr.bf16.mxu0 0
      %2602 = vmatpush1.bf16.msra.mxu0 %v2583
      %2603 = vmatprep.subr.bf16.mxu0 0
      %2604 = vmatpush1.bf16.msra.mxu0 %v2582
      %2605 = vmatprep.subr.bf16.mxu0 0
      %2606 = vmatpush1.bf16.msra.mxu0 %v2581
      %2607 = vmatprep.subr.bf16.mxu0 0
      %2608 = vmatpush1.bf16.msra.mxu0 %v2580
      %2609 = vmatprep.subr.bf16.mxu0 0
      %2610 = vmatpush1.bf16.msra.mxu0 %v2579
      %2611 = vmatprep.subr.bf16.mxu0 0
      %2612 = vmatpush2.bf16.msra.mxu0 0
      %2613 = vmatprep.subr.bf16.mxu0 0
      %2614 = vmatpush2.bf16.msra.mxu0 0
      %2615 = vmatprep.subr.bf16.mxu0 0
      %2616 = vmatpush2.bf16.msra.mxu0 0
      %2617 = vmatprep.subr.bf16.mxu0 0
      %2618 = vmatpush2.bf16.msra.mxu0 0
      %2619 = vmatprep.subr.bf16.mxu0 0
      %2620 = vmatpush2.bf16.msra.mxu0 0
      %2621 = vmatprep.subr.bf16.mxu0 0
      %2622 = vmatpush2.bf16.msra.mxu0 0
      %2623 = vmatprep.subr.bf16.mxu0 0
      %2624 = vmatpush2.bf16.msra.mxu0 0
      %2625 = vmatprep.subr.bf16.mxu0 0
      %2626 = vmatpush2.bf16.msra.mxu0 0
      %2627 = vmatprep.mubr.bf16.mxu0 0
      %2628 = vmatmul.mubr.bf16.gmra.mxu0 %v1759
      %v2629 = vpop.f32.mrf.mxu0
      %v2630 = vadd.f32 0.0, %v2629
      %v2631 = vpop.f32.mrf.mxu0
      %v2632 = vpop.f32.mrf.mxu0
      %v2633 = vadd.f32 0.0, %v2632
      %v2634 = vpop.f32.mrf.mxu0
      %2635 = vmatprep.mubr.bf16.mxu0 0
      %2636 = vmatmul.mubr.bf16.gmra.mxu0 %v1760
      %v2637 = vpop.f32.mrf.mxu0
      %v2638 = vadd.f32 0.0, %v2637
      %v2639 = vpop.f32.mrf.mxu0
      %v2640 = vpop.f32.mrf.mxu0
      %v2641 = vadd.f32 0.0, %v2640
      %v2642 = vpop.f32.mrf.mxu0
      %2643 = vdwg.mxu0
      %v2644 = vpack.c.bf16 %v2633, %v2630
      %v2645 = vpack.c.bf16 %v2641, %v2638
      %s2646 = scalar_lea.vmem %s6, 64
      %v2647 = vld [vmem:[%s2646] sm:$0xf]
      %v2648 = vld [vmem:[%s2646 + $0x4] sm:$0xf]
      %v2649 = vld [vmem:[%s2646 + $0x8] sm:$0xf]
      %v2650 = vld [vmem:[%s2646 + $0xc] sm:$0xf]
      %v2655 = vunpack.c.l.b16 %v2647
      %v2656 = vunpack.c.l.b16 %v2648
      %v2657 = vunpack.c.l.b16 %v2649
      %v2658 = vunpack.c.l.b16 %v2650
      %v2659 = vpack.c.b16 %v2656, %v2655
      %v2660 = vpack.c.b16 %v2658, %v2657
      %v2662 = vsel %vm2029, %v2659, 0
      %v2665 = vsel %vm2029, %v2660, 0
      %2667 = vmatprep.subr.bf16.mxu0 0
      %2668 = vmatpush1.bf16.msra.mxu0 0
      %2669 = vmatprep.subr.bf16.mxu0 0
      %2670 = vmatpush1.bf16.msra.mxu0 0
      %2671 = vmatprep.subr.bf16.mxu0 0
      %2672 = vmatpush1.bf16.msra.mxu0 0
      %2673 = vmatprep.subr.bf16.mxu0 0
      %2674 = vmatpush1.bf16.msra.mxu0 0
      %2675 = vmatprep.subr.bf16.mxu0 0
      %2676 = vmatpush1.bf16.msra.mxu0 0
      %2677 = vmatprep.subr.bf16.mxu0 0
      %2678 = vmatpush1.bf16.msra.mxu0 0
      %2679 = vmatprep.subr.bf16.mxu0 0
      %2680 = vmatpush1.bf16.msra.mxu0 %v2645
      %2681 = vmatprep.subr.bf16.mxu0 0
      %2682 = vmatpush1.bf16.msra.mxu0 %v2644
      %2683 = vmatprep.subr.bf16.mxu0 0
      %2684 = vmatpush2.bf16.msra.mxu0 0
      %2685 = vmatprep.subr.bf16.mxu0 0
      %2686 = vmatpush2.bf16.msra.mxu0 0
      %2687 = vmatprep.subr.bf16.mxu0 0
      %2688 = vmatpush2.bf16.msra.mxu0 0
      %2689 = vmatprep.subr.bf16.mxu0 0
      %2690 = vmatpush2.bf16.msra.mxu0 0
      %2691 = vmatprep.subr.bf16.mxu0 0
      %2692 = vmatpush2.bf16.msra.mxu0 0
      %2693 = vmatprep.subr.bf16.mxu0 0
      %2694 = vmatpush2.bf16.msra.mxu0 0
      %2695 = vmatprep.subr.bf16.mxu0 0
      %2696 = vmatpush2.bf16.msra.mxu0 0
      %2697 = vmatprep.subr.bf16.mxu0 0
      %2698 = vmatpush2.bf16.msra.mxu0 0
      %2699 = vmatprep.mubr.bf16.mxu0 0
      %2700 = vmatmul.mubr.bf16.gmra.mxu0 %v2662
      %v2701 = vpop.f32.mrf.mxu0
      %v2702 = vadd.f32 0.0, %v2701
      %v2703 = vpop.f32.mrf.mxu0
      %v2704 = vpop.f32.mrf.mxu0
      %v2705 = vadd.f32 0.0, %v2704
      %v2706 = vpop.f32.mrf.mxu0
      %2707 = vmatprep.mubr.bf16.mxu0 0
      %2708 = vmatmul.mubr.bf16.gmra.mxu0 %v2665
      %v2709 = vpop.f32.mrf.mxu0
      %v2710 = vadd.f32 0.0, %v2709
      %v2711 = vpop.f32.mrf.mxu0
      %v2712 = vpop.f32.mrf.mxu0
      %v2713 = vadd.f32 0.0, %v2712
      %v2714 = vpop.f32.mrf.mxu0
      %2715 = vdwg.mxu0
      %v2716 = vadd.f32 %v2526, %v2702
      %v2717 = vadd.f32 %v2527, %v2705
      %v2718 = vadd.f32 %v2528, %v2710
      %v2719 = vadd.f32 %v2529, %v2713
      %s2720 = scalar_lea.vmem %s5, 320
      %v2721 = vld [vmem:[%s2720] sm:$0xf]
      %v2722 = vld [vmem:[%s2720 + $0x4] sm:$0xf]
      %v2723 = vld [vmem:[%s2720 + $0x8] sm:$0xf]
      %v2724 = vld [vmem:[%s2720 + $0xc] sm:$0xf]
      %v2725 = vld [vmem:[%s2720 + $0x10] sm:$0xf]
      %v2726 = vld [vmem:[%s2720 + $0x14] sm:$0xf]
      %v2727 = vld [vmem:[%s2720 + $0x18] sm:$0xf]
      %v2728 = vld [vmem:[%s2720 + $0x1c] sm:$0xf]
      %v2729 = vld [vmem:[%s2720 + $0x20] sm:$0xf]
      %v2730 = vld [vmem:[%s2720 + $0x24] sm:$0xf]
      %v2731 = vld [vmem:[%s2720 + $0x28] sm:$0xf]
      %v2732 = vld [vmem:[%s2720 + $0x2c] sm:$0xf]
      %v2733 = vld [vmem:[%s2720 + $0x30] sm:$0xf]
      %v2734 = vld [vmem:[%s2720 + $0x34] sm:$0xf]
      %v2735 = vld [vmem:[%s2720 + $0x38] sm:$0xf]
      %v2736 = vld [vmem:[%s2720 + $0x3c] sm:$0xf]
      %v2753 = vunpack.c.l.b16 %v2721
      %v2754 = vunpack.c.l.b16 %v2722
      %v2755 = vunpack.c.l.b16 %v2723
      %v2756 = vunpack.c.l.b16 %v2724
      %v2757 = vunpack.c.l.b16 %v2725
      %v2758 = vunpack.c.l.b16 %v2726
      %v2759 = vunpack.c.l.b16 %v2727
      %v2760 = vunpack.c.l.b16 %v2728
      %v2761 = vunpack.c.l.b16 %v2729
      %v2762 = vunpack.c.l.b16 %v2730
      %v2763 = vunpack.c.l.b16 %v2731
      %v2764 = vunpack.c.l.b16 %v2732
      %v2765 = vunpack.c.l.b16 %v2733
      %v2766 = vunpack.c.l.b16 %v2734
      %v2767 = vunpack.c.l.b16 %v2735
      %v2768 = vunpack.c.l.b16 %v2736
      %v2769 = vpack.c.b16 %v2754, %v2753
      %v2770 = vpack.c.b16 %v2756, %v2755
      %v2771 = vpack.c.b16 %v2758, %v2757
      %v2772 = vpack.c.b16 %v2760, %v2759
      %v2773 = vpack.c.b16 %v2762, %v2761
      %v2774 = vpack.c.b16 %v2764, %v2763
      %v2775 = vpack.c.b16 %v2766, %v2765
      %v2776 = vpack.c.b16 %v2768, %v2767
      %2785 = vmatprep.subr.bf16.mxu0 0
      %2786 = vmatpush1.bf16.msra.mxu0 %v2776
      %2787 = vmatprep.subr.bf16.mxu0 0
      %2788 = vmatpush1.bf16.msra.mxu0 %v2775
      %2789 = vmatprep.subr.bf16.mxu0 0
      %2790 = vmatpush1.bf16.msra.mxu0 %v2774
      %2791 = vmatprep.subr.bf16.mxu0 0
      %2792 = vmatpush1.bf16.msra.mxu0 %v2773
      %2793 = vmatprep.subr.bf16.mxu0 0
      %2794 = vmatpush1.bf16.msra.mxu0 %v2772
      %2795 = vmatprep.subr.bf16.mxu0 0
      %2796 = vmatpush1.bf16.msra.mxu0 %v2771
      %2797 = vmatprep.subr.bf16.mxu0 0
      %2798 = vmatpush1.bf16.msra.mxu0 %v2770
      %2799 = vmatprep.subr.bf16.mxu0 0
      %2800 = vmatpush1.bf16.msra.mxu0 %v2769
      %2801 = vmatprep.subr.bf16.mxu0 0
      %2802 = vmatpush2.bf16.msra.mxu0 0
      %2803 = vmatprep.subr.bf16.mxu0 0
      %2804 = vmatpush2.bf16.msra.mxu0 0
      %2805 = vmatprep.subr.bf16.mxu0 0
      %2806 = vmatpush2.bf16.msra.mxu0 0
      %2807 = vmatprep.subr.bf16.mxu0 0
      %2808 = vmatpush2.bf16.msra.mxu0 0
      %2809 = vmatprep.subr.bf16.mxu0 0
      %2810 = vmatpush2.bf16.msra.mxu0 0
      %2811 = vmatprep.subr.bf16.mxu0 0
      %2812 = vmatpush2.bf16.msra.mxu0 0
      %2813 = vmatprep.subr.bf16.mxu0 0
      %2814 = vmatpush2.bf16.msra.mxu0 0
      %2815 = vmatprep.subr.bf16.mxu0 0
      %2816 = vmatpush2.bf16.msra.mxu0 0
      %2817 = vmatprep.mubr.bf16.mxu0 0
      %2818 = vmatmul.mubr.bf16.gmra.mxu0 %v1759
      %v2819 = vpop.f32.mrf.mxu0
      %v2820 = vadd.f32 0.0, %v2819
      %v2821 = vpop.f32.mrf.mxu0
      %v2822 = vpop.f32.mrf.mxu0
      %v2823 = vadd.f32 0.0, %v2822
      %v2824 = vpop.f32.mrf.mxu0
      %2825 = vmatprep.mubr.bf16.mxu0 0
      %2826 = vmatmul.mubr.bf16.gmra.mxu0 %v1760
      %v2827 = vpop.f32.mrf.mxu0
      %v2828 = vadd.f32 0.0, %v2827
      %v2829 = vpop.f32.mrf.mxu0
      %v2830 = vpop.f32.mrf.mxu0
      %v2831 = vadd.f32 0.0, %v2830
      %v2832 = vpop.f32.mrf.mxu0
      %2833 = vdwg.mxu0
      %v2834 = vpack.c.bf16 %v2823, %v2820
      %v2835 = vpack.c.bf16 %v2831, %v2828
      %s2836 = scalar_lea.vmem %s6, 80
      %v2837 = vld [vmem:[%s2836] sm:$0xf]
      %v2838 = vld [vmem:[%s2836 + $0x4] sm:$0xf]
      %v2839 = vld [vmem:[%s2836 + $0x8] sm:$0xf]
      %v2840 = vld [vmem:[%s2836 + $0xc] sm:$0xf]
      %v2845 = vunpack.c.l.b16 %v2837
      %v2846 = vunpack.c.l.b16 %v2838
      %v2847 = vunpack.c.l.b16 %v2839
      %v2848 = vunpack.c.l.b16 %v2840
      %v2849 = vpack.c.b16 %v2846, %v2845
      %v2850 = vpack.c.b16 %v2848, %v2847
      %v2852 = vsel %vm2029, %v2849, 0
      %v2855 = vsel %vm2029, %v2850, 0
      %2857 = vmatprep.subr.bf16.mxu0 0
      %2858 = vmatpush1.bf16.msra.mxu0 0
      %2859 = vmatprep.subr.bf16.mxu0 0
      %2860 = vmatpush1.bf16.msra.mxu0 0
      %2861 = vmatprep.subr.bf16.mxu0 0
      %2862 = vmatpush1.bf16.msra.mxu0 0
      %2863 = vmatprep.subr.bf16.mxu0 0
      %2864 = vmatpush1.bf16.msra.mxu0 0
      %2865 = vmatprep.subr.bf16.mxu0 0
      %2866 = vmatpush1.bf16.msra.mxu0 0
      %2867 = vmatprep.subr.bf16.mxu0 0
      %2868 = vmatpush1.bf16.msra.mxu0 0
      %2869 = vmatprep.subr.bf16.mxu0 0
      %2870 = vmatpush1.bf16.msra.mxu0 %v2835
      %2871 = vmatprep.subr.bf16.mxu0 0
      %2872 = vmatpush1.bf16.msra.mxu0 %v2834
      %2873 = vmatprep.subr.bf16.mxu0 0
      %2874 = vmatpush2.bf16.msra.mxu0 0
      %2875 = vmatprep.subr.bf16.mxu0 0
      %2876 = vmatpush2.bf16.msra.mxu0 0
      %2877 = vmatprep.subr.bf16.mxu0 0
      %2878 = vmatpush2.bf16.msra.mxu0 0
      %2879 = vmatprep.subr.bf16.mxu0 0
      %2880 = vmatpush2.bf16.msra.mxu0 0
      %2881 = vmatprep.subr.bf16.mxu0 0
      %2882 = vmatpush2.bf16.msra.mxu0 0
      %2883 = vmatprep.subr.bf16.mxu0 0
      %2884 = vmatpush2.bf16.msra.mxu0 0
      %2885 = vmatprep.subr.bf16.mxu0 0
      %2886 = vmatpush2.bf16.msra.mxu0 0
      %2887 = vmatprep.subr.bf16.mxu0 0
      %2888 = vmatpush2.bf16.msra.mxu0 0
      %2889 = vmatprep.mubr.bf16.mxu0 0
      %2890 = vmatmul.mubr.bf16.gmra.mxu0 %v2852
      %v2891 = vpop.f32.mrf.mxu0
      %v2892 = vadd.f32 0.0, %v2891
      %v2893 = vpop.f32.mrf.mxu0
      %v2894 = vpop.f32.mrf.mxu0
      %v2895 = vadd.f32 0.0, %v2894
      %v2896 = vpop.f32.mrf.mxu0
      %2897 = vmatprep.mubr.bf16.mxu0 0
      %2898 = vmatmul.mubr.bf16.gmra.mxu0 %v2855
      %v2899 = vpop.f32.mrf.mxu0
      %v2900 = vadd.f32 0.0, %v2899
      %v2901 = vpop.f32.mrf.mxu0
      %v2902 = vpop.f32.mrf.mxu0
      %v2903 = vadd.f32 0.0, %v2902
      %v2904 = vpop.f32.mrf.mxu0
      %2905 = vdwg.mxu0
      %v2906 = vadd.f32 %v2716, %v2892
      %v2907 = vadd.f32 %v2717, %v2895
      %v2908 = vadd.f32 %v2718, %v2900
      %v2909 = vadd.f32 %v2719, %v2903
      %s2910 = scalar_lea.vmem %s5, 384
      %v2911 = vld [vmem:[%s2910] sm:$0xf]
      %v2912 = vld [vmem:[%s2910 + $0x4] sm:$0xf]
      %v2913 = vld [vmem:[%s2910 + $0x8] sm:$0xf]
      %v2914 = vld [vmem:[%s2910 + $0xc] sm:$0xf]
      %v2915 = vld [vmem:[%s2910 + $0x10] sm:$0xf]
      %v2916 = vld [vmem:[%s2910 + $0x14] sm:$0xf]
      %v2917 = vld [vmem:[%s2910 + $0x18] sm:$0xf]
      %v2918 = vld [vmem:[%s2910 + $0x1c] sm:$0xf]
      %v2919 = vld [vmem:[%s2910 + $0x20] sm:$0xf]
      %v2920 = vld [vmem:[%s2910 + $0x24] sm:$0xf]
      %v2921 = vld [vmem:[%s2910 + $0x28] sm:$0xf]
      %v2922 = vld [vmem:[%s2910 + $0x2c] sm:$0xf]
      %v2923 = vld [vmem:[%s2910 + $0x30] sm:$0xf]
      %v2924 = vld [vmem:[%s2910 + $0x34] sm:$0xf]
      %v2925 = vld [vmem:[%s2910 + $0x38] sm:$0xf]
      %v2926 = vld [vmem:[%s2910 + $0x3c] sm:$0xf]
      %v2943 = vunpack.c.l.b16 %v2911
      %v2944 = vunpack.c.l.b16 %v2912
      %v2945 = vunpack.c.l.b16 %v2913
      %v2946 = vunpack.c.l.b16 %v2914
      %v2947 = vunpack.c.l.b16 %v2915
      %v2948 = vunpack.c.l.b16 %v2916
      %v2949 = vunpack.c.l.b16 %v2917
      %v2950 = vunpack.c.l.b16 %v2918
      %v2951 = vunpack.c.l.b16 %v2919
      %v2952 = vunpack.c.l.b16 %v2920
      %v2953 = vunpack.c.l.b16 %v2921
      %v2954 = vunpack.c.l.b16 %v2922
      %v2955 = vunpack.c.l.b16 %v2923
      %v2956 = vunpack.c.l.b16 %v2924
      %v2957 = vunpack.c.l.b16 %v2925
      %v2958 = vunpack.c.l.b16 %v2926
      %v2959 = vpack.c.b16 %v2944, %v2943
      %v2960 = vpack.c.b16 %v2946, %v2945
      %v2961 = vpack.c.b16 %v2948, %v2947
      %v2962 = vpack.c.b16 %v2950, %v2949
      %v2963 = vpack.c.b16 %v2952, %v2951
      %v2964 = vpack.c.b16 %v2954, %v2953
      %v2965 = vpack.c.b16 %v2956, %v2955
      %v2966 = vpack.c.b16 %v2958, %v2957
      %2975 = vmatprep.subr.bf16.mxu0 0
      %2976 = vmatpush1.bf16.msra.mxu0 %v2966
      %2977 = vmatprep.subr.bf16.mxu0 0
      %2978 = vmatpush1.bf16.msra.mxu0 %v2965
      %2979 = vmatprep.subr.bf16.mxu0 0
      %2980 = vmatpush1.bf16.msra.mxu0 %v2964
      %2981 = vmatprep.subr.bf16.mxu0 0
      %2982 = vmatpush1.bf16.msra.mxu0 %v2963
      %2983 = vmatprep.subr.bf16.mxu0 0
      %2984 = vmatpush1.bf16.msra.mxu0 %v2962
      %2985 = vmatprep.subr.bf16.mxu0 0
      %2986 = vmatpush1.bf16.msra.mxu0 %v2961
      %2987 = vmatprep.subr.bf16.mxu0 0
      %2988 = vmatpush1.bf16.msra.mxu0 %v2960
      %2989 = vmatprep.subr.bf16.mxu0 0
      %2990 = vmatpush1.bf16.msra.mxu0 %v2959
      %2991 = vmatprep.subr.bf16.mxu0 0
      %2992 = vmatpush2.bf16.msra.mxu0 0
      %2993 = vmatprep.subr.bf16.mxu0 0
      %2994 = vmatpush2.bf16.msra.mxu0 0
      %2995 = vmatprep.subr.bf16.mxu0 0
      %2996 = vmatpush2.bf16.msra.mxu0 0
      %2997 = vmatprep.subr.bf16.mxu0 0
      %2998 = vmatpush2.bf16.msra.mxu0 0
      %2999 = vmatprep.subr.bf16.mxu0 0
      %3000 = vmatpush2.bf16.msra.mxu0 0
      %3001 = vmatprep.subr.bf16.mxu0 0
      %3002 = vmatpush2.bf16.msra.mxu0 0
      %3003 = vmatprep.subr.bf16.mxu0 0
      %3004 = vmatpush2.bf16.msra.mxu0 0
      %3005 = vmatprep.subr.bf16.mxu0 0
      %3006 = vmatpush2.bf16.msra.mxu0 0
      %3007 = vmatprep.mubr.bf16.mxu0 0
      %3008 = vmatmul.mubr.bf16.gmra.mxu0 %v1759
      %v3009 = vpop.f32.mrf.mxu0
      %v3010 = vadd.f32 0.0, %v3009
      %v3011 = vpop.f32.mrf.mxu0
      %v3012 = vpop.f32.mrf.mxu0
      %v3013 = vadd.f32 0.0, %v3012
      %v3014 = vpop.f32.mrf.mxu0
      %3015 = vmatprep.mubr.bf16.mxu0 0
      %3016 = vmatmul.mubr.bf16.gmra.mxu0 %v1760
      %v3017 = vpop.f32.mrf.mxu0
      %v3018 = vadd.f32 0.0, %v3017
      %v3019 = vpop.f32.mrf.mxu0
      %v3020 = vpop.f32.mrf.mxu0
      %v3021 = vadd.f32 0.0, %v3020
      %v3022 = vpop.f32.mrf.mxu0
      %3023 = vdwg.mxu0
      %v3024 = vpack.c.bf16 %v3013, %v3010
      %v3025 = vpack.c.bf16 %v3021, %v3018
      %s3026 = scalar_lea.vmem %s6, 96
      %v3027 = vld [vmem:[%s3026] sm:$0xf]
      %v3028 = vld [vmem:[%s3026 + $0x4] sm:$0xf]
      %v3029 = vld [vmem:[%s3026 + $0x8] sm:$0xf]
      %v3030 = vld [vmem:[%s3026 + $0xc] sm:$0xf]
      %v3035 = vunpack.c.l.b16 %v3027
      %v3036 = vunpack.c.l.b16 %v3028
      %v3037 = vunpack.c.l.b16 %v3029
      %v3038 = vunpack.c.l.b16 %v3030
      %v3039 = vpack.c.b16 %v3036, %v3035
      %v3040 = vpack.c.b16 %v3038, %v3037
      %v3042 = vsel %vm2029, %v3039, 0
      %v3045 = vsel %vm2029, %v3040, 0
      %3047 = vmatprep.subr.bf16.mxu0 0
      %3048 = vmatpush1.bf16.msra.mxu0 0
      %3049 = vmatprep.subr.bf16.mxu0 0
      %3050 = vmatpush1.bf16.msra.mxu0 0
      %3051 = vmatprep.subr.bf16.mxu0 0
      %3052 = vmatpush1.bf16.msra.mxu0 0
      %3053 = vmatprep.subr.bf16.mxu0 0
      %3054 = vmatpush1.bf16.msra.mxu0 0
      %3055 = vmatprep.subr.bf16.mxu0 0
      %3056 = vmatpush1.bf16.msra.mxu0 0
      %3057 = vmatprep.subr.bf16.mxu0 0
      %3058 = vmatpush1.bf16.msra.mxu0 0
      %3059 = vmatprep.subr.bf16.mxu0 0
      %3060 = vmatpush1.bf16.msra.mxu0 %v3025
      %3061 = vmatprep.subr.bf16.mxu0 0
      %3062 = vmatpush1.bf16.msra.mxu0 %v3024
      %3063 = vmatprep.subr.bf16.mxu0 0
      %3064 = vmatpush2.bf16.msra.mxu0 0
      %3065 = vmatprep.subr.bf16.mxu0 0
      %3066 = vmatpush2.bf16.msra.mxu0 0
      %3067 = vmatprep.subr.bf16.mxu0 0
      %3068 = vmatpush2.bf16.msra.mxu0 0
      %3069 = vmatprep.subr.bf16.mxu0 0
      %3070 = vmatpush2.bf16.msra.mxu0 0
      %3071 = vmatprep.subr.bf16.mxu0 0
      %3072 = vmatpush2.bf16.msra.mxu0 0
      %3073 = vmatprep.subr.bf16.mxu0 0
      %3074 = vmatpush2.bf16.msra.mxu0 0
      %3075 = vmatprep.subr.bf16.mxu0 0
      %3076 = vmatpush2.bf16.msra.mxu0 0
      %3077 = vmatprep.subr.bf16.mxu0 0
      %3078 = vmatpush2.bf16.msra.mxu0 0
      %3079 = vmatprep.mubr.bf16.mxu0 0
      %3080 = vmatmul.mubr.bf16.gmra.mxu0 %v3042
      %v3081 = vpop.f32.mrf.mxu0
      %v3082 = vadd.f32 0.0, %v3081
      %v3083 = vpop.f32.mrf.mxu0
      %v3084 = vpop.f32.mrf.mxu0
      %v3085 = vadd.f32 0.0, %v3084
      %v3086 = vpop.f32.mrf.mxu0
      %3087 = vmatprep.mubr.bf16.mxu0 0
      %3088 = vmatmul.mubr.bf16.gmra.mxu0 %v3045
      %v3089 = vpop.f32.mrf.mxu0
      %v3090 = vadd.f32 0.0, %v3089
      %v3091 = vpop.f32.mrf.mxu0
      %v3092 = vpop.f32.mrf.mxu0
      %v3093 = vadd.f32 0.0, %v3092
      %v3094 = vpop.f32.mrf.mxu0
      %3095 = vdwg.mxu0
      %v3096 = vadd.f32 %v2906, %v3082
      %v3097 = vadd.f32 %v2907, %v3085
      %v3098 = vadd.f32 %v2908, %v3090
      %v3099 = vadd.f32 %v2909, %v3093
      %s3100 = scalar_lea.vmem %s5, 448
      %v3101 = vld [vmem:[%s3100] sm:$0xf]
      %v3102 = vld [vmem:[%s3100 + $0x4] sm:$0xf]
      %v3103 = vld [vmem:[%s3100 + $0x8] sm:$0xf]
      %v3104 = vld [vmem:[%s3100 + $0xc] sm:$0xf]
      %v3105 = vld [vmem:[%s3100 + $0x10] sm:$0xf]
      %v3106 = vld [vmem:[%s3100 + $0x14] sm:$0xf]
      %v3107 = vld [vmem:[%s3100 + $0x18] sm:$0xf]
      %v3108 = vld [vmem:[%s3100 + $0x1c] sm:$0xf]
      %v3109 = vld [vmem:[%s3100 + $0x20] sm:$0xf]
      %v3110 = vld [vmem:[%s3100 + $0x24] sm:$0xf]
      %v3111 = vld [vmem:[%s3100 + $0x28] sm:$0xf]
      %v3112 = vld [vmem:[%s3100 + $0x2c] sm:$0xf]
      %v3113 = vld [vmem:[%s3100 + $0x30] sm:$0xf]
      %v3114 = vld [vmem:[%s3100 + $0x34] sm:$0xf]
      %v3115 = vld [vmem:[%s3100 + $0x38] sm:$0xf]
      %v3116 = vld [vmem:[%s3100 + $0x3c] sm:$0xf]
      %v3133 = vunpack.c.l.b16 %v3101
      %v3134 = vunpack.c.l.b16 %v3102
      %v3135 = vunpack.c.l.b16 %v3103
      %v3136 = vunpack.c.l.b16 %v3104
      %v3137 = vunpack.c.l.b16 %v3105
      %v3138 = vunpack.c.l.b16 %v3106
      %v3139 = vunpack.c.l.b16 %v3107
      %v3140 = vunpack.c.l.b16 %v3108
      %v3141 = vunpack.c.l.b16 %v3109
      %v3142 = vunpack.c.l.b16 %v3110
      %v3143 = vunpack.c.l.b16 %v3111
      %v3144 = vunpack.c.l.b16 %v3112
      %v3145 = vunpack.c.l.b16 %v3113
      %v3146 = vunpack.c.l.b16 %v3114
      %v3147 = vunpack.c.l.b16 %v3115
      %v3148 = vunpack.c.l.b16 %v3116
      %v3149 = vpack.c.b16 %v3134, %v3133
      %v3150 = vpack.c.b16 %v3136, %v3135
      %v3151 = vpack.c.b16 %v3138, %v3137
      %v3152 = vpack.c.b16 %v3140, %v3139
      %v3153 = vpack.c.b16 %v3142, %v3141
      %v3154 = vpack.c.b16 %v3144, %v3143
      %v3155 = vpack.c.b16 %v3146, %v3145
      %v3156 = vpack.c.b16 %v3148, %v3147
      %3165 = vmatprep.subr.bf16.mxu0 0
      %3166 = vmatpush1.bf16.msra.mxu0 %v3156
      %3167 = vmatprep.subr.bf16.mxu0 0
      %3168 = vmatpush1.bf16.msra.mxu0 %v3155
      %3169 = vmatprep.subr.bf16.mxu0 0
      %3170 = vmatpush1.bf16.msra.mxu0 %v3154
      %3171 = vmatprep.subr.bf16.mxu0 0
      %3172 = vmatpush1.bf16.msra.mxu0 %v3153
      %3173 = vmatprep.subr.bf16.mxu0 0
      %3174 = vmatpush1.bf16.msra.mxu0 %v3152
      %3175 = vmatprep.subr.bf16.mxu0 0
      %3176 = vmatpush1.bf16.msra.mxu0 %v3151
      %3177 = vmatprep.subr.bf16.mxu0 0
      %3178 = vmatpush1.bf16.msra.mxu0 %v3150
      %3179 = vmatprep.subr.bf16.mxu0 0
      %3180 = vmatpush1.bf16.msra.mxu0 %v3149
      %3181 = vmatprep.subr.bf16.mxu0 0
      %3182 = vmatpush2.bf16.msra.mxu0 0
      %3183 = vmatprep.subr.bf16.mxu0 0
      %3184 = vmatpush2.bf16.msra.mxu0 0
      %3185 = vmatprep.subr.bf16.mxu0 0
      %3186 = vmatpush2.bf16.msra.mxu0 0
      %3187 = vmatprep.subr.bf16.mxu0 0
      %3188 = vmatpush2.bf16.msra.mxu0 0
      %3189 = vmatprep.subr.bf16.mxu0 0
      %3190 = vmatpush2.bf16.msra.mxu0 0
      %3191 = vmatprep.subr.bf16.mxu0 0
      %3192 = vmatpush2.bf16.msra.mxu0 0
      %3193 = vmatprep.subr.bf16.mxu0 0
      %3194 = vmatpush2.bf16.msra.mxu0 0
      %3195 = vmatprep.subr.bf16.mxu0 0
      %3196 = vmatpush2.bf16.msra.mxu0 0
      %3197 = vmatprep.mubr.bf16.mxu0 0
      %3198 = vmatmul.mubr.bf16.gmra.mxu0 %v1759
      %v3199 = vpop.f32.mrf.mxu0
      %v3200 = vadd.f32 0.0, %v3199
      %v3201 = vpop.f32.mrf.mxu0
      %v3202 = vpop.f32.mrf.mxu0
      %v3203 = vadd.f32 0.0, %v3202
      %v3204 = vpop.f32.mrf.mxu0
      %3205 = vmatprep.mubr.bf16.mxu0 0
      %3206 = vmatmul.mubr.bf16.gmra.mxu0 %v1760
      %v3207 = vpop.f32.mrf.mxu0
      %v3208 = vadd.f32 0.0, %v3207
      %v3209 = vpop.f32.mrf.mxu0
      %v3210 = vpop.f32.mrf.mxu0
      %v3211 = vadd.f32 0.0, %v3210
      %v3212 = vpop.f32.mrf.mxu0
      %3213 = vdwg.mxu0
      %v3214 = vpack.c.bf16 %v3203, %v3200
      %v3215 = vpack.c.bf16 %v3211, %v3208
      %s3216 = scalar_lea.vmem %s6, 112
      %v3217 = vld [vmem:[%s3216] sm:$0xf]
      %v3218 = vld [vmem:[%s3216 + $0x4] sm:$0xf]
      %v3219 = vld [vmem:[%s3216 + $0x8] sm:$0xf]
      %v3220 = vld [vmem:[%s3216 + $0xc] sm:$0xf]
      %v3225 = vunpack.c.l.b16 %v3217
      %v3226 = vunpack.c.l.b16 %v3218
      %v3227 = vunpack.c.l.b16 %v3219
      %v3228 = vunpack.c.l.b16 %v3220
      %v3229 = vpack.c.b16 %v3226, %v3225
      %v3230 = vpack.c.b16 %v3228, %v3227
      %v3232 = vsel %vm2029, %v3229, 0
      %v3235 = vsel %vm2029, %v3230, 0
      %3237 = vmatprep.subr.bf16.mxu0 0
      %3238 = vmatpush1.bf16.msra.mxu0 0
      %3239 = vmatprep.subr.bf16.mxu0 0
      %3240 = vmatpush1.bf16.msra.mxu0 0
      %3241 = vmatprep.subr.bf16.mxu0 0
      %3242 = vmatpush1.bf16.msra.mxu0 0
      %3243 = vmatprep.subr.bf16.mxu0 0
      %3244 = vmatpush1.bf16.msra.mxu0 0
      %3245 = vmatprep.subr.bf16.mxu0 0
      %3246 = vmatpush1.bf16.msra.mxu0 0
      %3247 = vmatprep.subr.bf16.mxu0 0
      %3248 = vmatpush1.bf16.msra.mxu0 0
      %3249 = vmatprep.subr.bf16.mxu0 0
      %3250 = vmatpush1.bf16.msra.mxu0 %v3215
      %3251 = vmatprep.subr.bf16.mxu0 0
      %3252 = vmatpush1.bf16.msra.mxu0 %v3214
      %3253 = vmatprep.subr.bf16.mxu0 0
      %3254 = vmatpush2.bf16.msra.mxu0 0
      %3255 = vmatprep.subr.bf16.mxu0 0
      %3256 = vmatpush2.bf16.msra.mxu0 0
      %3257 = vmatprep.subr.bf16.mxu0 0
      %3258 = vmatpush2.bf16.msra.mxu0 0
      %3259 = vmatprep.subr.bf16.mxu0 0
      %3260 = vmatpush2.bf16.msra.mxu0 0
      %3261 = vmatprep.subr.bf16.mxu0 0
      %3262 = vmatpush2.bf16.msra.mxu0 0
      %3263 = vmatprep.subr.bf16.mxu0 0
      %3264 = vmatpush2.bf16.msra.mxu0 0
      %3265 = vmatprep.subr.bf16.mxu0 0
      %3266 = vmatpush2.bf16.msra.mxu0 0
      %3267 = vmatprep.subr.bf16.mxu0 0
      %3268 = vmatpush2.bf16.msra.mxu0 0
      %3269 = vmatprep.mubr.bf16.mxu0 0
      %3270 = vmatmul.mubr.bf16.gmra.mxu0 %v3232
      %v3271 = vpop.f32.mrf.mxu0
      %v3272 = vadd.f32 0.0, %v3271
      %v3273 = vpop.f32.mrf.mxu0
      %v3274 = vpop.f32.mrf.mxu0
      %v3275 = vadd.f32 0.0, %v3274
      %v3276 = vpop.f32.mrf.mxu0
      %3277 = vmatprep.mubr.bf16.mxu0 0
      %3278 = vmatmul.mubr.bf16.gmra.mxu0 %v3235
      %v3279 = vpop.f32.mrf.mxu0
      %v3280 = vadd.f32 0.0, %v3279
      %v3281 = vpop.f32.mrf.mxu0
      %v3282 = vpop.f32.mrf.mxu0
      %v3283 = vadd.f32 0.0, %v3282
      %v3284 = vpop.f32.mrf.mxu0
      %3285 = vdwg.mxu0
      %v3286 = vadd.f32 %v3096, %v3272
      %v3287 = vadd.f32 %v3097, %v3275
      %v3288 = vadd.f32 %v3098, %v3280
      %v3289 = vadd.f32 %v3099, %v3283
      %s3290 = scalar_lea.vmem %s5, 512
      %v3291 = vld [vmem:[%s3290] sm:$0xf]
      %v3292 = vld [vmem:[%s3290 + $0x4] sm:$0xf]
      %v3293 = vld [vmem:[%s3290 + $0x8] sm:$0xf]
      %v3294 = vld [vmem:[%s3290 + $0xc] sm:$0xf]
      %v3295 = vld [vmem:[%s3290 + $0x10] sm:$0xf]
      %v3296 = vld [vmem:[%s3290 + $0x14] sm:$0xf]
      %v3297 = vld [vmem:[%s3290 + $0x18] sm:$0xf]
      %v3298 = vld [vmem:[%s3290 + $0x1c] sm:$0xf]
      %v3299 = vld [vmem:[%s3290 + $0x20] sm:$0xf]
      %v3300 = vld [vmem:[%s3290 + $0x24] sm:$0xf]
      %v3301 = vld [vmem:[%s3290 + $0x28] sm:$0xf]
      %v3302 = vld [vmem:[%s3290 + $0x2c] sm:$0xf]
      %v3303 = vld [vmem:[%s3290 + $0x30] sm:$0xf]
      %v3304 = vld [vmem:[%s3290 + $0x34] sm:$0xf]
      %v3305 = vld [vmem:[%s3290 + $0x38] sm:$0xf]
      %v3306 = vld [vmem:[%s3290 + $0x3c] sm:$0xf]
      %v3323 = vunpack.c.l.b16 %v3291
      %v3324 = vunpack.c.l.b16 %v3292
      %v3325 = vunpack.c.l.b16 %v3293
      %v3326 = vunpack.c.l.b16 %v3294
      %v3327 = vunpack.c.l.b16 %v3295
      %v3328 = vunpack.c.l.b16 %v3296
      %v3329 = vunpack.c.l.b16 %v3297
      %v3330 = vunpack.c.l.b16 %v3298
      %v3331 = vunpack.c.l.b16 %v3299
      %v3332 = vunpack.c.l.b16 %v3300
      %v3333 = vunpack.c.l.b16 %v3301
      %v3334 = vunpack.c.l.b16 %v3302
      %v3335 = vunpack.c.l.b16 %v3303
      %v3336 = vunpack.c.l.b16 %v3304
      %v3337 = vunpack.c.l.b16 %v3305
      %v3338 = vunpack.c.l.b16 %v3306
      %v3339 = vpack.c.b16 %v3324, %v3323
      %v3340 = vpack.c.b16 %v3326, %v3325
      %v3341 = vpack.c.b16 %v3328, %v3327
      %v3342 = vpack.c.b16 %v3330, %v3329
      %v3343 = vpack.c.b16 %v3332, %v3331
      %v3344 = vpack.c.b16 %v3334, %v3333
      %v3345 = vpack.c.b16 %v3336, %v3335
      %v3346 = vpack.c.b16 %v3338, %v3337
      %3355 = vmatprep.subr.bf16.mxu0 0
      %3356 = vmatpush1.bf16.msra.mxu0 %v3346
      %3357 = vmatprep.subr.bf16.mxu0 0
      %3358 = vmatpush1.bf16.msra.mxu0 %v3345
      %3359 = vmatprep.subr.bf16.mxu0 0
      %3360 = vmatpush1.bf16.msra.mxu0 %v3344
      %3361 = vmatprep.subr.bf16.mxu0 0
      %3362 = vmatpush1.bf16.msra.mxu0 %v3343
      %3363 = vmatprep.subr.bf16.mxu0 0
      %3364 = vmatpush1.bf16.msra.mxu0 %v3342
      %3365 = vmatprep.subr.bf16.mxu0 0
      %3366 = vmatpush1.bf16.msra.mxu0 %v3341
      %3367 = vmatprep.subr.bf16.mxu0 0
      %3368 = vmatpush1.bf16.msra.mxu0 %v3340
      %3369 = vmatprep.subr.bf16.mxu0 0
      %3370 = vmatpush1.bf16.msra.mxu0 %v3339
      %3371 = vmatprep.subr.bf16.mxu0 0
      %3372 = vmatpush2.bf16.msra.mxu0 0
      %3373 = vmatprep.subr.bf16.mxu0 0
      %3374 = vmatpush2.bf16.msra.mxu0 0
      %3375 = vmatprep.subr.bf16.mxu0 0
      %3376 = vmatpush2.bf16.msra.mxu0 0
      %3377 = vmatprep.subr.bf16.mxu0 0
      %3378 = vmatpush2.bf16.msra.mxu0 0
      %3379 = vmatprep.subr.bf16.mxu0 0
      %3380 = vmatpush2.bf16.msra.mxu0 0
      %3381 = vmatprep.subr.bf16.mxu0 0
      %3382 = vmatpush2.bf16.msra.mxu0 0
      %3383 = vmatprep.subr.bf16.mxu0 0
      %3384 = vmatpush2.bf16.msra.mxu0 0
      %3385 = vmatprep.subr.bf16.mxu0 0
      %3386 = vmatpush2.bf16.msra.mxu0 0
      %3387 = vmatprep.mubr.bf16.mxu0 0
      %3388 = vmatmul.mubr.bf16.gmra.mxu0 %v1759
      %v3389 = vpop.f32.mrf.mxu0
      %v3390 = vadd.f32 0.0, %v3389
      %v3391 = vpop.f32.mrf.mxu0
      %v3392 = vpop.f32.mrf.mxu0
      %v3393 = vadd.f32 0.0, %v3392
      %v3394 = vpop.f32.mrf.mxu0
      %3395 = vmatprep.mubr.bf16.mxu0 0
      %3396 = vmatmul.mubr.bf16.gmra.mxu0 %v1760
      %v3397 = vpop.f32.mrf.mxu0
      %v3398 = vadd.f32 0.0, %v3397
      %v3399 = vpop.f32.mrf.mxu0
      %v3400 = vpop.f32.mrf.mxu0
      %v3401 = vadd.f32 0.0, %v3400
      %v3402 = vpop.f32.mrf.mxu0
      %3403 = vdwg.mxu0
      %v3404 = vpack.c.bf16 %v3393, %v3390
      %v3405 = vpack.c.bf16 %v3401, %v3398
      %s3406 = scalar_lea.vmem %s6, 128
      %v3407 = vld [vmem:[%s3406] sm:$0xf]
      %v3408 = vld [vmem:[%s3406 + $0x4] sm:$0xf]
      %v3409 = vld [vmem:[%s3406 + $0x8] sm:$0xf]
      %v3410 = vld [vmem:[%s3406 + $0xc] sm:$0xf]
      %v3415 = vunpack.c.l.b16 %v3407
      %v3416 = vunpack.c.l.b16 %v3408
      %v3417 = vunpack.c.l.b16 %v3409
      %v3418 = vunpack.c.l.b16 %v3410
      %v3419 = vpack.c.b16 %v3416, %v3415
      %v3420 = vpack.c.b16 %v3418, %v3417
      %v3422 = vsel %vm2029, %v3419, 0
      %v3425 = vsel %vm2029, %v3420, 0
      %3427 = vmatprep.subr.bf16.mxu0 0
      %3428 = vmatpush1.bf16.msra.mxu0 0
      %3429 = vmatprep.subr.bf16.mxu0 0
      %3430 = vmatpush1.bf16.msra.mxu0 0
      %3431 = vmatprep.subr.bf16.mxu0 0
      %3432 = vmatpush1.bf16.msra.mxu0 0
      %3433 = vmatprep.subr.bf16.mxu0 0
      %3434 = vmatpush1.bf16.msra.mxu0 0
      %3435 = vmatprep.subr.bf16.mxu0 0
      %3436 = vmatpush1.bf16.msra.mxu0 0
      %3437 = vmatprep.subr.bf16.mxu0 0
      %3438 = vmatpush1.bf16.msra.mxu0 0
      %3439 = vmatprep.subr.bf16.mxu0 0
      %3440 = vmatpush1.bf16.msra.mxu0 %v3405
      %3441 = vmatprep.subr.bf16.mxu0 0
      %3442 = vmatpush1.bf16.msra.mxu0 %v3404
      %3443 = vmatprep.subr.bf16.mxu0 0
      %3444 = vmatpush2.bf16.msra.mxu0 0
      %3445 = vmatprep.subr.bf16.mxu0 0
      %3446 = vmatpush2.bf16.msra.mxu0 0
      %3447 = vmatprep.subr.bf16.mxu0 0
      %3448 = vmatpush2.bf16.msra.mxu0 0
      %3449 = vmatprep.subr.bf16.mxu0 0
      %3450 = vmatpush2.bf16.msra.mxu0 0
      %3451 = vmatprep.subr.bf16.mxu0 0
      %3452 = vmatpush2.bf16.msra.mxu0 0
      %3453 = vmatprep.subr.bf16.mxu0 0
      %3454 = vmatpush2.bf16.msra.mxu0 0
      %3455 = vmatprep.subr.bf16.mxu0 0
      %3456 = vmatpush2.bf16.msra.mxu0 0
      %3457 = vmatprep.subr.bf16.mxu0 0
      %3458 = vmatpush2.bf16.msra.mxu0 0
      %3459 = vmatprep.mubr.bf16.mxu0 0
      %3460 = vmatmul.mubr.bf16.gmra.mxu0 %v3422
      %v3461 = vpop.f32.mrf.mxu0
      %v3462 = vadd.f32 0.0, %v3461
      %v3463 = vpop.f32.mrf.mxu0
      %v3464 = vpop.f32.mrf.mxu0
      %v3465 = vadd.f32 0.0, %v3464
      %v3466 = vpop.f32.mrf.mxu0
      %3467 = vmatprep.mubr.bf16.mxu0 0
      %3468 = vmatmul.mubr.bf16.gmra.mxu0 %v3425
      %v3469 = vpop.f32.mrf.mxu0
      %v3470 = vadd.f32 0.0, %v3469
      %v3471 = vpop.f32.mrf.mxu0
      %v3472 = vpop.f32.mrf.mxu0
      %v3473 = vadd.f32 0.0, %v3472
      %v3474 = vpop.f32.mrf.mxu0
      %3475 = vdwg.mxu0
      %v3476 = vadd.f32 %v3286, %v3462
      %v3477 = vadd.f32 %v3287, %v3465
      %v3478 = vadd.f32 %v3288, %v3470
      %v3479 = vadd.f32 %v3289, %v3473
      %s3480 = scalar_lea.vmem %s5, 576
      %v3481 = vld [vmem:[%s3480] sm:$0xf]
      %v3482 = vld [vmem:[%s3480 + $0x4] sm:$0xf]
      %v3483 = vld [vmem:[%s3480 + $0x8] sm:$0xf]
      %v3484 = vld [vmem:[%s3480 + $0xc] sm:$0xf]
      %v3485 = vld [vmem:[%s3480 + $0x10] sm:$0xf]
      %v3486 = vld [vmem:[%s3480 + $0x14] sm:$0xf]
      %v3487 = vld [vmem:[%s3480 + $0x18] sm:$0xf]
      %v3488 = vld [vmem:[%s3480 + $0x1c] sm:$0xf]
      %v3489 = vld [vmem:[%s3480 + $0x20] sm:$0xf]
      %v3490 = vld [vmem:[%s3480 + $0x24] sm:$0xf]
      %v3491 = vld [vmem:[%s3480 + $0x28] sm:$0xf]
      %v3492 = vld [vmem:[%s3480 + $0x2c] sm:$0xf]
      %v3493 = vld [vmem:[%s3480 + $0x30] sm:$0xf]
      %v3494 = vld [vmem:[%s3480 + $0x34] sm:$0xf]
      %v3495 = vld [vmem:[%s3480 + $0x38] sm:$0xf]
      %v3496 = vld [vmem:[%s3480 + $0x3c] sm:$0xf]
      %v3513 = vunpack.c.l.b16 %v3481
      %v3514 = vunpack.c.l.b16 %v3482
      %v3515 = vunpack.c.l.b16 %v3483
      %v3516 = vunpack.c.l.b16 %v3484
      %v3517 = vunpack.c.l.b16 %v3485
      %v3518 = vunpack.c.l.b16 %v3486
      %v3519 = vunpack.c.l.b16 %v3487
      %v3520 = vunpack.c.l.b16 %v3488
      %v3521 = vunpack.c.l.b16 %v3489
      %v3522 = vunpack.c.l.b16 %v3490
      %v3523 = vunpack.c.l.b16 %v3491
      %v3524 = vunpack.c.l.b16 %v3492
      %v3525 = vunpack.c.l.b16 %v3493
      %v3526 = vunpack.c.l.b16 %v3494
      %v3527 = vunpack.c.l.b16 %v3495
      %v3528 = vunpack.c.l.b16 %v3496
      %v3529 = vpack.c.b16 %v3514, %v3513
      %v3530 = vpack.c.b16 %v3516, %v3515
      %v3531 = vpack.c.b16 %v3518, %v3517
      %v3532 = vpack.c.b16 %v3520, %v3519
      %v3533 = vpack.c.b16 %v3522, %v3521
      %v3534 = vpack.c.b16 %v3524, %v3523
      %v3535 = vpack.c.b16 %v3526, %v3525
      %v3536 = vpack.c.b16 %v3528, %v3527
      %3545 = vmatprep.subr.bf16.mxu0 0
      %3546 = vmatpush1.bf16.msra.mxu0 %v3536
      %3547 = vmatprep.subr.bf16.mxu0 0
      %3548 = vmatpush1.bf16.msra.mxu0 %v3535
      %3549 = vmatprep.subr.bf16.mxu0 0
      %3550 = vmatpush1.bf16.msra.mxu0 %v3534
      %3551 = vmatprep.subr.bf16.mxu0 0
      %3552 = vmatpush1.bf16.msra.mxu0 %v3533
      %3553 = vmatprep.subr.bf16.mxu0 0
      %3554 = vmatpush1.bf16.msra.mxu0 %v3532
      %3555 = vmatprep.subr.bf16.mxu0 0
      %3556 = vmatpush1.bf16.msra.mxu0 %v3531
      %3557 = vmatprep.subr.bf16.mxu0 0
      %3558 = vmatpush1.bf16.msra.mxu0 %v3530
      %3559 = vmatprep.subr.bf16.mxu0 0
      %3560 = vmatpush1.bf16.msra.mxu0 %v3529
      %3561 = vmatprep.subr.bf16.mxu0 0
      %3562 = vmatpush2.bf16.msra.mxu0 0
      %3563 = vmatprep.subr.bf16.mxu0 0
      %3564 = vmatpush2.bf16.msra.mxu0 0
      %3565 = vmatprep.subr.bf16.mxu0 0
      %3566 = vmatpush2.bf16.msra.mxu0 0
      %3567 = vmatprep.subr.bf16.mxu0 0
      %3568 = vmatpush2.bf16.msra.mxu0 0
      %3569 = vmatprep.subr.bf16.mxu0 0
      %3570 = vmatpush2.bf16.msra.mxu0 0
      %3571 = vmatprep.subr.bf16.mxu0 0
      %3572 = vmatpush2.bf16.msra.mxu0 0
      %3573 = vmatprep.subr.bf16.mxu0 0
      %3574 = vmatpush2.bf16.msra.mxu0 0
      %3575 = vmatprep.subr.bf16.mxu0 0
      %3576 = vmatpush2.bf16.msra.mxu0 0
      %3577 = vmatprep.mubr.bf16.mxu0 0
      %3578 = vmatmul.mubr.bf16.gmra.mxu0 %v1759
      %v3579 = vpop.f32.mrf.mxu0
      %v3580 = vadd.f32 0.0, %v3579
      %v3581 = vpop.f32.mrf.mxu0
      %v3582 = vpop.f32.mrf.mxu0
      %v3583 = vadd.f32 0.0, %v3582
      %v3584 = vpop.f32.mrf.mxu0
      %3585 = vmatprep.mubr.bf16.mxu0 0
      %3586 = vmatmul.mubr.bf16.gmra.mxu0 %v1760
      %v3587 = vpop.f32.mrf.mxu0
      %v3588 = vadd.f32 0.0, %v3587
      %v3589 = vpop.f32.mrf.mxu0
      %v3590 = vpop.f32.mrf.mxu0
      %v3591 = vadd.f32 0.0, %v3590
      %v3592 = vpop.f32.mrf.mxu0
      %3593 = vdwg.mxu0
      %v3594 = vpack.c.bf16 %v3583, %v3580
      %v3595 = vpack.c.bf16 %v3591, %v3588
      %s3596 = scalar_lea.vmem %s6, 144
      %v3597 = vld [vmem:[%s3596] sm:$0xf]
      %v3598 = vld [vmem:[%s3596 + $0x4] sm:$0xf]
      %v3599 = vld [vmem:[%s3596 + $0x8] sm:$0xf]
      %v3600 = vld [vmem:[%s3596 + $0xc] sm:$0xf]
      %v3605 = vunpack.c.l.b16 %v3597
      %v3606 = vunpack.c.l.b16 %v3598
      %v3607 = vunpack.c.l.b16 %v3599
      %v3608 = vunpack.c.l.b16 %v3600
      %v3609 = vpack.c.b16 %v3606, %v3605
      %v3610 = vpack.c.b16 %v3608, %v3607
      %v3612 = vsel %vm2029, %v3609, 0
      %v3615 = vsel %vm2029, %v3610, 0
      %3617 = vmatprep.subr.bf16.mxu0 0
      %3618 = vmatpush1.bf16.msra.mxu0 0
      %3619 = vmatprep.subr.bf16.mxu0 0
      %3620 = vmatpush1.bf16.msra.mxu0 0
      %3621 = vmatprep.subr.bf16.mxu0 0
      %3622 = vmatpush1.bf16.msra.mxu0 0
      %3623 = vmatprep.subr.bf16.mxu0 0
      %3624 = vmatpush1.bf16.msra.mxu0 0
      %3625 = vmatprep.subr.bf16.mxu0 0
      %3626 = vmatpush1.bf16.msra.mxu0 0
      %3627 = vmatprep.subr.bf16.mxu0 0
      %3628 = vmatpush1.bf16.msra.mxu0 0
      %3629 = vmatprep.subr.bf16.mxu0 0
      %3630 = vmatpush1.bf16.msra.mxu0 %v3595
      %3631 = vmatprep.subr.bf16.mxu0 0
      %3632 = vmatpush1.bf16.msra.mxu0 %v3594
      %3633 = vmatprep.subr.bf16.mxu0 0
      %3634 = vmatpush2.bf16.msra.mxu0 0
      %3635 = vmatprep.subr.bf16.mxu0 0
      %3636 = vmatpush2.bf16.msra.mxu0 0
      %3637 = vmatprep.subr.bf16.mxu0 0
      %3638 = vmatpush2.bf16.msra.mxu0 0
      %3639 = vmatprep.subr.bf16.mxu0 0
      %3640 = vmatpush2.bf16.msra.mxu0 0
      %3641 = vmatprep.subr.bf16.mxu0 0
      %3642 = vmatpush2.bf16.msra.mxu0 0
      %3643 = vmatprep.subr.bf16.mxu0 0
      %3644 = vmatpush2.bf16.msra.mxu0 0
      %3645 = vmatprep.subr.bf16.mxu0 0
      %3646 = vmatpush2.bf16.msra.mxu0 0
      %3647 = vmatprep.subr.bf16.mxu0 0
      %3648 = vmatpush2.bf16.msra.mxu0 0
      %3649 = vmatprep.mubr.bf16.mxu0 0
      %3650 = vmatmul.mubr.bf16.gmra.mxu0 %v3612
      %v3651 = vpop.f32.mrf.mxu0
      %v3652 = vadd.f32 0.0, %v3651
      %v3653 = vpop.f32.mrf.mxu0
      %v3654 = vpop.f32.mrf.mxu0
      %v3655 = vadd.f32 0.0, %v3654
      %v3656 = vpop.f32.mrf.mxu0
      %3657 = vmatprep.mubr.bf16.mxu0 0
      %3658 = vmatmul.mubr.bf16.gmra.mxu0 %v3615
      %v3659 = vpop.f32.mrf.mxu0
      %v3660 = vadd.f32 0.0, %v3659
      %v3661 = vpop.f32.mrf.mxu0
      %v3662 = vpop.f32.mrf.mxu0
      %v3663 = vadd.f32 0.0, %v3662
      %v3664 = vpop.f32.mrf.mxu0
      %3665 = vdwg.mxu0
      %v3666 = vadd.f32 %v3476, %v3652
      %v3667 = vadd.f32 %v3477, %v3655
      %v3668 = vadd.f32 %v3478, %v3660
      %v3669 = vadd.f32 %v3479, %v3663
      %s3670 = scalar_lea.vmem %s5, 640
      %v3671 = vld [vmem:[%s3670] sm:$0xf]
      %v3672 = vld [vmem:[%s3670 + $0x4] sm:$0xf]
      %v3673 = vld [vmem:[%s3670 + $0x8] sm:$0xf]
      %v3674 = vld [vmem:[%s3670 + $0xc] sm:$0xf]
      %v3675 = vld [vmem:[%s3670 + $0x10] sm:$0xf]
      %v3676 = vld [vmem:[%s3670 + $0x14] sm:$0xf]
      %v3677 = vld [vmem:[%s3670 + $0x18] sm:$0xf]
      %v3678 = vld [vmem:[%s3670 + $0x1c] sm:$0xf]
      %v3679 = vld [vmem:[%s3670 + $0x20] sm:$0xf]
      %v3680 = vld [vmem:[%s3670 + $0x24] sm:$0xf]
      %v3681 = vld [vmem:[%s3670 + $0x28] sm:$0xf]
      %v3682 = vld [vmem:[%s3670 + $0x2c] sm:$0xf]
      %v3683 = vld [vmem:[%s3670 + $0x30] sm:$0xf]
      %v3684 = vld [vmem:[%s3670 + $0x34] sm:$0xf]
      %v3685 = vld [vmem:[%s3670 + $0x38] sm:$0xf]
      %v3686 = vld [vmem:[%s3670 + $0x3c] sm:$0xf]
      %v3703 = vunpack.c.l.b16 %v3671
      %v3704 = vunpack.c.l.b16 %v3672
      %v3705 = vunpack.c.l.b16 %v3673
      %v3706 = vunpack.c.l.b16 %v3674
      %v3707 = vunpack.c.l.b16 %v3675
      %v3708 = vunpack.c.l.b16 %v3676
      %v3709 = vunpack.c.l.b16 %v3677
      %v3710 = vunpack.c.l.b16 %v3678
      %v3711 = vunpack.c.l.b16 %v3679
      %v3712 = vunpack.c.l.b16 %v3680
      %v3713 = vunpack.c.l.b16 %v3681
      %v3714 = vunpack.c.l.b16 %v3682
      %v3715 = vunpack.c.l.b16 %v3683
      %v3716 = vunpack.c.l.b16 %v3684
      %v3717 = vunpack.c.l.b16 %v3685
      %v3718 = vunpack.c.l.b16 %v3686
      %v3719 = vpack.c.b16 %v3704, %v3703
      %v3720 = vpack.c.b16 %v3706, %v3705
      %v3721 = vpack.c.b16 %v3708, %v3707
      %v3722 = vpack.c.b16 %v3710, %v3709
      %v3723 = vpack.c.b16 %v3712, %v3711
      %v3724 = vpack.c.b16 %v3714, %v3713
      %v3725 = vpack.c.b16 %v3716, %v3715
      %v3726 = vpack.c.b16 %v3718, %v3717
      %3735 = vmatprep.subr.bf16.mxu0 0
      %3736 = vmatpush1.bf16.msra.mxu0 %v3726
      %3737 = vmatprep.subr.bf16.mxu0 0
      %3738 = vmatpush1.bf16.msra.mxu0 %v3725
      %3739 = vmatprep.subr.bf16.mxu0 0
      %3740 = vmatpush1.bf16.msra.mxu0 %v3724
      %3741 = vmatprep.subr.bf16.mxu0 0
      %3742 = vmatpush1.bf16.msra.mxu0 %v3723
      %3743 = vmatprep.subr.bf16.mxu0 0
      %3744 = vmatpush1.bf16.msra.mxu0 %v3722
      %3745 = vmatprep.subr.bf16.mxu0 0
      %3746 = vmatpush1.bf16.msra.mxu0 %v3721
      %3747 = vmatprep.subr.bf16.mxu0 0
      %3748 = vmatpush1.bf16.msra.mxu0 %v3720
      %3749 = vmatprep.subr.bf16.mxu0 0
      %3750 = vmatpush1.bf16.msra.mxu0 %v3719
      %3751 = vmatprep.subr.bf16.mxu0 0
      %3752 = vmatpush2.bf16.msra.mxu0 0
      %3753 = vmatprep.subr.bf16.mxu0 0
      %3754 = vmatpush2.bf16.msra.mxu0 0
      %3755 = vmatprep.subr.bf16.mxu0 0
      %3756 = vmatpush2.bf16.msra.mxu0 0
      %3757 = vmatprep.subr.bf16.mxu0 0
      %3758 = vmatpush2.bf16.msra.mxu0 0
      %3759 = vmatprep.subr.bf16.mxu0 0
      %3760 = vmatpush2.bf16.msra.mxu0 0
      %3761 = vmatprep.subr.bf16.mxu0 0
      %3762 = vmatpush2.bf16.msra.mxu0 0
      %3763 = vmatprep.subr.bf16.mxu0 0
      %3764 = vmatpush2.bf16.msra.mxu0 0
      %3765 = vmatprep.subr.bf16.mxu0 0
      %3766 = vmatpush2.bf16.msra.mxu0 0
      %3767 = vmatprep.mubr.bf16.mxu0 0
      %3768 = vmatmul.mubr.bf16.gmra.mxu0 %v1759
      %v3769 = vpop.f32.mrf.mxu0
      %v3770 = vadd.f32 0.0, %v3769
      %v3771 = vpop.f32.mrf.mxu0
      %v3772 = vpop.f32.mrf.mxu0
      %v3773 = vadd.f32 0.0, %v3772
      %v3774 = vpop.f32.mrf.mxu0
      %3775 = vmatprep.mubr.bf16.mxu0 0
      %3776 = vmatmul.mubr.bf16.gmra.mxu0 %v1760
      %v3777 = vpop.f32.mrf.mxu0
      %v3778 = vadd.f32 0.0, %v3777
      %v3779 = vpop.f32.mrf.mxu0
      %v3780 = vpop.f32.mrf.mxu0
      %v3781 = vadd.f32 0.0, %v3780
      %v3782 = vpop.f32.mrf.mxu0
      %3783 = vdwg.mxu0
      %v3784 = vpack.c.bf16 %v3773, %v3770
      %v3785 = vpack.c.bf16 %v3781, %v3778
      %s3786 = scalar_lea.vmem %s6, 160
      %v3787 = vld [vmem:[%s3786] sm:$0xf]
      %v3788 = vld [vmem:[%s3786 + $0x4] sm:$0xf]
      %v3789 = vld [vmem:[%s3786 + $0x8] sm:$0xf]
      %v3790 = vld [vmem:[%s3786 + $0xc] sm:$0xf]
      %v3795 = vunpack.c.l.b16 %v3787
      %v3796 = vunpack.c.l.b16 %v3788
      %v3797 = vunpack.c.l.b16 %v3789
      %v3798 = vunpack.c.l.b16 %v3790
      %v3799 = vpack.c.b16 %v3796, %v3795
      %v3800 = vpack.c.b16 %v3798, %v3797
      %v3802 = vsel %vm2029, %v3799, 0
      %v3805 = vsel %vm2029, %v3800, 0
      %3807 = vmatprep.subr.bf16.mxu0 0
      %3808 = vmatpush1.bf16.msra.mxu0 0
      %3809 = vmatprep.subr.bf16.mxu0 0
      %3810 = vmatpush1.bf16.msra.mxu0 0
      %3811 = vmatprep.subr.bf16.mxu0 0
      %3812 = vmatpush1.bf16.msra.mxu0 0
      %3813 = vmatprep.subr.bf16.mxu0 0
      %3814 = vmatpush1.bf16.msra.mxu0 0
      %3815 = vmatprep.subr.bf16.mxu0 0
      %3816 = vmatpush1.bf16.msra.mxu0 0
      %3817 = vmatprep.subr.bf16.mxu0 0
      %3818 = vmatpush1.bf16.msra.mxu0 0
      %3819 = vmatprep.subr.bf16.mxu0 0
      %3820 = vmatpush1.bf16.msra.mxu0 %v3785
      %3821 = vmatprep.subr.bf16.mxu0 0
      %3822 = vmatpush1.bf16.msra.mxu0 %v3784
      %3823 = vmatprep.subr.bf16.mxu0 0
      %3824 = vmatpush2.bf16.msra.mxu0 0
      %3825 = vmatprep.subr.bf16.mxu0 0
      %3826 = vmatpush2.bf16.msra.mxu0 0
      %3827 = vmatprep.subr.bf16.mxu0 0
      %3828 = vmatpush2.bf16.msra.mxu0 0
      %3829 = vmatprep.subr.bf16.mxu0 0
      %3830 = vmatpush2.bf16.msra.mxu0 0
      %3831 = vmatprep.subr.bf16.mxu0 0
      %3832 = vmatpush2.bf16.msra.mxu0 0
      %3833 = vmatprep.subr.bf16.mxu0 0
      %3834 = vmatpush2.bf16.msra.mxu0 0
      %3835 = vmatprep.subr.bf16.mxu0 0
      %3836 = vmatpush2.bf16.msra.mxu0 0
      %3837 = vmatprep.subr.bf16.mxu0 0
      %3838 = vmatpush2.bf16.msra.mxu0 0
      %3839 = vmatprep.mubr.bf16.mxu0 0
      %3840 = vmatmul.mubr.bf16.gmra.mxu0 %v3802
      %v3841 = vpop.f32.mrf.mxu0
      %v3842 = vadd.f32 0.0, %v3841
      %v3843 = vpop.f32.mrf.mxu0
      %v3844 = vpop.f32.mrf.mxu0
      %v3845 = vadd.f32 0.0, %v3844
      %v3846 = vpop.f32.mrf.mxu0
      %3847 = vmatprep.mubr.bf16.mxu0 0
      %3848 = vmatmul.mubr.bf16.gmra.mxu0 %v3805
      %v3849 = vpop.f32.mrf.mxu0
      %v3850 = vadd.f32 0.0, %v3849
      %v3851 = vpop.f32.mrf.mxu0
      %v3852 = vpop.f32.mrf.mxu0
      %v3853 = vadd.f32 0.0, %v3852
      %v3854 = vpop.f32.mrf.mxu0
      %3855 = vdwg.mxu0
      %v3856 = vadd.f32 %v3666, %v3842
      %v3857 = vadd.f32 %v3667, %v3845
      %v3858 = vadd.f32 %v3668, %v3850
      %v3859 = vadd.f32 %v3669, %v3853
      %s3860 = scalar_lea.vmem %s5, 704
      %v3861 = vld [vmem:[%s3860] sm:$0xf]
      %v3862 = vld [vmem:[%s3860 + $0x4] sm:$0xf]
      %v3863 = vld [vmem:[%s3860 + $0x8] sm:$0xf]
      %v3864 = vld [vmem:[%s3860 + $0xc] sm:$0xf]
      %v3865 = vld [vmem:[%s3860 + $0x10] sm:$0xf]
      %v3866 = vld [vmem:[%s3860 + $0x14] sm:$0xf]
      %v3867 = vld [vmem:[%s3860 + $0x18] sm:$0xf]
      %v3868 = vld [vmem:[%s3860 + $0x1c] sm:$0xf]
      %v3869 = vld [vmem:[%s3860 + $0x20] sm:$0xf]
      %v3870 = vld [vmem:[%s3860 + $0x24] sm:$0xf]
      %v3871 = vld [vmem:[%s3860 + $0x28] sm:$0xf]
      %v3872 = vld [vmem:[%s3860 + $0x2c] sm:$0xf]
      %v3873 = vld [vmem:[%s3860 + $0x30] sm:$0xf]
      %v3874 = vld [vmem:[%s3860 + $0x34] sm:$0xf]
      %v3875 = vld [vmem:[%s3860 + $0x38] sm:$0xf]
      %v3876 = vld [vmem:[%s3860 + $0x3c] sm:$0xf]
      %v3893 = vunpack.c.l.b16 %v3861
      %v3894 = vunpack.c.l.b16 %v3862
      %v3895 = vunpack.c.l.b16 %v3863
      %v3896 = vunpack.c.l.b16 %v3864
      %v3897 = vunpack.c.l.b16 %v3865
      %v3898 = vunpack.c.l.b16 %v3866
      %v3899 = vunpack.c.l.b16 %v3867
      %v3900 = vunpack.c.l.b16 %v3868
      %v3901 = vunpack.c.l.b16 %v3869
      %v3902 = vunpack.c.l.b16 %v3870
      %v3903 = vunpack.c.l.b16 %v3871
      %v3904 = vunpack.c.l.b16 %v3872
      %v3905 = vunpack.c.l.b16 %v3873
      %v3906 = vunpack.c.l.b16 %v3874
      %v3907 = vunpack.c.l.b16 %v3875
      %v3908 = vunpack.c.l.b16 %v3876
      %v3909 = vpack.c.b16 %v3894, %v3893
      %v3910 = vpack.c.b16 %v3896, %v3895
      %v3911 = vpack.c.b16 %v3898, %v3897
      %v3912 = vpack.c.b16 %v3900, %v3899
      %v3913 = vpack.c.b16 %v3902, %v3901
      %v3914 = vpack.c.b16 %v3904, %v3903
      %v3915 = vpack.c.b16 %v3906, %v3905
      %v3916 = vpack.c.b16 %v3908, %v3907
      %3925 = vmatprep.subr.bf16.mxu0 0
      %3926 = vmatpush1.bf16.msra.mxu0 %v3916
      %3927 = vmatprep.subr.bf16.mxu0 0
      %3928 = vmatpush1.bf16.msra.mxu0 %v3915
      %3929 = vmatprep.subr.bf16.mxu0 0
      %3930 = vmatpush1.bf16.msra.mxu0 %v3914
      %3931 = vmatprep.subr.bf16.mxu0 0
      %3932 = vmatpush1.bf16.msra.mxu0 %v3913
      %3933 = vmatprep.subr.bf16.mxu0 0
      %3934 = vmatpush1.bf16.msra.mxu0 %v3912
      %3935 = vmatprep.subr.bf16.mxu0 0
      %3936 = vmatpush1.bf16.msra.mxu0 %v3911
      %3937 = vmatprep.subr.bf16.mxu0 0
      %3938 = vmatpush1.bf16.msra.mxu0 %v3910
      %3939 = vmatprep.subr.bf16.mxu0 0
      %3940 = vmatpush1.bf16.msra.mxu0 %v3909
      %3941 = vmatprep.subr.bf16.mxu0 0
      %3942 = vmatpush2.bf16.msra.mxu0 0
      %3943 = vmatprep.subr.bf16.mxu0 0
      %3944 = vmatpush2.bf16.msra.mxu0 0
      %3945 = vmatprep.subr.bf16.mxu0 0
      %3946 = vmatpush2.bf16.msra.mxu0 0
      %3947 = vmatprep.subr.bf16.mxu0 0
      %3948 = vmatpush2.bf16.msra.mxu0 0
      %3949 = vmatprep.subr.bf16.mxu0 0
      %3950 = vmatpush2.bf16.msra.mxu0 0
      %3951 = vmatprep.subr.bf16.mxu0 0
      %3952 = vmatpush2.bf16.msra.mxu0 0
      %3953 = vmatprep.subr.bf16.mxu0 0
      %3954 = vmatpush2.bf16.msra.mxu0 0
      %3955 = vmatprep.subr.bf16.mxu0 0
      %3956 = vmatpush2.bf16.msra.mxu0 0
      %3957 = vmatprep.mubr.bf16.mxu0 0
      %3958 = vmatmul.mubr.bf16.gmra.mxu0 %v1759
      %v3959 = vpop.f32.mrf.mxu0
      %v3960 = vadd.f32 0.0, %v3959
      %v3961 = vpop.f32.mrf.mxu0
      %v3962 = vpop.f32.mrf.mxu0
      %v3963 = vadd.f32 0.0, %v3962
      %v3964 = vpop.f32.mrf.mxu0
      %3965 = vmatprep.mubr.bf16.mxu0 0
      %3966 = vmatmul.mubr.bf16.gmra.mxu0 %v1760
      %v3967 = vpop.f32.mrf.mxu0
      %v3968 = vadd.f32 0.0, %v3967
      %v3969 = vpop.f32.mrf.mxu0
      %v3970 = vpop.f32.mrf.mxu0
      %v3971 = vadd.f32 0.0, %v3970
      %v3972 = vpop.f32.mrf.mxu0
      %3973 = vdwg.mxu0
      %v3974 = vpack.c.bf16 %v3963, %v3960
      %v3975 = vpack.c.bf16 %v3971, %v3968
      %s3976 = scalar_lea.vmem %s6, 176
      %v3977 = vld [vmem:[%s3976] sm:$0xf]
      %v3978 = vld [vmem:[%s3976 + $0x4] sm:$0xf]
      %v3979 = vld [vmem:[%s3976 + $0x8] sm:$0xf]
      %v3980 = vld [vmem:[%s3976 + $0xc] sm:$0xf]
      %v3985 = vunpack.c.l.b16 %v3977
      %v3986 = vunpack.c.l.b16 %v3978
      %v3987 = vunpack.c.l.b16 %v3979
      %v3988 = vunpack.c.l.b16 %v3980
      %v3989 = vpack.c.b16 %v3986, %v3985
      %v3990 = vpack.c.b16 %v3988, %v3987
      %v3992 = vsel %vm2029, %v3989, 0
      %v3995 = vsel %vm2029, %v3990, 0
      %3997 = vmatprep.subr.bf16.mxu0 0
      %3998 = vmatpush1.bf16.msra.mxu0 0
      %3999 = vmatprep.subr.bf16.mxu0 0
      %4000 = vmatpush1.bf16.msra.mxu0 0
      %4001 = vmatprep.subr.bf16.mxu0 0
      %4002 = vmatpush1.bf16.msra.mxu0 0
      %4003 = vmatprep.subr.bf16.mxu0 0
      %4004 = vmatpush1.bf16.msra.mxu0 0
      %4005 = vmatprep.subr.bf16.mxu0 0
      %4006 = vmatpush1.bf16.msra.mxu0 0
      %4007 = vmatprep.subr.bf16.mxu0 0
      %4008 = vmatpush1.bf16.msra.mxu0 0
      %4009 = vmatprep.subr.bf16.mxu0 0
      %4010 = vmatpush1.bf16.msra.mxu0 %v3975
      %4011 = vmatprep.subr.bf16.mxu0 0
      %4012 = vmatpush1.bf16.msra.mxu0 %v3974
      %4013 = vmatprep.subr.bf16.mxu0 0
      %4014 = vmatpush2.bf16.msra.mxu0 0
      %4015 = vmatprep.subr.bf16.mxu0 0
      %4016 = vmatpush2.bf16.msra.mxu0 0
      %4017 = vmatprep.subr.bf16.mxu0 0
      %4018 = vmatpush2.bf16.msra.mxu0 0
      %4019 = vmatprep.subr.bf16.mxu0 0
      %4020 = vmatpush2.bf16.msra.mxu0 0
      %4021 = vmatprep.subr.bf16.mxu0 0
      %4022 = vmatpush2.bf16.msra.mxu0 0
      %4023 = vmatprep.subr.bf16.mxu0 0
      %4024 = vmatpush2.bf16.msra.mxu0 0
      %4025 = vmatprep.subr.bf16.mxu0 0
      %4026 = vmatpush2.bf16.msra.mxu0 0
      %4027 = vmatprep.subr.bf16.mxu0 0
      %4028 = vmatpush2.bf16.msra.mxu0 0
      %4029 = vmatprep.mubr.bf16.mxu0 0
      %4030 = vmatmul.mubr.bf16.gmra.mxu0 %v3992
      %v4031 = vpop.f32.mrf.mxu0
      %v4032 = vadd.f32 0.0, %v4031
      %v4033 = vpop.f32.mrf.mxu0
      %v4034 = vpop.f32.mrf.mxu0
      %v4035 = vadd.f32 0.0, %v4034
      %v4036 = vpop.f32.mrf.mxu0
      %4037 = vmatprep.mubr.bf16.mxu0 0
      %4038 = vmatmul.mubr.bf16.gmra.mxu0 %v3995
      %v4039 = vpop.f32.mrf.mxu0
      %v4040 = vadd.f32 0.0, %v4039
      %v4041 = vpop.f32.mrf.mxu0
      %v4042 = vpop.f32.mrf.mxu0
      %v4043 = vadd.f32 0.0, %v4042
      %v4044 = vpop.f32.mrf.mxu0
      %4045 = vdwg.mxu0
      %v4046 = vadd.f32 %v3856, %v4032
      %v4047 = vadd.f32 %v3857, %v4035
      %v4048 = vadd.f32 %v3858, %v4040
      %v4049 = vadd.f32 %v3859, %v4043
      %s4050 = scalar_lea.vmem %s5, 768
      %v4051 = vld [vmem:[%s4050] sm:$0xf]
      %v4052 = vld [vmem:[%s4050 + $0x4] sm:$0xf]
      %v4053 = vld [vmem:[%s4050 + $0x8] sm:$0xf]
      %v4054 = vld [vmem:[%s4050 + $0xc] sm:$0xf]
      %v4055 = vld [vmem:[%s4050 + $0x10] sm:$0xf]
      %v4056 = vld [vmem:[%s4050 + $0x14] sm:$0xf]
      %v4057 = vld [vmem:[%s4050 + $0x18] sm:$0xf]
      %v4058 = vld [vmem:[%s4050 + $0x1c] sm:$0xf]
      %v4059 = vld [vmem:[%s4050 + $0x20] sm:$0xf]
      %v4060 = vld [vmem:[%s4050 + $0x24] sm:$0xf]
      %v4061 = vld [vmem:[%s4050 + $0x28] sm:$0xf]
      %v4062 = vld [vmem:[%s4050 + $0x2c] sm:$0xf]
      %v4063 = vld [vmem:[%s4050 + $0x30] sm:$0xf]
      %v4064 = vld [vmem:[%s4050 + $0x34] sm:$0xf]
      %v4065 = vld [vmem:[%s4050 + $0x38] sm:$0xf]
      %v4066 = vld [vmem:[%s4050 + $0x3c] sm:$0xf]
      %v4083 = vunpack.c.l.b16 %v4051
      %v4084 = vunpack.c.l.b16 %v4052
      %v4085 = vunpack.c.l.b16 %v4053
      %v4086 = vunpack.c.l.b16 %v4054
      %v4087 = vunpack.c.l.b16 %v4055
      %v4088 = vunpack.c.l.b16 %v4056
      %v4089 = vunpack.c.l.b16 %v4057
      %v4090 = vunpack.c.l.b16 %v4058
      %v4091 = vunpack.c.l.b16 %v4059
      %v4092 = vunpack.c.l.b16 %v4060
      %v4093 = vunpack.c.l.b16 %v4061
      %v4094 = vunpack.c.l.b16 %v4062
      %v4095 = vunpack.c.l.b16 %v4063
      %v4096 = vunpack.c.l.b16 %v4064
      %v4097 = vunpack.c.l.b16 %v4065
      %v4098 = vunpack.c.l.b16 %v4066
      %v4099 = vpack.c.b16 %v4084, %v4083
      %v4100 = vpack.c.b16 %v4086, %v4085
      %v4101 = vpack.c.b16 %v4088, %v4087
      %v4102 = vpack.c.b16 %v4090, %v4089
      %v4103 = vpack.c.b16 %v4092, %v4091
      %v4104 = vpack.c.b16 %v4094, %v4093
      %v4105 = vpack.c.b16 %v4096, %v4095
      %v4106 = vpack.c.b16 %v4098, %v4097
      %4115 = vmatprep.subr.bf16.mxu0 0
      %4116 = vmatpush1.bf16.msra.mxu0 %v4106
      %4117 = vmatprep.subr.bf16.mxu0 0
      %4118 = vmatpush1.bf16.msra.mxu0 %v4105
      %4119 = vmatprep.subr.bf16.mxu0 0
      %4120 = vmatpush1.bf16.msra.mxu0 %v4104
      %4121 = vmatprep.subr.bf16.mxu0 0
      %4122 = vmatpush1.bf16.msra.mxu0 %v4103
      %4123 = vmatprep.subr.bf16.mxu0 0
      %4124 = vmatpush1.bf16.msra.mxu0 %v4102
      %4125 = vmatprep.subr.bf16.mxu0 0
      %4126 = vmatpush1.bf16.msra.mxu0 %v4101
      %4127 = vmatprep.subr.bf16.mxu0 0
      %4128 = vmatpush1.bf16.msra.mxu0 %v4100
      %4129 = vmatprep.subr.bf16.mxu0 0
      %4130 = vmatpush1.bf16.msra.mxu0 %v4099
      %4131 = vmatprep.subr.bf16.mxu0 0
      %4132 = vmatpush2.bf16.msra.mxu0 0
      %4133 = vmatprep.subr.bf16.mxu0 0
      %4134 = vmatpush2.bf16.msra.mxu0 0
      %4135 = vmatprep.subr.bf16.mxu0 0
      %4136 = vmatpush2.bf16.msra.mxu0 0
      %4137 = vmatprep.subr.bf16.mxu0 0
      %4138 = vmatpush2.bf16.msra.mxu0 0
      %4139 = vmatprep.subr.bf16.mxu0 0
      %4140 = vmatpush2.bf16.msra.mxu0 0
      %4141 = vmatprep.subr.bf16.mxu0 0
      %4142 = vmatpush2.bf16.msra.mxu0 0
      %4143 = vmatprep.subr.bf16.mxu0 0
      %4144 = vmatpush2.bf16.msra.mxu0 0
      %4145 = vmatprep.subr.bf16.mxu0 0
      %4146 = vmatpush2.bf16.msra.mxu0 0
      %4147 = vmatprep.mubr.bf16.mxu0 0
      %4148 = vmatmul.mubr.bf16.gmra.mxu0 %v1759
      %v4149 = vpop.f32.mrf.mxu0
      %v4150 = vadd.f32 0.0, %v4149
      %v4151 = vpop.f32.mrf.mxu0
      %v4152 = vpop.f32.mrf.mxu0
      %v4153 = vadd.f32 0.0, %v4152
      %v4154 = vpop.f32.mrf.mxu0
      %4155 = vmatprep.mubr.bf16.mxu0 0
      %4156 = vmatmul.mubr.bf16.gmra.mxu0 %v1760
      %v4157 = vpop.f32.mrf.mxu0
      %v4158 = vadd.f32 0.0, %v4157
      %v4159 = vpop.f32.mrf.mxu0
      %v4160 = vpop.f32.mrf.mxu0
      %v4161 = vadd.f32 0.0, %v4160
      %v4162 = vpop.f32.mrf.mxu0
      %4163 = vdwg.mxu0
      %v4164 = vpack.c.bf16 %v4153, %v4150
      %v4165 = vpack.c.bf16 %v4161, %v4158
      %s4166 = scalar_lea.vmem %s6, 192
      %v4167 = vld [vmem:[%s4166] sm:$0xf]
      %v4168 = vld [vmem:[%s4166 + $0x4] sm:$0xf]
      %v4169 = vld [vmem:[%s4166 + $0x8] sm:$0xf]
      %v4170 = vld [vmem:[%s4166 + $0xc] sm:$0xf]
      %v4175 = vunpack.c.l.b16 %v4167
      %v4176 = vunpack.c.l.b16 %v4168
      %v4177 = vunpack.c.l.b16 %v4169
      %v4178 = vunpack.c.l.b16 %v4170
      %v4179 = vpack.c.b16 %v4176, %v4175
      %v4180 = vpack.c.b16 %v4178, %v4177
      %v4182 = vsel %vm2029, %v4179, 0
      %v4185 = vsel %vm2029, %v4180, 0
      %4187 = vmatprep.subr.bf16.mxu0 0
      %4188 = vmatpush1.bf16.msra.mxu0 0
      %4189 = vmatprep.subr.bf16.mxu0 0
      %4190 = vmatpush1.bf16.msra.mxu0 0
      %4191 = vmatprep.subr.bf16.mxu0 0
      %4192 = vmatpush1.bf16.msra.mxu0 0
      %4193 = vmatprep.subr.bf16.mxu0 0
      %4194 = vmatpush1.bf16.msra.mxu0 0
      %4195 = vmatprep.subr.bf16.mxu0 0
      %4196 = vmatpush1.bf16.msra.mxu0 0
      %4197 = vmatprep.subr.bf16.mxu0 0
      %4198 = vmatpush1.bf16.msra.mxu0 0
      %4199 = vmatprep.subr.bf16.mxu0 0
      %4200 = vmatpush1.bf16.msra.mxu0 %v4165
      %4201 = vmatprep.subr.bf16.mxu0 0
      %4202 = vmatpush1.bf16.msra.mxu0 %v4164
      %4203 = vmatprep.subr.bf16.mxu0 0
      %4204 = vmatpush2.bf16.msra.mxu0 0
      %4205 = vmatprep.subr.bf16.mxu0 0
      %4206 = vmatpush2.bf16.msra.mxu0 0
      %4207 = vmatprep.subr.bf16.mxu0 0
      %4208 = vmatpush2.bf16.msra.mxu0 0
      %4209 = vmatprep.subr.bf16.mxu0 0
      %4210 = vmatpush2.bf16.msra.mxu0 0
      %4211 = vmatprep.subr.bf16.mxu0 0
      %4212 = vmatpush2.bf16.msra.mxu0 0
      %4213 = vmatprep.subr.bf16.mxu0 0
      %4214 = vmatpush2.bf16.msra.mxu0 0
      %4215 = vmatprep.subr.bf16.mxu0 0
      %4216 = vmatpush2.bf16.msra.mxu0 0
      %4217 = vmatprep.subr.bf16.mxu0 0
      %4218 = vmatpush2.bf16.msra.mxu0 0
      %4219 = vmatprep.mubr.bf16.mxu0 0
      %4220 = vmatmul.mubr.bf16.gmra.mxu0 %v4182
      %v4221 = vpop.f32.mrf.mxu0
      %v4222 = vadd.f32 0.0, %v4221
      %v4223 = vpop.f32.mrf.mxu0
      %v4224 = vpop.f32.mrf.mxu0
      %v4225 = vadd.f32 0.0, %v4224
      %v4226 = vpop.f32.mrf.mxu0
      %4227 = vmatprep.mubr.bf16.mxu0 0
      %4228 = vmatmul.mubr.bf16.gmra.mxu0 %v4185
      %v4229 = vpop.f32.mrf.mxu0
      %v4230 = vadd.f32 0.0, %v4229
      %v4231 = vpop.f32.mrf.mxu0
      %v4232 = vpop.f32.mrf.mxu0
      %v4233 = vadd.f32 0.0, %v4232
      %v4234 = vpop.f32.mrf.mxu0
      %4235 = vdwg.mxu0
      %v4236 = vadd.f32 %v4046, %v4222
      %v4237 = vadd.f32 %v4047, %v4225
      %v4238 = vadd.f32 %v4048, %v4230
      %v4239 = vadd.f32 %v4049, %v4233
      %s4240 = scalar_lea.vmem %s5, 832
      %v4241 = vld [vmem:[%s4240] sm:$0xf]
      %v4242 = vld [vmem:[%s4240 + $0x4] sm:$0xf]
      %v4243 = vld [vmem:[%s4240 + $0x8] sm:$0xf]
      %v4244 = vld [vmem:[%s4240 + $0xc] sm:$0xf]
      %v4245 = vld [vmem:[%s4240 + $0x10] sm:$0xf]
      %v4246 = vld [vmem:[%s4240 + $0x14] sm:$0xf]
      %v4247 = vld [vmem:[%s4240 + $0x18] sm:$0xf]
      %v4248 = vld [vmem:[%s4240 + $0x1c] sm:$0xf]
      %v4249 = vld [vmem:[%s4240 + $0x20] sm:$0xf]
      %v4250 = vld [vmem:[%s4240 + $0x24] sm:$0xf]
      %v4251 = vld [vmem:[%s4240 + $0x28] sm:$0xf]
      %v4252 = vld [vmem:[%s4240 + $0x2c] sm:$0xf]
      %v4253 = vld [vmem:[%s4240 + $0x30] sm:$0xf]
      %v4254 = vld [vmem:[%s4240 + $0x34] sm:$0xf]
      %v4255 = vld [vmem:[%s4240 + $0x38] sm:$0xf]
      %v4256 = vld [vmem:[%s4240 + $0x3c] sm:$0xf]
      %v4273 = vunpack.c.l.b16 %v4241
      %v4274 = vunpack.c.l.b16 %v4242
      %v4275 = vunpack.c.l.b16 %v4243
      %v4276 = vunpack.c.l.b16 %v4244
      %v4277 = vunpack.c.l.b16 %v4245
      %v4278 = vunpack.c.l.b16 %v4246
      %v4279 = vunpack.c.l.b16 %v4247
      %v4280 = vunpack.c.l.b16 %v4248
      %v4281 = vunpack.c.l.b16 %v4249
      %v4282 = vunpack.c.l.b16 %v4250
      %v4283 = vunpack.c.l.b16 %v4251
      %v4284 = vunpack.c.l.b16 %v4252
      %v4285 = vunpack.c.l.b16 %v4253
      %v4286 = vunpack.c.l.b16 %v4254
      %v4287 = vunpack.c.l.b16 %v4255
      %v4288 = vunpack.c.l.b16 %v4256
      %v4289 = vpack.c.b16 %v4274, %v4273
      %v4290 = vpack.c.b16 %v4276, %v4275
      %v4291 = vpack.c.b16 %v4278, %v4277
      %v4292 = vpack.c.b16 %v4280, %v4279
      %v4293 = vpack.c.b16 %v4282, %v4281
      %v4294 = vpack.c.b16 %v4284, %v4283
      %v4295 = vpack.c.b16 %v4286, %v4285
      %v4296 = vpack.c.b16 %v4288, %v4287
      %4305 = vmatprep.subr.bf16.mxu0 0
      %4306 = vmatpush1.bf16.msra.mxu0 %v4296
      %4307 = vmatprep.subr.bf16.mxu0 0
      %4308 = vmatpush1.bf16.msra.mxu0 %v4295
      %4309 = vmatprep.subr.bf16.mxu0 0
      %4310 = vmatpush1.bf16.msra.mxu0 %v4294
      %4311 = vmatprep.subr.bf16.mxu0 0
      %4312 = vmatpush1.bf16.msra.mxu0 %v4293
      %4313 = vmatprep.subr.bf16.mxu0 0
      %4314 = vmatpush1.bf16.msra.mxu0 %v4292
      %4315 = vmatprep.subr.bf16.mxu0 0
      %4316 = vmatpush1.bf16.msra.mxu0 %v4291
      %4317 = vmatprep.subr.bf16.mxu0 0
      %4318 = vmatpush1.bf16.msra.mxu0 %v4290
      %4319 = vmatprep.subr.bf16.mxu0 0
      %4320 = vmatpush1.bf16.msra.mxu0 %v4289
      %4321 = vmatprep.subr.bf16.mxu0 0
      %4322 = vmatpush2.bf16.msra.mxu0 0
      %4323 = vmatprep.subr.bf16.mxu0 0
      %4324 = vmatpush2.bf16.msra.mxu0 0
      %4325 = vmatprep.subr.bf16.mxu0 0
      %4326 = vmatpush2.bf16.msra.mxu0 0
      %4327 = vmatprep.subr.bf16.mxu0 0
      %4328 = vmatpush2.bf16.msra.mxu0 0
      %4329 = vmatprep.subr.bf16.mxu0 0
      %4330 = vmatpush2.bf16.msra.mxu0 0
      %4331 = vmatprep.subr.bf16.mxu0 0
      %4332 = vmatpush2.bf16.msra.mxu0 0
      %4333 = vmatprep.subr.bf16.mxu0 0
      %4334 = vmatpush2.bf16.msra.mxu0 0
      %4335 = vmatprep.subr.bf16.mxu0 0
      %4336 = vmatpush2.bf16.msra.mxu0 0
      %4337 = vmatprep.mubr.bf16.mxu0 0
      %4338 = vmatmul.mubr.bf16.gmra.mxu0 %v1759
      %v4339 = vpop.f32.mrf.mxu0
      %v4340 = vadd.f32 0.0, %v4339
      %v4341 = vpop.f32.mrf.mxu0
      %v4342 = vpop.f32.mrf.mxu0
      %v4343 = vadd.f32 0.0, %v4342
      %v4344 = vpop.f32.mrf.mxu0
      %4345 = vmatprep.mubr.bf16.mxu0 0
      %4346 = vmatmul.mubr.bf16.gmra.mxu0 %v1760
      %v4347 = vpop.f32.mrf.mxu0
      %v4348 = vadd.f32 0.0, %v4347
      %v4349 = vpop.f32.mrf.mxu0
      %v4350 = vpop.f32.mrf.mxu0
      %v4351 = vadd.f32 0.0, %v4350
      %v4352 = vpop.f32.mrf.mxu0
      %4353 = vdwg.mxu0
      %v4354 = vpack.c.bf16 %v4343, %v4340
      %v4355 = vpack.c.bf16 %v4351, %v4348
      %s4356 = scalar_lea.vmem %s6, 208
      %v4357 = vld [vmem:[%s4356] sm:$0xf]
      %v4358 = vld [vmem:[%s4356 + $0x4] sm:$0xf]
      %v4359 = vld [vmem:[%s4356 + $0x8] sm:$0xf]
      %v4360 = vld [vmem:[%s4356 + $0xc] sm:$0xf]
      %v4365 = vunpack.c.l.b16 %v4357
      %v4366 = vunpack.c.l.b16 %v4358
      %v4367 = vunpack.c.l.b16 %v4359
      %v4368 = vunpack.c.l.b16 %v4360
      %v4369 = vpack.c.b16 %v4366, %v4365
      %v4370 = vpack.c.b16 %v4368, %v4367
      %v4372 = vsel %vm2029, %v4369, 0
      %v4375 = vsel %vm2029, %v4370, 0
      %4377 = vmatprep.subr.bf16.mxu0 0
      %4378 = vmatpush1.bf16.msra.mxu0 0
      %4379 = vmatprep.subr.bf16.mxu0 0
      %4380 = vmatpush1.bf16.msra.mxu0 0
      %4381 = vmatprep.subr.bf16.mxu0 0
      %4382 = vmatpush1.bf16.msra.mxu0 0
      %4383 = vmatprep.subr.bf16.mxu0 0
      %4384 = vmatpush1.bf16.msra.mxu0 0
      %4385 = vmatprep.subr.bf16.mxu0 0
      %4386 = vmatpush1.bf16.msra.mxu0 0
      %4387 = vmatprep.subr.bf16.mxu0 0
      %4388 = vmatpush1.bf16.msra.mxu0 0
      %4389 = vmatprep.subr.bf16.mxu0 0
      %4390 = vmatpush1.bf16.msra.mxu0 %v4355
      %4391 = vmatprep.subr.bf16.mxu0 0
      %4392 = vmatpush1.bf16.msra.mxu0 %v4354
      %4393 = vmatprep.subr.bf16.mxu0 0
      %4394 = vmatpush2.bf16.msra.mxu0 0
      %4395 = vmatprep.subr.bf16.mxu0 0
      %4396 = vmatpush2.bf16.msra.mxu0 0
      %4397 = vmatprep.subr.bf16.mxu0 0
      %4398 = vmatpush2.bf16.msra.mxu0 0
      %4399 = vmatprep.subr.bf16.mxu0 0
      %4400 = vmatpush2.bf16.msra.mxu0 0
      %4401 = vmatprep.subr.bf16.mxu0 0
      %4402 = vmatpush2.bf16.msra.mxu0 0
      %4403 = vmatprep.subr.bf16.mxu0 0
      %4404 = vmatpush2.bf16.msra.mxu0 0
      %4405 = vmatprep.subr.bf16.mxu0 0
      %4406 = vmatpush2.bf16.msra.mxu0 0
      %4407 = vmatprep.subr.bf16.mxu0 0
      %4408 = vmatpush2.bf16.msra.mxu0 0
      %4409 = vmatprep.mubr.bf16.mxu0 0
      %4410 = vmatmul.mubr.bf16.gmra.mxu0 %v4372
      %v4411 = vpop.f32.mrf.mxu0
      %v4412 = vadd.f32 0.0, %v4411
      %v4413 = vpop.f32.mrf.mxu0
      %v4414 = vpop.f32.mrf.mxu0
      %v4415 = vadd.f32 0.0, %v4414
      %v4416 = vpop.f32.mrf.mxu0
      %4417 = vmatprep.mubr.bf16.mxu0 0
      %4418 = vmatmul.mubr.bf16.gmra.mxu0 %v4375
      %v4419 = vpop.f32.mrf.mxu0
      %v4420 = vadd.f32 0.0, %v4419
      %v4421 = vpop.f32.mrf.mxu0
      %v4422 = vpop.f32.mrf.mxu0
      %v4423 = vadd.f32 0.0, %v4422
      %v4424 = vpop.f32.mrf.mxu0
      %4425 = vdwg.mxu0
      %v4426 = vadd.f32 %v4236, %v4412
      %v4427 = vadd.f32 %v4237, %v4415
      %v4428 = vadd.f32 %v4238, %v4420
      %v4429 = vadd.f32 %v4239, %v4423
      %s4430 = scalar_lea.vmem %s5, 896
      %v4431 = vld [vmem:[%s4430] sm:$0xf]
      %v4432 = vld [vmem:[%s4430 + $0x4] sm:$0xf]
      %v4433 = vld [vmem:[%s4430 + $0x8] sm:$0xf]
      %v4434 = vld [vmem:[%s4430 + $0xc] sm:$0xf]
      %v4435 = vld [vmem:[%s4430 + $0x10] sm:$0xf]
      %v4436 = vld [vmem:[%s4430 + $0x14] sm:$0xf]
      %v4437 = vld [vmem:[%s4430 + $0x18] sm:$0xf]
      %v4438 = vld [vmem:[%s4430 + $0x1c] sm:$0xf]
      %v4439 = vld [vmem:[%s4430 + $0x20] sm:$0xf]
      %v4440 = vld [vmem:[%s4430 + $0x24] sm:$0xf]
      %v4441 = vld [vmem:[%s4430 + $0x28] sm:$0xf]
      %v4442 = vld [vmem:[%s4430 + $0x2c] sm:$0xf]
      %v4443 = vld [vmem:[%s4430 + $0x30] sm:$0xf]
      %v4444 = vld [vmem:[%s4430 + $0x34] sm:$0xf]
      %v4445 = vld [vmem:[%s4430 + $0x38] sm:$0xf]
      %v4446 = vld [vmem:[%s4430 + $0x3c] sm:$0xf]
      %v4463 = vunpack.c.l.b16 %v4431
      %v4464 = vunpack.c.l.b16 %v4432
      %v4465 = vunpack.c.l.b16 %v4433
      %v4466 = vunpack.c.l.b16 %v4434
      %v4467 = vunpack.c.l.b16 %v4435
      %v4468 = vunpack.c.l.b16 %v4436
      %v4469 = vunpack.c.l.b16 %v4437
      %v4470 = vunpack.c.l.b16 %v4438
      %v4471 = vunpack.c.l.b16 %v4439
      %v4472 = vunpack.c.l.b16 %v4440
      %v4473 = vunpack.c.l.b16 %v4441
      %v4474 = vunpack.c.l.b16 %v4442
      %v4475 = vunpack.c.l.b16 %v4443
      %v4476 = vunpack.c.l.b16 %v4444
      %v4477 = vunpack.c.l.b16 %v4445
      %v4478 = vunpack.c.l.b16 %v4446
      %v4479 = vpack.c.b16 %v4464, %v4463
      %v4480 = vpack.c.b16 %v4466, %v4465
      %v4481 = vpack.c.b16 %v4468, %v4467
      %v4482 = vpack.c.b16 %v4470, %v4469
      %v4483 = vpack.c.b16 %v4472, %v4471
      %v4484 = vpack.c.b16 %v4474, %v4473
      %v4485 = vpack.c.b16 %v4476, %v4475
      %v4486 = vpack.c.b16 %v4478, %v4477
      %4495 = vmatprep.subr.bf16.mxu0 0
      %4496 = vmatpush1.bf16.msra.mxu0 %v4486
      %4497 = vmatprep.subr.bf16.mxu0 0
      %4498 = vmatpush1.bf16.msra.mxu0 %v4485
      %4499 = vmatprep.subr.bf16.mxu0 0
      %4500 = vmatpush1.bf16.msra.mxu0 %v4484
      %4501 = vmatprep.subr.bf16.mxu0 0
      %4502 = vmatpush1.bf16.msra.mxu0 %v4483
      %4503 = vmatprep.subr.bf16.mxu0 0
      %4504 = vmatpush1.bf16.msra.mxu0 %v4482
      %4505 = vmatprep.subr.bf16.mxu0 0
      %4506 = vmatpush1.bf16.msra.mxu0 %v4481
      %4507 = vmatprep.subr.bf16.mxu0 0
      %4508 = vmatpush1.bf16.msra.mxu0 %v4480
      %4509 = vmatprep.subr.bf16.mxu0 0
      %4510 = vmatpush1.bf16.msra.mxu0 %v4479
      %4511 = vmatprep.subr.bf16.mxu0 0
      %4512 = vmatpush2.bf16.msra.mxu0 0
      %4513 = vmatprep.subr.bf16.mxu0 0
      %4514 = vmatpush2.bf16.msra.mxu0 0
      %4515 = vmatprep.subr.bf16.mxu0 0
      %4516 = vmatpush2.bf16.msra.mxu0 0
      %4517 = vmatprep.subr.bf16.mxu0 0
      %4518 = vmatpush2.bf16.msra.mxu0 0
      %4519 = vmatprep.subr.bf16.mxu0 0
      %4520 = vmatpush2.bf16.msra.mxu0 0
      %4521 = vmatprep.subr.bf16.mxu0 0
      %4522 = vmatpush2.bf16.msra.mxu0 0
      %4523 = vmatprep.subr.bf16.mxu0 0
      %4524 = vmatpush2.bf16.msra.mxu0 0
      %4525 = vmatprep.subr.bf16.mxu0 0
      %4526 = vmatpush2.bf16.msra.mxu0 0
      %4527 = vmatprep.mubr.bf16.mxu0 0
      %4528 = vmatmul.mubr.bf16.gmra.mxu0 %v1759
      %v4529 = vpop.f32.mrf.mxu0
      %v4530 = vadd.f32 0.0, %v4529
      %v4531 = vpop.f32.mrf.mxu0
      %v4532 = vpop.f32.mrf.mxu0
      %v4533 = vadd.f32 0.0, %v4532
      %v4534 = vpop.f32.mrf.mxu0
      %4535 = vmatprep.mubr.bf16.mxu0 0
      %4536 = vmatmul.mubr.bf16.gmra.mxu0 %v1760
      %v4537 = vpop.f32.mrf.mxu0
      %v4538 = vadd.f32 0.0, %v4537
      %v4539 = vpop.f32.mrf.mxu0
      %v4540 = vpop.f32.mrf.mxu0
      %v4541 = vadd.f32 0.0, %v4540
      %v4542 = vpop.f32.mrf.mxu0
      %4543 = vdwg.mxu0
      %v4544 = vpack.c.bf16 %v4533, %v4530
      %v4545 = vpack.c.bf16 %v4541, %v4538
      %s4546 = scalar_lea.vmem %s6, 224
      %v4547 = vld [vmem:[%s4546] sm:$0xf]
      %v4548 = vld [vmem:[%s4546 + $0x4] sm:$0xf]
      %v4549 = vld [vmem:[%s4546 + $0x8] sm:$0xf]
      %v4550 = vld [vmem:[%s4546 + $0xc] sm:$0xf]
      %v4555 = vunpack.c.l.b16 %v4547
      %v4556 = vunpack.c.l.b16 %v4548
      %v4557 = vunpack.c.l.b16 %v4549
      %v4558 = vunpack.c.l.b16 %v4550
      %v4559 = vpack.c.b16 %v4556, %v4555
      %v4560 = vpack.c.b16 %v4558, %v4557
      %v4562 = vsel %vm2029, %v4559, 0
      %v4565 = vsel %vm2029, %v4560, 0
      %4567 = vmatprep.subr.bf16.mxu0 0
      %4568 = vmatpush1.bf16.msra.mxu0 0
      %4569 = vmatprep.subr.bf16.mxu0 0
      %4570 = vmatpush1.bf16.msra.mxu0 0
      %4571 = vmatprep.subr.bf16.mxu0 0
      %4572 = vmatpush1.bf16.msra.mxu0 0
      %4573 = vmatprep.subr.bf16.mxu0 0
      %4574 = vmatpush1.bf16.msra.mxu0 0
      %4575 = vmatprep.subr.bf16.mxu0 0
      %4576 = vmatpush1.bf16.msra.mxu0 0
      %4577 = vmatprep.subr.bf16.mxu0 0
      %4578 = vmatpush1.bf16.msra.mxu0 0
      %4579 = vmatprep.subr.bf16.mxu0 0
      %4580 = vmatpush1.bf16.msra.mxu0 %v4545
      %4581 = vmatprep.subr.bf16.mxu0 0
      %4582 = vmatpush1.bf16.msra.mxu0 %v4544
      %4583 = vmatprep.subr.bf16.mxu0 0
      %4584 = vmatpush2.bf16.msra.mxu0 0
      %4585 = vmatprep.subr.bf16.mxu0 0
      %4586 = vmatpush2.bf16.msra.mxu0 0
      %4587 = vmatprep.subr.bf16.mxu0 0
      %4588 = vmatpush2.bf16.msra.mxu0 0
      %4589 = vmatprep.subr.bf16.mxu0 0
      %4590 = vmatpush2.bf16.msra.mxu0 0
      %4591 = vmatprep.subr.bf16.mxu0 0
      %4592 = vmatpush2.bf16.msra.mxu0 0
      %4593 = vmatprep.subr.bf16.mxu0 0
      %4594 = vmatpush2.bf16.msra.mxu0 0
      %4595 = vmatprep.subr.bf16.mxu0 0
      %4596 = vmatpush2.bf16.msra.mxu0 0
      %4597 = vmatprep.subr.bf16.mxu0 0
      %4598 = vmatpush2.bf16.msra.mxu0 0
      %4599 = vmatprep.mubr.bf16.mxu0 0
      %4600 = vmatmul.mubr.bf16.gmra.mxu0 %v4562
      %v4601 = vpop.f32.mrf.mxu0
      %v4602 = vadd.f32 0.0, %v4601
      %v4603 = vpop.f32.mrf.mxu0
      %v4604 = vpop.f32.mrf.mxu0
      %v4605 = vadd.f32 0.0, %v4604
      %v4606 = vpop.f32.mrf.mxu0
      %4607 = vmatprep.mubr.bf16.mxu0 0
      %4608 = vmatmul.mubr.bf16.gmra.mxu0 %v4565
      %v4609 = vpop.f32.mrf.mxu0
      %v4610 = vadd.f32 0.0, %v4609
      %v4611 = vpop.f32.mrf.mxu0
      %v4612 = vpop.f32.mrf.mxu0
      %v4613 = vadd.f32 0.0, %v4612
      %v4614 = vpop.f32.mrf.mxu0
      %4615 = vdwg.mxu0
      %v4616 = vadd.f32 %v4426, %v4602
      %v4617 = vadd.f32 %v4427, %v4605
      %v4618 = vadd.f32 %v4428, %v4610
      %v4619 = vadd.f32 %v4429, %v4613
      %s4620 = scalar_lea.vmem %s5, 960
      %v4621 = vld [vmem:[%s4620] sm:$0xf]
      %v4622 = vld [vmem:[%s4620 + $0x4] sm:$0xf]
      %v4623 = vld [vmem:[%s4620 + $0x8] sm:$0xf]
      %v4624 = vld [vmem:[%s4620 + $0xc] sm:$0xf]
      %v4625 = vld [vmem:[%s4620 + $0x10] sm:$0xf]
      %v4626 = vld [vmem:[%s4620 + $0x14] sm:$0xf]
      %v4627 = vld [vmem:[%s4620 + $0x18] sm:$0xf]
      %v4628 = vld [vmem:[%s4620 + $0x1c] sm:$0xf]
      %v4629 = vld [vmem:[%s4620 + $0x20] sm:$0xf]
      %v4630 = vld [vmem:[%s4620 + $0x24] sm:$0xf]
      %v4631 = vld [vmem:[%s4620 + $0x28] sm:$0xf]
      %v4632 = vld [vmem:[%s4620 + $0x2c] sm:$0xf]
      %v4633 = vld [vmem:[%s4620 + $0x30] sm:$0xf]
      %v4634 = vld [vmem:[%s4620 + $0x34] sm:$0xf]
      %v4635 = vld [vmem:[%s4620 + $0x38] sm:$0xf]
      %v4636 = vld [vmem:[%s4620 + $0x3c] sm:$0xf]
      %v4653 = vunpack.c.l.b16 %v4621
      %v4654 = vunpack.c.l.b16 %v4622
      %v4655 = vunpack.c.l.b16 %v4623
      %v4656 = vunpack.c.l.b16 %v4624
      %v4657 = vunpack.c.l.b16 %v4625
      %v4658 = vunpack.c.l.b16 %v4626
      %v4659 = vunpack.c.l.b16 %v4627
      %v4660 = vunpack.c.l.b16 %v4628
      %v4661 = vunpack.c.l.b16 %v4629
      %v4662 = vunpack.c.l.b16 %v4630
      %v4663 = vunpack.c.l.b16 %v4631
      %v4664 = vunpack.c.l.b16 %v4632
      %v4665 = vunpack.c.l.b16 %v4633
      %v4666 = vunpack.c.l.b16 %v4634
      %v4667 = vunpack.c.l.b16 %v4635
      %v4668 = vunpack.c.l.b16 %v4636
      %v4669 = vpack.c.b16 %v4654, %v4653
      %v4670 = vpack.c.b16 %v4656, %v4655
      %v4671 = vpack.c.b16 %v4658, %v4657
      %v4672 = vpack.c.b16 %v4660, %v4659
      %v4673 = vpack.c.b16 %v4662, %v4661
      %v4674 = vpack.c.b16 %v4664, %v4663
      %v4675 = vpack.c.b16 %v4666, %v4665
      %v4676 = vpack.c.b16 %v4668, %v4667
      %4685 = vmatprep.subr.bf16.mxu0 0
      %4686 = vmatpush1.bf16.msra.mxu0 %v4676
      %4687 = vmatprep.subr.bf16.mxu0 0
      %4688 = vmatpush1.bf16.msra.mxu0 %v4675
      %4689 = vmatprep.subr.bf16.mxu0 0
      %4690 = vmatpush1.bf16.msra.mxu0 %v4674
      %4691 = vmatprep.subr.bf16.mxu0 0
      %4692 = vmatpush1.bf16.msra.mxu0 %v4673
      %4693 = vmatprep.subr.bf16.mxu0 0
      %4694 = vmatpush1.bf16.msra.mxu0 %v4672
      %4695 = vmatprep.subr.bf16.mxu0 0
      %4696 = vmatpush1.bf16.msra.mxu0 %v4671
      %4697 = vmatprep.subr.bf16.mxu0 0
      %4698 = vmatpush1.bf16.msra.mxu0 %v4670
      %4699 = vmatprep.subr.bf16.mxu0 0
      %4700 = vmatpush1.bf16.msra.mxu0 %v4669
      %4701 = vmatprep.subr.bf16.mxu0 0
      %4702 = vmatpush2.bf16.msra.mxu0 0
      %4703 = vmatprep.subr.bf16.mxu0 0
      %4704 = vmatpush2.bf16.msra.mxu0 0
      %4705 = vmatprep.subr.bf16.mxu0 0
      %4706 = vmatpush2.bf16.msra.mxu0 0
      %4707 = vmatprep.subr.bf16.mxu0 0
      %4708 = vmatpush2.bf16.msra.mxu0 0
      %4709 = vmatprep.subr.bf16.mxu0 0
      %4710 = vmatpush2.bf16.msra.mxu0 0
      %4711 = vmatprep.subr.bf16.mxu0 0
      %4712 = vmatpush2.bf16.msra.mxu0 0
      %4713 = vmatprep.subr.bf16.mxu0 0
      %4714 = vmatpush2.bf16.msra.mxu0 0
      %4715 = vmatprep.subr.bf16.mxu0 0
      %4716 = vmatpush2.bf16.msra.mxu0 0
      %4717 = vmatprep.mubr.bf16.mxu0 0
      %4718 = vmatmul.mubr.bf16.gmra.mxu0 %v1759
      %v4719 = vpop.f32.mrf.mxu0
      %v4720 = vadd.f32 0.0, %v4719
      %v4721 = vpop.f32.mrf.mxu0
      %v4722 = vpop.f32.mrf.mxu0
      %v4723 = vadd.f32 0.0, %v4722
      %v4724 = vpop.f32.mrf.mxu0
      %4725 = vmatprep.mubr.bf16.mxu0 0
      %4726 = vmatmul.mubr.bf16.gmra.mxu0 %v1760
      %v4727 = vpop.f32.mrf.mxu0
      %v4728 = vadd.f32 0.0, %v4727
      %v4729 = vpop.f32.mrf.mxu0
      %v4730 = vpop.f32.mrf.mxu0
      %v4731 = vadd.f32 0.0, %v4730
      %v4732 = vpop.f32.mrf.mxu0
      %4733 = vdwg.mxu0
      %v4734 = vpack.c.bf16 %v4723, %v4720
      %v4735 = vpack.c.bf16 %v4731, %v4728
      %s4736 = scalar_lea.vmem %s6, 240
      %v4737 = vld [vmem:[%s4736] sm:$0xf]
      %v4738 = vld [vmem:[%s4736 + $0x4] sm:$0xf]
      %v4739 = vld [vmem:[%s4736 + $0x8] sm:$0xf]
      %v4740 = vld [vmem:[%s4736 + $0xc] sm:$0xf]
      %v4745 = vunpack.c.l.b16 %v4737
      %v4746 = vunpack.c.l.b16 %v4738
      %v4747 = vunpack.c.l.b16 %v4739
      %v4748 = vunpack.c.l.b16 %v4740
      %v4749 = vpack.c.b16 %v4746, %v4745
      %v4750 = vpack.c.b16 %v4748, %v4747
      %v4752 = vsel %vm2029, %v4749, 0
      %v4755 = vsel %vm2029, %v4750, 0
      %4757 = vmatprep.subr.bf16.mxu0 0
      %4758 = vmatpush1.bf16.msra.mxu0 0
      %4759 = vmatprep.subr.bf16.mxu0 0
      %4760 = vmatpush1.bf16.msra.mxu0 0
      %4761 = vmatprep.subr.bf16.mxu0 0
      %4762 = vmatpush1.bf16.msra.mxu0 0
      %4763 = vmatprep.subr.bf16.mxu0 0
      %4764 = vmatpush1.bf16.msra.mxu0 0
      %4765 = vmatprep.subr.bf16.mxu0 0
      %4766 = vmatpush1.bf16.msra.mxu0 0
      %4767 = vmatprep.subr.bf16.mxu0 0
      %4768 = vmatpush1.bf16.msra.mxu0 0
      %4769 = vmatprep.subr.bf16.mxu0 0
      %4770 = vmatpush1.bf16.msra.mxu0 %v4735
      %4771 = vmatprep.subr.bf16.mxu0 0
      %4772 = vmatpush1.bf16.msra.mxu0 %v4734
      %4773 = vmatprep.subr.bf16.mxu0 0
      %4774 = vmatpush2.bf16.msra.mxu0 0
      %4775 = vmatprep.subr.bf16.mxu0 0
      %4776 = vmatpush2.bf16.msra.mxu0 0
      %4777 = vmatprep.subr.bf16.mxu0 0
      %4778 = vmatpush2.bf16.msra.mxu0 0
      %4779 = vmatprep.subr.bf16.mxu0 0
      %4780 = vmatpush2.bf16.msra.mxu0 0
      %4781 = vmatprep.subr.bf16.mxu0 0
      %4782 = vmatpush2.bf16.msra.mxu0 0
      %4783 = vmatprep.subr.bf16.mxu0 0
      %4784 = vmatpush2.bf16.msra.mxu0 0
      %4785 = vmatprep.subr.bf16.mxu0 0
      %4786 = vmatpush2.bf16.msra.mxu0 0
      %4787 = vmatprep.subr.bf16.mxu0 0
      %4788 = vmatpush2.bf16.msra.mxu0 0
      %4789 = vmatprep.mubr.bf16.mxu0 0
      %4790 = vmatmul.mubr.bf16.gmra.mxu0 %v4752
      %v4791 = vpop.f32.mrf.mxu0
      %v4792 = vadd.f32 0.0, %v4791
      %v4793 = vpop.f32.mrf.mxu0
      %v4794 = vpop.f32.mrf.mxu0
      %v4795 = vadd.f32 0.0, %v4794
      %v4796 = vpop.f32.mrf.mxu0
      %4797 = vmatprep.mubr.bf16.mxu0 0
      %4798 = vmatmul.mubr.bf16.gmra.mxu0 %v4755
      %v4799 = vpop.f32.mrf.mxu0
      %v4800 = vadd.f32 0.0, %v4799
      %v4801 = vpop.f32.mrf.mxu0
      %v4802 = vpop.f32.mrf.mxu0
      %v4803 = vadd.f32 0.0, %v4802
      %v4804 = vpop.f32.mrf.mxu0
      %4805 = vdwg.mxu0
      %v4806 = vadd.f32 %v4616, %v4792
      %v4807 = vadd.f32 %v4617, %v4795
      %v4808 = vadd.f32 %v4618, %v4800
      %v4809 = vadd.f32 %v4619, %v4803
      %vm4810 = vcmask 64512
      %v4811 = vsel %vm4810, %v4806, 0.0
      %4812 = vadd.xlane.f32.xlu0 %v4811
      %v4813 = vpop.xlane.xlu0 %4812
      %v4814 = vsel %vm4810, %v4807, 0.0
      %4815 = vadd.xlane.f32.xlu0 %v4814
      %v4816 = vpop.xlane.xlu0 %4815
      %v4817 = vsel %vm4810, %v4808, 0.0
      %4818 = vadd.xlane.f32.xlu0 %v4817
      %v4819 = vpop.xlane.xlu0 %4818
      %v4820 = vsel %vm4810, %v4809, 0.0
      %4821 = vadd.xlane.f32.xlu0 %v4820
      %v4822 = vpop.xlane.xlu0 %4821
      %v4823 = vmul.f32 %v4813, 0.125
      %v4824 = vmul.f32 %v4816, 0.125
      %v4825 = vmul.f32 %v4819, 0.125
      %v4826 = vmul.f32 %v4822, 0.125
      %v4827 = vsub.f32 %v4806, %v4823
      %v4828 = vsub.f32 %v4807, %v4824
      %v4829 = vsub.f32 %v4808, %v4825
      %v4830 = vsub.f32 %v4809, %v4826
      %v4831 = vmul.f32 %v4827, %v4827
      %v4832 = vmul.f32 %v4828, %v4828
      %v4833 = vmul.f32 %v4829, %v4829
      %v4834 = vmul.f32 %v4830, %v4830
      %v4835 = vsel %vm4810, %v4831, 0.0
      %4836 = vadd.xlane.f32.xlu0 %v4835
      %v4837 = vpop.xlane.xlu0 %4836
      %v4838 = vsel %vm4810, %v4832, 0.0
      %4839 = vadd.xlane.f32.xlu0 %v4838
      %v4840 = vpop.xlane.xlu0 %4839
      %v4841 = vsel %vm4810, %v4833, 0.0
      %4842 = vadd.xlane.f32.xlu0 %v4841
      %v4843 = vpop.xlane.xlu0 %4842
      %v4844 = vsel %vm4810, %v4834, 0.0
      %4845 = vadd.xlane.f32.xlu0 %v4844
      %v4846 = vpop.xlane.xlu0 %4845
      %v4847 = vmul.f32 %v4837, 0.125
      %v4848 = vmul.f32 %v4840, 0.125
      %v4849 = vmul.f32 %v4843, 0.125
      %v4850 = vmul.f32 %v4846, 0.125
      %v4851 = vadd.f32 %v4847, 1e-05
      %v4852 = vadd.f32 %v4848, 1e-05
      %v4853 = vadd.f32 %v4849, 1e-05
      %v4854 = vadd.f32 %v4850, 1e-05
      %v4855 = vrsqrt.pop %v4851
      %v4856 = vrsqrt.pop %v4852
      %v4857 = vrsqrt.pop %v4853
      %v4858 = vrsqrt.pop %v4854
      %v4859 = vld [vmem:[%s7] sm:$0xff]
      %v4860 = vld [vmem:[%s7 + $0x8] sm:$0xff]
      %v4861 = vld [vmem:[%s7 + $0x10] sm:$0xff]
      %v4862 = vld [vmem:[%s7 + $0x18] sm:$0xff]
      %v4863 = vmul.f32 %v4855, %v4859
      %v4864 = vmul.f32 %v4856, %v4860
      %v4865 = vmul.f32 %v4857, %v4861
      %v4866 = vmul.f32 %v4858, %v4862
      %v4867 = vld [vmem:[%s8] sm:$0xff]
      %v4868 = vld [vmem:[%s8 + $0x8] sm:$0xff]
      %v4869 = vld [vmem:[%s8 + $0x10] sm:$0xff]
      %v4870 = vld [vmem:[%s8 + $0x18] sm:$0xff]
      %v4871 = vmul.f32 %v4823, %v4863
      %v4872 = vmul.f32 %v4824, %v4864
      %v4873 = vmul.f32 %v4825, %v4865
      %v4874 = vmul.f32 %v4826, %v4866
      %v4875 = vsub.f32 %v4867, %v4871
      %v4876 = vsub.f32 %v4868, %v4872
      %v4877 = vsub.f32 %v4869, %v4873
      %v4878 = vsub.f32 %v4870, %v4874
      %4880 = vset.pattern.permute.xlu0 0
      %4881 = vperm.xlu0 %4880, %v4863
      %v4882 = vpop.permute.xlu0 %4881
      %4885 = vset.pattern.permute.xlu0 0
      %4886 = vperm.xlu0 %4885, %v4864
      %v4887 = vpop.permute.xlu0 %4886
      %4890 = vset.pattern.permute.xlu0 0
      %4891 = vperm.xlu0 %4890, %v4865
      %v4892 = vpop.permute.xlu0 %4891
      %4895 = vset.pattern.permute.xlu0 0
      %4896 = vperm.xlu0 %4895, %v4866
      %v4897 = vpop.permute.xlu0 %4896
      %v4899 = vmul.f32 %v4806, %v4882
      %v4900 = vmul.f32 %v4807, %v4887
      %v4901 = vmul.f32 %v4808, %v4892
      %v4902 = vmul.f32 %v4809, %v4897
      %4904 = vset.pattern.permute.xlu0 0
      %4905 = vperm.xlu0 %4904, %v4875
      %v4906 = vpop.permute.xlu0 %4905
      %4909 = vset.pattern.permute.xlu0 0
      %4910 = vperm.xlu0 %4909, %v4876
      %v4911 = vpop.permute.xlu0 %4910
      %4914 = vset.pattern.permute.xlu0 0
      %4915 = vperm.xlu0 %4914, %v4877
      %v4916 = vpop.permute.xlu0 %4915
      %4919 = vset.pattern.permute.xlu0 0
      %4920 = vperm.xlu0 %4919, %v4878
      %v4921 = vpop.permute.xlu0 %4920
      %v4923 = vadd.f32 %v4899, %v4906
      %v4924 = vadd.f32 %v4900, %v4911
      %v4925 = vadd.f32 %v4901, %v4916
      %v4926 = vadd.f32 %v4902, %v4921
      %v4927 = vmul.f32 %v4923, 0.2
      %v4928 = vmul.f32 %v4924, 0.2
      %v4929 = vmul.f32 %v4925, 0.2
      %v4930 = vmul.f32 %v4926, 0.2
      %v4931 = vmax.f32 %v4923, %v4927
      %v4932 = vmax.f32 %v4924, %v4928
      %v4933 = vmax.f32 %v4925, %v4929
      %v4934 = vmax.f32 %v4926, %v4930
      %v4935 = vpack.c.bf16 %v4932, %v4931
      %v4936 = vpack.c.bf16 %v4934, %v4933
      %v4939 = vunpack.c.l.b16 %v4935
      %v4940 = vunpack.c.h.b16 %v4935
      %v4941 = vunpack.c.l.b16 %v4936
      %v4942 = vunpack.c.h.b16 %v4936
      %v4943 = vpack.c.b16 %v4939, %v4939
      %v4944 = vpack.c.b16 %v4940, %v4940
      %v4945 = vpack.c.b16 %v4941, %v4941
      %v4946 = vpack.c.b16 %v4942, %v4942
      %vm4951 = vcmask 60416
      %4952 = vst.msk [vmem:[%s460] sm:$0xf] %vm4951, %v4943
      %4953 = vst.msk [vmem:[%s460 + $0x4] sm:$0xf] %vm4951, %v4944
      %4954 = vst.msk [vmem:[%s460 + $0x8] sm:$0xf] %vm4951, %v4945
      %4955 = vst.msk [vmem:[%s460 + $0xc] sm:$0xf] %vm4951, %v4946
      %v4956 = vld [vmem:[%s9] sm:$0x1]
      %v4957 = vld [vmem:[#allocation2] sm:$0x1]
      %4959 = vset.pattern.permute.xlu0 0
      %4960 = vperm.xlu0 %4959, %v4957
      %v4961 = vpop.permute.xlu0 %4960
      %v4963 = vlaneseq
      %v4964 = vshrl.u32 %v4963, 7
      %v4965 = vsub.s32 0, %v4964
      %v4966 = vrot.slane %v4961, %v4965
      %v4968 = vsel %vm2029, %v4956, 0
      %4970 = vmatprep.subr.mxu0 0.0
      %4971 = vmatpush1.msra.mxu0 0.0
      %4972 = vmatprep.subr.mxu0 0.0
      %4973 = vmatpush1.msra.mxu0 0.0
      %4974 = vmatprep.subr.mxu0 0.0
      %4975 = vmatpush1.msra.mxu0 0.0
      %4976 = vmatprep.subr.mxu0 0.0
      %4977 = vmatpush1.msra.mxu0 0.0
      %4978 = vmatprep.subr.mxu0 0.0
      %4979 = vmatpush1.msra.mxu0 0.0
      %4980 = vmatprep.subr.mxu0 0.0
      %4981 = vmatpush1.msra.mxu0 0.0
      %4982 = vmatprep.subr.mxu0 0.0
      %4983 = vmatpush1.msra.mxu0 0.0
      %4984 = vmatprep.subr.mxu0 0.0
      %4985 = vmatpush1.msra.mxu0 0.0
      %4986 = vmatprep.subr.mxu0 0.0
      %4987 = vmatpush1.msra.mxu0 0.0
      %4988 = vmatprep.subr.mxu0 0.0
      %4989 = vmatpush1.msra.mxu0 0.0
      %4990 = vmatprep.subr.mxu0 0.0
      %4991 = vmatpush1.msra.mxu0 0.0
      %4992 = vmatprep.subr.mxu0 0.0
      %4993 = vmatpush1.msra.mxu0 0.0
      %4994 = vmatprep.subr.mxu0 0.0
      %4995 = vmatpush1.msra.mxu0 %v4934
      %4996 = vmatprep.subr.mxu0 0.0
      %4997 = vmatpush1.msra.mxu0 %v4933
      %4998 = vmatprep.subr.mxu0 0.0
      %4999 = vmatpush1.msra.mxu0 %v4932
      %5000 = vmatprep.subr.mxu0 0.0
      %5001 = vmatpush1.msra.mxu0 %v4931
      %5002 = vmatprep.subr.mxu0 0.0
      %5003 = vmatpush2.msra.mxu0 0.0
      %5004 = vmatprep.subr.mxu0 0.0
      %5005 = vmatpush2.msra.mxu0 0.0
      %5006 = vmatprep.subr.mxu0 0.0
      %5007 = vmatpush2.msra.mxu0 0.0
      %5008 = vmatprep.subr.mxu0 0.0
      %5009 = vmatpush2.msra.mxu0 0.0
      %5010 = vmatprep.subr.mxu0 0.0
      %5011 = vmatpush2.msra.mxu0 0.0
      %5012 = vmatprep.subr.mxu0 0.0
      %5013 = vmatpush2.msra.mxu0 0.0
      %5014 = vmatprep.subr.mxu0 0.0
      %5015 = vmatpush2.msra.mxu0 0.0
      %5016 = vmatprep.subr.mxu0 0.0
      %5017 = vmatpush2.msra.mxu0 0.0
      %5018 = vmatprep.subr.mxu0 0.0
      %5019 = vmatpush2.msra.mxu0 0.0
      %5020 = vmatprep.subr.mxu0 0.0
      %5021 = vmatpush2.msra.mxu0 0.0
      %5022 = vmatprep.subr.mxu0 0.0
      %5023 = vmatpush2.msra.mxu0 0.0
      %5024 = vmatprep.subr.mxu0 0.0
      %5025 = vmatpush2.msra.mxu0 0.0
      %5026 = vmatprep.subr.mxu0 0.0
      %5027 = vmatpush2.msra.mxu0 0.0
      %5028 = vmatprep.subr.mxu0 0.0
      %5029 = vmatpush2.msra.mxu0 0.0
      %5030 = vmatprep.subr.mxu0 0.0
      %5031 = vmatpush2.msra.mxu0 0.0
      %5032 = vmatprep.subr.mxu0 0.0
      %5033 = vmatpush2.msra.mxu0 0.0
      %5034 = vmatprep.mubr.f32.mxu0 0.0
      %5035 = vmatmul.mubr.f32.gmra.mxu0 %v4968
      %v5036 = vpop.f32.mrf.mxu0
      %v5037 = vadd.f32 %v4966, %v5036
      %v5038 = vpop.f32.mrf.mxu0
      %5039 = vdwg.mxu0
      %vm5040 = vcmask 57344
      %5041 = vst.msk [vmem:[%s463] sm:$0x1] %vm5040, %v5037
      %p5042 = scmp.lt.s32.totalorder %s27, 1
      %s5043 = scalar_select %p5042, %s27, 1
      %s5044 = smul.addr %s5043, 4
      %s5045 = smul.addr %s5044, 4
      %s5046 = scalar_lea.vmem %s11, %s5045
      %p5047 = scmp.lt.s32.totalorder %s27, 1
      %s5048 = scalar_select %p5047, %s27, 1
      %s5049 = smul.addr %s5048, 4
      %s5050 = smul.addr %s5049, 4
      %s5051 = scalar_lea.vmem %s12, %s5050
      %p5052 = scmp.lt.s32.totalorder %s27, 1
      %s5053 = scalar_select %p5052, %s27, 1
      %s5054 = scalar_lea.vmem %s13, %s5053
      // Predicated region
      $region65: #{discriminator_forward.5} parent=63 // pred_check
        %p5055 = pneg %p281
      $region66: #{discriminator_forward.5} parent=63 // pred_check_branch
        %5057 = sbr.rel (%p5055) target = $region68
      $region67: #{discriminator_forward.5} parent=63 // pred_region
        _
      $region68: #{discriminator_forward.5} parent=63 // pred_fallthru
        _
      // Predicated region
      $region69: #{discriminator_forward.5} parent=63 // pred_check
        %p5058 = pneg %p307
      $region70: #{discriminator_forward.5} parent=63 // pred_check_branch
        %5060 = sbr.rel (%p5058) target = $region72
      $region71: #{discriminator_forward.5} parent=63 // pred_region
        _
      $region72: #{discriminator_forward.5} parent=63 // pred_fallthru
        _
      // Predicated region
      $region73: #{discriminator_forward.5} parent=63 // pred_check
        %p5061 = pneg %p333
      $region74: #{discriminator_forward.5} parent=63 // pred_check_branch
        %5063 = sbr.rel (%p5061) target = $region76
      $region75: #{discriminator_forward.5} parent=63 // pred_region
        _
      $region76: #{discriminator_forward.5} parent=63 // pred_fallthru
        _
    $region64: #{discriminator_forward.5} parent=5 // pred_fallthru
      _
    %p5064 = scmp.le.s32.totalorder 2, %s22
    // Predicated region
    $region77: #{discriminator_forward.5} parent=5 // pred_check
      %p5065 = pneg %p5064
    $region78: #{discriminator_forward.5} parent=5 // pred_check_branch
      %5067 = sbr.rel (%p5065) target = $region80
    $region79: #{discriminator_forward.5} parent=5 // pred_region
      %s5068 = ssub.s32 %s22, 2
      // Predicated region
      $region81: #{discriminator_forward.5} parent=79 // pred_check
        %p5069 = pneg %p287
      $region82: #{discriminator_forward.5} parent=79 // pred_check_branch
        %5071 = sbr.rel (%p5069) target = $region84
      $region83: #{discriminator_forward.5} parent=79 // pred_region
        %p5072 = scmp.lt.s32.totalorder %s28, 1
        %s5073 = scalar_select %p5072, %s28, 1
        %s5074 = smul.addr %s5073, 4
        %s5075 = smul.addr %s5074, 4
        %s5076 = scalar_lea.vmem %s11, %s5075
      $region84: #{discriminator_forward.5} parent=79 // pred_fallthru
        _
      // Predicated region
      $region85: #{discriminator_forward.5} parent=79 // pred_check
        %p5077 = pneg %p313
      $region86: #{discriminator_forward.5} parent=79 // pred_check_branch
        %5079 = sbr.rel (%p5077) target = $region88
      $region87: #{discriminator_forward.5} parent=79 // pred_region
        %p5080 = scmp.lt.s32.totalorder %s28, 1
        %s5081 = scalar_select %p5080, %s28, 1
        %s5082 = smul.addr %s5081, 4
        %s5083 = smul.addr %s5082, 4
        %s5084 = scalar_lea.vmem %s12, %s5083
      $region88: #{discriminator_forward.5} parent=79 // pred_fallthru
        _
      // Predicated region
      $region89: #{discriminator_forward.5} parent=79 // pred_check
        %p5085 = pneg %p339
      $region90: #{discriminator_forward.5} parent=79 // pred_check_branch
        %5087 = sbr.rel (%p5085) target = $region92
      $region91: #{discriminator_forward.5} parent=79 // pred_region
        %p5088 = scmp.lt.s32.totalorder %s28, 1
        %s5089 = scalar_select %p5088, %s28, 1
        %s5090 = scalar_lea.vmem %s13, %s5089
      $region92: #{discriminator_forward.5} parent=79 // pred_fallthru
        _
    $region80: #{discriminator_forward.5} parent=5 // pred_fallthru
      _
  $region6: #{discriminator_forward.5} parent=0 // loop_footer
    %s26 = sadd.s32 1, %s22
  $region7: #{discriminator_forward.5} parent=0 // loop_footer_branch
    %21 = sbr.rel target = $region3
  $region8: #{discriminator_forward.5} parent=0 // loop_exit
    _

</llo_original>
